<compile_context>
chip_gen: v6e
topology: v6e:2x2x1
jax: 0.10.0
libtpu: 0.0.40
codegen_flags: <defaults>
</compile_context>

<pallas_src>
import numpy as np

import jax
import jax.numpy as jnp
from jax.experimental import pallas as pl
from jax.experimental.pallas import tpu as pltpu

EPS = 1e-5          # InstanceNorm1d default eps
SLOPE = 0.01        # LeakyReLU default negative_slope
CPAD = 128          # all activations / weight tap-blocks padded to 128 lanes

# (in_ch, out_ch, kernel, stride, padding)
DOWN_CFG = [(19, 32, 7, 1, 3), (32, 64, 4, 2, 1), (64, 128, 4, 2, 1), (128, 128, 4, 2, 1)]
UP_CFG = [(128, 128, 4, 2, 1), (128, 64, 4, 2, 1), (64, 32, 4, 2, 1), (32, 19, 9, 1, 2)]


# ----------------------------------------------------------------------------
# Constant packing: every weight / selector goes into one of two flat slabs
# ----------------------------------------------------------------------------
class _SlabPacker:
    def __init__(self, width):
        self.width = width
        self._pieces = []
        self.meta = {}
        self._off = 0

    def add(self, name, a):
        a = jnp.asarray(a, jnp.float32)
        r, c = a.shape
        rp = ((r + 7) // 8) * 8
        piece = jnp.zeros((rp, self.width), jnp.float32).at[:r, :c].set(a)
        self._pieces.append(piece)
        self.meta[name] = (self._off, r, c)
        self._off += rp

    def finish(self):
        return jnp.concatenate(self._pieces, axis=0), self.meta


def _pack_constants(params, context, W):
    """Build the two constant slabs + static config.  Runs as plain XLA
    (outside the kernel); offsets are trace-time Python ints."""
    p128 = _SlabPacker(128)
    p256 = _SlabPacker(256)

    def tap_block(m):
        # place a (ci, co) tap matrix into a (CPAD, CPAD) zero-padded block
        ci, co = m.shape
        return jnp.zeros((CPAD, CPAD), jnp.float32).at[:ci, :co].set(m)

    def conv_stack(w):                  # torch Conv1d weight (co, ci, K)
        K = w.shape[2]
        return jnp.concatenate(
            [tap_block(jnp.transpose(w[:, :, k])) for k in range(K)], axis=0)

    cfg = {"W": W}
    cfg["d0_off"] = tuple(k - DOWN_CFG[0][4] for k in range(DOWN_CFG[0][2]))  # (-3..3)
    cfg["dn_off"] = (-1, 0, 1, 2)       # K=4, pad=1 taps
    cfg["r_off"] = (-1, 0, 1)           # K=3, pad=1 taps

    # ---- downsample weights (+ even-row down-select matrices) ----
    p128.add("Wd0", conv_stack(params["down"][0]["w"]))
    L = W
    for li in (1, 2, 3):
        p128.add(f"Wd{li}", conv_stack(params["down"][li]["w"]))
        Lo = L // 2
        D = np.zeros((Lo, L), np.float32)
        D[np.arange(Lo), 2 * np.arange(Lo)] = 1.0
        p128.add(f"Dd{li}", D)
        L = Lo
    L0 = L

    # ---- shared residual backbone (feature / conditioning split) ----
    res = params["res"]
    p128.add("Wr1", conv_stack(res["w1"][:, :128, :]))
    p128.add("Wc", conv_stack(res["w1"][:, 128:, :]))
    p128.add("g1", res["g1"].reshape(1, -1))
    p128.add("b1", res["bt1"].reshape(1, -1))
    p128.add("Wr2", conv_stack(res["w2"]))
    p128.add("g2", res["g2"].reshape(1, -1))
    p128.add("b2", res["bt2"].reshape(1, -1))

    # ---- fused V|Q|K 1x1 projection ----
    at = params["attn"]
    wqkv = jnp.zeros((CPAD, 160), jnp.float32)
    wqkv = wqkv.at[:, :128].set(jnp.transpose(at["wv"][:, :, 0]))
    wqkv = wqkv.at[:, 128:144].set(jnp.transpose(at["wq"][:, :, 0]))
    wqkv = wqkv.at[:, 144:160].set(jnp.transpose(at["wk"][:, :, 0]))
    bqkv = jnp.concatenate([at["bv"], at["bq"], at["bk"]]).reshape(1, 160)
    p256.add("Wqkv", wqkv)
    p256.add("bqkv", bqkv)
    p128.add("gamma", at["gamma"].reshape(1, 1))

    # ---- stride-2 ConvTranspose layers: even|odd combined weights ----
    # out[2i]   = x[i-1] @ W3 + x[i]   @ W1   (tap offsets -1, 0)
    # out[2i+1] = x[i]   @ W2 + x[i+1] @ W0   (tap offsets  0, +1)
    Lu = L0
    for ui in (0, 1, 2):
        w = params["up"][ui]["w"]       # torch ConvTranspose1d layout (ci, co, 4)
        ci, co = w.shape[0], w.shape[1]
        even = jnp.zeros((3 * CPAD, CPAD), jnp.float32)
        even = even.at[0 * CPAD:0 * CPAD + ci, :co].set(w[:, :, 3])
        even = even.at[1 * CPAD:1 * CPAD + ci, :co].set(w[:, :, 1])
        odd = jnp.zeros((3 * CPAD, CPAD), jnp.float32)
        odd = odd.at[1 * CPAD:1 * CPAD + ci, :co].set(w[:, :, 2])
        odd = odd.at[2 * CPAD:2 * CPAD + ci, :co].set(w[:, :, 0])
        p256.add(f"Wu{ui}", jnp.concatenate([even, odd], axis=1))
        S = np.zeros((2 * Lu, 2 * Lu), np.float32)        # row interleaver
        S[2 * np.arange(Lu), np.arange(Lu)] = 1.0
        S[2 * np.arange(Lu) + 1, Lu + np.arange(Lu)] = 1.0
        p128.add(f"Su{ui}", S)
        Lu *= 2

    # ---- last ConvTranspose (K=9, stride=1, pad=2): out[i] = sum_d x[i+d] W_{2-d}
    w = params["up"][3]["w"]            # (32, 19, 9)
    cfg["u3_off"] = tuple(range(-6, 3))
    p128.add("Wu3", jnp.concatenate(
        [tap_block(w[:, :, 2 - d]) for d in cfg["u3_off"]], axis=0))
    cfg["L_final"] = (Lu - 1) - 2 * UP_CFG[3][4] + UP_CFG[3][2]   # 68 for W=64

    slab128, meta128 = p128.finish()
    slab256, meta256 = p256.finish()
    return slab128, slab256, meta128, meta256, cfg


# ----------------------------------------------------------------------------
# The single fused Pallas kernel (whole Generator forward for one sample)
# ----------------------------------------------------------------------------
def _make_kernel(meta128, meta256, cfg):
    W0 = cfg["W"]
    d0_off, dn_off, r_off, u3_off = (cfg["d0_off"], cfg["dn_off"],
                                     cfg["r_off"], cfg["u3_off"])
    L_fin = cfg["L_final"]

    def mm(a, b):
        return jnp.dot(a, b, preferred_element_type=jnp.float32)

    def tap_stack(h, offsets, L_out):
        """Lane-concat of tap-shifted copies of h (zero-padded at the edges).
        All pieces are CPAD wide -> 128-aligned concatenation (XLU/VPU work,
        no MXU selector matmuls)."""
        L_h = h.shape[0]
        lo = min(offsets)
        hi = max(offsets) + L_out - 1
        pad_lo = max(0, -lo)
        pad_hi = max(0, hi - (L_h - 1))
        parts = []
        if pad_lo:
            parts.append(jnp.zeros((pad_lo, CPAD), jnp.float32))
        parts.append(h)
        if pad_hi:
            parts.append(jnp.zeros((pad_hi, CPAD), jnp.float32))
        hp = jnp.concatenate(parts, axis=0) if len(parts) > 1 else h
        cols = [hp[pad_lo + d:pad_lo + d + L_out, :] for d in offsets]
        return jnp.concatenate(cols, axis=1)

    def inorm(y, gamma=None, beta=None):
        # InstanceNorm1d (per-channel over length), single-pass statistics.
        mu = jnp.mean(y, axis=0, keepdims=True)
        ms = jnp.mean(y * y, axis=0, keepdims=True)
        var = jnp.maximum(ms - mu * mu, 0.0)
        y = (y - mu) * jax.lax.rsqrt(var + EPS)
        if gamma is not None:
            y = y * gamma + beta
        return y

    def lrelu(y):
        return jnp.where(y > 0, y, SLOPE * y)

    def kernel(x_ref, c_ref, s128_ref, s256_ref, o_ref):
        def r1(name):
            off, r, c = meta128[name]
            return s128_ref[off:off + r, :c]

        def r2(name):
            off, r, c = meta256[name]
            return s256_ref[off:off + r, :c]

        # ---- downsample: Conv1d -> InstanceNorm -> LeakyReLU (x4) ----
        h = x_ref[0]                                              # (W, 128)
        h = lrelu(inorm(mm(tap_stack(h, d0_off, W0), r1("Wd0"))))
        L = W0
        for li in (1, 2, 3):
            y = mm(tap_stack(h, dn_off, L), r1(f"Wd{li}"))        # stride-1, full L
            y = mm(r1(f"Dd{li}"), y)                              # keep even rows
            L //= 2
            h = lrelu(inorm(y))
        L0 = L

        # ---- conditioning contribution to the first backbone conv (hoisted) ----
        c_rows = jnp.broadcast_to(c_ref[0], (L0, CPAD))
        c_contrib = mm(tap_stack(c_rows, r_off, L0), r1("Wc"))    # (L0, 128)

        g1, b1 = r1("g1"), r1("b1")
        g2, b2 = r1("g2"), r1("b2")

        # ---- residual backbone applied 3x with shared weights ----
        for _ in range(3):
            y = mm(tap_stack(h, r_off, L0), r1("Wr1")) + c_contrib
            y = lrelu(inorm(y, g1, b1))
            y = mm(tap_stack(y, r_off, L0), r1("Wr2"))
            y = inorm(y, g2, b2)
            h = h + y                        # x[:, :-context, :] + main(x)

        # ---- self attention (fused V|Q|K projection) ----
        qkv = mm(h, r2("Wqkv")) + r2("bqkv")                      # (L0, 160)
        v = qkv[:, :CPAD]
        q = qkv[:, CPAD:CPAD + 16]
        k = qkv[:, CPAD + 16:CPAD + 32]
        energy = jax.lax.dot_general(q, k, (((1,), (1,)), ((), ())),
                                     preferred_element_type=jnp.float32)
        e = jnp.exp(energy - jnp.max(energy, axis=-1, keepdims=True))
        attn = e / jnp.sum(e, axis=-1, keepdims=True)
        h = r1("gamma") * mm(attn, v) + h

        # ---- upsample: ConvTranspose1d -> InstanceNorm -> LeakyReLU (x4) ----
        for ui in (0, 1, 2):
            Lu = h.shape[0]
            y = mm(tap_stack(h, r_off, Lu), r2(f"Wu{ui}"))        # (Lu, 2*CPAD)
            z = jnp.concatenate([y[:, :CPAD], y[:, CPAD:]], axis=0)
            y = mm(r1(f"Su{ui}"), z)                              # interleave rows
            h = lrelu(inorm(y))

        h = lrelu(inorm(mm(tap_stack(h, u3_off, L_fin), r1("Wu3"))))
        o_ref[0] = h.astype(o_ref.dtype)

    return kernel


# ----------------------------------------------------------------------------
# Forward pass wrapper (matches Generator.forward, training-mode InstanceNorm)
# ----------------------------------------------------------------------------
def generator_forward(params, x_ncw, c, context):
    B, Cin, W = x_ncw.shape
    assert W % 8 == 0
    x_cl = jnp.transpose(x_ncw, (0, 2, 1)).astype(jnp.float32)    # (B, W, 19)
    x_p = jnp.zeros((B, W, CPAD), jnp.float32).at[:, :, :Cin].set(x_cl)
    c_p = jnp.zeros((B, 1, CPAD), jnp.float32).at[:, 0, :context].set(
        c.astype(jnp.float32))

    slab128, slab256, meta128, meta256, cfg = _pack_constants(params, context, W)
    R128, R256 = slab128.shape[0], slab256.shape[0]
    L_out = cfg["L_final"]

    kernel = _make_kernel(meta128, meta256, cfg)
    out = pl.pallas_call(
        kernel,
        out_shape=jax.ShapeDtypeStruct((B, L_out, CPAD), jnp.float32),
        grid_spec=pltpu.PrefetchScalarGridSpec(
            num_scalar_prefetch=0,
            grid=(B,),
            in_specs=[
                pl.BlockSpec((1, W, CPAD), lambda b: (b, 0, 0)),
                pl.BlockSpec((1, 1, CPAD), lambda b: (b, 0, 0)),
                pl.BlockSpec((R128, 128), lambda b: (0, 0)),      # constant slab
                pl.BlockSpec((R256, 256), lambda b: (0, 0)),      # constant slab
            ],
            out_specs=pl.BlockSpec((1, L_out, CPAD), lambda b: (b, 0, 0)),
        ),
        compiler_params=pltpu.CompilerParams(
            dimension_semantics=("parallel",)),
    )(x_p, c_p, slab128, slab256)

    co_final = UP_CFG[-1][1]
    return jnp.transpose(out[:, :, :co_final], (0, 2, 1))         # (B, 19, W+4)


# ----------------------------------------------------------------------------
# Parameters (deterministic synthetic init, mirrors the torch parameter set)
# ----------------------------------------------------------------------------
def init_params(key, context):
    def nrm(k, shape, scale=0.1):
        return scale * jax.random.normal(k, shape, jnp.float32)

    keys = iter(jax.random.split(key, 64))
    params = {"down": [], "up": []}
    for (ci, co, k, s, p) in DOWN_CFG:
        # bias kept for parity with torch; it is a mathematical no-op under the
        # following InstanceNorm and therefore never enters the kernel.
        params["down"].append({"w": nrm(next(keys), (co, ci, k)),
                               "b": nrm(next(keys), (co,))})
    params["res"] = {
        "w1": nrm(next(keys), (128, 128 + context, 3)),
        "g1": jnp.ones((128,), jnp.float32),
        "bt1": jnp.zeros((128,), jnp.float32),
        "w2": nrm(next(keys), (128, 128, 3)),
        "g2": jnp.ones((128,), jnp.float32),
        "bt2": jnp.zeros((128,), jnp.float32),
    }
    params["attn"] = {
        "wq": nrm(next(keys), (16, 128, 1)), "bq": nrm(next(keys), (16,)),
        "wk": nrm(next(keys), (16, 128, 1)), "bk": nrm(next(keys), (16,)),
        "wv": nrm(next(keys), (128, 128, 1)), "bv": nrm(next(keys), (128,)),
        "gamma": jnp.zeros((1,), jnp.float32),    # nn.Parameter(torch.zeros(1))
    }
    for (ci, co, k, s, p) in UP_CFG:
        params["up"].append({"w": nrm(next(keys), (ci, co, k)),   # torch ConvT layout
                             "b": nrm(next(keys), (co,))})
    return params


# TODO(synk): running-stats bookkeeping / eval-mode running statistics of
# InstanceNorm1d(track_running_stats=True) is not reproduced (forward uses
# per-instance batch statistics, i.e. torch training-mode math).

if __name__ == "__main__":
    context = 4
    B, C_in, W = 2, 19, 64
    key = jax.random.PRNGKey(0)
    kx, kc, kp = jax.random.split(key, 3)
    x = jax.random.normal(kx, (B, C_in, W), jnp.float32)
    c = jax.random.normal(kc, (B, context), jnp.float32)
    params = init_params(kp, context)

    fwd = jax.jit(lambda p, xx, cc: generator_forward(p, xx, cc, context))
    out = fwd(params, x, c)
    jax.block_until_ready(out)

    assert out.shape == (B, 19, W + 4), out.shape
    assert bool(jnp.all(jnp.isfinite(out)))
    print("KERNEL_OK")
</pallas_src>

<mosaic_0001>
module attributes {stable_mosaic.version = 11 : i64} {
  func.func @kernel(%arg0: i32, %arg1: memref<1x64x128xf32, #tpu.memory_space<vmem>>, %arg2: memref<1x1x128xf32, #tpu.memory_space<vmem>>, %arg3: memref<4944x128xf32, #tpu.memory_space<vmem>>, %arg4: memref<1288x256xf32, #tpu.memory_space<vmem>>, %arg5: memref<1x68x128xf32, #tpu.memory_space<vmem>>) attributes {dimension_semantics = [#tpu.dimension_semantics<parallel>], iteration_bounds = array<i64: 2>, scalar_prefetch = 0 : i64, scratch_operands = 0 : i64, tpu.core_type = #tpu.core_type<tc>, window_params = [{transform_indices = @transform_0, window_bounds = array<i64: 1, 64, 128>}, {transform_indices = @transform_1, window_bounds = array<i64: 1, 1, 128>}, {pipeline_mode = #tpu.pipeline_mode<synchronous>, transform_indices = @transform_2, window_bounds = array<i64: 4944, 128>}, {pipeline_mode = #tpu.pipeline_mode<synchronous>, transform_indices = @transform_3, window_bounds = array<i64: 1288, 256>}, {transform_indices = @transform_4, window_bounds = array<i64: 1, 68, 128>}]} {
    %c0 = arith.constant 0 : index
    %c0_0 = arith.constant 0 : index
    %c0_1 = arith.constant 0 : index
    %0 = vector.load %arg1[%c0, %c0_0, %c0_1] : memref<1x64x128xf32, #tpu.memory_space<vmem>>, vector<1x64x128xf32>
    %1 = vector.shape_cast %0 : vector<1x64x128xf32> to vector<64x128xf32>
    %cst = arith.constant 0.000000e+00 : f32
    %2 = vector.broadcast %cst : f32 to vector<3x128xf32>
    %cst_2 = arith.constant 0.000000e+00 : f32
    %3 = vector.broadcast %cst_2 : f32 to vector<3x128xf32>
    %4 = tpu.concatenate %2, %1, %3 in 0 : vector<3x128xf32>, vector<64x128xf32>, vector<3x128xf32> -> vector<70x128xf32>
    %5 = vector.extract_strided_slice %4 {offsets = [0, 0], sizes = [64, 128], strides = [1, 1]} : vector<70x128xf32> to vector<64x128xf32>
    %6 = vector.extract_strided_slice %4 {offsets = [1, 0], sizes = [64, 128], strides = [1, 1]} : vector<70x128xf32> to vector<64x128xf32>
    %7 = vector.extract_strided_slice %4 {offsets = [2, 0], sizes = [64, 128], strides = [1, 1]} : vector<70x128xf32> to vector<64x128xf32>
    %8 = vector.extract_strided_slice %4 {offsets = [3, 0], sizes = [64, 128], strides = [1, 1]} : vector<70x128xf32> to vector<64x128xf32>
    %9 = vector.extract_strided_slice %4 {offsets = [4, 0], sizes = [64, 128], strides = [1, 1]} : vector<70x128xf32> to vector<64x128xf32>
    %10 = vector.extract_strided_slice %4 {offsets = [5, 0], sizes = [64, 128], strides = [1, 1]} : vector<70x128xf32> to vector<64x128xf32>
    %11 = vector.extract_strided_slice %4 {offsets = [6, 0], sizes = [64, 128], strides = [1, 1]} : vector<70x128xf32> to vector<64x128xf32>
    %12 = tpu.concatenate %5, %6, %7, %8, %9, %10, %11 in 1 : vector<64x128xf32>, vector<64x128xf32>, vector<64x128xf32>, vector<64x128xf32>, vector<64x128xf32>, vector<64x128xf32>, vector<64x128xf32> -> vector<64x896xf32>
    %c0_3 = arith.constant 0 : index
    %c0_4 = arith.constant 0 : index
    %13 = vector.load %arg3[%c0_3, %c0_4] : memref<4944x128xf32, #tpu.memory_space<vmem>>, vector<896x128xf32>
    %cst_5 = arith.constant dense<0.000000e+00> : vector<64x128xf32>
    %14 = tpu.matmul %12, %13, %cst_5 {dimension_numbers = #tpu.dot_dimension_numbers<[1], [0], [0], [1], [0, 0, 1, 1], [], []>} : vector<64x896xf32>, vector<896x128xf32>, vector<64x128xf32> -> vector<64x128xf32>
    %cst_6 = arith.constant dense<0.000000e+00> : vector<128xf32>
    %15 = vector.multi_reduction <add>, %14, %cst_6 [0] : vector<64x128xf32> to vector<128xf32>
    %16 = vector.shape_cast %15 : vector<128xf32> to vector<1x128xf32>
    %cst_7 = arith.constant 6.400000e+01 : f32
    %17 = vector.broadcast %cst_7 : f32 to vector<1x128xf32>
    %18 = arith.divf %16, %17 : vector<1x128xf32>
    %19 = arith.mulf %14, %14 : vector<64x128xf32>
    %cst_8 = arith.constant dense<0.000000e+00> : vector<128xf32>
    %20 = vector.multi_reduction <add>, %19, %cst_8 [0] : vector<64x128xf32> to vector<128xf32>
    %21 = vector.shape_cast %20 : vector<128xf32> to vector<1x128xf32>
    %cst_9 = arith.constant 6.400000e+01 : f32
    %22 = vector.broadcast %cst_9 : f32 to vector<1x128xf32>
    %23 = arith.divf %21, %22 : vector<1x128xf32>
    %24 = arith.mulf %18, %18 : vector<1x128xf32>
    %25 = arith.subf %23, %24 : vector<1x128xf32>
    %cst_10 = arith.constant 0.000000e+00 : f32
    %26 = vector.broadcast %cst_10 : f32 to vector<1x128xf32>
    %27 = arith.maximumf %25, %26 : vector<1x128xf32>
    %28 = vector.broadcast %18 : vector<1x128xf32> to vector<64x128xf32>
    %29 = arith.subf %14, %28 : vector<64x128xf32>
    %cst_11 = arith.constant 9.99999974E-6 : f32
    %30 = vector.broadcast %cst_11 : f32 to vector<1x128xf32>
    %31 = arith.addf %27, %30 : vector<1x128xf32>
    %32 = math.rsqrt %31 : vector<1x128xf32>
    %33 = vector.broadcast %32 : vector<1x128xf32> to vector<64x128xf32>
    %34 = arith.mulf %29, %33 : vector<64x128xf32>
    %cst_12 = arith.constant 0.000000e+00 : f32
    %35 = vector.broadcast %cst_12 : f32 to vector<64x128xf32>
    %36 = arith.cmpf ogt, %34, %35 : vector<64x128xf32>
    %cst_13 = arith.constant 0.00999999977 : f32
    %37 = vector.broadcast %cst_13 : f32 to vector<64x128xf32>
    %38 = arith.mulf %37, %34 : vector<64x128xf32>
    %39 = arith.select %36, %34, %38 : vector<64x128xi1>, vector<64x128xf32>
    %cst_14 = arith.constant 0.000000e+00 : f32
    %40 = vector.broadcast %cst_14 : f32 to vector<1x128xf32>
    %cst_15 = arith.constant 0.000000e+00 : f32
    %41 = vector.broadcast %cst_15 : f32 to vector<2x128xf32>
    %42 = tpu.concatenate %40, %39, %41 in 0 : vector<1x128xf32>, vector<64x128xf32>, vector<2x128xf32> -> vector<67x128xf32>
    %43 = vector.extract_strided_slice %42 {offsets = [0, 0], sizes = [64, 128], strides = [1, 1]} : vector<67x128xf32> to vector<64x128xf32>
    %44 = vector.extract_strided_slice %42 {offsets = [1, 0], sizes = [64, 128], strides = [1, 1]} : vector<67x128xf32> to vector<64x128xf32>
    %45 = vector.extract_strided_slice %42 {offsets = [2, 0], sizes = [64, 128], strides = [1, 1]} : vector<67x128xf32> to vector<64x128xf32>
    %46 = vector.extract_strided_slice %42 {offsets = [3, 0], sizes = [64, 128], strides = [1, 1]} : vector<67x128xf32> to vector<64x128xf32>
    %47 = tpu.concatenate %43, %44, %45, %46 in 1 : vector<64x128xf32>, vector<64x128xf32>, vector<64x128xf32>, vector<64x128xf32> -> vector<64x512xf32>
    %c896 = arith.constant 896 : index
    %c0_16 = arith.constant 0 : index
    %48 = vector.load %arg3[%c896, %c0_16] : memref<4944x128xf32, #tpu.memory_space<vmem>>, vector<512x128xf32>
    %cst_17 = arith.constant dense<0.000000e+00> : vector<64x128xf32>
    %49 = tpu.matmul %47, %48, %cst_17 {dimension_numbers = #tpu.dot_dimension_numbers<[1], [0], [0], [1], [0, 0, 1, 1], [], []>} : vector<64x512xf32>, vector<512x128xf32>, vector<64x128xf32> -> vector<64x128xf32>
    %c1408 = arith.constant 1408 : index
    %c0_18 = arith.constant 0 : index
    %50 = vector.load %arg3[%c1408, %c0_18] : memref<4944x128xf32, #tpu.memory_space<vmem>>, vector<32x64xf32>
    %cst_19 = arith.constant dense<0.000000e+00> : vector<32x128xf32>
    %51 = tpu.matmul %50, %49, %cst_19 {dimension_numbers = #tpu.dot_dimension_numbers<[1], [0], [0], [1], [0, 0, 1, 1], [], []>} : vector<32x64xf32>, vector<64x128xf32>, vector<32x128xf32> -> vector<32x128xf32>
    %cst_20 = arith.constant dense<0.000000e+00> : vector<128xf32>
    %52 = vector.multi_reduction <add>, %51, %cst_20 [0] : vector<32x128xf32> to vector<128xf32>
    %53 = vector.shape_cast %52 : vector<128xf32> to vector<1x128xf32>
    %cst_21 = arith.constant 3.200000e+01 : f32
    %54 = vector.broadcast %cst_21 : f32 to vector<1x128xf32>
    %55 = arith.divf %53, %54 : vector<1x128xf32>
    %56 = arith.mulf %51, %51 : vector<32x128xf32>
    %cst_22 = arith.constant dense<0.000000e+00> : vector<128xf32>
    %57 = vector.multi_reduction <add>, %56, %cst_22 [0] : vector<32x128xf32> to vector<128xf32>
    %58 = vector.shape_cast %57 : vector<128xf32> to vector<1x128xf32>
    %cst_23 = arith.constant 3.200000e+01 : f32
    %59 = vector.broadcast %cst_23 : f32 to vector<1x128xf32>
    %60 = arith.divf %58, %59 : vector<1x128xf32>
    %61 = arith.mulf %55, %55 : vector<1x128xf32>
    %62 = arith.subf %60, %61 : vector<1x128xf32>
    %cst_24 = arith.constant 0.000000e+00 : f32
    %63 = vector.broadcast %cst_24 : f32 to vector<1x128xf32>
    %64 = arith.maximumf %62, %63 : vector<1x128xf32>
    %65 = vector.broadcast %55 : vector<1x128xf32> to vector<32x128xf32>
    %66 = arith.subf %51, %65 : vector<32x128xf32>
    %cst_25 = arith.constant 9.99999974E-6 : f32
    %67 = vector.broadcast %cst_25 : f32 to vector<1x128xf32>
    %68 = arith.addf %64, %67 : vector<1x128xf32>
    %69 = math.rsqrt %68 : vector<1x128xf32>
    %70 = vector.broadcast %69 : vector<1x128xf32> to vector<32x128xf32>
    %71 = arith.mulf %66, %70 : vector<32x128xf32>
    %cst_26 = arith.constant 0.000000e+00 : f32
    %72 = vector.broadcast %cst_26 : f32 to vector<32x128xf32>
    %73 = arith.cmpf ogt, %71, %72 : vector<32x128xf32>
    %cst_27 = arith.constant 0.00999999977 : f32
    %74 = vector.broadcast %cst_27 : f32 to vector<32x128xf32>
    %75 = arith.mulf %74, %71 : vector<32x128xf32>
    %76 = arith.select %73, %71, %75 : vector<32x128xi1>, vector<32x128xf32>
    %cst_28 = arith.constant 0.000000e+00 : f32
    %77 = vector.broadcast %cst_28 : f32 to vector<1x128xf32>
    %cst_29 = arith.constant 0.000000e+00 : f32
    %78 = vector.broadcast %cst_29 : f32 to vector<2x128xf32>
    %79 = tpu.concatenate %77, %76, %78 in 0 : vector<1x128xf32>, vector<32x128xf32>, vector<2x128xf32> -> vector<35x128xf32>
    %80 = vector.extract_strided_slice %79 {offsets = [0, 0], sizes = [32, 128], strides = [1, 1]} : vector<35x128xf32> to vector<32x128xf32>
    %81 = vector.extract_strided_slice %79 {offsets = [1, 0], sizes = [32, 128], strides = [1, 1]} : vector<35x128xf32> to vector<32x128xf32>
    %82 = vector.extract_strided_slice %79 {offsets = [2, 0], sizes = [32, 128], strides = [1, 1]} : vector<35x128xf32> to vector<32x128xf32>
    %83 = vector.extract_strided_slice %79 {offsets = [3, 0], sizes = [32, 128], strides = [1, 1]} : vector<35x128xf32> to vector<32x128xf32>
    %84 = tpu.concatenate %80, %81, %82, %83 in 1 : vector<32x128xf32>, vector<32x128xf32>, vector<32x128xf32>, vector<32x128xf32> -> vector<32x512xf32>
    %c1440 = arith.constant 1440 : index
    %c0_30 = arith.constant 0 : index
    %85 = vector.load %arg3[%c1440, %c0_30] : memref<4944x128xf32, #tpu.memory_space<vmem>>, vector<512x128xf32>
    %cst_31 = arith.constant dense<0.000000e+00> : vector<32x128xf32>
    %86 = tpu.matmul %84, %85, %cst_31 {dimension_numbers = #tpu.dot_dimension_numbers<[1], [0], [0], [1], [0, 0, 1, 1], [], []>} : vector<32x512xf32>, vector<512x128xf32>, vector<32x128xf32> -> vector<32x128xf32>
    %c1952 = arith.constant 1952 : index
    %c0_32 = arith.constant 0 : index
    %87 = vector.load %arg3[%c1952, %c0_32] : memref<4944x128xf32, #tpu.memory_space<vmem>>, vector<16x32xf32>
    %cst_33 = arith.constant dense<0.000000e+00> : vector<16x128xf32>
    %88 = tpu.matmul %87, %86, %cst_33 {dimension_numbers = #tpu.dot_dimension_numbers<[1], [0], [0], [1], [0, 0, 1, 1], [], []>} : vector<16x32xf32>, vector<32x128xf32>, vector<16x128xf32> -> vector<16x128xf32>
    %cst_34 = arith.constant dense<0.000000e+00> : vector<128xf32>
    %89 = vector.multi_reduction <add>, %88, %cst_34 [0] : vector<16x128xf32> to vector<128xf32>
    %90 = vector.shape_cast %89 : vector<128xf32> to vector<1x128xf32>
    %cst_35 = arith.constant 1.600000e+01 : f32
    %91 = vector.broadcast %cst_35 : f32 to vector<1x128xf32>
    %92 = arith.divf %90, %91 : vector<1x128xf32>
    %93 = arith.mulf %88, %88 : vector<16x128xf32>
    %cst_36 = arith.constant dense<0.000000e+00> : vector<128xf32>
    %94 = vector.multi_reduction <add>, %93, %cst_36 [0] : vector<16x128xf32> to vector<128xf32>
    %95 = vector.shape_cast %94 : vector<128xf32> to vector<1x128xf32>
    %cst_37 = arith.constant 1.600000e+01 : f32
    %96 = vector.broadcast %cst_37 : f32 to vector<1x128xf32>
    %97 = arith.divf %95, %96 : vector<1x128xf32>
    %98 = arith.mulf %92, %92 : vector<1x128xf32>
    %99 = arith.subf %97, %98 : vector<1x128xf32>
    %cst_38 = arith.constant 0.000000e+00 : f32
    %100 = vector.broadcast %cst_38 : f32 to vector<1x128xf32>
    %101 = arith.maximumf %99, %100 : vector<1x128xf32>
    %102 = vector.broadcast %92 : vector<1x128xf32> to vector<16x128xf32>
    %103 = arith.subf %88, %102 : vector<16x128xf32>
    %cst_39 = arith.constant 9.99999974E-6 : f32
    %104 = vector.broadcast %cst_39 : f32 to vector<1x128xf32>
    %105 = arith.addf %101, %104 : vector<1x128xf32>
    %106 = math.rsqrt %105 : vector<1x128xf32>
    %107 = vector.broadcast %106 : vector<1x128xf32> to vector<16x128xf32>
    %108 = arith.mulf %103, %107 : vector<16x128xf32>
    %cst_40 = arith.constant 0.000000e+00 : f32
    %109 = vector.broadcast %cst_40 : f32 to vector<16x128xf32>
    %110 = arith.cmpf ogt, %108, %109 : vector<16x128xf32>
    %cst_41 = arith.constant 0.00999999977 : f32
    %111 = vector.broadcast %cst_41 : f32 to vector<16x128xf32>
    %112 = arith.mulf %111, %108 : vector<16x128xf32>
    %113 = arith.select %110, %108, %112 : vector<16x128xi1>, vector<16x128xf32>
    %cst_42 = arith.constant 0.000000e+00 : f32
    %114 = vector.broadcast %cst_42 : f32 to vector<1x128xf32>
    %cst_43 = arith.constant 0.000000e+00 : f32
    %115 = vector.broadcast %cst_43 : f32 to vector<2x128xf32>
    %116 = tpu.concatenate %114, %113, %115 in 0 : vector<1x128xf32>, vector<16x128xf32>, vector<2x128xf32> -> vector<19x128xf32>
    %117 = vector.extract_strided_slice %116 {offsets = [0, 0], sizes = [16, 128], strides = [1, 1]} : vector<19x128xf32> to vector<16x128xf32>
    %118 = vector.extract_strided_slice %116 {offsets = [1, 0], sizes = [16, 128], strides = [1, 1]} : vector<19x128xf32> to vector<16x128xf32>
    %119 = vector.extract_strided_slice %116 {offsets = [2, 0], sizes = [16, 128], strides = [1, 1]} : vector<19x128xf32> to vector<16x128xf32>
    %120 = vector.extract_strided_slice %116 {offsets = [3, 0], sizes = [16, 128], strides = [1, 1]} : vector<19x128xf32> to vector<16x128xf32>
    %121 = tpu.concatenate %117, %118, %119, %120 in 1 : vector<16x128xf32>, vector<16x128xf32>, vector<16x128xf32>, vector<16x128xf32> -> vector<16x512xf32>
    %c1968 = arith.constant 1968 : index
    %c0_44 = arith.constant 0 : index
    %122 = vector.load %arg3[%c1968, %c0_44] : memref<4944x128xf32, #tpu.memory_space<vmem>>, vector<512x128xf32>
    %cst_45 = arith.constant dense<0.000000e+00> : vector<16x128xf32>
    %123 = tpu.matmul %121, %122, %cst_45 {dimension_numbers = #tpu.dot_dimension_numbers<[1], [0], [0], [1], [0, 0, 1, 1], [], []>} : vector<16x512xf32>, vector<512x128xf32>, vector<16x128xf32> -> vector<16x128xf32>
    %c2480 = arith.constant 2480 : index
    %c0_46 = arith.constant 0 : index
    %124 = vector.load %arg3[%c2480, %c0_46] : memref<4944x128xf32, #tpu.memory_space<vmem>>, vector<8x16xf32>
    %cst_47 = arith.constant dense<0.000000e+00> : vector<8x128xf32>
    %125 = tpu.matmul %124, %123, %cst_47 {dimension_numbers = #tpu.dot_dimension_numbers<[1], [0], [0], [1], [0, 0, 1, 1], [], []>} : vector<8x16xf32>, vector<16x128xf32>, vector<8x128xf32> -> vector<8x128xf32>
    %cst_48 = arith.constant dense<0.000000e+00> : vector<128xf32>
    %126 = vector.multi_reduction <add>, %125, %cst_48 [0] : vector<8x128xf32> to vector<128xf32>
    %127 = vector.shape_cast %126 : vector<128xf32> to vector<1x128xf32>
    %cst_49 = arith.constant 8.000000e+00 : f32
    %128 = vector.broadcast %cst_49 : f32 to vector<1x128xf32>
    %129 = arith.divf %127, %128 : vector<1x128xf32>
    %130 = arith.mulf %125, %125 : vector<8x128xf32>
    %cst_50 = arith.constant dense<0.000000e+00> : vector<128xf32>
    %131 = vector.multi_reduction <add>, %130, %cst_50 [0] : vector<8x128xf32> to vector<128xf32>
    %132 = vector.shape_cast %131 : vector<128xf32> to vector<1x128xf32>
    %cst_51 = arith.constant 8.000000e+00 : f32
    %133 = vector.broadcast %cst_51 : f32 to vector<1x128xf32>
    %134 = arith.divf %132, %133 : vector<1x128xf32>
    %135 = arith.mulf %129, %129 : vector<1x128xf32>
    %136 = arith.subf %134, %135 : vector<1x128xf32>
    %cst_52 = arith.constant 0.000000e+00 : f32
    %137 = vector.broadcast %cst_52 : f32 to vector<1x128xf32>
    %138 = arith.maximumf %136, %137 : vector<1x128xf32>
    %139 = vector.broadcast %129 : vector<1x128xf32> to vector<8x128xf32>
    %140 = arith.subf %125, %139 : vector<8x128xf32>
    %cst_53 = arith.constant 9.99999974E-6 : f32
    %141 = vector.broadcast %cst_53 : f32 to vector<1x128xf32>
    %142 = arith.addf %138, %141 : vector<1x128xf32>
    %143 = math.rsqrt %142 : vector<1x128xf32>
    %144 = vector.broadcast %143 : vector<1x128xf32> to vector<8x128xf32>
    %145 = arith.mulf %140, %144 : vector<8x128xf32>
    %cst_54 = arith.constant 0.000000e+00 : f32
    %146 = vector.broadcast %cst_54 : f32 to vector<8x128xf32>
    %147 = arith.cmpf ogt, %145, %146 : vector<8x128xf32>
    %cst_55 = arith.constant 0.00999999977 : f32
    %148 = vector.broadcast %cst_55 : f32 to vector<8x128xf32>
    %149 = arith.mulf %148, %145 : vector<8x128xf32>
    %150 = arith.select %147, %145, %149 : vector<8x128xi1>, vector<8x128xf32>
    %c0_56 = arith.constant 0 : index
    %c0_57 = arith.constant 0 : index
    %c0_58 = arith.constant 0 : index
    %151 = vector.load %arg2[%c0_56, %c0_57, %c0_58] : memref<1x1x128xf32, #tpu.memory_space<vmem>>, vector<1x1x128xf32>
    %152 = vector.shape_cast %151 : vector<1x1x128xf32> to vector<1x128xf32>
    %153 = vector.shape_cast %152 : vector<1x128xf32> to vector<1x128xf32>
    %154 = vector.broadcast %153 : vector<1x128xf32> to vector<8x128xf32>
    %cst_59 = arith.constant 0.000000e+00 : f32
    %155 = vector.broadcast %cst_59 : f32 to vector<1x128xf32>
    %cst_60 = arith.constant 0.000000e+00 : f32
    %156 = vector.broadcast %cst_60 : f32 to vector<1x128xf32>
    %157 = tpu.concatenate %155, %154, %156 in 0 : vector<1x128xf32>, vector<8x128xf32>, vector<1x128xf32> -> vector<10x128xf32>
    %158 = vector.extract_strided_slice %157 {offsets = [0, 0], sizes = [8, 128], strides = [1, 1]} : vector<10x128xf32> to vector<8x128xf32>
    %159 = vector.extract_strided_slice %157 {offsets = [1, 0], sizes = [8, 128], strides = [1, 1]} : vector<10x128xf32> to vector<8x128xf32>
    %160 = vector.extract_strided_slice %157 {offsets = [2, 0], sizes = [8, 128], strides = [1, 1]} : vector<10x128xf32> to vector<8x128xf32>
    %161 = tpu.concatenate %158, %159, %160 in 1 : vector<8x128xf32>, vector<8x128xf32>, vector<8x128xf32> -> vector<8x384xf32>
    %c2872 = arith.constant 2872 : index
    %c0_61 = arith.constant 0 : index
    %162 = vector.load %arg3[%c2872, %c0_61] : memref<4944x128xf32, #tpu.memory_space<vmem>>, vector<384x128xf32>
    %cst_62 = arith.constant dense<0.000000e+00> : vector<8x128xf32>
    %163 = tpu.matmul %161, %162, %cst_62 {dimension_numbers = #tpu.dot_dimension_numbers<[1], [0], [0], [1], [0, 0, 1, 1], [], []>} : vector<8x384xf32>, vector<384x128xf32>, vector<8x128xf32> -> vector<8x128xf32>
    %c3256 = arith.constant 3256 : index
    %c0_63 = arith.constant 0 : index
    %164 = vector.load %arg3[%c3256, %c0_63] : memref<4944x128xf32, #tpu.memory_space<vmem>>, vector<1x128xf32>
    %c3264 = arith.constant 3264 : index
    %c0_64 = arith.constant 0 : index
    %165 = vector.load %arg3[%c3264, %c0_64] : memref<4944x128xf32, #tpu.memory_space<vmem>>, vector<1x128xf32>
    %c3656 = arith.constant 3656 : index
    %c0_65 = arith.constant 0 : index
    %166 = vector.load %arg3[%c3656, %c0_65] : memref<4944x128xf32, #tpu.memory_space<vmem>>, vector<1x128xf32>
    %c3664 = arith.constant 3664 : index
    %c0_66 = arith.constant 0 : index
    %167 = vector.load %arg3[%c3664, %c0_66] : memref<4944x128xf32, #tpu.memory_space<vmem>>, vector<1x128xf32>
    %cst_67 = arith.constant 0.000000e+00 : f32
    %168 = vector.broadcast %cst_67 : f32 to vector<1x128xf32>
    %cst_68 = arith.constant 0.000000e+00 : f32
    %169 = vector.broadcast %cst_68 : f32 to vector<1x128xf32>
    %170 = tpu.concatenate %168, %150, %169 in 0 : vector<1x128xf32>, vector<8x128xf32>, vector<1x128xf32> -> vector<10x128xf32>
    %171 = vector.extract_strided_slice %170 {offsets = [0, 0], sizes = [8, 128], strides = [1, 1]} : vector<10x128xf32> to vector<8x128xf32>
    %172 = vector.extract_strided_slice %170 {offsets = [1, 0], sizes = [8, 128], strides = [1, 1]} : vector<10x128xf32> to vector<8x128xf32>
    %173 = vector.extract_strided_slice %170 {offsets = [2, 0], sizes = [8, 128], strides = [1, 1]} : vector<10x128xf32> to vector<8x128xf32>
    %174 = tpu.concatenate %171, %172, %173 in 1 : vector<8x128xf32>, vector<8x128xf32>, vector<8x128xf32> -> vector<8x384xf32>
    %c2488 = arith.constant 2488 : index
    %c0_69 = arith.constant 0 : index
    %175 = vector.load %arg3[%c2488, %c0_69] : memref<4944x128xf32, #tpu.memory_space<vmem>>, vector<384x128xf32>
    %cst_70 = arith.constant dense<0.000000e+00> : vector<8x128xf32>
    %176 = tpu.matmul %174, %175, %cst_70 {dimension_numbers = #tpu.dot_dimension_numbers<[1], [0], [0], [1], [0, 0, 1, 1], [], []>} : vector<8x384xf32>, vector<384x128xf32>, vector<8x128xf32> -> vector<8x128xf32>
    %177 = arith.addf %176, %163 : vector<8x128xf32>
    %cst_71 = arith.constant dense<0.000000e+00> : vector<128xf32>
    %178 = vector.multi_reduction <add>, %177, %cst_71 [0] : vector<8x128xf32> to vector<128xf32>
    %179 = vector.shape_cast %178 : vector<128xf32> to vector<1x128xf32>
    %cst_72 = arith.constant 8.000000e+00 : f32
    %180 = vector.broadcast %cst_72 : f32 to vector<1x128xf32>
    %181 = arith.divf %179, %180 : vector<1x128xf32>
    %182 = arith.mulf %177, %177 : vector<8x128xf32>
    %cst_73 = arith.constant dense<0.000000e+00> : vector<128xf32>
    %183 = vector.multi_reduction <add>, %182, %cst_73 [0] : vector<8x128xf32> to vector<128xf32>
    %184 = vector.shape_cast %183 : vector<128xf32> to vector<1x128xf32>
    %cst_74 = arith.constant 8.000000e+00 : f32
    %185 = vector.broadcast %cst_74 : f32 to vector<1x128xf32>
    %186 = arith.divf %184, %185 : vector<1x128xf32>
    %187 = arith.mulf %181, %181 : vector<1x128xf32>
    %188 = arith.subf %186, %187 : vector<1x128xf32>
    %cst_75 = arith.constant 0.000000e+00 : f32
    %189 = vector.broadcast %cst_75 : f32 to vector<1x128xf32>
    %190 = arith.maximumf %188, %189 : vector<1x128xf32>
    %191 = vector.broadcast %181 : vector<1x128xf32> to vector<8x128xf32>
    %192 = arith.subf %177, %191 : vector<8x128xf32>
    %cst_76 = arith.constant 9.99999974E-6 : f32
    %193 = vector.broadcast %cst_76 : f32 to vector<1x128xf32>
    %194 = arith.addf %190, %193 : vector<1x128xf32>
    %195 = math.rsqrt %194 : vector<1x128xf32>
    %196 = vector.broadcast %195 : vector<1x128xf32> to vector<8x128xf32>
    %197 = arith.mulf %192, %196 : vector<8x128xf32>
    %198 = vector.broadcast %164 : vector<1x128xf32> to vector<8x128xf32>
    %199 = arith.mulf %197, %198 : vector<8x128xf32>
    %200 = vector.broadcast %165 : vector<1x128xf32> to vector<8x128xf32>
    %201 = arith.addf %199, %200 : vector<8x128xf32>
    %cst_77 = arith.constant 0.000000e+00 : f32
    %202 = vector.broadcast %cst_77 : f32 to vector<8x128xf32>
    %203 = arith.cmpf ogt, %201, %202 : vector<8x128xf32>
    %cst_78 = arith.constant 0.00999999977 : f32
    %204 = vector.broadcast %cst_78 : f32 to vector<8x128xf32>
    %205 = arith.mulf %204, %201 : vector<8x128xf32>
    %206 = arith.select %203, %201, %205 : vector<8x128xi1>, vector<8x128xf32>
    %cst_79 = arith.constant 0.000000e+00 : f32
    %207 = vector.broadcast %cst_79 : f32 to vector<1x128xf32>
    %cst_80 = arith.constant 0.000000e+00 : f32
    %208 = vector.broadcast %cst_80 : f32 to vector<1x128xf32>
    %209 = tpu.concatenate %207, %206, %208 in 0 : vector<1x128xf32>, vector<8x128xf32>, vector<1x128xf32> -> vector<10x128xf32>
    %210 = vector.extract_strided_slice %209 {offsets = [0, 0], sizes = [8, 128], strides = [1, 1]} : vector<10x128xf32> to vector<8x128xf32>
    %211 = vector.extract_strided_slice %209 {offsets = [1, 0], sizes = [8, 128], strides = [1, 1]} : vector<10x128xf32> to vector<8x128xf32>
    %212 = vector.extract_strided_slice %209 {offsets = [2, 0], sizes = [8, 128], strides = [1, 1]} : vector<10x128xf32> to vector<8x128xf32>
    %213 = tpu.concatenate %210, %211, %212 in 1 : vector<8x128xf32>, vector<8x128xf32>, vector<8x128xf32> -> vector<8x384xf32>
    %c3272 = arith.constant 3272 : index
    %c0_81 = arith.constant 0 : index
    %214 = vector.load %arg3[%c3272, %c0_81] : memref<4944x128xf32, #tpu.memory_space<vmem>>, vector<384x128xf32>
    %cst_82 = arith.constant dense<0.000000e+00> : vector<8x128xf32>
    %215 = tpu.matmul %213, %214, %cst_82 {dimension_numbers = #tpu.dot_dimension_numbers<[1], [0], [0], [1], [0, 0, 1, 1], [], []>} : vector<8x384xf32>, vector<384x128xf32>, vector<8x128xf32> -> vector<8x128xf32>
    %cst_83 = arith.constant dense<0.000000e+00> : vector<128xf32>
    %216 = vector.multi_reduction <add>, %215, %cst_83 [0] : vector<8x128xf32> to vector<128xf32>
    %217 = vector.shape_cast %216 : vector<128xf32> to vector<1x128xf32>
    %cst_84 = arith.constant 8.000000e+00 : f32
    %218 = vector.broadcast %cst_84 : f32 to vector<1x128xf32>
    %219 = arith.divf %217, %218 : vector<1x128xf32>
    %220 = arith.mulf %215, %215 : vector<8x128xf32>
    %cst_85 = arith.constant dense<0.000000e+00> : vector<128xf32>
    %221 = vector.multi_reduction <add>, %220, %cst_85 [0] : vector<8x128xf32> to vector<128xf32>
    %222 = vector.shape_cast %221 : vector<128xf32> to vector<1x128xf32>
    %cst_86 = arith.constant 8.000000e+00 : f32
    %223 = vector.broadcast %cst_86 : f32 to vector<1x128xf32>
    %224 = arith.divf %222, %223 : vector<1x128xf32>
    %225 = arith.mulf %219, %219 : vector<1x128xf32>
    %226 = arith.subf %224, %225 : vector<1x128xf32>
    %cst_87 = arith.constant 0.000000e+00 : f32
    %227 = vector.broadcast %cst_87 : f32 to vector<1x128xf32>
    %228 = arith.maximumf %226, %227 : vector<1x128xf32>
    %229 = vector.broadcast %219 : vector<1x128xf32> to vector<8x128xf32>
    %230 = arith.subf %215, %229 : vector<8x128xf32>
    %cst_88 = arith.constant 9.99999974E-6 : f32
    %231 = vector.broadcast %cst_88 : f32 to vector<1x128xf32>
    %232 = arith.addf %228, %231 : vector<1x128xf32>
    %233 = math.rsqrt %232 : vector<1x128xf32>
    %234 = vector.broadcast %233 : vector<1x128xf32> to vector<8x128xf32>
    %235 = arith.mulf %230, %234 : vector<8x128xf32>
    %236 = vector.broadcast %166 : vector<1x128xf32> to vector<8x128xf32>
    %237 = arith.mulf %235, %236 : vector<8x128xf32>
    %238 = vector.broadcast %167 : vector<1x128xf32> to vector<8x128xf32>
    %239 = arith.addf %237, %238 : vector<8x128xf32>
    %240 = arith.addf %150, %239 : vector<8x128xf32>
    %cst_89 = arith.constant 0.000000e+00 : f32
    %241 = vector.broadcast %cst_89 : f32 to vector<1x128xf32>
    %cst_90 = arith.constant 0.000000e+00 : f32
    %242 = vector.broadcast %cst_90 : f32 to vector<1x128xf32>
    %243 = tpu.concatenate %241, %240, %242 in 0 : vector<1x128xf32>, vector<8x128xf32>, vector<1x128xf32> -> vector<10x128xf32>
    %244 = vector.extract_strided_slice %243 {offsets = [0, 0], sizes = [8, 128], strides = [1, 1]} : vector<10x128xf32> to vector<8x128xf32>
    %245 = vector.extract_strided_slice %243 {offsets = [1, 0], sizes = [8, 128], strides = [1, 1]} : vector<10x128xf32> to vector<8x128xf32>
    %246 = vector.extract_strided_slice %243 {offsets = [2, 0], sizes = [8, 128], strides = [1, 1]} : vector<10x128xf32> to vector<8x128xf32>
    %247 = tpu.concatenate %244, %245, %246 in 1 : vector<8x128xf32>, vector<8x128xf32>, vector<8x128xf32> -> vector<8x384xf32>
    %c2488_91 = arith.constant 2488 : index
    %c0_92 = arith.constant 0 : index
    %248 = vector.load %arg3[%c2488_91, %c0_92] : memref<4944x128xf32, #tpu.memory_space<vmem>>, vector<384x128xf32>
    %cst_93 = arith.constant dense<0.000000e+00> : vector<8x128xf32>
    %249 = tpu.matmul %247, %248, %cst_93 {dimension_numbers = #tpu.dot_dimension_numbers<[1], [0], [0], [1], [0, 0, 1, 1], [], []>} : vector<8x384xf32>, vector<384x128xf32>, vector<8x128xf32> -> vector<8x128xf32>
    %250 = arith.addf %249, %163 : vector<8x128xf32>
    %cst_94 = arith.constant dense<0.000000e+00> : vector<128xf32>
    %251 = vector.multi_reduction <add>, %250, %cst_94 [0] : vector<8x128xf32> to vector<128xf32>
    %252 = vector.shape_cast %251 : vector<128xf32> to vector<1x128xf32>
    %cst_95 = arith.constant 8.000000e+00 : f32
    %253 = vector.broadcast %cst_95 : f32 to vector<1x128xf32>
    %254 = arith.divf %252, %253 : vector<1x128xf32>
    %255 = arith.mulf %250, %250 : vector<8x128xf32>
    %cst_96 = arith.constant dense<0.000000e+00> : vector<128xf32>
    %256 = vector.multi_reduction <add>, %255, %cst_96 [0] : vector<8x128xf32> to vector<128xf32>
    %257 = vector.shape_cast %256 : vector<128xf32> to vector<1x128xf32>
    %cst_97 = arith.constant 8.000000e+00 : f32
    %258 = vector.broadcast %cst_97 : f32 to vector<1x128xf32>
    %259 = arith.divf %257, %258 : vector<1x128xf32>
    %260 = arith.mulf %254, %254 : vector<1x128xf32>
    %261 = arith.subf %259, %260 : vector<1x128xf32>
    %cst_98 = arith.constant 0.000000e+00 : f32
    %262 = vector.broadcast %cst_98 : f32 to vector<1x128xf32>
    %263 = arith.maximumf %261, %262 : vector<1x128xf32>
    %264 = vector.broadcast %254 : vector<1x128xf32> to vector<8x128xf32>
    %265 = arith.subf %250, %264 : vector<8x128xf32>
    %cst_99 = arith.constant 9.99999974E-6 : f32
    %266 = vector.broadcast %cst_99 : f32 to vector<1x128xf32>
    %267 = arith.addf %263, %266 : vector<1x128xf32>
    %268 = math.rsqrt %267 : vector<1x128xf32>
    %269 = vector.broadcast %268 : vector<1x128xf32> to vector<8x128xf32>
    %270 = arith.mulf %265, %269 : vector<8x128xf32>
    %271 = vector.broadcast %164 : vector<1x128xf32> to vector<8x128xf32>
    %272 = arith.mulf %270, %271 : vector<8x128xf32>
    %273 = vector.broadcast %165 : vector<1x128xf32> to vector<8x128xf32>
    %274 = arith.addf %272, %273 : vector<8x128xf32>
    %cst_100 = arith.constant 0.000000e+00 : f32
    %275 = vector.broadcast %cst_100 : f32 to vector<8x128xf32>
    %276 = arith.cmpf ogt, %274, %275 : vector<8x128xf32>
    %cst_101 = arith.constant 0.00999999977 : f32
    %277 = vector.broadcast %cst_101 : f32 to vector<8x128xf32>
    %278 = arith.mulf %277, %274 : vector<8x128xf32>
    %279 = arith.select %276, %274, %278 : vector<8x128xi1>, vector<8x128xf32>
    %cst_102 = arith.constant 0.000000e+00 : f32
    %280 = vector.broadcast %cst_102 : f32 to vector<1x128xf32>
    %cst_103 = arith.constant 0.000000e+00 : f32
    %281 = vector.broadcast %cst_103 : f32 to vector<1x128xf32>
    %282 = tpu.concatenate %280, %279, %281 in 0 : vector<1x128xf32>, vector<8x128xf32>, vector<1x128xf32> -> vector<10x128xf32>
    %283 = vector.extract_strided_slice %282 {offsets = [0, 0], sizes = [8, 128], strides = [1, 1]} : vector<10x128xf32> to vector<8x128xf32>
    %284 = vector.extract_strided_slice %282 {offsets = [1, 0], sizes = [8, 128], strides = [1, 1]} : vector<10x128xf32> to vector<8x128xf32>
    %285 = vector.extract_strided_slice %282 {offsets = [2, 0], sizes = [8, 128], strides = [1, 1]} : vector<10x128xf32> to vector<8x128xf32>
    %286 = tpu.concatenate %283, %284, %285 in 1 : vector<8x128xf32>, vector<8x128xf32>, vector<8x128xf32> -> vector<8x384xf32>
    %c3272_104 = arith.constant 3272 : index
    %c0_105 = arith.constant 0 : index
    %287 = vector.load %arg3[%c3272_104, %c0_105] : memref<4944x128xf32, #tpu.memory_space<vmem>>, vector<384x128xf32>
    %cst_106 = arith.constant dense<0.000000e+00> : vector<8x128xf32>
    %288 = tpu.matmul %286, %287, %cst_106 {dimension_numbers = #tpu.dot_dimension_numbers<[1], [0], [0], [1], [0, 0, 1, 1], [], []>} : vector<8x384xf32>, vector<384x128xf32>, vector<8x128xf32> -> vector<8x128xf32>
    %cst_107 = arith.constant dense<0.000000e+00> : vector<128xf32>
    %289 = vector.multi_reduction <add>, %288, %cst_107 [0] : vector<8x128xf32> to vector<128xf32>
    %290 = vector.shape_cast %289 : vector<128xf32> to vector<1x128xf32>
    %cst_108 = arith.constant 8.000000e+00 : f32
    %291 = vector.broadcast %cst_108 : f32 to vector<1x128xf32>
    %292 = arith.divf %290, %291 : vector<1x128xf32>
    %293 = arith.mulf %288, %288 : vector<8x128xf32>
    %cst_109 = arith.constant dense<0.000000e+00> : vector<128xf32>
    %294 = vector.multi_reduction <add>, %293, %cst_109 [0] : vector<8x128xf32> to vector<128xf32>
    %295 = vector.shape_cast %294 : vector<128xf32> to vector<1x128xf32>
    %cst_110 = arith.constant 8.000000e+00 : f32
    %296 = vector.broadcast %cst_110 : f32 to vector<1x128xf32>
    %297 = arith.divf %295, %296 : vector<1x128xf32>
    %298 = arith.mulf %292, %292 : vector<1x128xf32>
    %299 = arith.subf %297, %298 : vector<1x128xf32>
    %cst_111 = arith.constant 0.000000e+00 : f32
    %300 = vector.broadcast %cst_111 : f32 to vector<1x128xf32>
    %301 = arith.maximumf %299, %300 : vector<1x128xf32>
    %302 = vector.broadcast %292 : vector<1x128xf32> to vector<8x128xf32>
    %303 = arith.subf %288, %302 : vector<8x128xf32>
    %cst_112 = arith.constant 9.99999974E-6 : f32
    %304 = vector.broadcast %cst_112 : f32 to vector<1x128xf32>
    %305 = arith.addf %301, %304 : vector<1x128xf32>
    %306 = math.rsqrt %305 : vector<1x128xf32>
    %307 = vector.broadcast %306 : vector<1x128xf32> to vector<8x128xf32>
    %308 = arith.mulf %303, %307 : vector<8x128xf32>
    %309 = vector.broadcast %166 : vector<1x128xf32> to vector<8x128xf32>
    %310 = arith.mulf %308, %309 : vector<8x128xf32>
    %311 = vector.broadcast %167 : vector<1x128xf32> to vector<8x128xf32>
    %312 = arith.addf %310, %311 : vector<8x128xf32>
    %313 = arith.addf %240, %312 : vector<8x128xf32>
    %cst_113 = arith.constant 0.000000e+00 : f32
    %314 = vector.broadcast %cst_113 : f32 to vector<1x128xf32>
    %cst_114 = arith.constant 0.000000e+00 : f32
    %315 = vector.broadcast %cst_114 : f32 to vector<1x128xf32>
    %316 = tpu.concatenate %314, %313, %315 in 0 : vector<1x128xf32>, vector<8x128xf32>, vector<1x128xf32> -> vector<10x128xf32>
    %317 = vector.extract_strided_slice %316 {offsets = [0, 0], sizes = [8, 128], strides = [1, 1]} : vector<10x128xf32> to vector<8x128xf32>
    %318 = vector.extract_strided_slice %316 {offsets = [1, 0], sizes = [8, 128], strides = [1, 1]} : vector<10x128xf32> to vector<8x128xf32>
    %319 = vector.extract_strided_slice %316 {offsets = [2, 0], sizes = [8, 128], strides = [1, 1]} : vector<10x128xf32> to vector<8x128xf32>
    %320 = tpu.concatenate %317, %318, %319 in 1 : vector<8x128xf32>, vector<8x128xf32>, vector<8x128xf32> -> vector<8x384xf32>
    %c2488_115 = arith.constant 2488 : index
    %c0_116 = arith.constant 0 : index
    %321 = vector.load %arg3[%c2488_115, %c0_116] : memref<4944x128xf32, #tpu.memory_space<vmem>>, vector<384x128xf32>
    %cst_117 = arith.constant dense<0.000000e+00> : vector<8x128xf32>
    %322 = tpu.matmul %320, %321, %cst_117 {dimension_numbers = #tpu.dot_dimension_numbers<[1], [0], [0], [1], [0, 0, 1, 1], [], []>} : vector<8x384xf32>, vector<384x128xf32>, vector<8x128xf32> -> vector<8x128xf32>
    %323 = arith.addf %322, %163 : vector<8x128xf32>
    %cst_118 = arith.constant dense<0.000000e+00> : vector<128xf32>
    %324 = vector.multi_reduction <add>, %323, %cst_118 [0] : vector<8x128xf32> to vector<128xf32>
    %325 = vector.shape_cast %324 : vector<128xf32> to vector<1x128xf32>
    %cst_119 = arith.constant 8.000000e+00 : f32
    %326 = vector.broadcast %cst_119 : f32 to vector<1x128xf32>
    %327 = arith.divf %325, %326 : vector<1x128xf32>
    %328 = arith.mulf %323, %323 : vector<8x128xf32>
    %cst_120 = arith.constant dense<0.000000e+00> : vector<128xf32>
    %329 = vector.multi_reduction <add>, %328, %cst_120 [0] : vector<8x128xf32> to vector<128xf32>
    %330 = vector.shape_cast %329 : vector<128xf32> to vector<1x128xf32>
    %cst_121 = arith.constant 8.000000e+00 : f32
    %331 = vector.broadcast %cst_121 : f32 to vector<1x128xf32>
    %332 = arith.divf %330, %331 : vector<1x128xf32>
    %333 = arith.mulf %327, %327 : vector<1x128xf32>
    %334 = arith.subf %332, %333 : vector<1x128xf32>
    %cst_122 = arith.constant 0.000000e+00 : f32
    %335 = vector.broadcast %cst_122 : f32 to vector<1x128xf32>
    %336 = arith.maximumf %334, %335 : vector<1x128xf32>
    %337 = vector.broadcast %327 : vector<1x128xf32> to vector<8x128xf32>
    %338 = arith.subf %323, %337 : vector<8x128xf32>
    %cst_123 = arith.constant 9.99999974E-6 : f32
    %339 = vector.broadcast %cst_123 : f32 to vector<1x128xf32>
    %340 = arith.addf %336, %339 : vector<1x128xf32>
    %341 = math.rsqrt %340 : vector<1x128xf32>
    %342 = vector.broadcast %341 : vector<1x128xf32> to vector<8x128xf32>
    %343 = arith.mulf %338, %342 : vector<8x128xf32>
    %344 = vector.broadcast %164 : vector<1x128xf32> to vector<8x128xf32>
    %345 = arith.mulf %343, %344 : vector<8x128xf32>
    %346 = vector.broadcast %165 : vector<1x128xf32> to vector<8x128xf32>
    %347 = arith.addf %345, %346 : vector<8x128xf32>
    %cst_124 = arith.constant 0.000000e+00 : f32
    %348 = vector.broadcast %cst_124 : f32 to vector<8x128xf32>
    %349 = arith.cmpf ogt, %347, %348 : vector<8x128xf32>
    %cst_125 = arith.constant 0.00999999977 : f32
    %350 = vector.broadcast %cst_125 : f32 to vector<8x128xf32>
    %351 = arith.mulf %350, %347 : vector<8x128xf32>
    %352 = arith.select %349, %347, %351 : vector<8x128xi1>, vector<8x128xf32>
    %cst_126 = arith.constant 0.000000e+00 : f32
    %353 = vector.broadcast %cst_126 : f32 to vector<1x128xf32>
    %cst_127 = arith.constant 0.000000e+00 : f32
    %354 = vector.broadcast %cst_127 : f32 to vector<1x128xf32>
    %355 = tpu.concatenate %353, %352, %354 in 0 : vector<1x128xf32>, vector<8x128xf32>, vector<1x128xf32> -> vector<10x128xf32>
    %356 = vector.extract_strided_slice %355 {offsets = [0, 0], sizes = [8, 128], strides = [1, 1]} : vector<10x128xf32> to vector<8x128xf32>
    %357 = vector.extract_strided_slice %355 {offsets = [1, 0], sizes = [8, 128], strides = [1, 1]} : vector<10x128xf32> to vector<8x128xf32>
    %358 = vector.extract_strided_slice %355 {offsets = [2, 0], sizes = [8, 128], strides = [1, 1]} : vector<10x128xf32> to vector<8x128xf32>
    %359 = tpu.concatenate %356, %357, %358 in 1 : vector<8x128xf32>, vector<8x128xf32>, vector<8x128xf32> -> vector<8x384xf32>
    %c3272_128 = arith.constant 3272 : index
    %c0_129 = arith.constant 0 : index
    %360 = vector.load %arg3[%c3272_128, %c0_129] : memref<4944x128xf32, #tpu.memory_space<vmem>>, vector<384x128xf32>
    %cst_130 = arith.constant dense<0.000000e+00> : vector<8x128xf32>
    %361 = tpu.matmul %359, %360, %cst_130 {dimension_numbers = #tpu.dot_dimension_numbers<[1], [0], [0], [1], [0, 0, 1, 1], [], []>} : vector<8x384xf32>, vector<384x128xf32>, vector<8x128xf32> -> vector<8x128xf32>
    %cst_131 = arith.constant dense<0.000000e+00> : vector<128xf32>
    %362 = vector.multi_reduction <add>, %361, %cst_131 [0] : vector<8x128xf32> to vector<128xf32>
    %363 = vector.shape_cast %362 : vector<128xf32> to vector<1x128xf32>
    %cst_132 = arith.constant 8.000000e+00 : f32
    %364 = vector.broadcast %cst_132 : f32 to vector<1x128xf32>
    %365 = arith.divf %363, %364 : vector<1x128xf32>
    %366 = arith.mulf %361, %361 : vector<8x128xf32>
    %cst_133 = arith.constant dense<0.000000e+00> : vector<128xf32>
    %367 = vector.multi_reduction <add>, %366, %cst_133 [0] : vector<8x128xf32> to vector<128xf32>
    %368 = vector.shape_cast %367 : vector<128xf32> to vector<1x128xf32>
    %cst_134 = arith.constant 8.000000e+00 : f32
    %369 = vector.broadcast %cst_134 : f32 to vector<1x128xf32>
    %370 = arith.divf %368, %369 : vector<1x128xf32>
    %371 = arith.mulf %365, %365 : vector<1x128xf32>
    %372 = arith.subf %370, %371 : vector<1x128xf32>
    %cst_135 = arith.constant 0.000000e+00 : f32
    %373 = vector.broadcast %cst_135 : f32 to vector<1x128xf32>
    %374 = arith.maximumf %372, %373 : vector<1x128xf32>
    %375 = vector.broadcast %365 : vector<1x128xf32> to vector<8x128xf32>
    %376 = arith.subf %361, %375 : vector<8x128xf32>
    %cst_136 = arith.constant 9.99999974E-6 : f32
    %377 = vector.broadcast %cst_136 : f32 to vector<1x128xf32>
    %378 = arith.addf %374, %377 : vector<1x128xf32>
    %379 = math.rsqrt %378 : vector<1x128xf32>
    %380 = vector.broadcast %379 : vector<1x128xf32> to vector<8x128xf32>
    %381 = arith.mulf %376, %380 : vector<8x128xf32>
    %382 = vector.broadcast %166 : vector<1x128xf32> to vector<8x128xf32>
    %383 = arith.mulf %381, %382 : vector<8x128xf32>
    %384 = vector.broadcast %167 : vector<1x128xf32> to vector<8x128xf32>
    %385 = arith.addf %383, %384 : vector<8x128xf32>
    %386 = arith.addf %313, %385 : vector<8x128xf32>
    %c0_137 = arith.constant 0 : index
    %c0_138 = arith.constant 0 : index
    %387 = vector.load %arg4[%c0_137, %c0_138] : memref<1288x256xf32, #tpu.memory_space<vmem>>, vector<128x160xf32>
    %cst_139 = arith.constant dense<0.000000e+00> : vector<8x160xf32>
    %388 = tpu.matmul %386, %387, %cst_139 {dimension_numbers = #tpu.dot_dimension_numbers<[1], [0], [0], [1], [0, 0, 1, 1], [], []>} : vector<8x128xf32>, vector<128x160xf32>, vector<8x160xf32> -> vector<8x160xf32>
    %c128 = arith.constant 128 : index
    %c0_140 = arith.constant 0 : index
    %389 = vector.load %arg4[%c128, %c0_140] : memref<1288x256xf32, #tpu.memory_space<vmem>>, vector<1x160xf32>
    %390 = vector.broadcast %389 : vector<1x160xf32> to vector<8x160xf32>
    %391 = arith.addf %388, %390 : vector<8x160xf32>
    %392 = vector.extract_strided_slice %391 {offsets = [0, 0], sizes = [8, 128], strides = [1, 1]} : vector<8x160xf32> to vector<8x128xf32>
    %393 = vector.extract_strided_slice %391 {offsets = [0, 128], sizes = [8, 16], strides = [1, 1]} : vector<8x160xf32> to vector<8x16xf32>
    %394 = vector.extract_strided_slice %391 {offsets = [0, 144], sizes = [8, 16], strides = [1, 1]} : vector<8x160xf32> to vector<8x16xf32>
    %cst_141 = arith.constant dense<0.000000e+00> : vector<8x8xf32>
    %395 = tpu.matmul %393, %394, %cst_141 {dimension_numbers = #tpu.dot_dimension_numbers<[1], [1], [0], [0], [0, 0, 1, 0], [], []>} : vector<8x16xf32>, vector<8x16xf32>, vector<8x8xf32> -> vector<8x8xf32>
    %cst_142 = arith.constant dense<0xFF800000> : vector<8xf32>
    %396 = vector.multi_reduction <maximumf>, %395, %cst_142 [1] : vector<8x8xf32> to vector<8xf32>
    %397 = vector.shape_cast %396 : vector<8xf32> to vector<8x1xf32>
    %398 = vector.broadcast %397 : vector<8x1xf32> to vector<8x8xf32>
    %399 = arith.subf %395, %398 : vector<8x8xf32>
    %400 = math.exp %399 : vector<8x8xf32>
    %cst_143 = arith.constant dense<0.000000e+00> : vector<8xf32>
    %401 = vector.multi_reduction <add>, %400, %cst_143 [1] : vector<8x8xf32> to vector<8xf32>
    %402 = vector.shape_cast %401 : vector<8xf32> to vector<8x1xf32>
    %403 = vector.broadcast %402 : vector<8x1xf32> to vector<8x8xf32>
    %404 = arith.divf %400, %403 : vector<8x8xf32>
    %c3672 = arith.constant 3672 : index
    %c0_144 = arith.constant 0 : index
    %405 = vector.load %arg3[%c3672, %c0_144] : memref<4944x128xf32, #tpu.memory_space<vmem>>, vector<1x1xf32>
    %cst_145 = arith.constant dense<0.000000e+00> : vector<8x128xf32>
    %406 = tpu.matmul %404, %392, %cst_145 {dimension_numbers = #tpu.dot_dimension_numbers<[1], [0], [0], [1], [0, 0, 1, 1], [], []>} : vector<8x8xf32>, vector<8x128xf32>, vector<8x128xf32> -> vector<8x128xf32>
    %407 = vector.broadcast %405 : vector<1x1xf32> to vector<8x128xf32>
    %408 = arith.mulf %407, %406 : vector<8x128xf32>
    %409 = arith.addf %408, %386 : vector<8x128xf32>
    %cst_146 = arith.constant 0.000000e+00 : f32
    %410 = vector.broadcast %cst_146 : f32 to vector<1x128xf32>
    %cst_147 = arith.constant 0.000000e+00 : f32
    %411 = vector.broadcast %cst_147 : f32 to vector<1x128xf32>
    %412 = tpu.concatenate %410, %409, %411 in 0 : vector<1x128xf32>, vector<8x128xf32>, vector<1x128xf32> -> vector<10x128xf32>
    %413 = vector.extract_strided_slice %412 {offsets = [0, 0], sizes = [8, 128], strides = [1, 1]} : vector<10x128xf32> to vector<8x128xf32>
    %414 = vector.extract_strided_slice %412 {offsets = [1, 0], sizes = [8, 128], strides = [1, 1]} : vector<10x128xf32> to vector<8x128xf32>
    %415 = vector.extract_strided_slice %412 {offsets = [2, 0], sizes = [8, 128], strides = [1, 1]} : vector<10x128xf32> to vector<8x128xf32>
    %416 = tpu.concatenate %413, %414, %415 in 1 : vector<8x128xf32>, vector<8x128xf32>, vector<8x128xf32> -> vector<8x384xf32>
    %c136 = arith.constant 136 : index
    %c0_148 = arith.constant 0 : index
    %417 = vector.load %arg4[%c136, %c0_148] : memref<1288x256xf32, #tpu.memory_space<vmem>>, vector<384x256xf32>
    %cst_149 = arith.constant dense<0.000000e+00> : vector<8x256xf32>
    %418 = tpu.matmul %416, %417, %cst_149 {dimension_numbers = #tpu.dot_dimension_numbers<[1], [0], [0], [1], [0, 0, 1, 1], [], []>} : vector<8x384xf32>, vector<384x256xf32>, vector<8x256xf32> -> vector<8x256xf32>
    %419 = vector.extract_strided_slice %418 {offsets = [0, 0], sizes = [8, 128], strides = [1, 1]} : vector<8x256xf32> to vector<8x128xf32>
    %420 = vector.extract_strided_slice %418 {offsets = [0, 128], sizes = [8, 128], strides = [1, 1]} : vector<8x256xf32> to vector<8x128xf32>
    %421 = tpu.concatenate %419, %420 in 0 : vector<8x128xf32>, vector<8x128xf32> -> vector<16x128xf32>
    %c3680 = arith.constant 3680 : index
    %c0_150 = arith.constant 0 : index
    %422 = vector.load %arg3[%c3680, %c0_150] : memref<4944x128xf32, #tpu.memory_space<vmem>>, vector<16x16xf32>
    %cst_151 = arith.constant dense<0.000000e+00> : vector<16x128xf32>
    %423 = tpu.matmul %422, %421, %cst_151 {dimension_numbers = #tpu.dot_dimension_numbers<[1], [0], [0], [1], [0, 0, 1, 1], [], []>} : vector<16x16xf32>, vector<16x128xf32>, vector<16x128xf32> -> vector<16x128xf32>
    %cst_152 = arith.constant dense<0.000000e+00> : vector<128xf32>
    %424 = vector.multi_reduction <add>, %423, %cst_152 [0] : vector<16x128xf32> to vector<128xf32>
    %425 = vector.shape_cast %424 : vector<128xf32> to vector<1x128xf32>
    %cst_153 = arith.constant 1.600000e+01 : f32
    %426 = vector.broadcast %cst_153 : f32 to vector<1x128xf32>
    %427 = arith.divf %425, %426 : vector<1x128xf32>
    %428 = arith.mulf %423, %423 : vector<16x128xf32>
    %cst_154 = arith.constant dense<0.000000e+00> : vector<128xf32>
    %429 = vector.multi_reduction <add>, %428, %cst_154 [0] : vector<16x128xf32> to vector<128xf32>
    %430 = vector.shape_cast %429 : vector<128xf32> to vector<1x128xf32>
    %cst_155 = arith.constant 1.600000e+01 : f32
    %431 = vector.broadcast %cst_155 : f32 to vector<1x128xf32>
    %432 = arith.divf %430, %431 : vector<1x128xf32>
    %433 = arith.mulf %427, %427 : vector<1x128xf32>
    %434 = arith.subf %432, %433 : vector<1x128xf32>
    %cst_156 = arith.constant 0.000000e+00 : f32
    %435 = vector.broadcast %cst_156 : f32 to vector<1x128xf32>
    %436 = arith.maximumf %434, %435 : vector<1x128xf32>
    %437 = vector.broadcast %427 : vector<1x128xf32> to vector<16x128xf32>
    %438 = arith.subf %423, %437 : vector<16x128xf32>
    %cst_157 = arith.constant 9.99999974E-6 : f32
    %439 = vector.broadcast %cst_157 : f32 to vector<1x128xf32>
    %440 = arith.addf %436, %439 : vector<1x128xf32>
    %441 = math.rsqrt %440 : vector<1x128xf32>
    %442 = vector.broadcast %441 : vector<1x128xf32> to vector<16x128xf32>
    %443 = arith.mulf %438, %442 : vector<16x128xf32>
    %cst_158 = arith.constant 0.000000e+00 : f32
    %444 = vector.broadcast %cst_158 : f32 to vector<16x128xf32>
    %445 = arith.cmpf ogt, %443, %444 : vector<16x128xf32>
    %cst_159 = arith.constant 0.00999999977 : f32
    %446 = vector.broadcast %cst_159 : f32 to vector<16x128xf32>
    %447 = arith.mulf %446, %443 : vector<16x128xf32>
    %448 = arith.select %445, %443, %447 : vector<16x128xi1>, vector<16x128xf32>
    %cst_160 = arith.constant 0.000000e+00 : f32
    %449 = vector.broadcast %cst_160 : f32 to vector<1x128xf32>
    %cst_161 = arith.constant 0.000000e+00 : f32
    %450 = vector.broadcast %cst_161 : f32 to vector<1x128xf32>
    %451 = tpu.concatenate %449, %448, %450 in 0 : vector<1x128xf32>, vector<16x128xf32>, vector<1x128xf32> -> vector<18x128xf32>
    %452 = vector.extract_strided_slice %451 {offsets = [0, 0], sizes = [16, 128], strides = [1, 1]} : vector<18x128xf32> to vector<16x128xf32>
    %453 = vector.extract_strided_slice %451 {offsets = [1, 0], sizes = [16, 128], strides = [1, 1]} : vector<18x128xf32> to vector<16x128xf32>
    %454 = vector.extract_strided_slice %451 {offsets = [2, 0], sizes = [16, 128], strides = [1, 1]} : vector<18x128xf32> to vector<16x128xf32>
    %455 = tpu.concatenate %452, %453, %454 in 1 : vector<16x128xf32>, vector<16x128xf32>, vector<16x128xf32> -> vector<16x384xf32>
    %c520 = arith.constant 520 : index
    %c0_162 = arith.constant 0 : index
    %456 = vector.load %arg4[%c520, %c0_162] : memref<1288x256xf32, #tpu.memory_space<vmem>>, vector<384x256xf32>
    %cst_163 = arith.constant dense<0.000000e+00> : vector<16x256xf32>
    %457 = tpu.matmul %455, %456, %cst_163 {dimension_numbers = #tpu.dot_dimension_numbers<[1], [0], [0], [1], [0, 0, 1, 1], [], []>} : vector<16x384xf32>, vector<384x256xf32>, vector<16x256xf32> -> vector<16x256xf32>
    %458 = vector.extract_strided_slice %457 {offsets = [0, 0], sizes = [16, 128], strides = [1, 1]} : vector<16x256xf32> to vector<16x128xf32>
    %459 = vector.extract_strided_slice %457 {offsets = [0, 128], sizes = [16, 128], strides = [1, 1]} : vector<16x256xf32> to vector<16x128xf32>
    %460 = tpu.concatenate %458, %459 in 0 : vector<16x128xf32>, vector<16x128xf32> -> vector<32x128xf32>
    %c3696 = arith.constant 3696 : index
    %c0_164 = arith.constant 0 : index
    %461 = vector.load %arg3[%c3696, %c0_164] : memref<4944x128xf32, #tpu.memory_space<vmem>>, vector<32x32xf32>
    %cst_165 = arith.constant dense<0.000000e+00> : vector<32x128xf32>
    %462 = tpu.matmul %461, %460, %cst_165 {dimension_numbers = #tpu.dot_dimension_numbers<[1], [0], [0], [1], [0, 0, 1, 1], [], []>} : vector<32x32xf32>, vector<32x128xf32>, vector<32x128xf32> -> vector<32x128xf32>
    %cst_166 = arith.constant dense<0.000000e+00> : vector<128xf32>
    %463 = vector.multi_reduction <add>, %462, %cst_166 [0] : vector<32x128xf32> to vector<128xf32>
    %464 = vector.shape_cast %463 : vector<128xf32> to vector<1x128xf32>
    %cst_167 = arith.constant 3.200000e+01 : f32
    %465 = vector.broadcast %cst_167 : f32 to vector<1x128xf32>
    %466 = arith.divf %464, %465 : vector<1x128xf32>
    %467 = arith.mulf %462, %462 : vector<32x128xf32>
    %cst_168 = arith.constant dense<0.000000e+00> : vector<128xf32>
    %468 = vector.multi_reduction <add>, %467, %cst_168 [0] : vector<32x128xf32> to vector<128xf32>
    %469 = vector.shape_cast %468 : vector<128xf32> to vector<1x128xf32>
    %cst_169 = arith.constant 3.200000e+01 : f32
    %470 = vector.broadcast %cst_169 : f32 to vector<1x128xf32>
    %471 = arith.divf %469, %470 : vector<1x128xf32>
    %472 = arith.mulf %466, %466 : vector<1x128xf32>
    %473 = arith.subf %471, %472 : vector<1x128xf32>
    %cst_170 = arith.constant 0.000000e+00 : f32
    %474 = vector.broadcast %cst_170 : f32 to vector<1x128xf32>
    %475 = arith.maximumf %473, %474 : vector<1x128xf32>
    %476 = vector.broadcast %466 : vector<1x128xf32> to vector<32x128xf32>
    %477 = arith.subf %462, %476 : vector<32x128xf32>
    %cst_171 = arith.constant 9.99999974E-6 : f32
    %478 = vector.broadcast %cst_171 : f32 to vector<1x128xf32>
    %479 = arith.addf %475, %478 : vector<1x128xf32>
    %480 = math.rsqrt %479 : vector<1x128xf32>
    %481 = vector.broadcast %480 : vector<1x128xf32> to vector<32x128xf32>
    %482 = arith.mulf %477, %481 : vector<32x128xf32>
    %cst_172 = arith.constant 0.000000e+00 : f32
    %483 = vector.broadcast %cst_172 : f32 to vector<32x128xf32>
    %484 = arith.cmpf ogt, %482, %483 : vector<32x128xf32>
    %cst_173 = arith.constant 0.00999999977 : f32
    %485 = vector.broadcast %cst_173 : f32 to vector<32x128xf32>
    %486 = arith.mulf %485, %482 : vector<32x128xf32>
    %487 = arith.select %484, %482, %486 : vector<32x128xi1>, vector<32x128xf32>
    %cst_174 = arith.constant 0.000000e+00 : f32
    %488 = vector.broadcast %cst_174 : f32 to vector<1x128xf32>
    %cst_175 = arith.constant 0.000000e+00 : f32
    %489 = vector.broadcast %cst_175 : f32 to vector<1x128xf32>
    %490 = tpu.concatenate %488, %487, %489 in 0 : vector<1x128xf32>, vector<32x128xf32>, vector<1x128xf32> -> vector<34x128xf32>
    %491 = vector.extract_strided_slice %490 {offsets = [0, 0], sizes = [32, 128], strides = [1, 1]} : vector<34x128xf32> to vector<32x128xf32>
    %492 = vector.extract_strided_slice %490 {offsets = [1, 0], sizes = [32, 128], strides = [1, 1]} : vector<34x128xf32> to vector<32x128xf32>
    %493 = vector.extract_strided_slice %490 {offsets = [2, 0], sizes = [32, 128], strides = [1, 1]} : vector<34x128xf32> to vector<32x128xf32>
    %494 = tpu.concatenate %491, %492, %493 in 1 : vector<32x128xf32>, vector<32x128xf32>, vector<32x128xf32> -> vector<32x384xf32>
    %c904 = arith.constant 904 : index
    %c0_176 = arith.constant 0 : index
    %495 = vector.load %arg4[%c904, %c0_176] : memref<1288x256xf32, #tpu.memory_space<vmem>>, vector<384x256xf32>
    %cst_177 = arith.constant dense<0.000000e+00> : vector<32x256xf32>
    %496 = tpu.matmul %494, %495, %cst_177 {dimension_numbers = #tpu.dot_dimension_numbers<[1], [0], [0], [1], [0, 0, 1, 1], [], []>} : vector<32x384xf32>, vector<384x256xf32>, vector<32x256xf32> -> vector<32x256xf32>
    %497 = vector.extract_strided_slice %496 {offsets = [0, 0], sizes = [32, 128], strides = [1, 1]} : vector<32x256xf32> to vector<32x128xf32>
    %498 = vector.extract_strided_slice %496 {offsets = [0, 128], sizes = [32, 128], strides = [1, 1]} : vector<32x256xf32> to vector<32x128xf32>
    %499 = tpu.concatenate %497, %498 in 0 : vector<32x128xf32>, vector<32x128xf32> -> vector<64x128xf32>
    %c3728 = arith.constant 3728 : index
    %c0_178 = arith.constant 0 : index
    %500 = vector.load %arg3[%c3728, %c0_178] : memref<4944x128xf32, #tpu.memory_space<vmem>>, vector<64x64xf32>
    %cst_179 = arith.constant dense<0.000000e+00> : vector<64x128xf32>
    %501 = tpu.matmul %500, %499, %cst_179 {dimension_numbers = #tpu.dot_dimension_numbers<[1], [0], [0], [1], [0, 0, 1, 1], [], []>} : vector<64x64xf32>, vector<64x128xf32>, vector<64x128xf32> -> vector<64x128xf32>
    %cst_180 = arith.constant dense<0.000000e+00> : vector<128xf32>
    %502 = vector.multi_reduction <add>, %501, %cst_180 [0] : vector<64x128xf32> to vector<128xf32>
    %503 = vector.shape_cast %502 : vector<128xf32> to vector<1x128xf32>
    %cst_181 = arith.constant 6.400000e+01 : f32
    %504 = vector.broadcast %cst_181 : f32 to vector<1x128xf32>
    %505 = arith.divf %503, %504 : vector<1x128xf32>
    %506 = arith.mulf %501, %501 : vector<64x128xf32>
    %cst_182 = arith.constant dense<0.000000e+00> : vector<128xf32>
    %507 = vector.multi_reduction <add>, %506, %cst_182 [0] : vector<64x128xf32> to vector<128xf32>
    %508 = vector.shape_cast %507 : vector<128xf32> to vector<1x128xf32>
    %cst_183 = arith.constant 6.400000e+01 : f32
    %509 = vector.broadcast %cst_183 : f32 to vector<1x128xf32>
    %510 = arith.divf %508, %509 : vector<1x128xf32>
    %511 = arith.mulf %505, %505 : vector<1x128xf32>
    %512 = arith.subf %510, %511 : vector<1x128xf32>
    %cst_184 = arith.constant 0.000000e+00 : f32
    %513 = vector.broadcast %cst_184 : f32 to vector<1x128xf32>
    %514 = arith.maximumf %512, %513 : vector<1x128xf32>
    %515 = vector.broadcast %505 : vector<1x128xf32> to vector<64x128xf32>
    %516 = arith.subf %501, %515 : vector<64x128xf32>
    %cst_185 = arith.constant 9.99999974E-6 : f32
    %517 = vector.broadcast %cst_185 : f32 to vector<1x128xf32>
    %518 = arith.addf %514, %517 : vector<1x128xf32>
    %519 = math.rsqrt %518 : vector<1x128xf32>
    %520 = vector.broadcast %519 : vector<1x128xf32> to vector<64x128xf32>
    %521 = arith.mulf %516, %520 : vector<64x128xf32>
    %cst_186 = arith.constant 0.000000e+00 : f32
    %522 = vector.broadcast %cst_186 : f32 to vector<64x128xf32>
    %523 = arith.cmpf ogt, %521, %522 : vector<64x128xf32>
    %cst_187 = arith.constant 0.00999999977 : f32
    %524 = vector.broadcast %cst_187 : f32 to vector<64x128xf32>
    %525 = arith.mulf %524, %521 : vector<64x128xf32>
    %526 = arith.select %523, %521, %525 : vector<64x128xi1>, vector<64x128xf32>
    %cst_188 = arith.constant 0.000000e+00 : f32
    %527 = vector.broadcast %cst_188 : f32 to vector<6x128xf32>
    %cst_189 = arith.constant 0.000000e+00 : f32
    %528 = vector.broadcast %cst_189 : f32 to vector<6x128xf32>
    %529 = tpu.concatenate %527, %526, %528 in 0 : vector<6x128xf32>, vector<64x128xf32>, vector<6x128xf32> -> vector<76x128xf32>
    %530 = vector.extract_strided_slice %529 {offsets = [0, 0], sizes = [68, 128], strides = [1, 1]} : vector<76x128xf32> to vector<68x128xf32>
    %531 = vector.extract_strided_slice %529 {offsets = [1, 0], sizes = [68, 128], strides = [1, 1]} : vector<76x128xf32> to vector<68x128xf32>
    %532 = vector.extract_strided_slice %529 {offsets = [2, 0], sizes = [68, 128], strides = [1, 1]} : vector<76x128xf32> to vector<68x128xf32>
    %533 = vector.extract_strided_slice %529 {offsets = [3, 0], sizes = [68, 128], strides = [1, 1]} : vector<76x128xf32> to vector<68x128xf32>
    %534 = vector.extract_strided_slice %529 {offsets = [4, 0], sizes = [68, 128], strides = [1, 1]} : vector<76x128xf32> to vector<68x128xf32>
    %535 = vector.extract_strided_slice %529 {offsets = [5, 0], sizes = [68, 128], strides = [1, 1]} : vector<76x128xf32> to vector<68x128xf32>
    %536 = vector.extract_strided_slice %529 {offsets = [6, 0], sizes = [68, 128], strides = [1, 1]} : vector<76x128xf32> to vector<68x128xf32>
    %537 = vector.extract_strided_slice %529 {offsets = [7, 0], sizes = [68, 128], strides = [1, 1]} : vector<76x128xf32> to vector<68x128xf32>
    %538 = vector.extract_strided_slice %529 {offsets = [8, 0], sizes = [68, 128], strides = [1, 1]} : vector<76x128xf32> to vector<68x128xf32>
    %539 = tpu.concatenate %530, %531, %532, %533, %534, %535, %536, %537, %538 in 1 : vector<68x128xf32>, vector<68x128xf32>, vector<68x128xf32>, vector<68x128xf32>, vector<68x128xf32>, vector<68x128xf32>, vector<68x128xf32>, vector<68x128xf32>, vector<68x128xf32> -> vector<68x1152xf32>
    %c3792 = arith.constant 3792 : index
    %c0_190 = arith.constant 0 : index
    %540 = vector.load %arg3[%c3792, %c0_190] : memref<4944x128xf32, #tpu.memory_space<vmem>>, vector<1152x128xf32>
    %cst_191 = arith.constant dense<0.000000e+00> : vector<68x128xf32>
    %541 = tpu.matmul %539, %540, %cst_191 {dimension_numbers = #tpu.dot_dimension_numbers<[1], [0], [0], [1], [0, 0, 1, 1], [], []>} : vector<68x1152xf32>, vector<1152x128xf32>, vector<68x128xf32> -> vector<68x128xf32>
    %cst_192 = arith.constant dense<0.000000e+00> : vector<128xf32>
    %542 = vector.multi_reduction <add>, %541, %cst_192 [0] : vector<68x128xf32> to vector<128xf32>
    %543 = vector.shape_cast %542 : vector<128xf32> to vector<1x128xf32>
    %cst_193 = arith.constant 6.800000e+01 : f32
    %544 = vector.broadcast %cst_193 : f32 to vector<1x128xf32>
    %545 = arith.divf %543, %544 : vector<1x128xf32>
    %546 = arith.mulf %541, %541 : vector<68x128xf32>
    %cst_194 = arith.constant dense<0.000000e+00> : vector<128xf32>
    %547 = vector.multi_reduction <add>, %546, %cst_194 [0] : vector<68x128xf32> to vector<128xf32>
    %548 = vector.shape_cast %547 : vector<128xf32> to vector<1x128xf32>
    %cst_195 = arith.constant 6.800000e+01 : f32
    %549 = vector.broadcast %cst_195 : f32 to vector<1x128xf32>
    %550 = arith.divf %548, %549 : vector<1x128xf32>
    %551 = arith.mulf %545, %545 : vector<1x128xf32>
    %552 = arith.subf %550, %551 : vector<1x128xf32>
    %cst_196 = arith.constant 0.000000e+00 : f32
    %553 = vector.broadcast %cst_196 : f32 to vector<1x128xf32>
    %554 = arith.maximumf %552, %553 : vector<1x128xf32>
    %555 = vector.broadcast %545 : vector<1x128xf32> to vector<68x128xf32>
    %556 = arith.subf %541, %555 : vector<68x128xf32>
    %cst_197 = arith.constant 9.99999974E-6 : f32
    %557 = vector.broadcast %cst_197 : f32 to vector<1x128xf32>
    %558 = arith.addf %554, %557 : vector<1x128xf32>
    %559 = math.rsqrt %558 : vector<1x128xf32>
    %560 = vector.broadcast %559 : vector<1x128xf32> to vector<68x128xf32>
    %561 = arith.mulf %556, %560 : vector<68x128xf32>
    %cst_198 = arith.constant 0.000000e+00 : f32
    %562 = vector.broadcast %cst_198 : f32 to vector<68x128xf32>
    %563 = arith.cmpf ogt, %561, %562 : vector<68x128xf32>
    %cst_199 = arith.constant 0.00999999977 : f32
    %564 = vector.broadcast %cst_199 : f32 to vector<68x128xf32>
    %565 = arith.mulf %564, %561 : vector<68x128xf32>
    %566 = arith.select %563, %561, %565 : vector<68x128xi1>, vector<68x128xf32>
    %c0_200 = arith.constant 0 : index
    %c0_201 = arith.constant 0 : index
    %c0_202 = arith.constant 0 : index
    %567 = vector.load %arg5[%c0_200, %c0_201, %c0_202] : memref<1x68x128xf32, #tpu.memory_space<vmem>>, vector<1x68x128xf32>
    %568 = vector.shape_cast %567 : vector<1x68x128xf32> to vector<68x128xf32>
    %569 = vector.shape_cast %566 : vector<68x128xf32> to vector<1x68x128xf32>
    tpu.vector_store %arg5[%c0_200, %c0_201, %c0_202], %569 {strides = array<i32>} : memref<1x68x128xf32, #tpu.memory_space<vmem>>, vector<1x68x128xf32>,
    return
  }
  func.func @transform_0(%arg0: i32) -> (i32, i32, i32) {
    %c0_i32 = arith.constant 0 : i32
    %c0_i32_0 = arith.constant 0 : i32
    %c0_i32_1 = arith.constant 0 : i32
    return %arg0, %c0_i32, %c0_i32_0 : i32, i32, i32
  }
  func.func @transform_1(%arg0: i32) -> (i32, i32, i32) {
    %c0_i32 = arith.constant 0 : i32
    %c0_i32_0 = arith.constant 0 : i32
    %c0_i32_1 = arith.constant 0 : i32
    return %arg0, %c0_i32, %c0_i32_0 : i32, i32, i32
  }
  func.func @transform_2(%arg0: i32) -> (i32, i32) {
    %c0_i32 = arith.constant 0 : i32
    %c0_i32_0 = arith.constant 0 : i32
    %c0_i32_1 = arith.constant 0 : i32
    return %c0_i32, %c0_i32_0 : i32, i32
  }
  func.func @transform_3(%arg0: i32) -> (i32, i32) {
    %c0_i32 = arith.constant 0 : i32
    %c0_i32_0 = arith.constant 0 : i32
    %c0_i32_1 = arith.constant 0 : i32
    return %c0_i32, %c0_i32_0 : i32, i32
  }
  func.func @transform_4(%arg0: i32) -> (i32, i32, i32) {
    %c0_i32 = arith.constant 0 : i32
    %c0_i32_0 = arith.constant 0 : i32
    %c0_i32_1 = arith.constant 0 : i32
    return %arg0, %c0_i32, %c0_i32_0 : i32, i32, i32
  }
}

</mosaic_0001>

<llo_original>
// kernel: _lambda_.1
$region0: #{_lambda_.1}
  #allocation0 [shape = 'u32[]', space=smem, size = 0x4, offset = 0x4, fixed_abs, tag = 'smem constant byte address 0x4 - core index']
  #allocation1 [shape = 'u32[144,128]{1,0:T(1,128)}', space=vmem, size = 0x12000, scoped, tag = 'internal scratch']
  %s0 = inlined_call_operand.vmem [shape: f32[2,64,128], index: 0, kind: input, shape index: {}]
  %s1 = inlined_call_operand.vmem [shape: f32[2,1,128], index: 1, kind: input, shape index: {}]
  %s2 = inlined_call_operand.vmem [shape: f32[4944,128], index: 2, kind: input, shape index: {}]
  %s3 = inlined_call_operand.vmem [shape: f32[1288,256], index: 3, kind: input, shape index: {}]
  %s4 = inlined_call_operand.vmem [shape: f32[2,68,128], index: 4, kind: output, shape index: {}]
  %s5 = sld [smem:[#allocation0]]
  $region49: #{_lambda_.1} parent=0
    _
  %s7 = ssub.s32 1, %s5
  %s8 = scalar_select 0, %s7, %s5
  loop: start=0, step=1, limit=4
  $region2: #{_lambda_.1} parent=0 // loop_pre_header
    _
  $region3: #{_lambda_.1} parent=0 // loop_header
    %s10 = sphi 0, %s14
    %p11 = scmp.ge.s32.totalorder %s10, 4
    %s20 = sphi 0, %s22
    %s23 = sphi 0, %s20
    %s24 = sphi 0, %s23
    %s40 = sphi 0, %s24
    %s46 = sphi 0, %s48
    %s49 = sphi 0, %s46
    %s50 = sphi 0, %s49
    %s66 = sphi 0, %s50
    %s70 = sphi 0, %s70
    %s72 = sphi 0, %s70
    %s73 = sphi 0, %s72
    %s87 = sphi 0, %s73
    %s91 = sphi 0, %s91
    %s93 = sphi 0, %s91
    %s94 = sphi 0, %s93
    %s108 = sphi 0, %s94
    %s114 = sphi 0, %s116
    %s117 = sphi 0, %s114
    %s118 = sphi 0, %s117
    %s134 = sphi 0, %s118
  $region4: #{_lambda_.1} parent=0 // loop_header_branch
    %13 = sbr.rel (%p11) target = $region8
  $region5: #{_lambda_.1} parent=0 // loop_body
    %s15 = ssub.s32 %s10, 1
    %s16 = ssub.s32 %s10, 2
    %s17 = sadd.s32 %s10, 1
    %s18 = ssub.s32 %s10, %s17
    %p19 = scmp.eq.s32.totalorder %s18, 0
    %s21 = sadd.s32 %s20, 1
    %s22 = scalar_select %p19, %s20, %s21
    %p25 = pneg %p19
    %p26 = scmp.eq.s32.totalorder %s10, 1
    %p27 = por %p25, %p26
    %p28 = scmp.ne.s32.totalorder %s20, %s23
    %p29 = scmp.eq.s32.totalorder %s10, 0
    %p30 = por %p28, %p29
    %p31 = scmp.ne.s32.totalorder %s20, %s23
    %p32 = scmp.eq.s32.totalorder %s15, 1
    %p33 = por %p31, %p32
    %p34 = scmp.ne.s32.totalorder %s23, %s24
    %p35 = scmp.eq.s32.totalorder %s15, 0
    %p36 = por %p34, %p35
    %p37 = scmp.ne.s32.totalorder %s23, %s24
    %p38 = scmp.eq.s32.totalorder %s16, 1
    %p39 = por %p37, %p38
    %p41 = scmp.ne.s32.totalorder %s24, %s40
    %p42 = scmp.eq.s32.totalorder %s16, 0
    %p43 = por %p41, %p42
    %s44 = ssub.s32 %s10, %s17
    %p45 = scmp.eq.s32.totalorder %s44, 0
    %s47 = sadd.s32 %s46, 1
    %s48 = scalar_select %p45, %s46, %s47
    %p51 = pneg %p45
    %p52 = scmp.eq.s32.totalorder %s10, 1
    %p53 = por %p51, %p52
    %p54 = scmp.ne.s32.totalorder %s46, %s49
    %p55 = scmp.eq.s32.totalorder %s10, 0
    %p56 = por %p54, %p55
    %p57 = scmp.ne.s32.totalorder %s46, %s49
    %p58 = scmp.eq.s32.totalorder %s15, 1
    %p59 = por %p57, %p58
    %p60 = scmp.ne.s32.totalorder %s49, %s50
    %p61 = scmp.eq.s32.totalorder %s15, 0
    %p62 = por %p60, %p61
    %p63 = scmp.ne.s32.totalorder %s49, %s50
    %p64 = scmp.eq.s32.totalorder %s16, 1
    %p65 = por %p63, %p64
    %p67 = scmp.ne.s32.totalorder %s50, %s66
    %p68 = scmp.eq.s32.totalorder %s16, 0
    %p69 = por %p67, %p68
    %s71 = sadd.s32 %s70, 1
    %p74 = scmp.eq.s32.totalorder %s10, 1
    %p75 = scmp.ne.s32.totalorder %s70, %s72
    %p76 = scmp.eq.s32.totalorder %s10, 0
    %p77 = por %p75, %p76
    %p78 = scmp.ne.s32.totalorder %s70, %s72
    %p79 = scmp.eq.s32.totalorder %s15, 1
    %p80 = por %p78, %p79
    %p81 = scmp.ne.s32.totalorder %s72, %s73
    %p82 = scmp.eq.s32.totalorder %s15, 0
    %p83 = por %p81, %p82
    %p84 = scmp.ne.s32.totalorder %s72, %s73
    %p85 = scmp.eq.s32.totalorder %s16, 1
    %p86 = por %p84, %p85
    %p88 = scmp.ne.s32.totalorder %s73, %s87
    %p89 = scmp.eq.s32.totalorder %s16, 0
    %p90 = por %p88, %p89
    %s92 = sadd.s32 %s91, 1
    %p95 = scmp.eq.s32.totalorder %s10, 1
    %p96 = scmp.ne.s32.totalorder %s91, %s93
    %p97 = scmp.eq.s32.totalorder %s10, 0
    %p98 = por %p96, %p97
    %p99 = scmp.ne.s32.totalorder %s91, %s93
    %p100 = scmp.eq.s32.totalorder %s15, 1
    %p101 = por %p99, %p100
    %p102 = scmp.ne.s32.totalorder %s93, %s94
    %p103 = scmp.eq.s32.totalorder %s15, 0
    %p104 = por %p102, %p103
    %p105 = scmp.ne.s32.totalorder %s93, %s94
    %p106 = scmp.eq.s32.totalorder %s16, 1
    %p107 = por %p105, %p106
    %p109 = scmp.ne.s32.totalorder %s94, %s108
    %p110 = scmp.eq.s32.totalorder %s16, 0
    %p111 = por %p109, %p110
    %s112 = ssub.s32 %s10, %s17
    %p113 = scmp.eq.s32.totalorder %s112, 0
    %s115 = sadd.s32 %s114, 1
    %s116 = scalar_select %p113, %s114, %s115
    %p119 = pneg %p113
    %p120 = scmp.eq.s32.totalorder %s10, 1
    %p121 = por %p119, %p120
    %p122 = scmp.ne.s32.totalorder %s114, %s117
    %p123 = scmp.eq.s32.totalorder %s10, 0
    %p124 = por %p122, %p123
    %p125 = scmp.ne.s32.totalorder %s114, %s117
    %p126 = scmp.eq.s32.totalorder %s15, 1
    %p127 = por %p125, %p126
    %p128 = scmp.ne.s32.totalorder %s117, %s118
    %p129 = scmp.eq.s32.totalorder %s15, 0
    %p130 = por %p128, %p129
    %p131 = scmp.ne.s32.totalorder %s117, %s118
    %p132 = scmp.eq.s32.totalorder %s16, 1
    %p133 = por %p131, %p132
    %p135 = scmp.ne.s32.totalorder %s118, %s134
    %p136 = scmp.eq.s32.totalorder %s16, 0
    %p137 = por %p135, %p136
    %p138 = scmp.le.s32.totalorder 1, %s10
    %p139 = scmp.lt.s32.totalorder %s10, 3
    %p140 = pnand %p138, %p139
    %p141 = pneg %p140
    // Predicated region
    $region9: #{_lambda_.1} parent=5 // pred_check
      _
    $region10: #{_lambda_.1} parent=5 // pred_check_branch
      %143 = sbr.rel (%p140) target = $region12
    $region11: #{_lambda_.1} parent=5 // pred_region
      %s144 = ssub.s32 %s10, 1
      // Predicated region
      $region13: #{_lambda_.1} parent=11 // pred_check
        %p145 = pneg %p83
      $region14: #{_lambda_.1} parent=11 // pred_check_branch
        %147 = sbr.rel (%p145) target = $region16
      $region15: #{_lambda_.1} parent=11 // pred_region
        _
      $region16: #{_lambda_.1} parent=11 // pred_fallthru
        _
      // Predicated region
      $region17: #{_lambda_.1} parent=11 // pred_check
        %p148 = pneg %p104
      $region18: #{_lambda_.1} parent=11 // pred_check_branch
        %150 = sbr.rel (%p148) target = $region20
      $region19: #{_lambda_.1} parent=11 // pred_region
        _
      $region20: #{_lambda_.1} parent=11 // pred_fallthru
        _
    $region12: #{_lambda_.1} parent=5 // pred_fallthru
      _
    %p151 = scmp.lt.s32.totalorder %s10, 2
    // Predicated region
    $region21: #{_lambda_.1} parent=5 // pred_check
      %p152 = pneg %p151
    $region22: #{_lambda_.1} parent=5 // pred_check_branch
      %154 = sbr.rel (%p152) target = $region24
    $region23: #{_lambda_.1} parent=5 // pred_region
      // Predicated region
      $region25: #{_lambda_.1} parent=23 // pred_check
        %p155 = pneg %p30
      $region26: #{_lambda_.1} parent=23 // pred_check_branch
        %157 = sbr.rel (%p155) target = $region28
      $region27: #{_lambda_.1} parent=23 // pred_region
        %p158 = scmp.lt.s32.totalorder %s10, 1
        %s159 = scalar_select %p158, %s10, 1
        %s160 = smul.addr %s159, 8
        %s161 = smul.addr %s160, 8
        %s162 = scalar_lea.vmem %s0, %s161
      $region28: #{_lambda_.1} parent=23 // pred_fallthru
        _
      // Predicated region
      $region29: #{_lambda_.1} parent=23 // pred_check
        %p163 = pneg %p56
      $region30: #{_lambda_.1} parent=23 // pred_check_branch
        %165 = sbr.rel (%p163) target = $region32
      $region31: #{_lambda_.1} parent=23 // pred_region
        %p166 = scmp.lt.s32.totalorder %s10, 1
        %s167 = scalar_select %p166, %s10, 1
        %s168 = scalar_lea.vmem %s1, %s167
      $region32: #{_lambda_.1} parent=23 // pred_fallthru
        _
    $region24: #{_lambda_.1} parent=5 // pred_fallthru
      _
    %p169 = scmp.le.s32.totalorder 1, %s10
    %p170 = scmp.lt.s32.totalorder %s10, 3
    %p171 = pnand %p169, %p170
    %p172 = pneg %p171
    // Predicated region
    $region33: #{_lambda_.1} parent=5 // pred_check
      _
    $region34: #{_lambda_.1} parent=5 // pred_check_branch
      %174 = sbr.rel (%p171) target = $region36
    $region35: #{_lambda_.1} parent=5 // pred_region
      %s175 = ssub.s32 %s10, 1
      %p176 = scmp.lt.s32.totalorder %s15, 1
      %s177 = scalar_select %p176, %s15, 1
      %s178 = smul.addr %s177, 8
      %s179 = smul.addr %s178, 8
      %s180 = scalar_lea.vmem %s0, %s179
      %p181 = pneg %p36
      %p182 = pneg %p33
      %p183 = scmp.lt.s32.totalorder %s15, 1
      %s184 = scalar_select %p183, %s15, 1
      %s185 = scalar_lea.vmem %s1, %s184
      %p186 = pneg %p62
      %p187 = pneg %p59
      %p188 = pneg %p83
      %p189 = pneg %p80
      %p190 = pneg %p104
      %p191 = pneg %p101
      %p192 = pneg %p130
      %p193 = pneg %p127
      %p194 = scmp.lt.s32.totalorder %s15, 1
      %s195 = scalar_select %p194, %s15, 1
      %s196 = smul.addr %s195, 9
      %s197 = smul.addr %s196, 8
      %s198 = scalar_lea.vmem %s4, %s197
      %p199 = scmp.lt.s32.totalorder %s15, 1
      %s200 = scalar_select %p199, %s15, 1
      %s201 = smul.addr %s200, 8
      %s202 = smul.addr %s201, 8
      %s203 = scalar_lea.vmem %s0, %s202
      %p204 = scmp.lt.s32.totalorder %s15, 1
      %s205 = scalar_select %p204, %s15, 1
      %s206 = scalar_lea.vmem %s1, %s205
      %p207 = scmp.lt.s32.totalorder %s15, 1
      %s208 = scalar_select %p207, %s15, 1
      %s209 = smul.addr %s208, 9
      %s210 = smul.addr %s209, 8
      %s211 = scalar_lea.vmem %s4, %s210
      %v212 = vld [vmem:[%s203] sm:$0xff]
      %v213 = vld [vmem:[%s203 + $0x8] sm:$0xff]
      %v214 = vld [vmem:[%s203 + $0x10] sm:$0xff]
      %v215 = vld [vmem:[%s203 + $0x18] sm:$0xff]
      %v216 = vld [vmem:[%s203 + $0x20] sm:$0xff]
      %v217 = vld [vmem:[%s203 + $0x28] sm:$0xff]
      %v218 = vld [vmem:[%s203 + $0x30] sm:$0xff]
      %v219 = vld [vmem:[%s203 + $0x38] sm:$0xff]
      %vm228 = vcmask 1042432
      %v229 = vrot.slane %v212, 5
      %v230 = vrot.slane %v213, 5
      %v231 = vsel %vm228, %v229, %v230
      %v232 = vrot.slane %v214, 5
      %v233 = vsel %vm228, %v230, %v232
      %v234 = vrot.slane %v215, 5
      %v235 = vsel %vm228, %v232, %v234
      %v236 = vrot.slane %v216, 5
      %v237 = vsel %vm228, %v234, %v236
      %v238 = vrot.slane %v217, 5
      %v239 = vsel %vm228, %v236, %v238
      %v240 = vrot.slane %v218, 5
      %v241 = vsel %vm228, %v238, %v240
      %v242 = vrot.slane %v219, 5
      %v243 = vsel %vm228, %v240, %v242
      %v253 = vsel %vm228, 0.0, %v229
      %v254 = vsel %vm228, %v242, 0.0
      %vm257 = vcmask 1046528
      %v258 = vrot.slane %v253, 1
      %v259 = vrot.slane %v231, 1
      %v260 = vsel %vm257, %v258, %v259
      %v261 = vrot.slane %v233, 1
      %v262 = vsel %vm257, %v259, %v261
      %v263 = vrot.slane %v235, 1
      %v264 = vsel %vm257, %v261, %v263
      %v265 = vrot.slane %v237, 1
      %v266 = vsel %vm257, %v263, %v265
      %v267 = vrot.slane %v239, 1
      %v268 = vsel %vm257, %v265, %v267
      %v269 = vrot.slane %v241, 1
      %v270 = vsel %vm257, %v267, %v269
      %v271 = vrot.slane %v243, 1
      %v272 = vsel %vm257, %v269, %v271
      %v273 = vrot.slane %v254, 1
      %v274 = vsel %vm257, %v271, %v273
      %vm283 = vcmask 1045504
      %v284 = vrot.slane %v253, 2
      %v285 = vrot.slane %v231, 2
      %v286 = vsel %vm283, %v284, %v285
      %v287 = vrot.slane %v233, 2
      %v288 = vsel %vm283, %v285, %v287
      %v289 = vrot.slane %v235, 2
      %v290 = vsel %vm283, %v287, %v289
      %v291 = vrot.slane %v237, 2
      %v292 = vsel %vm283, %v289, %v291
      %v293 = vrot.slane %v239, 2
      %v294 = vsel %vm283, %v291, %v293
      %v295 = vrot.slane %v241, 2
      %v296 = vsel %vm283, %v293, %v295
      %v297 = vrot.slane %v243, 2
      %v298 = vsel %vm283, %v295, %v297
      %v299 = vrot.slane %v254, 2
      %v300 = vsel %vm283, %v297, %v299
      %vm309 = vcmask 1044480
      %v310 = vrot.slane %v253, 3
      %v311 = vrot.slane %v231, 3
      %v312 = vsel %vm309, %v310, %v311
      %v313 = vrot.slane %v233, 3
      %v314 = vsel %vm309, %v311, %v313
      %v315 = vrot.slane %v235, 3
      %v316 = vsel %vm309, %v313, %v315
      %v317 = vrot.slane %v237, 3
      %v318 = vsel %vm309, %v315, %v317
      %v319 = vrot.slane %v239, 3
      %v320 = vsel %vm309, %v317, %v319
      %v321 = vrot.slane %v241, 3
      %v322 = vsel %vm309, %v319, %v321
      %v323 = vrot.slane %v243, 3
      %v324 = vsel %vm309, %v321, %v323
      %v325 = vrot.slane %v254, 3
      %v326 = vsel %vm309, %v323, %v325
      %vm335 = vcmask 1043456
      %v336 = vrot.slane %v253, 4
      %v337 = vrot.slane %v231, 4
      %v338 = vsel %vm335, %v336, %v337
      %v339 = vrot.slane %v233, 4
      %v340 = vsel %vm335, %v337, %v339
      %v341 = vrot.slane %v235, 4
      %v342 = vsel %vm335, %v339, %v341
      %v343 = vrot.slane %v237, 4
      %v344 = vsel %vm335, %v341, %v343
      %v345 = vrot.slane %v239, 4
      %v346 = vsel %vm335, %v343, %v345
      %v347 = vrot.slane %v241, 4
      %v348 = vsel %vm335, %v345, %v347
      %v349 = vrot.slane %v243, 4
      %v350 = vsel %vm335, %v347, %v349
      %v351 = vrot.slane %v254, 4
      %v352 = vsel %vm335, %v349, %v351
      %v361 = vrot.slane %v253, 5
      %v362 = vrot.slane %v231, 5
      %v363 = vsel %vm228, %v361, %v362
      %v364 = vrot.slane %v233, 5
      %v365 = vsel %vm228, %v362, %v364
      %v366 = vrot.slane %v235, 5
      %v367 = vsel %vm228, %v364, %v366
      %v368 = vrot.slane %v237, 5
      %v369 = vsel %vm228, %v366, %v368
      %v370 = vrot.slane %v239, 5
      %v371 = vsel %vm228, %v368, %v370
      %v372 = vrot.slane %v241, 5
      %v373 = vsel %vm228, %v370, %v372
      %v374 = vrot.slane %v243, 5
      %v375 = vsel %vm228, %v372, %v374
      %v376 = vrot.slane %v254, 5
      %v377 = vsel %vm228, %v374, %v376
      %vm386 = vcmask 1041408
      %v387 = vrot.slane %v253, 6
      %v388 = vrot.slane %v231, 6
      %v389 = vsel %vm386, %v387, %v388
      %v390 = vrot.slane %v233, 6
      %v391 = vsel %vm386, %v388, %v390
      %v392 = vrot.slane %v235, 6
      %v393 = vsel %vm386, %v390, %v392
      %v394 = vrot.slane %v237, 6
      %v395 = vsel %vm386, %v392, %v394
      %v396 = vrot.slane %v239, 6
      %v397 = vsel %vm386, %v394, %v396
      %v398 = vrot.slane %v241, 6
      %v399 = vsel %vm386, %v396, %v398
      %v400 = vrot.slane %v243, 6
      %v401 = vsel %vm386, %v398, %v400
      %v402 = vrot.slane %v254, 6
      %v403 = vsel %vm386, %v400, %v402
      %v412 = vld [vmem:[%s2] sm:$0xff]
      %v413 = vld [vmem:[%s2 + $0x8] sm:$0xff]
      %v414 = vld [vmem:[%s2 + $0x10] sm:$0xff]
      %v415 = vld [vmem:[%s2 + $0x18] sm:$0xff]
      %v416 = vld [vmem:[%s2 + $0x20] sm:$0xff]
      %v417 = vld [vmem:[%s2 + $0x28] sm:$0xff]
      %v418 = vld [vmem:[%s2 + $0x30] sm:$0xff]
      %v419 = vld [vmem:[%s2 + $0x38] sm:$0xff]
      %v420 = vld [vmem:[%s2 + $0x40] sm:$0xff]
      %v421 = vld [vmem:[%s2 + $0x48] sm:$0xff]
      %v422 = vld [vmem:[%s2 + $0x50] sm:$0xff]
      %v423 = vld [vmem:[%s2 + $0x58] sm:$0xff]
      %v424 = vld [vmem:[%s2 + $0x60] sm:$0xff]
      %v425 = vld [vmem:[%s2 + $0x68] sm:$0xff]
      %v426 = vld [vmem:[%s2 + $0x70] sm:$0xff]
      %v427 = vld [vmem:[%s2 + $0x78] sm:$0xff]
      %v428 = vld [vmem:[%s2 + $0x80] sm:$0xff]
      %v429 = vld [vmem:[%s2 + $0x88] sm:$0xff]
      %v430 = vld [vmem:[%s2 + $0x90] sm:$0xff]
      %v431 = vld [vmem:[%s2 + $0x98] sm:$0xff]
      %v432 = vld [vmem:[%s2 + $0xa0] sm:$0xff]
      %v433 = vld [vmem:[%s2 + $0xa8] sm:$0xff]
      %v434 = vld [vmem:[%s2 + $0xb0] sm:$0xff]
      %v435 = vld [vmem:[%s2 + $0xb8] sm:$0xff]
      %v436 = vld [vmem:[%s2 + $0xc0] sm:$0xff]
      %v437 = vld [vmem:[%s2 + $0xc8] sm:$0xff]
      %v438 = vld [vmem:[%s2 + $0xd0] sm:$0xff]
      %v439 = vld [vmem:[%s2 + $0xd8] sm:$0xff]
      %v440 = vld [vmem:[%s2 + $0xe0] sm:$0xff]
      %v441 = vld [vmem:[%s2 + $0xe8] sm:$0xff]
      %v442 = vld [vmem:[%s2 + $0xf0] sm:$0xff]
      %v443 = vld [vmem:[%s2 + $0xf8] sm:$0xff]
      %v444 = vld [vmem:[%s2 + $0x100] sm:$0xff]
      %v445 = vld [vmem:[%s2 + $0x108] sm:$0xff]
      %v446 = vld [vmem:[%s2 + $0x110] sm:$0xff]
      %v447 = vld [vmem:[%s2 + $0x118] sm:$0xff]
      %v448 = vld [vmem:[%s2 + $0x120] sm:$0xff]
      %v449 = vld [vmem:[%s2 + $0x128] sm:$0xff]
      %v450 = vld [vmem:[%s2 + $0x130] sm:$0xff]
      %v451 = vld [vmem:[%s2 + $0x138] sm:$0xff]
      %v452 = vld [vmem:[%s2 + $0x140] sm:$0xff]
      %v453 = vld [vmem:[%s2 + $0x148] sm:$0xff]
      %v454 = vld [vmem:[%s2 + $0x150] sm:$0xff]
      %v455 = vld [vmem:[%s2 + $0x158] sm:$0xff]
      %v456 = vld [vmem:[%s2 + $0x160] sm:$0xff]
      %v457 = vld [vmem:[%s2 + $0x168] sm:$0xff]
      %v458 = vld [vmem:[%s2 + $0x170] sm:$0xff]
      %v459 = vld [vmem:[%s2 + $0x178] sm:$0xff]
      %v460 = vld [vmem:[%s2 + $0x180] sm:$0xff]
      %v461 = vld [vmem:[%s2 + $0x188] sm:$0xff]
      %v462 = vld [vmem:[%s2 + $0x190] sm:$0xff]
      %v463 = vld [vmem:[%s2 + $0x198] sm:$0xff]
      %v464 = vld [vmem:[%s2 + $0x1a0] sm:$0xff]
      %v465 = vld [vmem:[%s2 + $0x1a8] sm:$0xff]
      %v466 = vld [vmem:[%s2 + $0x1b0] sm:$0xff]
      %v467 = vld [vmem:[%s2 + $0x1b8] sm:$0xff]
      %v468 = vld [vmem:[%s2 + $0x1c0] sm:$0xff]
      %v469 = vld [vmem:[%s2 + $0x1c8] sm:$0xff]
      %v470 = vld [vmem:[%s2 + $0x1d0] sm:$0xff]
      %v471 = vld [vmem:[%s2 + $0x1d8] sm:$0xff]
      %v472 = vld [vmem:[%s2 + $0x1e0] sm:$0xff]
      %v473 = vld [vmem:[%s2 + $0x1e8] sm:$0xff]
      %v474 = vld [vmem:[%s2 + $0x1f0] sm:$0xff]
      %v475 = vld [vmem:[%s2 + $0x1f8] sm:$0xff]
      %v476 = vld [vmem:[%s2 + $0x200] sm:$0xff]
      %v477 = vld [vmem:[%s2 + $0x208] sm:$0xff]
      %v478 = vld [vmem:[%s2 + $0x210] sm:$0xff]
      %v479 = vld [vmem:[%s2 + $0x218] sm:$0xff]
      %v480 = vld [vmem:[%s2 + $0x220] sm:$0xff]
      %v481 = vld [vmem:[%s2 + $0x228] sm:$0xff]
      %v482 = vld [vmem:[%s2 + $0x230] sm:$0xff]
      %v483 = vld [vmem:[%s2 + $0x238] sm:$0xff]
      %v484 = vld [vmem:[%s2 + $0x240] sm:$0xff]
      %v485 = vld [vmem:[%s2 + $0x248] sm:$0xff]
      %v486 = vld [vmem:[%s2 + $0x250] sm:$0xff]
      %v487 = vld [vmem:[%s2 + $0x258] sm:$0xff]
      %v488 = vld [vmem:[%s2 + $0x260] sm:$0xff]
      %v489 = vld [vmem:[%s2 + $0x268] sm:$0xff]
      %v490 = vld [vmem:[%s2 + $0x270] sm:$0xff]
      %v491 = vld [vmem:[%s2 + $0x278] sm:$0xff]
      %v492 = vld [vmem:[%s2 + $0x280] sm:$0xff]
      %v493 = vld [vmem:[%s2 + $0x288] sm:$0xff]
      %v494 = vld [vmem:[%s2 + $0x290] sm:$0xff]
      %v495 = vld [vmem:[%s2 + $0x298] sm:$0xff]
      %v496 = vld [vmem:[%s2 + $0x2a0] sm:$0xff]
      %v497 = vld [vmem:[%s2 + $0x2a8] sm:$0xff]
      %v498 = vld [vmem:[%s2 + $0x2b0] sm:$0xff]
      %v499 = vld [vmem:[%s2 + $0x2b8] sm:$0xff]
      %v500 = vld [vmem:[%s2 + $0x2c0] sm:$0xff]
      %v501 = vld [vmem:[%s2 + $0x2c8] sm:$0xff]
      %v502 = vld [vmem:[%s2 + $0x2d0] sm:$0xff]
      %v503 = vld [vmem:[%s2 + $0x2d8] sm:$0xff]
      %v504 = vld [vmem:[%s2 + $0x2e0] sm:$0xff]
      %v505 = vld [vmem:[%s2 + $0x2e8] sm:$0xff]
      %v506 = vld [vmem:[%s2 + $0x2f0] sm:$0xff]
      %v507 = vld [vmem:[%s2 + $0x2f8] sm:$0xff]
      %v508 = vld [vmem:[%s2 + $0x300] sm:$0xff]
      %v509 = vld [vmem:[%s2 + $0x308] sm:$0xff]
      %v510 = vld [vmem:[%s2 + $0x310] sm:$0xff]
      %v511 = vld [vmem:[%s2 + $0x318] sm:$0xff]
      %v512 = vld [vmem:[%s2 + $0x320] sm:$0xff]
      %v513 = vld [vmem:[%s2 + $0x328] sm:$0xff]
      %v514 = vld [vmem:[%s2 + $0x330] sm:$0xff]
      %v515 = vld [vmem:[%s2 + $0x338] sm:$0xff]
      %v516 = vld [vmem:[%s2 + $0x340] sm:$0xff]
      %v517 = vld [vmem:[%s2 + $0x348] sm:$0xff]
      %v518 = vld [vmem:[%s2 + $0x350] sm:$0xff]
      %v519 = vld [vmem:[%s2 + $0x358] sm:$0xff]
      %v520 = vld [vmem:[%s2 + $0x360] sm:$0xff]
      %v521 = vld [vmem:[%s2 + $0x368] sm:$0xff]
      %v522 = vld [vmem:[%s2 + $0x370] sm:$0xff]
      %v523 = vld [vmem:[%s2 + $0x378] sm:$0xff]
      %524 = vmatprep.subr.mxu0 0.0
      %525 = vmatpush1.msra.mxu0 %v427
      %526 = vmatprep.subr.mxu0 0.0
      %527 = vmatpush1.msra.mxu0 %v426
      %528 = vmatprep.subr.mxu0 0.0
      %529 = vmatpush1.msra.mxu0 %v425
      %530 = vmatprep.subr.mxu0 0.0
      %531 = vmatpush1.msra.mxu0 %v424
      %532 = vmatprep.subr.mxu0 0.0
      %533 = vmatpush1.msra.mxu0 %v423
      %534 = vmatprep.subr.mxu0 0.0
      %535 = vmatpush1.msra.mxu0 %v422
      %536 = vmatprep.subr.mxu0 0.0
      %537 = vmatpush1.msra.mxu0 %v421
      %538 = vmatprep.subr.mxu0 0.0
      %539 = vmatpush1.msra.mxu0 %v420
      %540 = vmatprep.subr.mxu0 0.0
      %541 = vmatpush1.msra.mxu0 %v419
      %542 = vmatprep.subr.mxu0 0.0
      %543 = vmatpush1.msra.mxu0 %v418
      %544 = vmatprep.subr.mxu0 0.0
      %545 = vmatpush1.msra.mxu0 %v417
      %546 = vmatprep.subr.mxu0 0.0
      %547 = vmatpush1.msra.mxu0 %v416
      %548 = vmatprep.subr.mxu0 0.0
      %549 = vmatpush1.msra.mxu0 %v415
      %550 = vmatprep.subr.mxu0 0.0
      %551 = vmatpush1.msra.mxu0 %v414
      %552 = vmatprep.subr.mxu0 0.0
      %553 = vmatpush1.msra.mxu0 %v413
      %554 = vmatprep.subr.mxu0 0.0
      %555 = vmatpush1.msra.mxu0 %v412
      %556 = vmatprep.subr.mxu0 0.0
      %557 = vmatpush2.msra.mxu0 %v443
      %558 = vmatprep.subr.mxu0 0.0
      %559 = vmatpush2.msra.mxu0 %v442
      %560 = vmatprep.subr.mxu0 0.0
      %561 = vmatpush2.msra.mxu0 %v441
      %562 = vmatprep.subr.mxu0 0.0
      %563 = vmatpush2.msra.mxu0 %v440
      %564 = vmatprep.subr.mxu0 0.0
      %565 = vmatpush2.msra.mxu0 %v439
      %566 = vmatprep.subr.mxu0 0.0
      %567 = vmatpush2.msra.mxu0 %v438
      %568 = vmatprep.subr.mxu0 0.0
      %569 = vmatpush2.msra.mxu0 %v437
      %570 = vmatprep.subr.mxu0 0.0
      %571 = vmatpush2.msra.mxu0 %v436
      %572 = vmatprep.subr.mxu0 0.0
      %573 = vmatpush2.msra.mxu0 %v435
      %574 = vmatprep.subr.mxu0 0.0
      %575 = vmatpush2.msra.mxu0 %v434
      %576 = vmatprep.subr.mxu0 0.0
      %577 = vmatpush2.msra.mxu0 %v433
      %578 = vmatprep.subr.mxu0 0.0
      %579 = vmatpush2.msra.mxu0 %v432
      %580 = vmatprep.subr.mxu0 0.0
      %581 = vmatpush2.msra.mxu0 %v431
      %582 = vmatprep.subr.mxu0 0.0
      %583 = vmatpush2.msra.mxu0 %v430
      %584 = vmatprep.subr.mxu0 0.0
      %585 = vmatpush2.msra.mxu0 %v429
      %586 = vmatprep.subr.mxu0 0.0
      %587 = vmatpush2.msra.mxu0 %v428
      %588 = vmatprep.mubr.f32.mxu0 %v260
      %589 = vmatmul.mubr.f32.gmra.mxu0 %v253
      %v590 = vpop.f32.mrf.mxu0
      %v591 = vadd.f32 0.0, %v590
      %v592 = vpop.f32.mrf.mxu0
      %593 = vmatprep.mubr.f32.mxu0 %v262
      %594 = vmatmul.mubr.f32.gmra.mxu0 %v231
      %v595 = vpop.f32.mrf.mxu0
      %v596 = vadd.f32 0.0, %v595
      %v597 = vpop.f32.mrf.mxu0
      %598 = vmatprep.mubr.f32.mxu0 %v264
      %599 = vmatmul.mubr.f32.gmra.mxu0 %v233
      %v600 = vpop.f32.mrf.mxu0
      %v601 = vadd.f32 0.0, %v600
      %v602 = vpop.f32.mrf.mxu0
      %603 = vmatprep.mubr.f32.mxu0 %v266
      %604 = vmatmul.mubr.f32.gmra.mxu0 %v235
      %v605 = vpop.f32.mrf.mxu0
      %v606 = vadd.f32 0.0, %v605
      %v607 = vpop.f32.mrf.mxu0
      %608 = vmatprep.mubr.f32.mxu0 %v268
      %609 = vmatmul.mubr.f32.gmra.mxu0 %v237
      %v610 = vpop.f32.mrf.mxu0
      %v611 = vadd.f32 0.0, %v610
      %v612 = vpop.f32.mrf.mxu0
      %613 = vmatprep.mubr.f32.mxu0 %v270
      %614 = vmatmul.mubr.f32.gmra.mxu0 %v239
      %v615 = vpop.f32.mrf.mxu0
      %v616 = vadd.f32 0.0, %v615
      %v617 = vpop.f32.mrf.mxu0
      %618 = vmatprep.mubr.f32.mxu0 %v272
      %619 = vmatmul.mubr.f32.gmra.mxu0 %v241
      %v620 = vpop.f32.mrf.mxu0
      %v621 = vadd.f32 0.0, %v620
      %v622 = vpop.f32.mrf.mxu0
      %623 = vmatprep.mubr.f32.mxu0 %v274
      %624 = vmatmul.mubr.f32.gmra.mxu0 %v243
      %v625 = vpop.f32.mrf.mxu0
      %v626 = vadd.f32 0.0, %v625
      %v627 = vpop.f32.mrf.mxu0
      %628 = vdwg.mxu0
      %629 = vmatprep.subr.mxu0 0.0
      %630 = vmatpush1.msra.mxu0 %v459
      %631 = vmatprep.subr.mxu0 0.0
      %632 = vmatpush1.msra.mxu0 %v458
      %633 = vmatprep.subr.mxu0 0.0
      %634 = vmatpush1.msra.mxu0 %v457
      %635 = vmatprep.subr.mxu0 0.0
      %636 = vmatpush1.msra.mxu0 %v456
      %637 = vmatprep.subr.mxu0 0.0
      %638 = vmatpush1.msra.mxu0 %v455
      %639 = vmatprep.subr.mxu0 0.0
      %640 = vmatpush1.msra.mxu0 %v454
      %641 = vmatprep.subr.mxu0 0.0
      %642 = vmatpush1.msra.mxu0 %v453
      %643 = vmatprep.subr.mxu0 0.0
      %644 = vmatpush1.msra.mxu0 %v452
      %645 = vmatprep.subr.mxu0 0.0
      %646 = vmatpush1.msra.mxu0 %v451
      %647 = vmatprep.subr.mxu0 0.0
      %648 = vmatpush1.msra.mxu0 %v450
      %649 = vmatprep.subr.mxu0 0.0
      %650 = vmatpush1.msra.mxu0 %v449
      %651 = vmatprep.subr.mxu0 0.0
      %652 = vmatpush1.msra.mxu0 %v448
      %653 = vmatprep.subr.mxu0 0.0
      %654 = vmatpush1.msra.mxu0 %v447
      %655 = vmatprep.subr.mxu0 0.0
      %656 = vmatpush1.msra.mxu0 %v446
      %657 = vmatprep.subr.mxu0 0.0
      %658 = vmatpush1.msra.mxu0 %v445
      %659 = vmatprep.subr.mxu0 0.0
      %660 = vmatpush1.msra.mxu0 %v444
      %661 = vmatprep.subr.mxu0 0.0
      %662 = vmatpush2.msra.mxu0 %v475
      %663 = vmatprep.subr.mxu0 0.0
      %664 = vmatpush2.msra.mxu0 %v474
      %665 = vmatprep.subr.mxu0 0.0
      %666 = vmatpush2.msra.mxu0 %v473
      %667 = vmatprep.subr.mxu0 0.0
      %668 = vmatpush2.msra.mxu0 %v472
      %669 = vmatprep.subr.mxu0 0.0
      %670 = vmatpush2.msra.mxu0 %v471
      %671 = vmatprep.subr.mxu0 0.0
      %672 = vmatpush2.msra.mxu0 %v470
      %673 = vmatprep.subr.mxu0 0.0
      %674 = vmatpush2.msra.mxu0 %v469
      %675 = vmatprep.subr.mxu0 0.0
      %676 = vmatpush2.msra.mxu0 %v468
      %677 = vmatprep.subr.mxu0 0.0
      %678 = vmatpush2.msra.mxu0 %v467
      %679 = vmatprep.subr.mxu0 0.0
      %680 = vmatpush2.msra.mxu0 %v466
      %681 = vmatprep.subr.mxu0 0.0
      %682 = vmatpush2.msra.mxu0 %v465
      %683 = vmatprep.subr.mxu0 0.0
      %684 = vmatpush2.msra.mxu0 %v464
      %685 = vmatprep.subr.mxu0 0.0
      %686 = vmatpush2.msra.mxu0 %v463
      %687 = vmatprep.subr.mxu0 0.0
      %688 = vmatpush2.msra.mxu0 %v462
      %689 = vmatprep.subr.mxu0 0.0
      %690 = vmatpush2.msra.mxu0 %v461
      %691 = vmatprep.subr.mxu0 0.0
      %692 = vmatpush2.msra.mxu0 %v460
      %693 = vmatprep.mubr.f32.mxu0 %v312
      %694 = vmatmul.mubr.f32.gmra.mxu0 %v286
      %v695 = vpop.f32.mrf.mxu0
      %v696 = vadd.f32 %v591, %v695
      %v697 = vpop.f32.mrf.mxu0
      %698 = vmatprep.mubr.f32.mxu0 %v314
      %699 = vmatmul.mubr.f32.gmra.mxu0 %v288
      %v700 = vpop.f32.mrf.mxu0
      %v701 = vadd.f32 %v596, %v700
      %v702 = vpop.f32.mrf.mxu0
      %703 = vmatprep.mubr.f32.mxu0 %v316
      %704 = vmatmul.mubr.f32.gmra.mxu0 %v290
      %v705 = vpop.f32.mrf.mxu0
      %v706 = vadd.f32 %v601, %v705
      %v707 = vpop.f32.mrf.mxu0
      %708 = vmatprep.mubr.f32.mxu0 %v318
      %709 = vmatmul.mubr.f32.gmra.mxu0 %v292
      %v710 = vpop.f32.mrf.mxu0
      %v711 = vadd.f32 %v606, %v710
      %v712 = vpop.f32.mrf.mxu0
      %713 = vmatprep.mubr.f32.mxu0 %v320
      %714 = vmatmul.mubr.f32.gmra.mxu0 %v294
      %v715 = vpop.f32.mrf.mxu0
      %v716 = vadd.f32 %v611, %v715
      %v717 = vpop.f32.mrf.mxu0
      %718 = vmatprep.mubr.f32.mxu0 %v322
      %719 = vmatmul.mubr.f32.gmra.mxu0 %v296
      %v720 = vpop.f32.mrf.mxu0
      %v721 = vadd.f32 %v616, %v720
      %v722 = vpop.f32.mrf.mxu0
      %723 = vmatprep.mubr.f32.mxu0 %v324
      %724 = vmatmul.mubr.f32.gmra.mxu0 %v298
      %v725 = vpop.f32.mrf.mxu0
      %v726 = vadd.f32 %v621, %v725
      %v727 = vpop.f32.mrf.mxu0
      %728 = vmatprep.mubr.f32.mxu0 %v326
      %729 = vmatmul.mubr.f32.gmra.mxu0 %v300
      %v730 = vpop.f32.mrf.mxu0
      %v731 = vadd.f32 %v626, %v730
      %v732 = vpop.f32.mrf.mxu0
      %733 = vdwg.mxu0
      %734 = vmatprep.subr.mxu0 0.0
      %735 = vmatpush1.msra.mxu0 %v491
      %736 = vmatprep.subr.mxu0 0.0
      %737 = vmatpush1.msra.mxu0 %v490
      %738 = vmatprep.subr.mxu0 0.0
      %739 = vmatpush1.msra.mxu0 %v489
      %740 = vmatprep.subr.mxu0 0.0
      %741 = vmatpush1.msra.mxu0 %v488
      %742 = vmatprep.subr.mxu0 0.0
      %743 = vmatpush1.msra.mxu0 %v487
      %744 = vmatprep.subr.mxu0 0.0
      %745 = vmatpush1.msra.mxu0 %v486
      %746 = vmatprep.subr.mxu0 0.0
      %747 = vmatpush1.msra.mxu0 %v485
      %748 = vmatprep.subr.mxu0 0.0
      %749 = vmatpush1.msra.mxu0 %v484
      %750 = vmatprep.subr.mxu0 0.0
      %751 = vmatpush1.msra.mxu0 %v483
      %752 = vmatprep.subr.mxu0 0.0
      %753 = vmatpush1.msra.mxu0 %v482
      %754 = vmatprep.subr.mxu0 0.0
      %755 = vmatpush1.msra.mxu0 %v481
      %756 = vmatprep.subr.mxu0 0.0
      %757 = vmatpush1.msra.mxu0 %v480
      %758 = vmatprep.subr.mxu0 0.0
      %759 = vmatpush1.msra.mxu0 %v479
      %760 = vmatprep.subr.mxu0 0.0
      %761 = vmatpush1.msra.mxu0 %v478
      %762 = vmatprep.subr.mxu0 0.0
      %763 = vmatpush1.msra.mxu0 %v477
      %764 = vmatprep.subr.mxu0 0.0
      %765 = vmatpush1.msra.mxu0 %v476
      %766 = vmatprep.subr.mxu0 0.0
      %767 = vmatpush2.msra.mxu0 %v507
      %768 = vmatprep.subr.mxu0 0.0
      %769 = vmatpush2.msra.mxu0 %v506
      %770 = vmatprep.subr.mxu0 0.0
      %771 = vmatpush2.msra.mxu0 %v505
      %772 = vmatprep.subr.mxu0 0.0
      %773 = vmatpush2.msra.mxu0 %v504
      %774 = vmatprep.subr.mxu0 0.0
      %775 = vmatpush2.msra.mxu0 %v503
      %776 = vmatprep.subr.mxu0 0.0
      %777 = vmatpush2.msra.mxu0 %v502
      %778 = vmatprep.subr.mxu0 0.0
      %779 = vmatpush2.msra.mxu0 %v501
      %780 = vmatprep.subr.mxu0 0.0
      %781 = vmatpush2.msra.mxu0 %v500
      %782 = vmatprep.subr.mxu0 0.0
      %783 = vmatpush2.msra.mxu0 %v499
      %784 = vmatprep.subr.mxu0 0.0
      %785 = vmatpush2.msra.mxu0 %v498
      %786 = vmatprep.subr.mxu0 0.0
      %787 = vmatpush2.msra.mxu0 %v497
      %788 = vmatprep.subr.mxu0 0.0
      %789 = vmatpush2.msra.mxu0 %v496
      %790 = vmatprep.subr.mxu0 0.0
      %791 = vmatpush2.msra.mxu0 %v495
      %792 = vmatprep.subr.mxu0 0.0
      %793 = vmatpush2.msra.mxu0 %v494
      %794 = vmatprep.subr.mxu0 0.0
      %795 = vmatpush2.msra.mxu0 %v493
      %796 = vmatprep.subr.mxu0 0.0
      %797 = vmatpush2.msra.mxu0 %v492
      %798 = vmatprep.mubr.f32.mxu0 %v363
      %799 = vmatmul.mubr.f32.gmra.mxu0 %v338
      %v800 = vpop.f32.mrf.mxu0
      %v801 = vadd.f32 %v696, %v800
      %v802 = vpop.f32.mrf.mxu0
      %803 = vmatprep.mubr.f32.mxu0 %v365
      %804 = vmatmul.mubr.f32.gmra.mxu0 %v340
      %v805 = vpop.f32.mrf.mxu0
      %v806 = vadd.f32 %v701, %v805
      %v807 = vpop.f32.mrf.mxu0
      %808 = vmatprep.mubr.f32.mxu0 %v367
      %809 = vmatmul.mubr.f32.gmra.mxu0 %v342
      %v810 = vpop.f32.mrf.mxu0
      %v811 = vadd.f32 %v706, %v810
      %v812 = vpop.f32.mrf.mxu0
      %813 = vmatprep.mubr.f32.mxu0 %v369
      %814 = vmatmul.mubr.f32.gmra.mxu0 %v344
      %v815 = vpop.f32.mrf.mxu0
      %v816 = vadd.f32 %v711, %v815
      %v817 = vpop.f32.mrf.mxu0
      %818 = vmatprep.mubr.f32.mxu0 %v371
      %819 = vmatmul.mubr.f32.gmra.mxu0 %v346
      %v820 = vpop.f32.mrf.mxu0
      %v821 = vadd.f32 %v716, %v820
      %v822 = vpop.f32.mrf.mxu0
      %823 = vmatprep.mubr.f32.mxu0 %v373
      %824 = vmatmul.mubr.f32.gmra.mxu0 %v348
      %v825 = vpop.f32.mrf.mxu0
      %v826 = vadd.f32 %v721, %v825
      %v827 = vpop.f32.mrf.mxu0
      %828 = vmatprep.mubr.f32.mxu0 %v375
      %829 = vmatmul.mubr.f32.gmra.mxu0 %v350
      %v830 = vpop.f32.mrf.mxu0
      %v831 = vadd.f32 %v726, %v830
      %v832 = vpop.f32.mrf.mxu0
      %833 = vmatprep.mubr.f32.mxu0 %v377
      %834 = vmatmul.mubr.f32.gmra.mxu0 %v352
      %v835 = vpop.f32.mrf.mxu0
      %v836 = vadd.f32 %v731, %v835
      %v837 = vpop.f32.mrf.mxu0
      %838 = vdwg.mxu0
      %839 = vmatprep.subr.mxu0 0.0
      %840 = vmatpush1.msra.mxu0 %v523
      %841 = vmatprep.subr.mxu0 0.0
      %842 = vmatpush1.msra.mxu0 %v522
      %843 = vmatprep.subr.mxu0 0.0
      %844 = vmatpush1.msra.mxu0 %v521
      %845 = vmatprep.subr.mxu0 0.0
      %846 = vmatpush1.msra.mxu0 %v520
      %847 = vmatprep.subr.mxu0 0.0
      %848 = vmatpush1.msra.mxu0 %v519
      %849 = vmatprep.subr.mxu0 0.0
      %850 = vmatpush1.msra.mxu0 %v518
      %851 = vmatprep.subr.mxu0 0.0
      %852 = vmatpush1.msra.mxu0 %v517
      %853 = vmatprep.subr.mxu0 0.0
      %854 = vmatpush1.msra.mxu0 %v516
      %855 = vmatprep.subr.mxu0 0.0
      %856 = vmatpush1.msra.mxu0 %v515
      %857 = vmatprep.subr.mxu0 0.0
      %858 = vmatpush1.msra.mxu0 %v514
      %859 = vmatprep.subr.mxu0 0.0
      %860 = vmatpush1.msra.mxu0 %v513
      %861 = vmatprep.subr.mxu0 0.0
      %862 = vmatpush1.msra.mxu0 %v512
      %863 = vmatprep.subr.mxu0 0.0
      %864 = vmatpush1.msra.mxu0 %v511
      %865 = vmatprep.subr.mxu0 0.0
      %866 = vmatpush1.msra.mxu0 %v510
      %867 = vmatprep.subr.mxu0 0.0
      %868 = vmatpush1.msra.mxu0 %v509
      %869 = vmatprep.subr.mxu0 0.0
      %870 = vmatpush1.msra.mxu0 %v508
      %871 = vmatprep.subr.mxu0 0.0
      %872 = vmatpush2.msra.mxu0 0.0
      %873 = vmatprep.subr.mxu0 0.0
      %874 = vmatpush2.msra.mxu0 0.0
      %875 = vmatprep.subr.mxu0 0.0
      %876 = vmatpush2.msra.mxu0 0.0
      %877 = vmatprep.subr.mxu0 0.0
      %878 = vmatpush2.msra.mxu0 0.0
      %879 = vmatprep.subr.mxu0 0.0
      %880 = vmatpush2.msra.mxu0 0.0
      %881 = vmatprep.subr.mxu0 0.0
      %882 = vmatpush2.msra.mxu0 0.0
      %883 = vmatprep.subr.mxu0 0.0
      %884 = vmatpush2.msra.mxu0 0.0
      %885 = vmatprep.subr.mxu0 0.0
      %886 = vmatpush2.msra.mxu0 0.0
      %887 = vmatprep.subr.mxu0 0.0
      %888 = vmatpush2.msra.mxu0 0.0
      %889 = vmatprep.subr.mxu0 0.0
      %890 = vmatpush2.msra.mxu0 0.0
      %891 = vmatprep.subr.mxu0 0.0
      %892 = vmatpush2.msra.mxu0 0.0
      %893 = vmatprep.subr.mxu0 0.0
      %894 = vmatpush2.msra.mxu0 0.0
      %895 = vmatprep.subr.mxu0 0.0
      %896 = vmatpush2.msra.mxu0 0.0
      %897 = vmatprep.subr.mxu0 0.0
      %898 = vmatpush2.msra.mxu0 0.0
      %899 = vmatprep.subr.mxu0 0.0
      %900 = vmatpush2.msra.mxu0 0.0
      %901 = vmatprep.subr.mxu0 0.0
      %902 = vmatpush2.msra.mxu0 0.0
      %903 = vmatprep.mubr.f32.mxu0 0.0
      %904 = vmatmul.mubr.f32.gmra.mxu0 %v389
      %v905 = vpop.f32.mrf.mxu0
      %v906 = vadd.f32 %v801, %v905
      %v907 = vpop.f32.mrf.mxu0
      %908 = vmatprep.mubr.f32.mxu0 0.0
      %909 = vmatmul.mubr.f32.gmra.mxu0 %v391
      %v910 = vpop.f32.mrf.mxu0
      %v911 = vadd.f32 %v806, %v910
      %v912 = vpop.f32.mrf.mxu0
      %913 = vmatprep.mubr.f32.mxu0 0.0
      %914 = vmatmul.mubr.f32.gmra.mxu0 %v393
      %v915 = vpop.f32.mrf.mxu0
      %v916 = vadd.f32 %v811, %v915
      %v917 = vpop.f32.mrf.mxu0
      %918 = vmatprep.mubr.f32.mxu0 0.0
      %919 = vmatmul.mubr.f32.gmra.mxu0 %v395
      %v920 = vpop.f32.mrf.mxu0
      %v921 = vadd.f32 %v816, %v920
      %v922 = vpop.f32.mrf.mxu0
      %923 = vmatprep.mubr.f32.mxu0 0.0
      %924 = vmatmul.mubr.f32.gmra.mxu0 %v397
      %v925 = vpop.f32.mrf.mxu0
      %v926 = vadd.f32 %v821, %v925
      %v927 = vpop.f32.mrf.mxu0
      %928 = vmatprep.mubr.f32.mxu0 0.0
      %929 = vmatmul.mubr.f32.gmra.mxu0 %v399
      %v930 = vpop.f32.mrf.mxu0
      %v931 = vadd.f32 %v826, %v930
      %v932 = vpop.f32.mrf.mxu0
      %933 = vmatprep.mubr.f32.mxu0 0.0
      %934 = vmatmul.mubr.f32.gmra.mxu0 %v401
      %v935 = vpop.f32.mrf.mxu0
      %v936 = vadd.f32 %v831, %v935
      %v937 = vpop.f32.mrf.mxu0
      %938 = vmatprep.mubr.f32.mxu0 0.0
      %939 = vmatmul.mubr.f32.gmra.mxu0 %v403
      %v940 = vpop.f32.mrf.mxu0
      %v941 = vadd.f32 %v836, %v940
      %v942 = vpop.f32.mrf.mxu0
      %943 = vdwg.mxu0
      %v944 = vadd.f32 %v906, %v911
      %v945 = vadd.f32 %v944, %v916
      %v946 = vadd.f32 %v945, %v921
      %v947 = vadd.f32 %v946, %v926
      %v948 = vadd.f32 %v947, %v931
      %v949 = vadd.f32 %v948, %v936
      %v950 = vadd.f32 %v949, %v941
      %v951 = vrot.slane %v950, 4
      %v952 = vadd.f32 %v950, %v951
      %v953 = vrot.slane %v952, 2
      %v954 = vadd.f32 %v952, %v953
      %v955 = vrot.slane %v954, 1
      %v956 = vadd.f32 %v954, %v955
      %v957 = vrcp.pop 64.0
      %v958 = vmul.f32 %v956, %v957
      %v959 = vmul.f32 %v906, %v906
      %v960 = vmul.f32 %v911, %v911
      %v961 = vmul.f32 %v916, %v916
      %v962 = vmul.f32 %v921, %v921
      %v963 = vmul.f32 %v926, %v926
      %v964 = vmul.f32 %v931, %v931
      %v965 = vmul.f32 %v936, %v936
      %v966 = vmul.f32 %v941, %v941
      %v967 = vadd.f32 %v959, %v960
      %v968 = vadd.f32 %v967, %v961
      %v969 = vadd.f32 %v968, %v962
      %v970 = vadd.f32 %v969, %v963
      %v971 = vadd.f32 %v970, %v964
      %v972 = vadd.f32 %v971, %v965
      %v973 = vadd.f32 %v972, %v966
      %v974 = vrot.slane %v973, 4
      %v975 = vadd.f32 %v973, %v974
      %v976 = vrot.slane %v975, 2
      %v977 = vadd.f32 %v975, %v976
      %v978 = vrot.slane %v977, 1
      %v979 = vadd.f32 %v977, %v978
      %v980 = vmul.f32 %v979, %v957
      %v981 = vmul.f32 %v958, %v958
      %v982 = vsub.f32 %v980, %v981
      %v983 = vmax.f32 %v982, 0.0
      %v984 = vsub.f32 %v906, %v958
      %v985 = vsub.f32 %v911, %v958
      %v986 = vsub.f32 %v916, %v958
      %v987 = vsub.f32 %v921, %v958
      %v988 = vsub.f32 %v926, %v958
      %v989 = vsub.f32 %v931, %v958
      %v990 = vsub.f32 %v936, %v958
      %v991 = vsub.f32 %v941, %v958
      %v992 = vadd.f32 %v983, 1e-05
      %v993 = vrsqrt.pop %v992
      %v994 = vmul.f32 %v984, %v993
      %v995 = vmul.f32 %v985, %v993
      %v996 = vmul.f32 %v986, %v993
      %v997 = vmul.f32 %v987, %v993
      %v998 = vmul.f32 %v988, %v993
      %v999 = vmul.f32 %v989, %v993
      %v1000 = vmul.f32 %v990, %v993
      %v1001 = vmul.f32 %v991, %v993
      %vm1002 = vcmp.gt.f32.partialorder %v994, 0.0
      %vm1003 = vcmp.gt.f32.partialorder %v995, 0.0
      %vm1004 = vcmp.gt.f32.partialorder %v996, 0.0
      %vm1005 = vcmp.gt.f32.partialorder %v997, 0.0
      %vm1006 = vcmp.gt.f32.partialorder %v998, 0.0
      %vm1007 = vcmp.gt.f32.partialorder %v999, 0.0
      %vm1008 = vcmp.gt.f32.partialorder %v1000, 0.0
      %vm1009 = vcmp.gt.f32.partialorder %v1001, 0.0
      %v1010 = vmul.f32 %v994, 0.01
      %v1011 = vmul.f32 %v995, 0.01
      %v1012 = vmul.f32 %v996, 0.01
      %v1013 = vmul.f32 %v997, 0.01
      %v1014 = vmul.f32 %v998, 0.01
      %v1015 = vmul.f32 %v999, 0.01
      %v1016 = vmul.f32 %v1000, 0.01
      %v1017 = vmul.f32 %v1001, 0.01
      %v1018 = vsel %vm1002, %v994, %v1010
      %v1019 = vsel %vm1003, %v995, %v1011
      %v1020 = vsel %vm1004, %v996, %v1012
      %v1021 = vsel %vm1005, %v997, %v1013
      %v1022 = vsel %vm1006, %v998, %v1014
      %v1023 = vsel %vm1007, %v999, %v1015
      %v1024 = vsel %vm1008, %v1000, %v1016
      %v1025 = vsel %vm1009, %v1001, %v1017
      %vm1034 = vcmask 1040384
      %v1035 = vrot.slane %v1018, 7
      %v1036 = vrot.slane %v1019, 7
      %v1037 = vsel %vm1034, %v1035, %v1036
      %v1038 = vrot.slane %v1020, 7
      %v1039 = vsel %vm1034, %v1036, %v1038
      %v1040 = vrot.slane %v1021, 7
      %v1041 = vsel %vm1034, %v1038, %v1040
      %v1042 = vrot.slane %v1022, 7
      %v1043 = vsel %vm1034, %v1040, %v1042
      %v1044 = vrot.slane %v1023, 7
      %v1045 = vsel %vm1034, %v1042, %v1044
      %v1046 = vrot.slane %v1024, 7
      %v1047 = vsel %vm1034, %v1044, %v1046
      %v1048 = vrot.slane %v1025, 7
      %v1049 = vsel %vm1034, %v1046, %v1048
      %v1059 = vsel %vm1034, 0.0, %v1035
      %v1060 = vsel %vm1034, %v1048, 0.0
      %v1063 = vrot.slane %v1059, 1
      %v1064 = vrot.slane %v1037, 1
      %v1065 = vsel %vm257, %v1063, %v1064
      %v1066 = vrot.slane %v1039, 1
      %v1067 = vsel %vm257, %v1064, %v1066
      %v1068 = vrot.slane %v1041, 1
      %v1069 = vsel %vm257, %v1066, %v1068
      %v1070 = vrot.slane %v1043, 1
      %v1071 = vsel %vm257, %v1068, %v1070
      %v1072 = vrot.slane %v1045, 1
      %v1073 = vsel %vm257, %v1070, %v1072
      %v1074 = vrot.slane %v1047, 1
      %v1075 = vsel %vm257, %v1072, %v1074
      %v1076 = vrot.slane %v1049, 1
      %v1077 = vsel %vm257, %v1074, %v1076
      %v1078 = vrot.slane %v1060, 1
      %v1079 = vsel %vm257, %v1076, %v1078
      %v1088 = vrot.slane %v1059, 2
      %v1089 = vrot.slane %v1037, 2
      %v1090 = vsel %vm283, %v1088, %v1089
      %v1091 = vrot.slane %v1039, 2
      %v1092 = vsel %vm283, %v1089, %v1091
      %v1093 = vrot.slane %v1041, 2
      %v1094 = vsel %vm283, %v1091, %v1093
      %v1095 = vrot.slane %v1043, 2
      %v1096 = vsel %vm283, %v1093, %v1095
      %v1097 = vrot.slane %v1045, 2
      %v1098 = vsel %vm283, %v1095, %v1097
      %v1099 = vrot.slane %v1047, 2
      %v1100 = vsel %vm283, %v1097, %v1099
      %v1101 = vrot.slane %v1049, 2
      %v1102 = vsel %vm283, %v1099, %v1101
      %v1103 = vrot.slane %v1060, 2
      %v1104 = vsel %vm283, %v1101, %v1103
      %v1113 = vrot.slane %v1059, 3
      %v1114 = vrot.slane %v1037, 3
      %v1115 = vsel %vm309, %v1113, %v1114
      %v1116 = vrot.slane %v1039, 3
      %v1117 = vsel %vm309, %v1114, %v1116
      %v1118 = vrot.slane %v1041, 3
      %v1119 = vsel %vm309, %v1116, %v1118
      %v1120 = vrot.slane %v1043, 3
      %v1121 = vsel %vm309, %v1118, %v1120
      %v1122 = vrot.slane %v1045, 3
      %v1123 = vsel %vm309, %v1120, %v1122
      %v1124 = vrot.slane %v1047, 3
      %v1125 = vsel %vm309, %v1122, %v1124
      %v1126 = vrot.slane %v1049, 3
      %v1127 = vsel %vm309, %v1124, %v1126
      %v1128 = vrot.slane %v1060, 3
      %v1129 = vsel %vm309, %v1126, %v1128
      %v1138 = vld [vmem:[%s2 + $0x380] sm:$0xff]
      %v1139 = vld [vmem:[%s2 + $0x388] sm:$0xff]
      %v1140 = vld [vmem:[%s2 + $0x390] sm:$0xff]
      %v1141 = vld [vmem:[%s2 + $0x398] sm:$0xff]
      %v1142 = vld [vmem:[%s2 + $0x3a0] sm:$0xff]
      %v1143 = vld [vmem:[%s2 + $0x3a8] sm:$0xff]
      %v1144 = vld [vmem:[%s2 + $0x3b0] sm:$0xff]
      %v1145 = vld [vmem:[%s2 + $0x3b8] sm:$0xff]
      %v1146 = vld [vmem:[%s2 + $0x3c0] sm:$0xff]
      %v1147 = vld [vmem:[%s2 + $0x3c8] sm:$0xff]
      %v1148 = vld [vmem:[%s2 + $0x3d0] sm:$0xff]
      %v1149 = vld [vmem:[%s2 + $0x3d8] sm:$0xff]
      %v1150 = vld [vmem:[%s2 + $0x3e0] sm:$0xff]
      %v1151 = vld [vmem:[%s2 + $0x3e8] sm:$0xff]
      %v1152 = vld [vmem:[%s2 + $0x3f0] sm:$0xff]
      %v1153 = vld [vmem:[%s2 + $0x3f8] sm:$0xff]
      %v1154 = vld [vmem:[%s2 + $0x400] sm:$0xff]
      %v1155 = vld [vmem:[%s2 + $0x408] sm:$0xff]
      %v1156 = vld [vmem:[%s2 + $0x410] sm:$0xff]
      %v1157 = vld [vmem:[%s2 + $0x418] sm:$0xff]
      %v1158 = vld [vmem:[%s2 + $0x420] sm:$0xff]
      %v1159 = vld [vmem:[%s2 + $0x428] sm:$0xff]
      %v1160 = vld [vmem:[%s2 + $0x430] sm:$0xff]
      %v1161 = vld [vmem:[%s2 + $0x438] sm:$0xff]
      %v1162 = vld [vmem:[%s2 + $0x440] sm:$0xff]
      %v1163 = vld [vmem:[%s2 + $0x448] sm:$0xff]
      %v1164 = vld [vmem:[%s2 + $0x450] sm:$0xff]
      %v1165 = vld [vmem:[%s2 + $0x458] sm:$0xff]
      %v1166 = vld [vmem:[%s2 + $0x460] sm:$0xff]
      %v1167 = vld [vmem:[%s2 + $0x468] sm:$0xff]
      %v1168 = vld [vmem:[%s2 + $0x470] sm:$0xff]
      %v1169 = vld [vmem:[%s2 + $0x478] sm:$0xff]
      %v1170 = vld [vmem:[%s2 + $0x480] sm:$0xff]
      %v1171 = vld [vmem:[%s2 + $0x488] sm:$0xff]
      %v1172 = vld [vmem:[%s2 + $0x490] sm:$0xff]
      %v1173 = vld [vmem:[%s2 + $0x498] sm:$0xff]
      %v1174 = vld [vmem:[%s2 + $0x4a0] sm:$0xff]
      %v1175 = vld [vmem:[%s2 + $0x4a8] sm:$0xff]
      %v1176 = vld [vmem:[%s2 + $0x4b0] sm:$0xff]
      %v1177 = vld [vmem:[%s2 + $0x4b8] sm:$0xff]
      %v1178 = vld [vmem:[%s2 + $0x4c0] sm:$0xff]
      %v1179 = vld [vmem:[%s2 + $0x4c8] sm:$0xff]
      %v1180 = vld [vmem:[%s2 + $0x4d0] sm:$0xff]
      %v1181 = vld [vmem:[%s2 + $0x4d8] sm:$0xff]
      %v1182 = vld [vmem:[%s2 + $0x4e0] sm:$0xff]
      %v1183 = vld [vmem:[%s2 + $0x4e8] sm:$0xff]
      %v1184 = vld [vmem:[%s2 + $0x4f0] sm:$0xff]
      %v1185 = vld [vmem:[%s2 + $0x4f8] sm:$0xff]
      %v1186 = vld [vmem:[%s2 + $0x500] sm:$0xff]
      %v1187 = vld [vmem:[%s2 + $0x508] sm:$0xff]
      %v1188 = vld [vmem:[%s2 + $0x510] sm:$0xff]
      %v1189 = vld [vmem:[%s2 + $0x518] sm:$0xff]
      %v1190 = vld [vmem:[%s2 + $0x520] sm:$0xff]
      %v1191 = vld [vmem:[%s2 + $0x528] sm:$0xff]
      %v1192 = vld [vmem:[%s2 + $0x530] sm:$0xff]
      %v1193 = vld [vmem:[%s2 + $0x538] sm:$0xff]
      %v1194 = vld [vmem:[%s2 + $0x540] sm:$0xff]
      %v1195 = vld [vmem:[%s2 + $0x548] sm:$0xff]
      %v1196 = vld [vmem:[%s2 + $0x550] sm:$0xff]
      %v1197 = vld [vmem:[%s2 + $0x558] sm:$0xff]
      %v1198 = vld [vmem:[%s2 + $0x560] sm:$0xff]
      %v1199 = vld [vmem:[%s2 + $0x568] sm:$0xff]
      %v1200 = vld [vmem:[%s2 + $0x570] sm:$0xff]
      %v1201 = vld [vmem:[%s2 + $0x578] sm:$0xff]
      %1202 = vmatprep.subr.mxu0 0.0
      %1203 = vmatpush1.msra.mxu0 %v1153
      %1204 = vmatprep.subr.mxu0 0.0
      %1205 = vmatpush1.msra.mxu0 %v1152
      %1206 = vmatprep.subr.mxu0 0.0
      %1207 = vmatpush1.msra.mxu0 %v1151
      %1208 = vmatprep.subr.mxu0 0.0
      %1209 = vmatpush1.msra.mxu0 %v1150
      %1210 = vmatprep.subr.mxu0 0.0
      %1211 = vmatpush1.msra.mxu0 %v1149
      %1212 = vmatprep.subr.mxu0 0.0
      %1213 = vmatpush1.msra.mxu0 %v1148
      %1214 = vmatprep.subr.mxu0 0.0
      %1215 = vmatpush1.msra.mxu0 %v1147
      %1216 = vmatprep.subr.mxu0 0.0
      %1217 = vmatpush1.msra.mxu0 %v1146
      %1218 = vmatprep.subr.mxu0 0.0
      %1219 = vmatpush1.msra.mxu0 %v1145
      %1220 = vmatprep.subr.mxu0 0.0
      %1221 = vmatpush1.msra.mxu0 %v1144
      %1222 = vmatprep.subr.mxu0 0.0
      %1223 = vmatpush1.msra.mxu0 %v1143
      %1224 = vmatprep.subr.mxu0 0.0
      %1225 = vmatpush1.msra.mxu0 %v1142
      %1226 = vmatprep.subr.mxu0 0.0
      %1227 = vmatpush1.msra.mxu0 %v1141
      %1228 = vmatprep.subr.mxu0 0.0
      %1229 = vmatpush1.msra.mxu0 %v1140
      %1230 = vmatprep.subr.mxu0 0.0
      %1231 = vmatpush1.msra.mxu0 %v1139
      %1232 = vmatprep.subr.mxu0 0.0
      %1233 = vmatpush1.msra.mxu0 %v1138
      %1234 = vmatprep.subr.mxu0 0.0
      %1235 = vmatpush2.msra.mxu0 %v1169
      %1236 = vmatprep.subr.mxu0 0.0
      %1237 = vmatpush2.msra.mxu0 %v1168
      %1238 = vmatprep.subr.mxu0 0.0
      %1239 = vmatpush2.msra.mxu0 %v1167
      %1240 = vmatprep.subr.mxu0 0.0
      %1241 = vmatpush2.msra.mxu0 %v1166
      %1242 = vmatprep.subr.mxu0 0.0
      %1243 = vmatpush2.msra.mxu0 %v1165
      %1244 = vmatprep.subr.mxu0 0.0
      %1245 = vmatpush2.msra.mxu0 %v1164
      %1246 = vmatprep.subr.mxu0 0.0
      %1247 = vmatpush2.msra.mxu0 %v1163
      %1248 = vmatprep.subr.mxu0 0.0
      %1249 = vmatpush2.msra.mxu0 %v1162
      %1250 = vmatprep.subr.mxu0 0.0
      %1251 = vmatpush2.msra.mxu0 %v1161
      %1252 = vmatprep.subr.mxu0 0.0
      %1253 = vmatpush2.msra.mxu0 %v1160
      %1254 = vmatprep.subr.mxu0 0.0
      %1255 = vmatpush2.msra.mxu0 %v1159
      %1256 = vmatprep.subr.mxu0 0.0
      %1257 = vmatpush2.msra.mxu0 %v1158
      %1258 = vmatprep.subr.mxu0 0.0
      %1259 = vmatpush2.msra.mxu0 %v1157
      %1260 = vmatprep.subr.mxu0 0.0
      %1261 = vmatpush2.msra.mxu0 %v1156
      %1262 = vmatprep.subr.mxu0 0.0
      %1263 = vmatpush2.msra.mxu0 %v1155
      %1264 = vmatprep.subr.mxu0 0.0
      %1265 = vmatpush2.msra.mxu0 %v1154
      %1266 = vmatprep.mubr.f32.mxu0 %v1065
      %1267 = vmatmul.mubr.f32.gmra.mxu0 %v1059
      %v1268 = vpop.f32.mrf.mxu0
      %v1269 = vadd.f32 0.0, %v1268
      %v1270 = vpop.f32.mrf.mxu0
      %1271 = vmatprep.mubr.f32.mxu0 %v1067
      %1272 = vmatmul.mubr.f32.gmra.mxu0 %v1037
      %v1273 = vpop.f32.mrf.mxu0
      %v1274 = vadd.f32 0.0, %v1273
      %v1275 = vpop.f32.mrf.mxu0
      %1276 = vmatprep.mubr.f32.mxu0 %v1069
      %1277 = vmatmul.mubr.f32.gmra.mxu0 %v1039
      %v1278 = vpop.f32.mrf.mxu0
      %v1279 = vadd.f32 0.0, %v1278
      %v1280 = vpop.f32.mrf.mxu0
      %1281 = vmatprep.mubr.f32.mxu0 %v1071
      %1282 = vmatmul.mubr.f32.gmra.mxu0 %v1041
      %v1283 = vpop.f32.mrf.mxu0
      %v1284 = vadd.f32 0.0, %v1283
      %v1285 = vpop.f32.mrf.mxu0
      %1286 = vmatprep.mubr.f32.mxu0 %v1073
      %1287 = vmatmul.mubr.f32.gmra.mxu0 %v1043
      %v1288 = vpop.f32.mrf.mxu0
      %v1289 = vadd.f32 0.0, %v1288
      %v1290 = vpop.f32.mrf.mxu0
      %1291 = vmatprep.mubr.f32.mxu0 %v1075
      %1292 = vmatmul.mubr.f32.gmra.mxu0 %v1045
      %v1293 = vpop.f32.mrf.mxu0
      %v1294 = vadd.f32 0.0, %v1293
      %v1295 = vpop.f32.mrf.mxu0
      %1296 = vmatprep.mubr.f32.mxu0 %v1077
      %1297 = vmatmul.mubr.f32.gmra.mxu0 %v1047
      %v1298 = vpop.f32.mrf.mxu0
      %v1299 = vadd.f32 0.0, %v1298
      %v1300 = vpop.f32.mrf.mxu0
      %1301 = vmatprep.mubr.f32.mxu0 %v1079
      %1302 = vmatmul.mubr.f32.gmra.mxu0 %v1049
      %v1303 = vpop.f32.mrf.mxu0
      %v1304 = vadd.f32 0.0, %v1303
      %v1305 = vpop.f32.mrf.mxu0
      %1306 = vdwg.mxu0
      %1307 = vmatprep.subr.mxu0 0.0
      %1308 = vmatpush1.msra.mxu0 %v1185
      %1309 = vmatprep.subr.mxu0 0.0
      %1310 = vmatpush1.msra.mxu0 %v1184
      %1311 = vmatprep.subr.mxu0 0.0
      %1312 = vmatpush1.msra.mxu0 %v1183
      %1313 = vmatprep.subr.mxu0 0.0
      %1314 = vmatpush1.msra.mxu0 %v1182
      %1315 = vmatprep.subr.mxu0 0.0
      %1316 = vmatpush1.msra.mxu0 %v1181
      %1317 = vmatprep.subr.mxu0 0.0
      %1318 = vmatpush1.msra.mxu0 %v1180
      %1319 = vmatprep.subr.mxu0 0.0
      %1320 = vmatpush1.msra.mxu0 %v1179
      %1321 = vmatprep.subr.mxu0 0.0
      %1322 = vmatpush1.msra.mxu0 %v1178
      %1323 = vmatprep.subr.mxu0 0.0
      %1324 = vmatpush1.msra.mxu0 %v1177
      %1325 = vmatprep.subr.mxu0 0.0
      %1326 = vmatpush1.msra.mxu0 %v1176
      %1327 = vmatprep.subr.mxu0 0.0
      %1328 = vmatpush1.msra.mxu0 %v1175
      %1329 = vmatprep.subr.mxu0 0.0
      %1330 = vmatpush1.msra.mxu0 %v1174
      %1331 = vmatprep.subr.mxu0 0.0
      %1332 = vmatpush1.msra.mxu0 %v1173
      %1333 = vmatprep.subr.mxu0 0.0
      %1334 = vmatpush1.msra.mxu0 %v1172
      %1335 = vmatprep.subr.mxu0 0.0
      %1336 = vmatpush1.msra.mxu0 %v1171
      %1337 = vmatprep.subr.mxu0 0.0
      %1338 = vmatpush1.msra.mxu0 %v1170
      %1339 = vmatprep.subr.mxu0 0.0
      %1340 = vmatpush2.msra.mxu0 %v1201
      %1341 = vmatprep.subr.mxu0 0.0
      %1342 = vmatpush2.msra.mxu0 %v1200
      %1343 = vmatprep.subr.mxu0 0.0
      %1344 = vmatpush2.msra.mxu0 %v1199
      %1345 = vmatprep.subr.mxu0 0.0
      %1346 = vmatpush2.msra.mxu0 %v1198
      %1347 = vmatprep.subr.mxu0 0.0
      %1348 = vmatpush2.msra.mxu0 %v1197
      %1349 = vmatprep.subr.mxu0 0.0
      %1350 = vmatpush2.msra.mxu0 %v1196
      %1351 = vmatprep.subr.mxu0 0.0
      %1352 = vmatpush2.msra.mxu0 %v1195
      %1353 = vmatprep.subr.mxu0 0.0
      %1354 = vmatpush2.msra.mxu0 %v1194
      %1355 = vmatprep.subr.mxu0 0.0
      %1356 = vmatpush2.msra.mxu0 %v1193
      %1357 = vmatprep.subr.mxu0 0.0
      %1358 = vmatpush2.msra.mxu0 %v1192
      %1359 = vmatprep.subr.mxu0 0.0
      %1360 = vmatpush2.msra.mxu0 %v1191
      %1361 = vmatprep.subr.mxu0 0.0
      %1362 = vmatpush2.msra.mxu0 %v1190
      %1363 = vmatprep.subr.mxu0 0.0
      %1364 = vmatpush2.msra.mxu0 %v1189
      %1365 = vmatprep.subr.mxu0 0.0
      %1366 = vmatpush2.msra.mxu0 %v1188
      %1367 = vmatprep.subr.mxu0 0.0
      %1368 = vmatpush2.msra.mxu0 %v1187
      %1369 = vmatprep.subr.mxu0 0.0
      %1370 = vmatpush2.msra.mxu0 %v1186
      %1371 = vmatprep.mubr.f32.mxu0 %v1115
      %1372 = vmatmul.mubr.f32.gmra.mxu0 %v1090
      %v1373 = vpop.f32.mrf.mxu0
      %v1374 = vadd.f32 %v1269, %v1373
      %v1375 = vpop.f32.mrf.mxu0
      %1376 = vmatprep.mubr.f32.mxu0 %v1117
      %1377 = vmatmul.mubr.f32.gmra.mxu0 %v1092
      %v1378 = vpop.f32.mrf.mxu0
      %v1379 = vadd.f32 %v1274, %v1378
      %v1380 = vpop.f32.mrf.mxu0
      %1381 = vmatprep.mubr.f32.mxu0 %v1119
      %1382 = vmatmul.mubr.f32.gmra.mxu0 %v1094
      %v1383 = vpop.f32.mrf.mxu0
      %v1384 = vadd.f32 %v1279, %v1383
      %v1385 = vpop.f32.mrf.mxu0
      %1386 = vmatprep.mubr.f32.mxu0 %v1121
      %1387 = vmatmul.mubr.f32.gmra.mxu0 %v1096
      %v1388 = vpop.f32.mrf.mxu0
      %v1389 = vadd.f32 %v1284, %v1388
      %v1390 = vpop.f32.mrf.mxu0
      %1391 = vmatprep.mubr.f32.mxu0 %v1123
      %1392 = vmatmul.mubr.f32.gmra.mxu0 %v1098
      %v1393 = vpop.f32.mrf.mxu0
      %v1394 = vadd.f32 %v1289, %v1393
      %v1395 = vpop.f32.mrf.mxu0
      %1396 = vmatprep.mubr.f32.mxu0 %v1125
      %1397 = vmatmul.mubr.f32.gmra.mxu0 %v1100
      %v1398 = vpop.f32.mrf.mxu0
      %v1399 = vadd.f32 %v1294, %v1398
      %v1400 = vpop.f32.mrf.mxu0
      %1401 = vmatprep.mubr.f32.mxu0 %v1127
      %1402 = vmatmul.mubr.f32.gmra.mxu0 %v1102
      %v1403 = vpop.f32.mrf.mxu0
      %v1404 = vadd.f32 %v1299, %v1403
      %v1405 = vpop.f32.mrf.mxu0
      %1406 = vmatprep.mubr.f32.mxu0 %v1129
      %1407 = vmatmul.mubr.f32.gmra.mxu0 %v1104
      %v1408 = vpop.f32.mrf.mxu0
      %v1409 = vadd.f32 %v1304, %v1408
      %v1410 = vpop.f32.mrf.mxu0
      %1411 = vdwg.mxu0
      %v1412 = vld [vmem:[%s2 + $0x580] sm:$0xff]
      %v1413 = vld [vmem:[%s2 + $0x588] sm:$0xff]
      %v1414 = vld [vmem:[%s2 + $0x590] sm:$0xff]
      %v1415 = vld [vmem:[%s2 + $0x598] sm:$0xff]
      %vm1416 = vcmask 523264
      %v1418 = vsel %vm1416, %v1412, 0
      %v1421 = vsel %vm1416, %v1413, 0
      %v1424 = vsel %vm1416, %v1414, 0
      %v1427 = vsel %vm1416, %v1415, 0
      %1429 = vmatprep.subr.mxu0 0.0
      %1430 = vmatpush1.msra.mxu0 0.0
      %1431 = vmatprep.subr.mxu0 0.0
      %1432 = vmatpush1.msra.mxu0 0.0
      %1433 = vmatprep.subr.mxu0 0.0
      %1434 = vmatpush1.msra.mxu0 0.0
      %1435 = vmatprep.subr.mxu0 0.0
      %1436 = vmatpush1.msra.mxu0 0.0
      %1437 = vmatprep.subr.mxu0 0.0
      %1438 = vmatpush1.msra.mxu0 0.0
      %1439 = vmatprep.subr.mxu0 0.0
      %1440 = vmatpush1.msra.mxu0 0.0
      %1441 = vmatprep.subr.mxu0 0.0
      %1442 = vmatpush1.msra.mxu0 0.0
      %1443 = vmatprep.subr.mxu0 0.0
      %1444 = vmatpush1.msra.mxu0 0.0
      %1445 = vmatprep.subr.mxu0 0.0
      %1446 = vmatpush1.msra.mxu0 %v1409
      %1447 = vmatprep.subr.mxu0 0.0
      %1448 = vmatpush1.msra.mxu0 %v1404
      %1449 = vmatprep.subr.mxu0 0.0
      %1450 = vmatpush1.msra.mxu0 %v1399
      %1451 = vmatprep.subr.mxu0 0.0
      %1452 = vmatpush1.msra.mxu0 %v1394
      %1453 = vmatprep.subr.mxu0 0.0
      %1454 = vmatpush1.msra.mxu0 %v1389
      %1455 = vmatprep.subr.mxu0 0.0
      %1456 = vmatpush1.msra.mxu0 %v1384
      %1457 = vmatprep.subr.mxu0 0.0
      %1458 = vmatpush1.msra.mxu0 %v1379
      %1459 = vmatprep.subr.mxu0 0.0
      %1460 = vmatpush1.msra.mxu0 %v1374
      %1461 = vmatprep.subr.mxu0 0.0
      %1462 = vmatpush2.msra.mxu0 0.0
      %1463 = vmatprep.subr.mxu0 0.0
      %1464 = vmatpush2.msra.mxu0 0.0
      %1465 = vmatprep.subr.mxu0 0.0
      %1466 = vmatpush2.msra.mxu0 0.0
      %1467 = vmatprep.subr.mxu0 0.0
      %1468 = vmatpush2.msra.mxu0 0.0
      %1469 = vmatprep.subr.mxu0 0.0
      %1470 = vmatpush2.msra.mxu0 0.0
      %1471 = vmatprep.subr.mxu0 0.0
      %1472 = vmatpush2.msra.mxu0 0.0
      %1473 = vmatprep.subr.mxu0 0.0
      %1474 = vmatpush2.msra.mxu0 0.0
      %1475 = vmatprep.subr.mxu0 0.0
      %1476 = vmatpush2.msra.mxu0 0.0
      %1477 = vmatprep.subr.mxu0 0.0
      %1478 = vmatpush2.msra.mxu0 0.0
      %1479 = vmatprep.subr.mxu0 0.0
      %1480 = vmatpush2.msra.mxu0 0.0
      %1481 = vmatprep.subr.mxu0 0.0
      %1482 = vmatpush2.msra.mxu0 0.0
      %1483 = vmatprep.subr.mxu0 0.0
      %1484 = vmatpush2.msra.mxu0 0.0
      %1485 = vmatprep.subr.mxu0 0.0
      %1486 = vmatpush2.msra.mxu0 0.0
      %1487 = vmatprep.subr.mxu0 0.0
      %1488 = vmatpush2.msra.mxu0 0.0
      %1489 = vmatprep.subr.mxu0 0.0
      %1490 = vmatpush2.msra.mxu0 0.0
      %1491 = vmatprep.subr.mxu0 0.0
      %1492 = vmatpush2.msra.mxu0 0.0
      %1493 = vmatprep.mubr.f32.mxu0 0.0
      %1494 = vmatmul.mubr.f32.gmra.mxu0 %v1418
      %v1495 = vpop.f32.mrf.mxu0
      %v1496 = vadd.f32 0.0, %v1495
      %v1497 = vpop.f32.mrf.mxu0
      %1498 = vmatprep.mubr.f32.mxu0 0.0
      %1499 = vmatmul.mubr.f32.gmra.mxu0 %v1421
      %v1500 = vpop.f32.mrf.mxu0
      %v1501 = vadd.f32 0.0, %v1500
      %v1502 = vpop.f32.mrf.mxu0
      %1503 = vmatprep.mubr.f32.mxu0 0.0
      %1504 = vmatmul.mubr.f32.gmra.mxu0 %v1424
      %v1505 = vpop.f32.mrf.mxu0
      %v1506 = vadd.f32 0.0, %v1505
      %v1507 = vpop.f32.mrf.mxu0
      %1508 = vmatprep.mubr.f32.mxu0 0.0
      %1509 = vmatmul.mubr.f32.gmra.mxu0 %v1427
      %v1510 = vpop.f32.mrf.mxu0
      %v1511 = vadd.f32 0.0, %v1510
      %v1512 = vpop.f32.mrf.mxu0
      %1513 = vdwg.mxu0
      %v1514 = vadd.f32 %v1496, %v1501
      %v1515 = vadd.f32 %v1514, %v1506
      %v1516 = vadd.f32 %v1515, %v1511
      %v1517 = vrot.slane %v1516, 4
      %v1518 = vadd.f32 %v1516, %v1517
      %v1519 = vrot.slane %v1518, 2
      %v1520 = vadd.f32 %v1518, %v1519
      %v1521 = vrot.slane %v1520, 1
      %v1522 = vadd.f32 %v1520, %v1521
      %v1523 = vrcp.pop 32.0
      %v1524 = vmul.f32 %v1522, %v1523
      %v1525 = vmul.f32 %v1496, %v1496
      %v1526 = vmul.f32 %v1501, %v1501
      %v1527 = vmul.f32 %v1506, %v1506
      %v1528 = vmul.f32 %v1511, %v1511
      %v1529 = vadd.f32 %v1525, %v1526
      %v1530 = vadd.f32 %v1529, %v1527
      %v1531 = vadd.f32 %v1530, %v1528
      %v1532 = vrot.slane %v1531, 4
      %v1533 = vadd.f32 %v1531, %v1532
      %v1534 = vrot.slane %v1533, 2
      %v1535 = vadd.f32 %v1533, %v1534
      %v1536 = vrot.slane %v1535, 1
      %v1537 = vadd.f32 %v1535, %v1536
      %v1538 = vmul.f32 %v1537, %v1523
      %v1539 = vmul.f32 %v1524, %v1524
      %v1540 = vsub.f32 %v1538, %v1539
      %v1541 = vmax.f32 %v1540, 0.0
      %v1542 = vsub.f32 %v1496, %v1524
      %v1543 = vsub.f32 %v1501, %v1524
      %v1544 = vsub.f32 %v1506, %v1524
      %v1545 = vsub.f32 %v1511, %v1524
      %v1546 = vadd.f32 %v1541, 1e-05
      %v1547 = vrsqrt.pop %v1546
      %v1548 = vmul.f32 %v1542, %v1547
      %v1549 = vmul.f32 %v1543, %v1547
      %v1550 = vmul.f32 %v1544, %v1547
      %v1551 = vmul.f32 %v1545, %v1547
      %vm1552 = vcmp.gt.f32.partialorder %v1548, 0.0
      %vm1553 = vcmp.gt.f32.partialorder %v1549, 0.0
      %vm1554 = vcmp.gt.f32.partialorder %v1550, 0.0
      %vm1555 = vcmp.gt.f32.partialorder %v1551, 0.0
      %v1556 = vmul.f32 %v1548, 0.01
      %v1557 = vmul.f32 %v1549, 0.01
      %v1558 = vmul.f32 %v1550, 0.01
      %v1559 = vmul.f32 %v1551, 0.01
      %v1560 = vsel %vm1552, %v1548, %v1556
      %v1561 = vsel %vm1553, %v1549, %v1557
      %v1562 = vsel %vm1554, %v1550, %v1558
      %v1563 = vsel %vm1555, %v1551, %v1559
      %v1568 = vrot.slane %v1560, 7
      %v1569 = vrot.slane %v1561, 7
      %v1570 = vsel %vm1034, %v1568, %v1569
      %v1571 = vrot.slane %v1562, 7
      %v1572 = vsel %vm1034, %v1569, %v1571
      %v1573 = vrot.slane %v1563, 7
      %v1574 = vsel %vm1034, %v1571, %v1573
      %v1580 = vsel %vm1034, 0.0, %v1568
      %v1581 = vsel %vm1034, %v1573, 0.0
      %v1584 = vrot.slane %v1580, 1
      %v1585 = vrot.slane %v1570, 1
      %v1586 = vsel %vm257, %v1584, %v1585
      %v1587 = vrot.slane %v1572, 1
      %v1588 = vsel %vm257, %v1585, %v1587
      %v1589 = vrot.slane %v1574, 1
      %v1590 = vsel %vm257, %v1587, %v1589
      %v1591 = vrot.slane %v1581, 1
      %v1592 = vsel %vm257, %v1589, %v1591
      %v1597 = vrot.slane %v1580, 2
      %v1598 = vrot.slane %v1570, 2
      %v1599 = vsel %vm283, %v1597, %v1598
      %v1600 = vrot.slane %v1572, 2
      %v1601 = vsel %vm283, %v1598, %v1600
      %v1602 = vrot.slane %v1574, 2
      %v1603 = vsel %vm283, %v1600, %v1602
      %v1604 = vrot.slane %v1581, 2
      %v1605 = vsel %vm283, %v1602, %v1604
      %v1610 = vrot.slane %v1580, 3
      %v1611 = vrot.slane %v1570, 3
      %v1612 = vsel %vm309, %v1610, %v1611
      %v1613 = vrot.slane %v1572, 3
      %v1614 = vsel %vm309, %v1611, %v1613
      %v1615 = vrot.slane %v1574, 3
      %v1616 = vsel %vm309, %v1613, %v1615
      %v1617 = vrot.slane %v1581, 3
      %v1618 = vsel %vm309, %v1615, %v1617
      %v1623 = vld [vmem:[%s2 + $0x5a0] sm:$0xff]
      %v1624 = vld [vmem:[%s2 + $0x5a8] sm:$0xff]
      %v1625 = vld [vmem:[%s2 + $0x5b0] sm:$0xff]
      %v1626 = vld [vmem:[%s2 + $0x5b8] sm:$0xff]
      %v1627 = vld [vmem:[%s2 + $0x5c0] sm:$0xff]
      %v1628 = vld [vmem:[%s2 + $0x5c8] sm:$0xff]
      %v1629 = vld [vmem:[%s2 + $0x5d0] sm:$0xff]
      %v1630 = vld [vmem:[%s2 + $0x5d8] sm:$0xff]
      %v1631 = vld [vmem:[%s2 + $0x5e0] sm:$0xff]
      %v1632 = vld [vmem:[%s2 + $0x5e8] sm:$0xff]
      %v1633 = vld [vmem:[%s2 + $0x5f0] sm:$0xff]
      %v1634 = vld [vmem:[%s2 + $0x5f8] sm:$0xff]
      %v1635 = vld [vmem:[%s2 + $0x600] sm:$0xff]
      %v1636 = vld [vmem:[%s2 + $0x608] sm:$0xff]
      %v1637 = vld [vmem:[%s2 + $0x610] sm:$0xff]
      %v1638 = vld [vmem:[%s2 + $0x618] sm:$0xff]
      %v1639 = vld [vmem:[%s2 + $0x620] sm:$0xff]
      %v1640 = vld [vmem:[%s2 + $0x628] sm:$0xff]
      %v1641 = vld [vmem:[%s2 + $0x630] sm:$0xff]
      %v1642 = vld [vmem:[%s2 + $0x638] sm:$0xff]
      %v1643 = vld [vmem:[%s2 + $0x640] sm:$0xff]
      %v1644 = vld [vmem:[%s2 + $0x648] sm:$0xff]
      %v1645 = vld [vmem:[%s2 + $0x650] sm:$0xff]
      %v1646 = vld [vmem:[%s2 + $0x658] sm:$0xff]
      %v1647 = vld [vmem:[%s2 + $0x660] sm:$0xff]
      %v1648 = vld [vmem:[%s2 + $0x668] sm:$0xff]
      %v1649 = vld [vmem:[%s2 + $0x670] sm:$0xff]
      %v1650 = vld [vmem:[%s2 + $0x678] sm:$0xff]
      %v1651 = vld [vmem:[%s2 + $0x680] sm:$0xff]
      %v1652 = vld [vmem:[%s2 + $0x688] sm:$0xff]
      %v1653 = vld [vmem:[%s2 + $0x690] sm:$0xff]
      %v1654 = vld [vmem:[%s2 + $0x698] sm:$0xff]
      %v1655 = vld [vmem:[%s2 + $0x6a0] sm:$0xff]
      %v1656 = vld [vmem:[%s2 + $0x6a8] sm:$0xff]
      %v1657 = vld [vmem:[%s2 + $0x6b0] sm:$0xff]
      %v1658 = vld [vmem:[%s2 + $0x6b8] sm:$0xff]
      %v1659 = vld [vmem:[%s2 + $0x6c0] sm:$0xff]
      %v1660 = vld [vmem:[%s2 + $0x6c8] sm:$0xff]
      %v1661 = vld [vmem:[%s2 + $0x6d0] sm:$0xff]
      %v1662 = vld [vmem:[%s2 + $0x6d8] sm:$0xff]
      %v1663 = vld [vmem:[%s2 + $0x6e0] sm:$0xff]
      %v1664 = vld [vmem:[%s2 + $0x6e8] sm:$0xff]
      %v1665 = vld [vmem:[%s2 + $0x6f0] sm:$0xff]
      %v1666 = vld [vmem:[%s2 + $0x6f8] sm:$0xff]
      %v1667 = vld [vmem:[%s2 + $0x700] sm:$0xff]
      %v1668 = vld [vmem:[%s2 + $0x708] sm:$0xff]
      %v1669 = vld [vmem:[%s2 + $0x710] sm:$0xff]
      %v1670 = vld [vmem:[%s2 + $0x718] sm:$0xff]
      %v1671 = vld [vmem:[%s2 + $0x720] sm:$0xff]
      %v1672 = vld [vmem:[%s2 + $0x728] sm:$0xff]
      %v1673 = vld [vmem:[%s2 + $0x730] sm:$0xff]
      %v1674 = vld [vmem:[%s2 + $0x738] sm:$0xff]
      %v1675 = vld [vmem:[%s2 + $0x740] sm:$0xff]
      %v1676 = vld [vmem:[%s2 + $0x748] sm:$0xff]
      %v1677 = vld [vmem:[%s2 + $0x750] sm:$0xff]
      %v1678 = vld [vmem:[%s2 + $0x758] sm:$0xff]
      %v1679 = vld [vmem:[%s2 + $0x760] sm:$0xff]
      %v1680 = vld [vmem:[%s2 + $0x768] sm:$0xff]
      %v1681 = vld [vmem:[%s2 + $0x770] sm:$0xff]
      %v1682 = vld [vmem:[%s2 + $0x778] sm:$0xff]
      %v1683 = vld [vmem:[%s2 + $0x780] sm:$0xff]
      %v1684 = vld [vmem:[%s2 + $0x788] sm:$0xff]
      %v1685 = vld [vmem:[%s2 + $0x790] sm:$0xff]
      %v1686 = vld [vmem:[%s2 + $0x798] sm:$0xff]
      %1687 = vmatprep.subr.mxu0 0.0
      %1688 = vmatpush1.msra.mxu0 %v1638
      %1689 = vmatprep.subr.mxu0 0.0
      %1690 = vmatpush1.msra.mxu0 %v1637
      %1691 = vmatprep.subr.mxu0 0.0
      %1692 = vmatpush1.msra.mxu0 %v1636
      %1693 = vmatprep.subr.mxu0 0.0
      %1694 = vmatpush1.msra.mxu0 %v1635
      %1695 = vmatprep.subr.mxu0 0.0
      %1696 = vmatpush1.msra.mxu0 %v1634
      %1697 = vmatprep.subr.mxu0 0.0
      %1698 = vmatpush1.msra.mxu0 %v1633
      %1699 = vmatprep.subr.mxu0 0.0
      %1700 = vmatpush1.msra.mxu0 %v1632
      %1701 = vmatprep.subr.mxu0 0.0
      %1702 = vmatpush1.msra.mxu0 %v1631
      %1703 = vmatprep.subr.mxu0 0.0
      %1704 = vmatpush1.msra.mxu0 %v1630
      %1705 = vmatprep.subr.mxu0 0.0
      %1706 = vmatpush1.msra.mxu0 %v1629
      %1707 = vmatprep.subr.mxu0 0.0
      %1708 = vmatpush1.msra.mxu0 %v1628
      %1709 = vmatprep.subr.mxu0 0.0
      %1710 = vmatpush1.msra.mxu0 %v1627
      %1711 = vmatprep.subr.mxu0 0.0
      %1712 = vmatpush1.msra.mxu0 %v1626
      %1713 = vmatprep.subr.mxu0 0.0
      %1714 = vmatpush1.msra.mxu0 %v1625
      %1715 = vmatprep.subr.mxu0 0.0
      %1716 = vmatpush1.msra.mxu0 %v1624
      %1717 = vmatprep.subr.mxu0 0.0
      %1718 = vmatpush1.msra.mxu0 %v1623
      %1719 = vmatprep.subr.mxu0 0.0
      %1720 = vmatpush2.msra.mxu0 %v1654
      %1721 = vmatprep.subr.mxu0 0.0
      %1722 = vmatpush2.msra.mxu0 %v1653
      %1723 = vmatprep.subr.mxu0 0.0
      %1724 = vmatpush2.msra.mxu0 %v1652
      %1725 = vmatprep.subr.mxu0 0.0
      %1726 = vmatpush2.msra.mxu0 %v1651
      %1727 = vmatprep.subr.mxu0 0.0
      %1728 = vmatpush2.msra.mxu0 %v1650
      %1729 = vmatprep.subr.mxu0 0.0
      %1730 = vmatpush2.msra.mxu0 %v1649
      %1731 = vmatprep.subr.mxu0 0.0
      %1732 = vmatpush2.msra.mxu0 %v1648
      %1733 = vmatprep.subr.mxu0 0.0
      %1734 = vmatpush2.msra.mxu0 %v1647
      %1735 = vmatprep.subr.mxu0 0.0
      %1736 = vmatpush2.msra.mxu0 %v1646
      %1737 = vmatprep.subr.mxu0 0.0
      %1738 = vmatpush2.msra.mxu0 %v1645
      %1739 = vmatprep.subr.mxu0 0.0
      %1740 = vmatpush2.msra.mxu0 %v1644
      %1741 = vmatprep.subr.mxu0 0.0
      %1742 = vmatpush2.msra.mxu0 %v1643
      %1743 = vmatprep.subr.mxu0 0.0
      %1744 = vmatpush2.msra.mxu0 %v1642
      %1745 = vmatprep.subr.mxu0 0.0
      %1746 = vmatpush2.msra.mxu0 %v1641
      %1747 = vmatprep.subr.mxu0 0.0
      %1748 = vmatpush2.msra.mxu0 %v1640
      %1749 = vmatprep.subr.mxu0 0.0
      %1750 = vmatpush2.msra.mxu0 %v1639
      %1751 = vmatprep.mubr.f32.mxu0 %v1586
      %1752 = vmatmul.mubr.f32.gmra.mxu0 %v1580
      %v1753 = vpop.f32.mrf.mxu0
      %v1754 = vadd.f32 0.0, %v1753
      %v1755 = vpop.f32.mrf.mxu0
      %1756 = vmatprep.mubr.f32.mxu0 %v1588
      %1757 = vmatmul.mubr.f32.gmra.mxu0 %v1570
      %v1758 = vpop.f32.mrf.mxu0
      %v1759 = vadd.f32 0.0, %v1758
      %v1760 = vpop.f32.mrf.mxu0
      %1761 = vmatprep.mubr.f32.mxu0 %v1590
      %1762 = vmatmul.mubr.f32.gmra.mxu0 %v1572
      %v1763 = vpop.f32.mrf.mxu0
      %v1764 = vadd.f32 0.0, %v1763
      %v1765 = vpop.f32.mrf.mxu0
      %1766 = vmatprep.mubr.f32.mxu0 %v1592
      %1767 = vmatmul.mubr.f32.gmra.mxu0 %v1574
      %v1768 = vpop.f32.mrf.mxu0
      %v1769 = vadd.f32 0.0, %v1768
      %v1770 = vpop.f32.mrf.mxu0
      %1771 = vdwg.mxu0
      %1772 = vmatprep.subr.mxu0 0.0
      %1773 = vmatpush1.msra.mxu0 %v1670
      %1774 = vmatprep.subr.mxu0 0.0
      %1775 = vmatpush1.msra.mxu0 %v1669
      %1776 = vmatprep.subr.mxu0 0.0
      %1777 = vmatpush1.msra.mxu0 %v1668
      %1778 = vmatprep.subr.mxu0 0.0
      %1779 = vmatpush1.msra.mxu0 %v1667
      %1780 = vmatprep.subr.mxu0 0.0
      %1781 = vmatpush1.msra.mxu0 %v1666
      %1782 = vmatprep.subr.mxu0 0.0
      %1783 = vmatpush1.msra.mxu0 %v1665
      %1784 = vmatprep.subr.mxu0 0.0
      %1785 = vmatpush1.msra.mxu0 %v1664
      %1786 = vmatprep.subr.mxu0 0.0
      %1787 = vmatpush1.msra.mxu0 %v1663
      %1788 = vmatprep.subr.mxu0 0.0
      %1789 = vmatpush1.msra.mxu0 %v1662
      %1790 = vmatprep.subr.mxu0 0.0
      %1791 = vmatpush1.msra.mxu0 %v1661
      %1792 = vmatprep.subr.mxu0 0.0
      %1793 = vmatpush1.msra.mxu0 %v1660
      %1794 = vmatprep.subr.mxu0 0.0
      %1795 = vmatpush1.msra.mxu0 %v1659
      %1796 = vmatprep.subr.mxu0 0.0
      %1797 = vmatpush1.msra.mxu0 %v1658
      %1798 = vmatprep.subr.mxu0 0.0
      %1799 = vmatpush1.msra.mxu0 %v1657
      %1800 = vmatprep.subr.mxu0 0.0
      %1801 = vmatpush1.msra.mxu0 %v1656
      %1802 = vmatprep.subr.mxu0 0.0
      %1803 = vmatpush1.msra.mxu0 %v1655
      %1804 = vmatprep.subr.mxu0 0.0
      %1805 = vmatpush2.msra.mxu0 %v1686
      %1806 = vmatprep.subr.mxu0 0.0
      %1807 = vmatpush2.msra.mxu0 %v1685
      %1808 = vmatprep.subr.mxu0 0.0
      %1809 = vmatpush2.msra.mxu0 %v1684
      %1810 = vmatprep.subr.mxu0 0.0
      %1811 = vmatpush2.msra.mxu0 %v1683
      %1812 = vmatprep.subr.mxu0 0.0
      %1813 = vmatpush2.msra.mxu0 %v1682
      %1814 = vmatprep.subr.mxu0 0.0
      %1815 = vmatpush2.msra.mxu0 %v1681
      %1816 = vmatprep.subr.mxu0 0.0
      %1817 = vmatpush2.msra.mxu0 %v1680
      %1818 = vmatprep.subr.mxu0 0.0
      %1819 = vmatpush2.msra.mxu0 %v1679
      %1820 = vmatprep.subr.mxu0 0.0
      %1821 = vmatpush2.msra.mxu0 %v1678
      %1822 = vmatprep.subr.mxu0 0.0
      %1823 = vmatpush2.msra.mxu0 %v1677
      %1824 = vmatprep.subr.mxu0 0.0
      %1825 = vmatpush2.msra.mxu0 %v1676
      %1826 = vmatprep.subr.mxu0 0.0
      %1827 = vmatpush2.msra.mxu0 %v1675
      %1828 = vmatprep.subr.mxu0 0.0
      %1829 = vmatpush2.msra.mxu0 %v1674
      %1830 = vmatprep.subr.mxu0 0.0
      %1831 = vmatpush2.msra.mxu0 %v1673
      %1832 = vmatprep.subr.mxu0 0.0
      %1833 = vmatpush2.msra.mxu0 %v1672
      %1834 = vmatprep.subr.mxu0 0.0
      %1835 = vmatpush2.msra.mxu0 %v1671
      %1836 = vmatprep.mubr.f32.mxu0 %v1612
      %1837 = vmatmul.mubr.f32.gmra.mxu0 %v1599
      %v1838 = vpop.f32.mrf.mxu0
      %v1839 = vadd.f32 %v1754, %v1838
      %v1840 = vpop.f32.mrf.mxu0
      %1841 = vmatprep.mubr.f32.mxu0 %v1614
      %1842 = vmatmul.mubr.f32.gmra.mxu0 %v1601
      %v1843 = vpop.f32.mrf.mxu0
      %v1844 = vadd.f32 %v1759, %v1843
      %v1845 = vpop.f32.mrf.mxu0
      %1846 = vmatprep.mubr.f32.mxu0 %v1616
      %1847 = vmatmul.mubr.f32.gmra.mxu0 %v1603
      %v1848 = vpop.f32.mrf.mxu0
      %v1849 = vadd.f32 %v1764, %v1848
      %v1850 = vpop.f32.mrf.mxu0
      %1851 = vmatprep.mubr.f32.mxu0 %v1618
      %1852 = vmatmul.mubr.f32.gmra.mxu0 %v1605
      %v1853 = vpop.f32.mrf.mxu0
      %v1854 = vadd.f32 %v1769, %v1853
      %v1855 = vpop.f32.mrf.mxu0
      %1856 = vdwg.mxu0
      %v1857 = vld [vmem:[%s2 + $0x7a0] sm:$0xff]
      %v1858 = vld [vmem:[%s2 + $0x7a8] sm:$0xff]
      %vm1859 = vcmask 261120
      %v1861 = vsel %vm1859, %v1857, 0
      %v1864 = vsel %vm1859, %v1858, 0
      %1866 = vmatprep.subr.mxu0 0.0
      %1867 = vmatpush1.msra.mxu0 0.0
      %1868 = vmatprep.subr.mxu0 0.0
      %1869 = vmatpush1.msra.mxu0 0.0
      %1870 = vmatprep.subr.mxu0 0.0
      %1871 = vmatpush1.msra.mxu0 0.0
      %1872 = vmatprep.subr.mxu0 0.0
      %1873 = vmatpush1.msra.mxu0 0.0
      %1874 = vmatprep.subr.mxu0 0.0
      %1875 = vmatpush1.msra.mxu0 0.0
      %1876 = vmatprep.subr.mxu0 0.0
      %1877 = vmatpush1.msra.mxu0 0.0
      %1878 = vmatprep.subr.mxu0 0.0
      %1879 = vmatpush1.msra.mxu0 0.0
      %1880 = vmatprep.subr.mxu0 0.0
      %1881 = vmatpush1.msra.mxu0 0.0
      %1882 = vmatprep.subr.mxu0 0.0
      %1883 = vmatpush1.msra.mxu0 0.0
      %1884 = vmatprep.subr.mxu0 0.0
      %1885 = vmatpush1.msra.mxu0 0.0
      %1886 = vmatprep.subr.mxu0 0.0
      %1887 = vmatpush1.msra.mxu0 0.0
      %1888 = vmatprep.subr.mxu0 0.0
      %1889 = vmatpush1.msra.mxu0 0.0
      %1890 = vmatprep.subr.mxu0 0.0
      %1891 = vmatpush1.msra.mxu0 %v1854
      %1892 = vmatprep.subr.mxu0 0.0
      %1893 = vmatpush1.msra.mxu0 %v1849
      %1894 = vmatprep.subr.mxu0 0.0
      %1895 = vmatpush1.msra.mxu0 %v1844
      %1896 = vmatprep.subr.mxu0 0.0
      %1897 = vmatpush1.msra.mxu0 %v1839
      %1898 = vmatprep.subr.mxu0 0.0
      %1899 = vmatpush2.msra.mxu0 0.0
      %1900 = vmatprep.subr.mxu0 0.0
      %1901 = vmatpush2.msra.mxu0 0.0
      %1902 = vmatprep.subr.mxu0 0.0
      %1903 = vmatpush2.msra.mxu0 0.0
      %1904 = vmatprep.subr.mxu0 0.0
      %1905 = vmatpush2.msra.mxu0 0.0
      %1906 = vmatprep.subr.mxu0 0.0
      %1907 = vmatpush2.msra.mxu0 0.0
      %1908 = vmatprep.subr.mxu0 0.0
      %1909 = vmatpush2.msra.mxu0 0.0
      %1910 = vmatprep.subr.mxu0 0.0
      %1911 = vmatpush2.msra.mxu0 0.0
      %1912 = vmatprep.subr.mxu0 0.0
      %1913 = vmatpush2.msra.mxu0 0.0
      %1914 = vmatprep.subr.mxu0 0.0
      %1915 = vmatpush2.msra.mxu0 0.0
      %1916 = vmatprep.subr.mxu0 0.0
      %1917 = vmatpush2.msra.mxu0 0.0
      %1918 = vmatprep.subr.mxu0 0.0
      %1919 = vmatpush2.msra.mxu0 0.0
      %1920 = vmatprep.subr.mxu0 0.0
      %1921 = vmatpush2.msra.mxu0 0.0
      %1922 = vmatprep.subr.mxu0 0.0
      %1923 = vmatpush2.msra.mxu0 0.0
      %1924 = vmatprep.subr.mxu0 0.0
      %1925 = vmatpush2.msra.mxu0 0.0
      %1926 = vmatprep.subr.mxu0 0.0
      %1927 = vmatpush2.msra.mxu0 0.0
      %1928 = vmatprep.subr.mxu0 0.0
      %1929 = vmatpush2.msra.mxu0 0.0
      %1930 = vmatprep.mubr.f32.mxu0 0.0
      %1931 = vmatmul.mubr.f32.gmra.mxu0 %v1861
      %v1932 = vpop.f32.mrf.mxu0
      %v1933 = vadd.f32 0.0, %v1932
      %v1934 = vpop.f32.mrf.mxu0
      %1935 = vmatprep.mubr.f32.mxu0 0.0
      %1936 = vmatmul.mubr.f32.gmra.mxu0 %v1864
      %v1937 = vpop.f32.mrf.mxu0
      %v1938 = vadd.f32 0.0, %v1937
      %v1939 = vpop.f32.mrf.mxu0
      %1940 = vdwg.mxu0
      %v1941 = vadd.f32 %v1933, %v1938
      %v1942 = vrot.slane %v1941, 4
      %v1943 = vadd.f32 %v1941, %v1942
      %v1944 = vrot.slane %v1943, 2
      %v1945 = vadd.f32 %v1943, %v1944
      %v1946 = vrot.slane %v1945, 1
      %v1947 = vadd.f32 %v1945, %v1946
      %v1948 = vrcp.pop 16.0
      %v1949 = vmul.f32 %v1947, %v1948
      %v1950 = vmul.f32 %v1933, %v1933
      %v1951 = vmul.f32 %v1938, %v1938
      %v1952 = vadd.f32 %v1950, %v1951
      %v1953 = vrot.slane %v1952, 4
      %v1954 = vadd.f32 %v1952, %v1953
      %v1955 = vrot.slane %v1954, 2
      %v1956 = vadd.f32 %v1954, %v1955
      %v1957 = vrot.slane %v1956, 1
      %v1958 = vadd.f32 %v1956, %v1957
      %v1959 = vmul.f32 %v1958, %v1948
      %v1960 = vmul.f32 %v1949, %v1949
      %v1961 = vsub.f32 %v1959, %v1960
      %v1962 = vmax.f32 %v1961, 0.0
      %v1963 = vsub.f32 %v1933, %v1949
      %v1964 = vsub.f32 %v1938, %v1949
      %v1965 = vadd.f32 %v1962, 1e-05
      %v1966 = vrsqrt.pop %v1965
      %v1967 = vmul.f32 %v1963, %v1966
      %v1968 = vmul.f32 %v1964, %v1966
      %vm1969 = vcmp.gt.f32.partialorder %v1967, 0.0
      %vm1970 = vcmp.gt.f32.partialorder %v1968, 0.0
      %v1971 = vmul.f32 %v1967, 0.01
      %v1972 = vmul.f32 %v1968, 0.01
      %v1973 = vsel %vm1969, %v1967, %v1971
      %v1974 = vsel %vm1970, %v1968, %v1972
      %v1977 = vrot.slane %v1973, 7
      %v1978 = vrot.slane %v1974, 7
      %v1979 = vsel %vm1034, %v1977, %v1978
      %v1983 = vsel %vm1034, 0.0, %v1977
      %v1984 = vsel %vm1034, %v1978, 0.0
      %v1987 = vrot.slane %v1983, 1
      %v1988 = vrot.slane %v1979, 1
      %v1989 = vsel %vm257, %v1987, %v1988
      %v1990 = vrot.slane %v1984, 1
      %v1991 = vsel %vm257, %v1988, %v1990
      %v1994 = vrot.slane %v1983, 2
      %v1995 = vrot.slane %v1979, 2
      %v1996 = vsel %vm283, %v1994, %v1995
      %v1997 = vrot.slane %v1984, 2
      %v1998 = vsel %vm283, %v1995, %v1997
      %v2001 = vrot.slane %v1983, 3
      %v2002 = vrot.slane %v1979, 3
      %v2003 = vsel %vm309, %v2001, %v2002
      %v2004 = vrot.slane %v1984, 3
      %v2005 = vsel %vm309, %v2002, %v2004
      %v2008 = vld [vmem:[%s2 + $0x7b0] sm:$0xff]
      %v2009 = vld [vmem:[%s2 + $0x7b8] sm:$0xff]
      %v2010 = vld [vmem:[%s2 + $0x7c0] sm:$0xff]
      %v2011 = vld [vmem:[%s2 + $0x7c8] sm:$0xff]
      %v2012 = vld [vmem:[%s2 + $0x7d0] sm:$0xff]
      %v2013 = vld [vmem:[%s2 + $0x7d8] sm:$0xff]
      %v2014 = vld [vmem:[%s2 + $0x7e0] sm:$0xff]
      %v2015 = vld [vmem:[%s2 + $0x7e8] sm:$0xff]
      %v2016 = vld [vmem:[%s2 + $0x7f0] sm:$0xff]
      %v2017 = vld [vmem:[%s2 + $0x7f8] sm:$0xff]
      %v2018 = vld [vmem:[%s2 + $0x800] sm:$0xff]
      %v2019 = vld [vmem:[%s2 + $0x808] sm:$0xff]
      %v2020 = vld [vmem:[%s2 + $0x810] sm:$0xff]
      %v2021 = vld [vmem:[%s2 + $0x818] sm:$0xff]
      %v2022 = vld [vmem:[%s2 + $0x820] sm:$0xff]
      %v2023 = vld [vmem:[%s2 + $0x828] sm:$0xff]
      %v2024 = vld [vmem:[%s2 + $0x830] sm:$0xff]
      %v2025 = vld [vmem:[%s2 + $0x838] sm:$0xff]
      %v2026 = vld [vmem:[%s2 + $0x840] sm:$0xff]
      %v2027 = vld [vmem:[%s2 + $0x848] sm:$0xff]
      %v2028 = vld [vmem:[%s2 + $0x850] sm:$0xff]
      %v2029 = vld [vmem:[%s2 + $0x858] sm:$0xff]
      %v2030 = vld [vmem:[%s2 + $0x860] sm:$0xff]
      %v2031 = vld [vmem:[%s2 + $0x868] sm:$0xff]
      %v2032 = vld [vmem:[%s2 + $0x870] sm:$0xff]
      %v2033 = vld [vmem:[%s2 + $0x878] sm:$0xff]
      %v2034 = vld [vmem:[%s2 + $0x880] sm:$0xff]
      %v2035 = vld [vmem:[%s2 + $0x888] sm:$0xff]
      %v2036 = vld [vmem:[%s2 + $0x890] sm:$0xff]
      %v2037 = vld [vmem:[%s2 + $0x898] sm:$0xff]
      %v2038 = vld [vmem:[%s2 + $0x8a0] sm:$0xff]
      %v2039 = vld [vmem:[%s2 + $0x8a8] sm:$0xff]
      %v2040 = vld [vmem:[%s2 + $0x8b0] sm:$0xff]
      %v2041 = vld [vmem:[%s2 + $0x8b8] sm:$0xff]
      %v2042 = vld [vmem:[%s2 + $0x8c0] sm:$0xff]
      %v2043 = vld [vmem:[%s2 + $0x8c8] sm:$0xff]
      %v2044 = vld [vmem:[%s2 + $0x8d0] sm:$0xff]
      %v2045 = vld [vmem:[%s2 + $0x8d8] sm:$0xff]
      %v2046 = vld [vmem:[%s2 + $0x8e0] sm:$0xff]
      %v2047 = vld [vmem:[%s2 + $0x8e8] sm:$0xff]
      %v2048 = vld [vmem:[%s2 + $0x8f0] sm:$0xff]
      %v2049 = vld [vmem:[%s2 + $0x8f8] sm:$0xff]
      %v2050 = vld [vmem:[%s2 + $0x900] sm:$0xff]
      %v2051 = vld [vmem:[%s2 + $0x908] sm:$0xff]
      %v2052 = vld [vmem:[%s2 + $0x910] sm:$0xff]
      %v2053 = vld [vmem:[%s2 + $0x918] sm:$0xff]
      %v2054 = vld [vmem:[%s2 + $0x920] sm:$0xff]
      %v2055 = vld [vmem:[%s2 + $0x928] sm:$0xff]
      %v2056 = vld [vmem:[%s2 + $0x930] sm:$0xff]
      %v2057 = vld [vmem:[%s2 + $0x938] sm:$0xff]
      %v2058 = vld [vmem:[%s2 + $0x940] sm:$0xff]
      %v2059 = vld [vmem:[%s2 + $0x948] sm:$0xff]
      %v2060 = vld [vmem:[%s2 + $0x950] sm:$0xff]
      %v2061 = vld [vmem:[%s2 + $0x958] sm:$0xff]
      %v2062 = vld [vmem:[%s2 + $0x960] sm:$0xff]
      %v2063 = vld [vmem:[%s2 + $0x968] sm:$0xff]
      %v2064 = vld [vmem:[%s2 + $0x970] sm:$0xff]
      %v2065 = vld [vmem:[%s2 + $0x978] sm:$0xff]
      %v2066 = vld [vmem:[%s2 + $0x980] sm:$0xff]
      %v2067 = vld [vmem:[%s2 + $0x988] sm:$0xff]
      %v2068 = vld [vmem:[%s2 + $0x990] sm:$0xff]
      %v2069 = vld [vmem:[%s2 + $0x998] sm:$0xff]
      %v2070 = vld [vmem:[%s2 + $0x9a0] sm:$0xff]
      %v2071 = vld [vmem:[%s2 + $0x9a8] sm:$0xff]
      %2072 = vmatprep.subr.mxu0 0.0
      %2073 = vmatpush1.msra.mxu0 %v2023
      %2074 = vmatprep.subr.mxu0 0.0
      %2075 = vmatpush1.msra.mxu0 %v2022
      %2076 = vmatprep.subr.mxu0 0.0
      %2077 = vmatpush1.msra.mxu0 %v2021
      %2078 = vmatprep.subr.mxu0 0.0
      %2079 = vmatpush1.msra.mxu0 %v2020
      %2080 = vmatprep.subr.mxu0 0.0
      %2081 = vmatpush1.msra.mxu0 %v2019
      %2082 = vmatprep.subr.mxu0 0.0
      %2083 = vmatpush1.msra.mxu0 %v2018
      %2084 = vmatprep.subr.mxu0 0.0
      %2085 = vmatpush1.msra.mxu0 %v2017
      %2086 = vmatprep.subr.mxu0 0.0
      %2087 = vmatpush1.msra.mxu0 %v2016
      %2088 = vmatprep.subr.mxu0 0.0
      %2089 = vmatpush1.msra.mxu0 %v2015
      %2090 = vmatprep.subr.mxu0 0.0
      %2091 = vmatpush1.msra.mxu0 %v2014
      %2092 = vmatprep.subr.mxu0 0.0
      %2093 = vmatpush1.msra.mxu0 %v2013
      %2094 = vmatprep.subr.mxu0 0.0
      %2095 = vmatpush1.msra.mxu0 %v2012
      %2096 = vmatprep.subr.mxu0 0.0
      %2097 = vmatpush1.msra.mxu0 %v2011
      %2098 = vmatprep.subr.mxu0 0.0
      %2099 = vmatpush1.msra.mxu0 %v2010
      %2100 = vmatprep.subr.mxu0 0.0
      %2101 = vmatpush1.msra.mxu0 %v2009
      %2102 = vmatprep.subr.mxu0 0.0
      %2103 = vmatpush1.msra.mxu0 %v2008
      %2104 = vmatprep.subr.mxu0 0.0
      %2105 = vmatpush2.msra.mxu0 %v2039
      %2106 = vmatprep.subr.mxu0 0.0
      %2107 = vmatpush2.msra.mxu0 %v2038
      %2108 = vmatprep.subr.mxu0 0.0
      %2109 = vmatpush2.msra.mxu0 %v2037
      %2110 = vmatprep.subr.mxu0 0.0
      %2111 = vmatpush2.msra.mxu0 %v2036
      %2112 = vmatprep.subr.mxu0 0.0
      %2113 = vmatpush2.msra.mxu0 %v2035
      %2114 = vmatprep.subr.mxu0 0.0
      %2115 = vmatpush2.msra.mxu0 %v2034
      %2116 = vmatprep.subr.mxu0 0.0
      %2117 = vmatpush2.msra.mxu0 %v2033
      %2118 = vmatprep.subr.mxu0 0.0
      %2119 = vmatpush2.msra.mxu0 %v2032
      %2120 = vmatprep.subr.mxu0 0.0
      %2121 = vmatpush2.msra.mxu0 %v2031
      %2122 = vmatprep.subr.mxu0 0.0
      %2123 = vmatpush2.msra.mxu0 %v2030
      %2124 = vmatprep.subr.mxu0 0.0
      %2125 = vmatpush2.msra.mxu0 %v2029
      %2126 = vmatprep.subr.mxu0 0.0
      %2127 = vmatpush2.msra.mxu0 %v2028
      %2128 = vmatprep.subr.mxu0 0.0
      %2129 = vmatpush2.msra.mxu0 %v2027
      %2130 = vmatprep.subr.mxu0 0.0
      %2131 = vmatpush2.msra.mxu0 %v2026
      %2132 = vmatprep.subr.mxu0 0.0
      %2133 = vmatpush2.msra.mxu0 %v2025
      %2134 = vmatprep.subr.mxu0 0.0
      %2135 = vmatpush2.msra.mxu0 %v2024
      %2136 = vmatprep.mubr.f32.mxu0 %v1989
      %2137 = vmatmul.mubr.f32.gmra.mxu0 %v1983
      %v2138 = vpop.f32.mrf.mxu0
      %v2139 = vadd.f32 0.0, %v2138
      %v2140 = vpop.f32.mrf.mxu0
      %2141 = vmatprep.mubr.f32.mxu0 %v1991
      %2142 = vmatmul.mubr.f32.gmra.mxu0 %v1979
      %v2143 = vpop.f32.mrf.mxu0
      %v2144 = vadd.f32 0.0, %v2143
      %v2145 = vpop.f32.mrf.mxu0
      %2146 = vdwg.mxu0
      %2147 = vmatprep.subr.mxu0 0.0
      %2148 = vmatpush1.msra.mxu0 %v2055
      %2149 = vmatprep.subr.mxu0 0.0
      %2150 = vmatpush1.msra.mxu0 %v2054
      %2151 = vmatprep.subr.mxu0 0.0
      %2152 = vmatpush1.msra.mxu0 %v2053
      %2153 = vmatprep.subr.mxu0 0.0
      %2154 = vmatpush1.msra.mxu0 %v2052
      %2155 = vmatprep.subr.mxu0 0.0
      %2156 = vmatpush1.msra.mxu0 %v2051
      %2157 = vmatprep.subr.mxu0 0.0
      %2158 = vmatpush1.msra.mxu0 %v2050
      %2159 = vmatprep.subr.mxu0 0.0
      %2160 = vmatpush1.msra.mxu0 %v2049
      %2161 = vmatprep.subr.mxu0 0.0
      %2162 = vmatpush1.msra.mxu0 %v2048
      %2163 = vmatprep.subr.mxu0 0.0
      %2164 = vmatpush1.msra.mxu0 %v2047
      %2165 = vmatprep.subr.mxu0 0.0
      %2166 = vmatpush1.msra.mxu0 %v2046
      %2167 = vmatprep.subr.mxu0 0.0
      %2168 = vmatpush1.msra.mxu0 %v2045
      %2169 = vmatprep.subr.mxu0 0.0
      %2170 = vmatpush1.msra.mxu0 %v2044
      %2171 = vmatprep.subr.mxu0 0.0
      %2172 = vmatpush1.msra.mxu0 %v2043
      %2173 = vmatprep.subr.mxu0 0.0
      %2174 = vmatpush1.msra.mxu0 %v2042
      %2175 = vmatprep.subr.mxu0 0.0
      %2176 = vmatpush1.msra.mxu0 %v2041
      %2177 = vmatprep.subr.mxu0 0.0
      %2178 = vmatpush1.msra.mxu0 %v2040
      %2179 = vmatprep.subr.mxu0 0.0
      %2180 = vmatpush2.msra.mxu0 %v2071
      %2181 = vmatprep.subr.mxu0 0.0
      %2182 = vmatpush2.msra.mxu0 %v2070
      %2183 = vmatprep.subr.mxu0 0.0
      %2184 = vmatpush2.msra.mxu0 %v2069
      %2185 = vmatprep.subr.mxu0 0.0
      %2186 = vmatpush2.msra.mxu0 %v2068
      %2187 = vmatprep.subr.mxu0 0.0
      %2188 = vmatpush2.msra.mxu0 %v2067
      %2189 = vmatprep.subr.mxu0 0.0
      %2190 = vmatpush2.msra.mxu0 %v2066
      %2191 = vmatprep.subr.mxu0 0.0
      %2192 = vmatpush2.msra.mxu0 %v2065
      %2193 = vmatprep.subr.mxu0 0.0
      %2194 = vmatpush2.msra.mxu0 %v2064
      %2195 = vmatprep.subr.mxu0 0.0
      %2196 = vmatpush2.msra.mxu0 %v2063
      %2197 = vmatprep.subr.mxu0 0.0
      %2198 = vmatpush2.msra.mxu0 %v2062
      %2199 = vmatprep.subr.mxu0 0.0
      %2200 = vmatpush2.msra.mxu0 %v2061
      %2201 = vmatprep.subr.mxu0 0.0
      %2202 = vmatpush2.msra.mxu0 %v2060
      %2203 = vmatprep.subr.mxu0 0.0
      %2204 = vmatpush2.msra.mxu0 %v2059
      %2205 = vmatprep.subr.mxu0 0.0
      %2206 = vmatpush2.msra.mxu0 %v2058
      %2207 = vmatprep.subr.mxu0 0.0
      %2208 = vmatpush2.msra.mxu0 %v2057
      %2209 = vmatprep.subr.mxu0 0.0
      %2210 = vmatpush2.msra.mxu0 %v2056
      %2211 = vmatprep.mubr.f32.mxu0 %v2003
      %2212 = vmatmul.mubr.f32.gmra.mxu0 %v1996
      %v2213 = vpop.f32.mrf.mxu0
      %v2214 = vadd.f32 %v2139, %v2213
      %v2215 = vpop.f32.mrf.mxu0
      %2216 = vmatprep.mubr.f32.mxu0 %v2005
      %2217 = vmatmul.mubr.f32.gmra.mxu0 %v1998
      %v2218 = vpop.f32.mrf.mxu0
      %v2219 = vadd.f32 %v2144, %v2218
      %v2220 = vpop.f32.mrf.mxu0
      %2221 = vdwg.mxu0
      %v2222 = vld [vmem:[%s2 + $0x9b0] sm:$0xff]
      %vm2223 = vcmask 130048
      %v2225 = vsel %vm2223, %v2222, 0
      %2227 = vmatprep.subr.mxu0 0.0
      %2228 = vmatpush1.msra.mxu0 0.0
      %2229 = vmatprep.subr.mxu0 0.0
      %2230 = vmatpush1.msra.mxu0 0.0
      %2231 = vmatprep.subr.mxu0 0.0
      %2232 = vmatpush1.msra.mxu0 0.0
      %2233 = vmatprep.subr.mxu0 0.0
      %2234 = vmatpush1.msra.mxu0 0.0
      %2235 = vmatprep.subr.mxu0 0.0
      %2236 = vmatpush1.msra.mxu0 0.0
      %2237 = vmatprep.subr.mxu0 0.0
      %2238 = vmatpush1.msra.mxu0 0.0
      %2239 = vmatprep.subr.mxu0 0.0
      %2240 = vmatpush1.msra.mxu0 0.0
      %2241 = vmatprep.subr.mxu0 0.0
      %2242 = vmatpush1.msra.mxu0 0.0
      %2243 = vmatprep.subr.mxu0 0.0
      %2244 = vmatpush1.msra.mxu0 0.0
      %2245 = vmatprep.subr.mxu0 0.0
      %2246 = vmatpush1.msra.mxu0 0.0
      %2247 = vmatprep.subr.mxu0 0.0
      %2248 = vmatpush1.msra.mxu0 0.0
      %2249 = vmatprep.subr.mxu0 0.0
      %2250 = vmatpush1.msra.mxu0 0.0
      %2251 = vmatprep.subr.mxu0 0.0
      %2252 = vmatpush1.msra.mxu0 0.0
      %2253 = vmatprep.subr.mxu0 0.0
      %2254 = vmatpush1.msra.mxu0 0.0
      %2255 = vmatprep.subr.mxu0 0.0
      %2256 = vmatpush1.msra.mxu0 %v2219
      %2257 = vmatprep.subr.mxu0 0.0
      %2258 = vmatpush1.msra.mxu0 %v2214
      %2259 = vmatprep.subr.mxu0 0.0
      %2260 = vmatpush2.msra.mxu0 0.0
      %2261 = vmatprep.subr.mxu0 0.0
      %2262 = vmatpush2.msra.mxu0 0.0
      %2263 = vmatprep.subr.mxu0 0.0
      %2264 = vmatpush2.msra.mxu0 0.0
      %2265 = vmatprep.subr.mxu0 0.0
      %2266 = vmatpush2.msra.mxu0 0.0
      %2267 = vmatprep.subr.mxu0 0.0
      %2268 = vmatpush2.msra.mxu0 0.0
      %2269 = vmatprep.subr.mxu0 0.0
      %2270 = vmatpush2.msra.mxu0 0.0
      %2271 = vmatprep.subr.mxu0 0.0
      %2272 = vmatpush2.msra.mxu0 0.0
      %2273 = vmatprep.subr.mxu0 0.0
      %2274 = vmatpush2.msra.mxu0 0.0
      %2275 = vmatprep.subr.mxu0 0.0
      %2276 = vmatpush2.msra.mxu0 0.0
      %2277 = vmatprep.subr.mxu0 0.0
      %2278 = vmatpush2.msra.mxu0 0.0
      %2279 = vmatprep.subr.mxu0 0.0
      %2280 = vmatpush2.msra.mxu0 0.0
      %2281 = vmatprep.subr.mxu0 0.0
      %2282 = vmatpush2.msra.mxu0 0.0
      %2283 = vmatprep.subr.mxu0 0.0
      %2284 = vmatpush2.msra.mxu0 0.0
      %2285 = vmatprep.subr.mxu0 0.0
      %2286 = vmatpush2.msra.mxu0 0.0
      %2287 = vmatprep.subr.mxu0 0.0
      %2288 = vmatpush2.msra.mxu0 0.0
      %2289 = vmatprep.subr.mxu0 0.0
      %2290 = vmatpush2.msra.mxu0 0.0
      %2291 = vmatprep.mubr.f32.mxu0 0.0
      %2292 = vmatmul.mubr.f32.gmra.mxu0 %v2225
      %v2293 = vpop.f32.mrf.mxu0
      %v2294 = vadd.f32 0.0, %v2293
      %v2295 = vpop.f32.mrf.mxu0
      %2296 = vdwg.mxu0
      %v2297 = vrot.slane %v2294, 4
      %v2298 = vadd.f32 %v2294, %v2297
      %v2299 = vrot.slane %v2298, 2
      %v2300 = vadd.f32 %v2298, %v2299
      %v2301 = vrot.slane %v2300, 1
      %v2302 = vadd.f32 %v2300, %v2301
      %v2303 = vrcp.pop 8.0
      %v2304 = vmul.f32 %v2302, %v2303
      %v2305 = vmul.f32 %v2294, %v2294
      %v2306 = vrot.slane %v2305, 4
      %v2307 = vadd.f32 %v2305, %v2306
      %v2308 = vrot.slane %v2307, 2
      %v2309 = vadd.f32 %v2307, %v2308
      %v2310 = vrot.slane %v2309, 1
      %v2311 = vadd.f32 %v2309, %v2310
      %v2312 = vmul.f32 %v2311, %v2303
      %v2313 = vmul.f32 %v2304, %v2304
      %v2314 = vsub.f32 %v2312, %v2313
      %v2315 = vmax.f32 %v2314, 0.0
      %v2316 = vsub.f32 %v2294, %v2304
      %v2317 = vadd.f32 %v2315, 1e-05
      %v2318 = vrsqrt.pop %v2317
      %v2319 = vmul.f32 %v2316, %v2318
      %vm2320 = vcmp.gt.f32.partialorder %v2319, 0.0
      %v2321 = vmul.f32 %v2319, 0.01
      %v2322 = vsel %vm2320, %v2319, %v2321
      %v2323 = vld [vmem:[%s206] sm:$0x1]
      %v2325 = vlaneseq
      %v2326 = vshrl.u32 %v2325, 7
      %v2327 = vsub.s32 0, %v2326
      %v2328 = vrot.slane %v2323, %v2327
      %v2330 = vsel %vm1034, 0.0, %v2328
      %v2331 = vsel %vm1034, %v2328, 0.0
      %v2334 = vrot.slane %v2330, 1
      %v2335 = vrot.slane %v2331, 1
      %v2336 = vsel %vm257, %v2334, %v2335
      %v2338 = vrot.slane %v2330, 2
      %v2339 = vrot.slane %v2331, 2
      %v2340 = vsel %vm283, %v2338, %v2339
      %v2342 = vld [vmem:[%s2 + $0xb38] sm:$0xff]
      %v2343 = vld [vmem:[%s2 + $0xb40] sm:$0xff]
      %v2344 = vld [vmem:[%s2 + $0xb48] sm:$0xff]
      %v2345 = vld [vmem:[%s2 + $0xb50] sm:$0xff]
      %v2346 = vld [vmem:[%s2 + $0xb58] sm:$0xff]
      %v2347 = vld [vmem:[%s2 + $0xb60] sm:$0xff]
      %v2348 = vld [vmem:[%s2 + $0xb68] sm:$0xff]
      %v2349 = vld [vmem:[%s2 + $0xb70] sm:$0xff]
      %v2350 = vld [vmem:[%s2 + $0xb78] sm:$0xff]
      %v2351 = vld [vmem:[%s2 + $0xb80] sm:$0xff]
      %v2352 = vld [vmem:[%s2 + $0xb88] sm:$0xff]
      %v2353 = vld [vmem:[%s2 + $0xb90] sm:$0xff]
      %v2354 = vld [vmem:[%s2 + $0xb98] sm:$0xff]
      %v2355 = vld [vmem:[%s2 + $0xba0] sm:$0xff]
      %v2356 = vld [vmem:[%s2 + $0xba8] sm:$0xff]
      %v2357 = vld [vmem:[%s2 + $0xbb0] sm:$0xff]
      %v2358 = vld [vmem:[%s2 + $0xbb8] sm:$0xff]
      %v2359 = vld [vmem:[%s2 + $0xbc0] sm:$0xff]
      %v2360 = vld [vmem:[%s2 + $0xbc8] sm:$0xff]
      %v2361 = vld [vmem:[%s2 + $0xbd0] sm:$0xff]
      %v2362 = vld [vmem:[%s2 + $0xbd8] sm:$0xff]
      %v2363 = vld [vmem:[%s2 + $0xbe0] sm:$0xff]
      %v2364 = vld [vmem:[%s2 + $0xbe8] sm:$0xff]
      %v2365 = vld [vmem:[%s2 + $0xbf0] sm:$0xff]
      %v2366 = vld [vmem:[%s2 + $0xbf8] sm:$0xff]
      %v2367 = vld [vmem:[%s2 + $0xc00] sm:$0xff]
      %v2368 = vld [vmem:[%s2 + $0xc08] sm:$0xff]
      %v2369 = vld [vmem:[%s2 + $0xc10] sm:$0xff]
      %v2370 = vld [vmem:[%s2 + $0xc18] sm:$0xff]
      %v2371 = vld [vmem:[%s2 + $0xc20] sm:$0xff]
      %v2372 = vld [vmem:[%s2 + $0xc28] sm:$0xff]
      %v2373 = vld [vmem:[%s2 + $0xc30] sm:$0xff]
      %v2374 = vld [vmem:[%s2 + $0xc38] sm:$0xff]
      %v2375 = vld [vmem:[%s2 + $0xc40] sm:$0xff]
      %v2376 = vld [vmem:[%s2 + $0xc48] sm:$0xff]
      %v2377 = vld [vmem:[%s2 + $0xc50] sm:$0xff]
      %v2378 = vld [vmem:[%s2 + $0xc58] sm:$0xff]
      %v2379 = vld [vmem:[%s2 + $0xc60] sm:$0xff]
      %v2380 = vld [vmem:[%s2 + $0xc68] sm:$0xff]
      %v2381 = vld [vmem:[%s2 + $0xc70] sm:$0xff]
      %v2382 = vld [vmem:[%s2 + $0xc78] sm:$0xff]
      %v2383 = vld [vmem:[%s2 + $0xc80] sm:$0xff]
      %v2384 = vld [vmem:[%s2 + $0xc88] sm:$0xff]
      %v2385 = vld [vmem:[%s2 + $0xc90] sm:$0xff]
      %v2386 = vld [vmem:[%s2 + $0xc98] sm:$0xff]
      %v2387 = vld [vmem:[%s2 + $0xca0] sm:$0xff]
      %v2388 = vld [vmem:[%s2 + $0xca8] sm:$0xff]
      %v2389 = vld [vmem:[%s2 + $0xcb0] sm:$0xff]
      %2390 = vmatprep.subr.mxu0 0.0
      %2391 = vmatpush1.msra.mxu0 %v2357
      %2392 = vmatprep.subr.mxu0 0.0
      %2393 = vmatpush1.msra.mxu0 %v2356
      %2394 = vmatprep.subr.mxu0 0.0
      %2395 = vmatpush1.msra.mxu0 %v2355
      %2396 = vmatprep.subr.mxu0 0.0
      %2397 = vmatpush1.msra.mxu0 %v2354
      %2398 = vmatprep.subr.mxu0 0.0
      %2399 = vmatpush1.msra.mxu0 %v2353
      %2400 = vmatprep.subr.mxu0 0.0
      %2401 = vmatpush1.msra.mxu0 %v2352
      %2402 = vmatprep.subr.mxu0 0.0
      %2403 = vmatpush1.msra.mxu0 %v2351
      %2404 = vmatprep.subr.mxu0 0.0
      %2405 = vmatpush1.msra.mxu0 %v2350
      %2406 = vmatprep.subr.mxu0 0.0
      %2407 = vmatpush1.msra.mxu0 %v2349
      %2408 = vmatprep.subr.mxu0 0.0
      %2409 = vmatpush1.msra.mxu0 %v2348
      %2410 = vmatprep.subr.mxu0 0.0
      %2411 = vmatpush1.msra.mxu0 %v2347
      %2412 = vmatprep.subr.mxu0 0.0
      %2413 = vmatpush1.msra.mxu0 %v2346
      %2414 = vmatprep.subr.mxu0 0.0
      %2415 = vmatpush1.msra.mxu0 %v2345
      %2416 = vmatprep.subr.mxu0 0.0
      %2417 = vmatpush1.msra.mxu0 %v2344
      %2418 = vmatprep.subr.mxu0 0.0
      %2419 = vmatpush1.msra.mxu0 %v2343
      %2420 = vmatprep.subr.mxu0 0.0
      %2421 = vmatpush1.msra.mxu0 %v2342
      %2422 = vmatprep.subr.mxu0 0.0
      %2423 = vmatpush2.msra.mxu0 %v2373
      %2424 = vmatprep.subr.mxu0 0.0
      %2425 = vmatpush2.msra.mxu0 %v2372
      %2426 = vmatprep.subr.mxu0 0.0
      %2427 = vmatpush2.msra.mxu0 %v2371
      %2428 = vmatprep.subr.mxu0 0.0
      %2429 = vmatpush2.msra.mxu0 %v2370
      %2430 = vmatprep.subr.mxu0 0.0
      %2431 = vmatpush2.msra.mxu0 %v2369
      %2432 = vmatprep.subr.mxu0 0.0
      %2433 = vmatpush2.msra.mxu0 %v2368
      %2434 = vmatprep.subr.mxu0 0.0
      %2435 = vmatpush2.msra.mxu0 %v2367
      %2436 = vmatprep.subr.mxu0 0.0
      %2437 = vmatpush2.msra.mxu0 %v2366
      %2438 = vmatprep.subr.mxu0 0.0
      %2439 = vmatpush2.msra.mxu0 %v2365
      %2440 = vmatprep.subr.mxu0 0.0
      %2441 = vmatpush2.msra.mxu0 %v2364
      %2442 = vmatprep.subr.mxu0 0.0
      %2443 = vmatpush2.msra.mxu0 %v2363
      %2444 = vmatprep.subr.mxu0 0.0
      %2445 = vmatpush2.msra.mxu0 %v2362
      %2446 = vmatprep.subr.mxu0 0.0
      %2447 = vmatpush2.msra.mxu0 %v2361
      %2448 = vmatprep.subr.mxu0 0.0
      %2449 = vmatpush2.msra.mxu0 %v2360
      %2450 = vmatprep.subr.mxu0 0.0
      %2451 = vmatpush2.msra.mxu0 %v2359
      %2452 = vmatprep.subr.mxu0 0.0
      %2453 = vmatpush2.msra.mxu0 %v2358
      %2454 = vmatprep.mubr.f32.mxu0 %v2336
      %2455 = vmatmul.mubr.f32.gmra.mxu0 %v2330
      %v2456 = vpop.f32.mrf.mxu0
      %v2457 = vadd.f32 0.0, %v2456
      %v2458 = vpop.f32.mrf.mxu0
      %2459 = vdwg.mxu0
      %2460 = vmatprep.subr.mxu0 0.0
      %2461 = vmatpush1.msra.mxu0 %v2389
      %2462 = vmatprep.subr.mxu0 0.0
      %2463 = vmatpush1.msra.mxu0 %v2388
      %2464 = vmatprep.subr.mxu0 0.0
      %2465 = vmatpush1.msra.mxu0 %v2387
      %2466 = vmatprep.subr.mxu0 0.0
      %2467 = vmatpush1.msra.mxu0 %v2386
      %2468 = vmatprep.subr.mxu0 0.0
      %2469 = vmatpush1.msra.mxu0 %v2385
      %2470 = vmatprep.subr.mxu0 0.0
      %2471 = vmatpush1.msra.mxu0 %v2384
      %2472 = vmatprep.subr.mxu0 0.0
      %2473 = vmatpush1.msra.mxu0 %v2383
      %2474 = vmatprep.subr.mxu0 0.0
      %2475 = vmatpush1.msra.mxu0 %v2382
      %2476 = vmatprep.subr.mxu0 0.0
      %2477 = vmatpush1.msra.mxu0 %v2381
      %2478 = vmatprep.subr.mxu0 0.0
      %2479 = vmatpush1.msra.mxu0 %v2380
      %2480 = vmatprep.subr.mxu0 0.0
      %2481 = vmatpush1.msra.mxu0 %v2379
      %2482 = vmatprep.subr.mxu0 0.0
      %2483 = vmatpush1.msra.mxu0 %v2378
      %2484 = vmatprep.subr.mxu0 0.0
      %2485 = vmatpush1.msra.mxu0 %v2377
      %2486 = vmatprep.subr.mxu0 0.0
      %2487 = vmatpush1.msra.mxu0 %v2376
      %2488 = vmatprep.subr.mxu0 0.0
      %2489 = vmatpush1.msra.mxu0 %v2375
      %2490 = vmatprep.subr.mxu0 0.0
      %2491 = vmatpush1.msra.mxu0 %v2374
      %2492 = vmatprep.subr.mxu0 0.0
      %2493 = vmatpush2.msra.mxu0 0.0
      %2494 = vmatprep.subr.mxu0 0.0
      %2495 = vmatpush2.msra.mxu0 0.0
      %2496 = vmatprep.subr.mxu0 0.0
      %2497 = vmatpush2.msra.mxu0 0.0
      %2498 = vmatprep.subr.mxu0 0.0
      %2499 = vmatpush2.msra.mxu0 0.0
      %2500 = vmatprep.subr.mxu0 0.0
      %2501 = vmatpush2.msra.mxu0 0.0
      %2502 = vmatprep.subr.mxu0 0.0
      %2503 = vmatpush2.msra.mxu0 0.0
      %2504 = vmatprep.subr.mxu0 0.0
      %2505 = vmatpush2.msra.mxu0 0.0
      %2506 = vmatprep.subr.mxu0 0.0
      %2507 = vmatpush2.msra.mxu0 0.0
      %2508 = vmatprep.subr.mxu0 0.0
      %2509 = vmatpush2.msra.mxu0 0.0
      %2510 = vmatprep.subr.mxu0 0.0
      %2511 = vmatpush2.msra.mxu0 0.0
      %2512 = vmatprep.subr.mxu0 0.0
      %2513 = vmatpush2.msra.mxu0 0.0
      %2514 = vmatprep.subr.mxu0 0.0
      %2515 = vmatpush2.msra.mxu0 0.0
      %2516 = vmatprep.subr.mxu0 0.0
      %2517 = vmatpush2.msra.mxu0 0.0
      %2518 = vmatprep.subr.mxu0 0.0
      %2519 = vmatpush2.msra.mxu0 0.0
      %2520 = vmatprep.subr.mxu0 0.0
      %2521 = vmatpush2.msra.mxu0 0.0
      %2522 = vmatprep.subr.mxu0 0.0
      %2523 = vmatpush2.msra.mxu0 0.0
      %2524 = vmatprep.mubr.f32.mxu0 0.0
      %2525 = vmatmul.mubr.f32.gmra.mxu0 %v2340
      %v2526 = vpop.f32.mrf.mxu0
      %v2527 = vadd.f32 %v2457, %v2526
      %v2528 = vpop.f32.mrf.mxu0
      %2529 = vdwg.mxu0
      %v2530 = vld [vmem:[%s2 + $0xcb8] sm:$0x1]
      %v2531 = vld [vmem:[%s2 + $0xcc0] sm:$0x1]
      %v2532 = vld [vmem:[%s2 + $0xe48] sm:$0x1]
      %v2533 = vld [vmem:[%s2 + $0xe50] sm:$0x1]
      %v2535 = vrot.slane %v2322, 7
      %v2537 = vsel %vm1034, 0.0, %v2535
      %v2538 = vsel %vm1034, %v2535, 0.0
      %v2541 = vrot.slane %v2537, 1
      %v2542 = vrot.slane %v2538, 1
      %v2543 = vsel %vm257, %v2541, %v2542
      %v2545 = vrot.slane %v2537, 2
      %v2546 = vrot.slane %v2538, 2
      %v2547 = vsel %vm283, %v2545, %v2546
      %v2549 = vld [vmem:[%s2 + $0x9b8] sm:$0xff]
      %v2550 = vld [vmem:[%s2 + $0x9c0] sm:$0xff]
      %v2551 = vld [vmem:[%s2 + $0x9c8] sm:$0xff]
      %v2552 = vld [vmem:[%s2 + $0x9d0] sm:$0xff]
      %v2553 = vld [vmem:[%s2 + $0x9d8] sm:$0xff]
      %v2554 = vld [vmem:[%s2 + $0x9e0] sm:$0xff]
      %v2555 = vld [vmem:[%s2 + $0x9e8] sm:$0xff]
      %v2556 = vld [vmem:[%s2 + $0x9f0] sm:$0xff]
      %v2557 = vld [vmem:[%s2 + $0x9f8] sm:$0xff]
      %v2558 = vld [vmem:[%s2 + $0xa00] sm:$0xff]
      %v2559 = vld [vmem:[%s2 + $0xa08] sm:$0xff]
      %v2560 = vld [vmem:[%s2 + $0xa10] sm:$0xff]
      %v2561 = vld [vmem:[%s2 + $0xa18] sm:$0xff]
      %v2562 = vld [vmem:[%s2 + $0xa20] sm:$0xff]
      %v2563 = vld [vmem:[%s2 + $0xa28] sm:$0xff]
      %v2564 = vld [vmem:[%s2 + $0xa30] sm:$0xff]
      %v2565 = vld [vmem:[%s2 + $0xa38] sm:$0xff]
      %v2566 = vld [vmem:[%s2 + $0xa40] sm:$0xff]
      %v2567 = vld [vmem:[%s2 + $0xa48] sm:$0xff]
      %v2568 = vld [vmem:[%s2 + $0xa50] sm:$0xff]
      %v2569 = vld [vmem:[%s2 + $0xa58] sm:$0xff]
      %v2570 = vld [vmem:[%s2 + $0xa60] sm:$0xff]
      %v2571 = vld [vmem:[%s2 + $0xa68] sm:$0xff]
      %v2572 = vld [vmem:[%s2 + $0xa70] sm:$0xff]
      %v2573 = vld [vmem:[%s2 + $0xa78] sm:$0xff]
      %v2574 = vld [vmem:[%s2 + $0xa80] sm:$0xff]
      %v2575 = vld [vmem:[%s2 + $0xa88] sm:$0xff]
      %v2576 = vld [vmem:[%s2 + $0xa90] sm:$0xff]
      %v2577 = vld [vmem:[%s2 + $0xa98] sm:$0xff]
      %v2578 = vld [vmem:[%s2 + $0xaa0] sm:$0xff]
      %v2579 = vld [vmem:[%s2 + $0xaa8] sm:$0xff]
      %v2580 = vld [vmem:[%s2 + $0xab0] sm:$0xff]
      %v2581 = vld [vmem:[%s2 + $0xab8] sm:$0xff]
      %v2582 = vld [vmem:[%s2 + $0xac0] sm:$0xff]
      %v2583 = vld [vmem:[%s2 + $0xac8] sm:$0xff]
      %v2584 = vld [vmem:[%s2 + $0xad0] sm:$0xff]
      %v2585 = vld [vmem:[%s2 + $0xad8] sm:$0xff]
      %v2586 = vld [vmem:[%s2 + $0xae0] sm:$0xff]
      %v2587 = vld [vmem:[%s2 + $0xae8] sm:$0xff]
      %v2588 = vld [vmem:[%s2 + $0xaf0] sm:$0xff]
      %v2589 = vld [vmem:[%s2 + $0xaf8] sm:$0xff]
      %v2590 = vld [vmem:[%s2 + $0xb00] sm:$0xff]
      %v2591 = vld [vmem:[%s2 + $0xb08] sm:$0xff]
      %v2592 = vld [vmem:[%s2 + $0xb10] sm:$0xff]
      %v2593 = vld [vmem:[%s2 + $0xb18] sm:$0xff]
      %v2594 = vld [vmem:[%s2 + $0xb20] sm:$0xff]
      %v2595 = vld [vmem:[%s2 + $0xb28] sm:$0xff]
      %v2596 = vld [vmem:[%s2 + $0xb30] sm:$0xff]
      %2597 = vmatprep.subr.mxu0 0.0
      %2598 = vmatpush1.msra.mxu0 %v2564
      %2599 = vmatprep.subr.mxu0 0.0
      %2600 = vmatpush1.msra.mxu0 %v2563
      %2601 = vmatprep.subr.mxu0 0.0
      %2602 = vmatpush1.msra.mxu0 %v2562
      %2603 = vmatprep.subr.mxu0 0.0
      %2604 = vmatpush1.msra.mxu0 %v2561
      %2605 = vmatprep.subr.mxu0 0.0
      %2606 = vmatpush1.msra.mxu0 %v2560
      %2607 = vmatprep.subr.mxu0 0.0
      %2608 = vmatpush1.msra.mxu0 %v2559
      %2609 = vmatprep.subr.mxu0 0.0
      %2610 = vmatpush1.msra.mxu0 %v2558
      %2611 = vmatprep.subr.mxu0 0.0
      %2612 = vmatpush1.msra.mxu0 %v2557
      %2613 = vmatprep.subr.mxu0 0.0
      %2614 = vmatpush1.msra.mxu0 %v2556
      %2615 = vmatprep.subr.mxu0 0.0
      %2616 = vmatpush1.msra.mxu0 %v2555
      %2617 = vmatprep.subr.mxu0 0.0
      %2618 = vmatpush1.msra.mxu0 %v2554
      %2619 = vmatprep.subr.mxu0 0.0
      %2620 = vmatpush1.msra.mxu0 %v2553
      %2621 = vmatprep.subr.mxu0 0.0
      %2622 = vmatpush1.msra.mxu0 %v2552
      %2623 = vmatprep.subr.mxu0 0.0
      %2624 = vmatpush1.msra.mxu0 %v2551
      %2625 = vmatprep.subr.mxu0 0.0
      %2626 = vmatpush1.msra.mxu0 %v2550
      %2627 = vmatprep.subr.mxu0 0.0
      %2628 = vmatpush1.msra.mxu0 %v2549
      %2629 = vmatprep.subr.mxu0 0.0
      %2630 = vmatpush2.msra.mxu0 %v2580
      %2631 = vmatprep.subr.mxu0 0.0
      %2632 = vmatpush2.msra.mxu0 %v2579
      %2633 = vmatprep.subr.mxu0 0.0
      %2634 = vmatpush2.msra.mxu0 %v2578
      %2635 = vmatprep.subr.mxu0 0.0
      %2636 = vmatpush2.msra.mxu0 %v2577
      %2637 = vmatprep.subr.mxu0 0.0
      %2638 = vmatpush2.msra.mxu0 %v2576
      %2639 = vmatprep.subr.mxu0 0.0
      %2640 = vmatpush2.msra.mxu0 %v2575
      %2641 = vmatprep.subr.mxu0 0.0
      %2642 = vmatpush2.msra.mxu0 %v2574
      %2643 = vmatprep.subr.mxu0 0.0
      %2644 = vmatpush2.msra.mxu0 %v2573
      %2645 = vmatprep.subr.mxu0 0.0
      %2646 = vmatpush2.msra.mxu0 %v2572
      %2647 = vmatprep.subr.mxu0 0.0
      %2648 = vmatpush2.msra.mxu0 %v2571
      %2649 = vmatprep.subr.mxu0 0.0
      %2650 = vmatpush2.msra.mxu0 %v2570
      %2651 = vmatprep.subr.mxu0 0.0
      %2652 = vmatpush2.msra.mxu0 %v2569
      %2653 = vmatprep.subr.mxu0 0.0
      %2654 = vmatpush2.msra.mxu0 %v2568
      %2655 = vmatprep.subr.mxu0 0.0
      %2656 = vmatpush2.msra.mxu0 %v2567
      %2657 = vmatprep.subr.mxu0 0.0
      %2658 = vmatpush2.msra.mxu0 %v2566
      %2659 = vmatprep.subr.mxu0 0.0
      %2660 = vmatpush2.msra.mxu0 %v2565
      %2661 = vmatprep.mubr.f32.mxu0 %v2543
      %2662 = vmatmul.mubr.f32.gmra.mxu0 %v2537
      %v2663 = vpop.f32.mrf.mxu0
      %v2664 = vadd.f32 %v2527, %v2663
      %v2665 = vpop.f32.mrf.mxu0
      %2666 = vdwg.mxu0
      %2667 = vmatprep.subr.mxu0 0.0
      %2668 = vmatpush1.msra.mxu0 %v2596
      %2669 = vmatprep.subr.mxu0 0.0
      %2670 = vmatpush1.msra.mxu0 %v2595
      %2671 = vmatprep.subr.mxu0 0.0
      %2672 = vmatpush1.msra.mxu0 %v2594
      %2673 = vmatprep.subr.mxu0 0.0
      %2674 = vmatpush1.msra.mxu0 %v2593
      %2675 = vmatprep.subr.mxu0 0.0
      %2676 = vmatpush1.msra.mxu0 %v2592
      %2677 = vmatprep.subr.mxu0 0.0
      %2678 = vmatpush1.msra.mxu0 %v2591
      %2679 = vmatprep.subr.mxu0 0.0
      %2680 = vmatpush1.msra.mxu0 %v2590
      %2681 = vmatprep.subr.mxu0 0.0
      %2682 = vmatpush1.msra.mxu0 %v2589
      %2683 = vmatprep.subr.mxu0 0.0
      %2684 = vmatpush1.msra.mxu0 %v2588
      %2685 = vmatprep.subr.mxu0 0.0
      %2686 = vmatpush1.msra.mxu0 %v2587
      %2687 = vmatprep.subr.mxu0 0.0
      %2688 = vmatpush1.msra.mxu0 %v2586
      %2689 = vmatprep.subr.mxu0 0.0
      %2690 = vmatpush1.msra.mxu0 %v2585
      %2691 = vmatprep.subr.mxu0 0.0
      %2692 = vmatpush1.msra.mxu0 %v2584
      %2693 = vmatprep.subr.mxu0 0.0
      %2694 = vmatpush1.msra.mxu0 %v2583
      %2695 = vmatprep.subr.mxu0 0.0
      %2696 = vmatpush1.msra.mxu0 %v2582
      %2697 = vmatprep.subr.mxu0 0.0
      %2698 = vmatpush1.msra.mxu0 %v2581
      %2699 = vmatprep.subr.mxu0 0.0
      %2700 = vmatpush2.msra.mxu0 0.0
      %2701 = vmatprep.subr.mxu0 0.0
      %2702 = vmatpush2.msra.mxu0 0.0
      %2703 = vmatprep.subr.mxu0 0.0
      %2704 = vmatpush2.msra.mxu0 0.0
      %2705 = vmatprep.subr.mxu0 0.0
      %2706 = vmatpush2.msra.mxu0 0.0
      %2707 = vmatprep.subr.mxu0 0.0
      %2708 = vmatpush2.msra.mxu0 0.0
      %2709 = vmatprep.subr.mxu0 0.0
      %2710 = vmatpush2.msra.mxu0 0.0
      %2711 = vmatprep.subr.mxu0 0.0
      %2712 = vmatpush2.msra.mxu0 0.0
      %2713 = vmatprep.subr.mxu0 0.0
      %2714 = vmatpush2.msra.mxu0 0.0
      %2715 = vmatprep.subr.mxu0 0.0
      %2716 = vmatpush2.msra.mxu0 0.0
      %2717 = vmatprep.subr.mxu0 0.0
      %2718 = vmatpush2.msra.mxu0 0.0
      %2719 = vmatprep.subr.mxu0 0.0
      %2720 = vmatpush2.msra.mxu0 0.0
      %2721 = vmatprep.subr.mxu0 0.0
      %2722 = vmatpush2.msra.mxu0 0.0
      %2723 = vmatprep.subr.mxu0 0.0
      %2724 = vmatpush2.msra.mxu0 0.0
      %2725 = vmatprep.subr.mxu0 0.0
      %2726 = vmatpush2.msra.mxu0 0.0
      %2727 = vmatprep.subr.mxu0 0.0
      %2728 = vmatpush2.msra.mxu0 0.0
      %2729 = vmatprep.subr.mxu0 0.0
      %2730 = vmatpush2.msra.mxu0 0.0
      %2731 = vmatprep.mubr.f32.mxu0 0.0
      %2732 = vmatmul.mubr.f32.gmra.mxu0 %v2547
      %v2733 = vpop.f32.mrf.mxu0
      %v2734 = vadd.f32 %v2664, %v2733
      %v2735 = vpop.f32.mrf.mxu0
      %2736 = vdwg.mxu0
      %v2737 = vrot.slane %v2734, 4
      %v2738 = vadd.f32 %v2734, %v2737
      %v2739 = vrot.slane %v2738, 2
      %v2740 = vadd.f32 %v2738, %v2739
      %v2741 = vrot.slane %v2740, 1
      %v2742 = vadd.f32 %v2740, %v2741
      %v2743 = vmul.f32 %v2742, %v2303
      %v2744 = vmul.f32 %v2734, %v2734
      %v2745 = vrot.slane %v2744, 4
      %v2746 = vadd.f32 %v2744, %v2745
      %v2747 = vrot.slane %v2746, 2
      %v2748 = vadd.f32 %v2746, %v2747
      %v2749 = vrot.slane %v2748, 1
      %v2750 = vadd.f32 %v2748, %v2749
      %v2751 = vmul.f32 %v2750, %v2303
      %v2752 = vmul.f32 %v2743, %v2743
      %v2753 = vsub.f32 %v2751, %v2752
      %v2754 = vmax.f32 %v2753, 0.0
      %v2755 = vsub.f32 %v2734, %v2743
      %v2756 = vadd.f32 %v2754, 1e-05
      %v2757 = vrsqrt.pop %v2756
      %v2758 = vmul.f32 %v2755, %v2757
      %v2759 = vlaneseq
      %v2760 = vshrl.u32 %v2759, 7
      %v2761 = vsub.s32 0, %v2760
      %v2762 = vrot.slane %v2530, %v2761
      %v2763 = vmul.f32 %v2758, %v2762
      %v2764 = vlaneseq
      %v2765 = vshrl.u32 %v2764, 7
      %v2766 = vsub.s32 0, %v2765
      %v2767 = vrot.slane %v2531, %v2766
      %v2768 = vadd.f32 %v2763, %v2767
      %vm2769 = vcmp.gt.f32.partialorder %v2768, 0.0
      %v2770 = vmul.f32 %v2768, 0.01
      %v2771 = vsel %vm2769, %v2768, %v2770
      %v2773 = vrot.slane %v2771, 7
      %v2775 = vsel %vm1034, 0.0, %v2773
      %v2776 = vsel %vm1034, %v2773, 0.0
      %v2779 = vrot.slane %v2775, 1
      %v2780 = vrot.slane %v2776, 1
      %v2781 = vsel %vm257, %v2779, %v2780
      %v2783 = vrot.slane %v2775, 2
      %v2784 = vrot.slane %v2776, 2
      %v2785 = vsel %vm283, %v2783, %v2784
      %v2787 = vld [vmem:[%s2 + $0xcc8] sm:$0xff]
      %v2788 = vld [vmem:[%s2 + $0xcd0] sm:$0xff]
      %v2789 = vld [vmem:[%s2 + $0xcd8] sm:$0xff]
      %v2790 = vld [vmem:[%s2 + $0xce0] sm:$0xff]
      %v2791 = vld [vmem:[%s2 + $0xce8] sm:$0xff]
      %v2792 = vld [vmem:[%s2 + $0xcf0] sm:$0xff]
      %v2793 = vld [vmem:[%s2 + $0xcf8] sm:$0xff]
      %v2794 = vld [vmem:[%s2 + $0xd00] sm:$0xff]
      %v2795 = vld [vmem:[%s2 + $0xd08] sm:$0xff]
      %v2796 = vld [vmem:[%s2 + $0xd10] sm:$0xff]
      %v2797 = vld [vmem:[%s2 + $0xd18] sm:$0xff]
      %v2798 = vld [vmem:[%s2 + $0xd20] sm:$0xff]
      %v2799 = vld [vmem:[%s2 + $0xd28] sm:$0xff]
      %v2800 = vld [vmem:[%s2 + $0xd30] sm:$0xff]
      %v2801 = vld [vmem:[%s2 + $0xd38] sm:$0xff]
      %v2802 = vld [vmem:[%s2 + $0xd40] sm:$0xff]
      %v2803 = vld [vmem:[%s2 + $0xd48] sm:$0xff]
      %v2804 = vld [vmem:[%s2 + $0xd50] sm:$0xff]
      %v2805 = vld [vmem:[%s2 + $0xd58] sm:$0xff]
      %v2806 = vld [vmem:[%s2 + $0xd60] sm:$0xff]
      %v2807 = vld [vmem:[%s2 + $0xd68] sm:$0xff]
      %v2808 = vld [vmem:[%s2 + $0xd70] sm:$0xff]
      %v2809 = vld [vmem:[%s2 + $0xd78] sm:$0xff]
      %v2810 = vld [vmem:[%s2 + $0xd80] sm:$0xff]
      %v2811 = vld [vmem:[%s2 + $0xd88] sm:$0xff]
      %v2812 = vld [vmem:[%s2 + $0xd90] sm:$0xff]
      %v2813 = vld [vmem:[%s2 + $0xd98] sm:$0xff]
      %v2814 = vld [vmem:[%s2 + $0xda0] sm:$0xff]
      %v2815 = vld [vmem:[%s2 + $0xda8] sm:$0xff]
      %v2816 = vld [vmem:[%s2 + $0xdb0] sm:$0xff]
      %v2817 = vld [vmem:[%s2 + $0xdb8] sm:$0xff]
      %v2818 = vld [vmem:[%s2 + $0xdc0] sm:$0xff]
      %v2819 = vld [vmem:[%s2 + $0xdc8] sm:$0xff]
      %v2820 = vld [vmem:[%s2 + $0xdd0] sm:$0xff]
      %v2821 = vld [vmem:[%s2 + $0xdd8] sm:$0xff]
      %v2822 = vld [vmem:[%s2 + $0xde0] sm:$0xff]
      %v2823 = vld [vmem:[%s2 + $0xde8] sm:$0xff]
      %v2824 = vld [vmem:[%s2 + $0xdf0] sm:$0xff]
      %v2825 = vld [vmem:[%s2 + $0xdf8] sm:$0xff]
      %v2826 = vld [vmem:[%s2 + $0xe00] sm:$0xff]
      %v2827 = vld [vmem:[%s2 + $0xe08] sm:$0xff]
      %v2828 = vld [vmem:[%s2 + $0xe10] sm:$0xff]
      %v2829 = vld [vmem:[%s2 + $0xe18] sm:$0xff]
      %v2830 = vld [vmem:[%s2 + $0xe20] sm:$0xff]
      %v2831 = vld [vmem:[%s2 + $0xe28] sm:$0xff]
      %v2832 = vld [vmem:[%s2 + $0xe30] sm:$0xff]
      %v2833 = vld [vmem:[%s2 + $0xe38] sm:$0xff]
      %v2834 = vld [vmem:[%s2 + $0xe40] sm:$0xff]
      %2835 = vmatprep.subr.mxu0 0.0
      %2836 = vmatpush1.msra.mxu0 %v2802
      %2837 = vmatprep.subr.mxu0 0.0
      %2838 = vmatpush1.msra.mxu0 %v2801
      %2839 = vmatprep.subr.mxu0 0.0
      %2840 = vmatpush1.msra.mxu0 %v2800
      %2841 = vmatprep.subr.mxu0 0.0
      %2842 = vmatpush1.msra.mxu0 %v2799
      %2843 = vmatprep.subr.mxu0 0.0
      %2844 = vmatpush1.msra.mxu0 %v2798
      %2845 = vmatprep.subr.mxu0 0.0
      %2846 = vmatpush1.msra.mxu0 %v2797
      %2847 = vmatprep.subr.mxu0 0.0
      %2848 = vmatpush1.msra.mxu0 %v2796
      %2849 = vmatprep.subr.mxu0 0.0
      %2850 = vmatpush1.msra.mxu0 %v2795
      %2851 = vmatprep.subr.mxu0 0.0
      %2852 = vmatpush1.msra.mxu0 %v2794
      %2853 = vmatprep.subr.mxu0 0.0
      %2854 = vmatpush1.msra.mxu0 %v2793
      %2855 = vmatprep.subr.mxu0 0.0
      %2856 = vmatpush1.msra.mxu0 %v2792
      %2857 = vmatprep.subr.mxu0 0.0
      %2858 = vmatpush1.msra.mxu0 %v2791
      %2859 = vmatprep.subr.mxu0 0.0
      %2860 = vmatpush1.msra.mxu0 %v2790
      %2861 = vmatprep.subr.mxu0 0.0
      %2862 = vmatpush1.msra.mxu0 %v2789
      %2863 = vmatprep.subr.mxu0 0.0
      %2864 = vmatpush1.msra.mxu0 %v2788
      %2865 = vmatprep.subr.mxu0 0.0
      %2866 = vmatpush1.msra.mxu0 %v2787
      %2867 = vmatprep.subr.mxu0 0.0
      %2868 = vmatpush2.msra.mxu0 %v2818
      %2869 = vmatprep.subr.mxu0 0.0
      %2870 = vmatpush2.msra.mxu0 %v2817
      %2871 = vmatprep.subr.mxu0 0.0
      %2872 = vmatpush2.msra.mxu0 %v2816
      %2873 = vmatprep.subr.mxu0 0.0
      %2874 = vmatpush2.msra.mxu0 %v2815
      %2875 = vmatprep.subr.mxu0 0.0
      %2876 = vmatpush2.msra.mxu0 %v2814
      %2877 = vmatprep.subr.mxu0 0.0
      %2878 = vmatpush2.msra.mxu0 %v2813
      %2879 = vmatprep.subr.mxu0 0.0
      %2880 = vmatpush2.msra.mxu0 %v2812
      %2881 = vmatprep.subr.mxu0 0.0
      %2882 = vmatpush2.msra.mxu0 %v2811
      %2883 = vmatprep.subr.mxu0 0.0
      %2884 = vmatpush2.msra.mxu0 %v2810
      %2885 = vmatprep.subr.mxu0 0.0
      %2886 = vmatpush2.msra.mxu0 %v2809
      %2887 = vmatprep.subr.mxu0 0.0
      %2888 = vmatpush2.msra.mxu0 %v2808
      %2889 = vmatprep.subr.mxu0 0.0
      %2890 = vmatpush2.msra.mxu0 %v2807
      %2891 = vmatprep.subr.mxu0 0.0
      %2892 = vmatpush2.msra.mxu0 %v2806
      %2893 = vmatprep.subr.mxu0 0.0
      %2894 = vmatpush2.msra.mxu0 %v2805
      %2895 = vmatprep.subr.mxu0 0.0
      %2896 = vmatpush2.msra.mxu0 %v2804
      %2897 = vmatprep.subr.mxu0 0.0
      %2898 = vmatpush2.msra.mxu0 %v2803
      %2899 = vmatprep.mubr.f32.mxu0 %v2781
      %2900 = vmatmul.mubr.f32.gmra.mxu0 %v2775
      %v2901 = vpop.f32.mrf.mxu0
      %v2902 = vadd.f32 0.0, %v2901
      %v2903 = vpop.f32.mrf.mxu0
      %2904 = vdwg.mxu0
      %2905 = vmatprep.subr.mxu0 0.0
      %2906 = vmatpush1.msra.mxu0 %v2834
      %2907 = vmatprep.subr.mxu0 0.0
      %2908 = vmatpush1.msra.mxu0 %v2833
      %2909 = vmatprep.subr.mxu0 0.0
      %2910 = vmatpush1.msra.mxu0 %v2832
      %2911 = vmatprep.subr.mxu0 0.0
      %2912 = vmatpush1.msra.mxu0 %v2831
      %2913 = vmatprep.subr.mxu0 0.0
      %2914 = vmatpush1.msra.mxu0 %v2830
      %2915 = vmatprep.subr.mxu0 0.0
      %2916 = vmatpush1.msra.mxu0 %v2829
      %2917 = vmatprep.subr.mxu0 0.0
      %2918 = vmatpush1.msra.mxu0 %v2828
      %2919 = vmatprep.subr.mxu0 0.0
      %2920 = vmatpush1.msra.mxu0 %v2827
      %2921 = vmatprep.subr.mxu0 0.0
      %2922 = vmatpush1.msra.mxu0 %v2826
      %2923 = vmatprep.subr.mxu0 0.0
      %2924 = vmatpush1.msra.mxu0 %v2825
      %2925 = vmatprep.subr.mxu0 0.0
      %2926 = vmatpush1.msra.mxu0 %v2824
      %2927 = vmatprep.subr.mxu0 0.0
      %2928 = vmatpush1.msra.mxu0 %v2823
      %2929 = vmatprep.subr.mxu0 0.0
      %2930 = vmatpush1.msra.mxu0 %v2822
      %2931 = vmatprep.subr.mxu0 0.0
      %2932 = vmatpush1.msra.mxu0 %v2821
      %2933 = vmatprep.subr.mxu0 0.0
      %2934 = vmatpush1.msra.mxu0 %v2820
      %2935 = vmatprep.subr.mxu0 0.0
      %2936 = vmatpush1.msra.mxu0 %v2819
      %2937 = vmatprep.subr.mxu0 0.0
      %2938 = vmatpush2.msra.mxu0 0.0
      %2939 = vmatprep.subr.mxu0 0.0
      %2940 = vmatpush2.msra.mxu0 0.0
      %2941 = vmatprep.subr.mxu0 0.0
      %2942 = vmatpush2.msra.mxu0 0.0
      %2943 = vmatprep.subr.mxu0 0.0
      %2944 = vmatpush2.msra.mxu0 0.0
      %2945 = vmatprep.subr.mxu0 0.0
      %2946 = vmatpush2.msra.mxu0 0.0
      %2947 = vmatprep.subr.mxu0 0.0
      %2948 = vmatpush2.msra.mxu0 0.0
      %2949 = vmatprep.subr.mxu0 0.0
      %2950 = vmatpush2.msra.mxu0 0.0
      %2951 = vmatprep.subr.mxu0 0.0
      %2952 = vmatpush2.msra.mxu0 0.0
      %2953 = vmatprep.subr.mxu0 0.0
      %2954 = vmatpush2.msra.mxu0 0.0
      %2955 = vmatprep.subr.mxu0 0.0
      %2956 = vmatpush2.msra.mxu0 0.0
      %2957 = vmatprep.subr.mxu0 0.0
      %2958 = vmatpush2.msra.mxu0 0.0
      %2959 = vmatprep.subr.mxu0 0.0
      %2960 = vmatpush2.msra.mxu0 0.0
      %2961 = vmatprep.subr.mxu0 0.0
      %2962 = vmatpush2.msra.mxu0 0.0
      %2963 = vmatprep.subr.mxu0 0.0
      %2964 = vmatpush2.msra.mxu0 0.0
      %2965 = vmatprep.subr.mxu0 0.0
      %2966 = vmatpush2.msra.mxu0 0.0
      %2967 = vmatprep.subr.mxu0 0.0
      %2968 = vmatpush2.msra.mxu0 0.0
      %2969 = vmatprep.mubr.f32.mxu0 0.0
      %2970 = vmatmul.mubr.f32.gmra.mxu0 %v2785
      %v2971 = vpop.f32.mrf.mxu0
      %v2972 = vadd.f32 %v2902, %v2971
      %v2973 = vpop.f32.mrf.mxu0
      %2974 = vdwg.mxu0
      %v2975 = vrot.slane %v2972, 4
      %v2976 = vadd.f32 %v2972, %v2975
      %v2977 = vrot.slane %v2976, 2
      %v2978 = vadd.f32 %v2976, %v2977
      %v2979 = vrot.slane %v2978, 1
      %v2980 = vadd.f32 %v2978, %v2979
      %v2981 = vmul.f32 %v2980, %v2303
      %v2982 = vmul.f32 %v2972, %v2972
      %v2983 = vrot.slane %v2982, 4
      %v2984 = vadd.f32 %v2982, %v2983
      %v2985 = vrot.slane %v2984, 2
      %v2986 = vadd.f32 %v2984, %v2985
      %v2987 = vrot.slane %v2986, 1
      %v2988 = vadd.f32 %v2986, %v2987
      %v2989 = vmul.f32 %v2988, %v2303
      %v2990 = vmul.f32 %v2981, %v2981
      %v2991 = vsub.f32 %v2989, %v2990
      %v2992 = vmax.f32 %v2991, 0.0
      %v2993 = vsub.f32 %v2972, %v2981
      %v2994 = vadd.f32 %v2992, 1e-05
      %v2995 = vrsqrt.pop %v2994
      %v2996 = vmul.f32 %v2993, %v2995
      %v2997 = vlaneseq
      %v2998 = vshrl.u32 %v2997, 7
      %v2999 = vsub.s32 0, %v2998
      %v3000 = vrot.slane %v2532, %v2999
      %v3001 = vmul.f32 %v2996, %v3000
      %v3002 = vlaneseq
      %v3003 = vshrl.u32 %v3002, 7
      %v3004 = vsub.s32 0, %v3003
      %v3005 = vrot.slane %v2533, %v3004
      %v3006 = vadd.f32 %v3001, %v3005
      %v3007 = vadd.f32 %v2322, %v3006
      %v3009 = vrot.slane %v3007, 7
      %v3011 = vsel %vm1034, 0.0, %v3009
      %v3012 = vsel %vm1034, %v3009, 0.0
      %v3015 = vrot.slane %v3011, 1
      %v3016 = vrot.slane %v3012, 1
      %v3017 = vsel %vm257, %v3015, %v3016
      %v3019 = vrot.slane %v3011, 2
      %v3020 = vrot.slane %v3012, 2
      %v3021 = vsel %vm283, %v3019, %v3020
      %3023 = vmatprep.subr.mxu0 0.0
      %3024 = vmatpush1.msra.mxu0 %v2564
      %3025 = vmatprep.subr.mxu0 0.0
      %3026 = vmatpush1.msra.mxu0 %v2563
      %3027 = vmatprep.subr.mxu0 0.0
      %3028 = vmatpush1.msra.mxu0 %v2562
      %3029 = vmatprep.subr.mxu0 0.0
      %3030 = vmatpush1.msra.mxu0 %v2561
      %3031 = vmatprep.subr.mxu0 0.0
      %3032 = vmatpush1.msra.mxu0 %v2560
      %3033 = vmatprep.subr.mxu0 0.0
      %3034 = vmatpush1.msra.mxu0 %v2559
      %3035 = vmatprep.subr.mxu0 0.0
      %3036 = vmatpush1.msra.mxu0 %v2558
      %3037 = vmatprep.subr.mxu0 0.0
      %3038 = vmatpush1.msra.mxu0 %v2557
      %3039 = vmatprep.subr.mxu0 0.0
      %3040 = vmatpush1.msra.mxu0 %v2556
      %3041 = vmatprep.subr.mxu0 0.0
      %3042 = vmatpush1.msra.mxu0 %v2555
      %3043 = vmatprep.subr.mxu0 0.0
      %3044 = vmatpush1.msra.mxu0 %v2554
      %3045 = vmatprep.subr.mxu0 0.0
      %3046 = vmatpush1.msra.mxu0 %v2553
      %3047 = vmatprep.subr.mxu0 0.0
      %3048 = vmatpush1.msra.mxu0 %v2552
      %3049 = vmatprep.subr.mxu0 0.0
      %3050 = vmatpush1.msra.mxu0 %v2551
      %3051 = vmatprep.subr.mxu0 0.0
      %3052 = vmatpush1.msra.mxu0 %v2550
      %3053 = vmatprep.subr.mxu0 0.0
      %3054 = vmatpush1.msra.mxu0 %v2549
      %3055 = vmatprep.subr.mxu0 0.0
      %3056 = vmatpush2.msra.mxu0 %v2580
      %3057 = vmatprep.subr.mxu0 0.0
      %3058 = vmatpush2.msra.mxu0 %v2579
      %3059 = vmatprep.subr.mxu0 0.0
      %3060 = vmatpush2.msra.mxu0 %v2578
      %3061 = vmatprep.subr.mxu0 0.0
      %3062 = vmatpush2.msra.mxu0 %v2577
      %3063 = vmatprep.subr.mxu0 0.0
      %3064 = vmatpush2.msra.mxu0 %v2576
      %3065 = vmatprep.subr.mxu0 0.0
      %3066 = vmatpush2.msra.mxu0 %v2575
      %3067 = vmatprep.subr.mxu0 0.0
      %3068 = vmatpush2.msra.mxu0 %v2574
      %3069 = vmatprep.subr.mxu0 0.0
      %3070 = vmatpush2.msra.mxu0 %v2573
      %3071 = vmatprep.subr.mxu0 0.0
      %3072 = vmatpush2.msra.mxu0 %v2572
      %3073 = vmatprep.subr.mxu0 0.0
      %3074 = vmatpush2.msra.mxu0 %v2571
      %3075 = vmatprep.subr.mxu0 0.0
      %3076 = vmatpush2.msra.mxu0 %v2570
      %3077 = vmatprep.subr.mxu0 0.0
      %3078 = vmatpush2.msra.mxu0 %v2569
      %3079 = vmatprep.subr.mxu0 0.0
      %3080 = vmatpush2.msra.mxu0 %v2568
      %3081 = vmatprep.subr.mxu0 0.0
      %3082 = vmatpush2.msra.mxu0 %v2567
      %3083 = vmatprep.subr.mxu0 0.0
      %3084 = vmatpush2.msra.mxu0 %v2566
      %3085 = vmatprep.subr.mxu0 0.0
      %3086 = vmatpush2.msra.mxu0 %v2565
      %3087 = vmatprep.mubr.f32.mxu0 %v3017
      %3088 = vmatmul.mubr.f32.gmra.mxu0 %v3011
      %v3089 = vpop.f32.mrf.mxu0
      %v3090 = vadd.f32 %v2527, %v3089
      %v3091 = vpop.f32.mrf.mxu0
      %3092 = vdwg.mxu0
      %3093 = vmatprep.subr.mxu0 0.0
      %3094 = vmatpush1.msra.mxu0 %v2596
      %3095 = vmatprep.subr.mxu0 0.0
      %3096 = vmatpush1.msra.mxu0 %v2595
      %3097 = vmatprep.subr.mxu0 0.0
      %3098 = vmatpush1.msra.mxu0 %v2594
      %3099 = vmatprep.subr.mxu0 0.0
      %3100 = vmatpush1.msra.mxu0 %v2593
      %3101 = vmatprep.subr.mxu0 0.0
      %3102 = vmatpush1.msra.mxu0 %v2592
      %3103 = vmatprep.subr.mxu0 0.0
      %3104 = vmatpush1.msra.mxu0 %v2591
      %3105 = vmatprep.subr.mxu0 0.0
      %3106 = vmatpush1.msra.mxu0 %v2590
      %3107 = vmatprep.subr.mxu0 0.0
      %3108 = vmatpush1.msra.mxu0 %v2589
      %3109 = vmatprep.subr.mxu0 0.0
      %3110 = vmatpush1.msra.mxu0 %v2588
      %3111 = vmatprep.subr.mxu0 0.0
      %3112 = vmatpush1.msra.mxu0 %v2587
      %3113 = vmatprep.subr.mxu0 0.0
      %3114 = vmatpush1.msra.mxu0 %v2586
      %3115 = vmatprep.subr.mxu0 0.0
      %3116 = vmatpush1.msra.mxu0 %v2585
      %3117 = vmatprep.subr.mxu0 0.0
      %3118 = vmatpush1.msra.mxu0 %v2584
      %3119 = vmatprep.subr.mxu0 0.0
      %3120 = vmatpush1.msra.mxu0 %v2583
      %3121 = vmatprep.subr.mxu0 0.0
      %3122 = vmatpush1.msra.mxu0 %v2582
      %3123 = vmatprep.subr.mxu0 0.0
      %3124 = vmatpush1.msra.mxu0 %v2581
      %3125 = vmatprep.subr.mxu0 0.0
      %3126 = vmatpush2.msra.mxu0 0.0
      %3127 = vmatprep.subr.mxu0 0.0
      %3128 = vmatpush2.msra.mxu0 0.0
      %3129 = vmatprep.subr.mxu0 0.0
      %3130 = vmatpush2.msra.mxu0 0.0
      %3131 = vmatprep.subr.mxu0 0.0
      %3132 = vmatpush2.msra.mxu0 0.0
      %3133 = vmatprep.subr.mxu0 0.0
      %3134 = vmatpush2.msra.mxu0 0.0
      %3135 = vmatprep.subr.mxu0 0.0
      %3136 = vmatpush2.msra.mxu0 0.0
      %3137 = vmatprep.subr.mxu0 0.0
      %3138 = vmatpush2.msra.mxu0 0.0
      %3139 = vmatprep.subr.mxu0 0.0
      %3140 = vmatpush2.msra.mxu0 0.0
      %3141 = vmatprep.subr.mxu0 0.0
      %3142 = vmatpush2.msra.mxu0 0.0
      %3143 = vmatprep.subr.mxu0 0.0
      %3144 = vmatpush2.msra.mxu0 0.0
      %3145 = vmatprep.subr.mxu0 0.0
      %3146 = vmatpush2.msra.mxu0 0.0
      %3147 = vmatprep.subr.mxu0 0.0
      %3148 = vmatpush2.msra.mxu0 0.0
      %3149 = vmatprep.subr.mxu0 0.0
      %3150 = vmatpush2.msra.mxu0 0.0
      %3151 = vmatprep.subr.mxu0 0.0
      %3152 = vmatpush2.msra.mxu0 0.0
      %3153 = vmatprep.subr.mxu0 0.0
      %3154 = vmatpush2.msra.mxu0 0.0
      %3155 = vmatprep.subr.mxu0 0.0
      %3156 = vmatpush2.msra.mxu0 0.0
      %3157 = vmatprep.mubr.f32.mxu0 0.0
      %3158 = vmatmul.mubr.f32.gmra.mxu0 %v3021
      %v3159 = vpop.f32.mrf.mxu0
      %v3160 = vadd.f32 %v3090, %v3159
      %v3161 = vpop.f32.mrf.mxu0
      %3162 = vdwg.mxu0
      %v3163 = vrot.slane %v3160, 4
      %v3164 = vadd.f32 %v3160, %v3163
      %v3165 = vrot.slane %v3164, 2
      %v3166 = vadd.f32 %v3164, %v3165
      %v3167 = vrot.slane %v3166, 1
      %v3168 = vadd.f32 %v3166, %v3167
      %v3169 = vmul.f32 %v3168, %v2303
      %v3170 = vmul.f32 %v3160, %v3160
      %v3171 = vrot.slane %v3170, 4
      %v3172 = vadd.f32 %v3170, %v3171
      %v3173 = vrot.slane %v3172, 2
      %v3174 = vadd.f32 %v3172, %v3173
      %v3175 = vrot.slane %v3174, 1
      %v3176 = vadd.f32 %v3174, %v3175
      %v3177 = vmul.f32 %v3176, %v2303
      %v3178 = vmul.f32 %v3169, %v3169
      %v3179 = vsub.f32 %v3177, %v3178
      %v3180 = vmax.f32 %v3179, 0.0
      %v3181 = vsub.f32 %v3160, %v3169
      %v3182 = vadd.f32 %v3180, 1e-05
      %v3183 = vrsqrt.pop %v3182
      %v3184 = vmul.f32 %v3181, %v3183
      %v3185 = vmul.f32 %v3184, %v2762
      %v3186 = vadd.f32 %v3185, %v2767
      %vm3187 = vcmp.gt.f32.partialorder %v3186, 0.0
      %v3188 = vmul.f32 %v3186, 0.01
      %v3189 = vsel %vm3187, %v3186, %v3188
      %v3191 = vrot.slane %v3189, 7
      %v3193 = vsel %vm1034, 0.0, %v3191
      %v3194 = vsel %vm1034, %v3191, 0.0
      %v3197 = vrot.slane %v3193, 1
      %v3198 = vrot.slane %v3194, 1
      %v3199 = vsel %vm257, %v3197, %v3198
      %v3201 = vrot.slane %v3193, 2
      %v3202 = vrot.slane %v3194, 2
      %v3203 = vsel %vm283, %v3201, %v3202
      %3205 = vmatprep.subr.mxu0 0.0
      %3206 = vmatpush1.msra.mxu0 %v2802
      %3207 = vmatprep.subr.mxu0 0.0
      %3208 = vmatpush1.msra.mxu0 %v2801
      %3209 = vmatprep.subr.mxu0 0.0
      %3210 = vmatpush1.msra.mxu0 %v2800
      %3211 = vmatprep.subr.mxu0 0.0
      %3212 = vmatpush1.msra.mxu0 %v2799
      %3213 = vmatprep.subr.mxu0 0.0
      %3214 = vmatpush1.msra.mxu0 %v2798
      %3215 = vmatprep.subr.mxu0 0.0
      %3216 = vmatpush1.msra.mxu0 %v2797
      %3217 = vmatprep.subr.mxu0 0.0
      %3218 = vmatpush1.msra.mxu0 %v2796
      %3219 = vmatprep.subr.mxu0 0.0
      %3220 = vmatpush1.msra.mxu0 %v2795
      %3221 = vmatprep.subr.mxu0 0.0
      %3222 = vmatpush1.msra.mxu0 %v2794
      %3223 = vmatprep.subr.mxu0 0.0
      %3224 = vmatpush1.msra.mxu0 %v2793
      %3225 = vmatprep.subr.mxu0 0.0
      %3226 = vmatpush1.msra.mxu0 %v2792
      %3227 = vmatprep.subr.mxu0 0.0
      %3228 = vmatpush1.msra.mxu0 %v2791
      %3229 = vmatprep.subr.mxu0 0.0
      %3230 = vmatpush1.msra.mxu0 %v2790
      %3231 = vmatprep.subr.mxu0 0.0
      %3232 = vmatpush1.msra.mxu0 %v2789
      %3233 = vmatprep.subr.mxu0 0.0
      %3234 = vmatpush1.msra.mxu0 %v2788
      %3235 = vmatprep.subr.mxu0 0.0
      %3236 = vmatpush1.msra.mxu0 %v2787
      %3237 = vmatprep.subr.mxu0 0.0
      %3238 = vmatpush2.msra.mxu0 %v2818
      %3239 = vmatprep.subr.mxu0 0.0
      %3240 = vmatpush2.msra.mxu0 %v2817
      %3241 = vmatprep.subr.mxu0 0.0
      %3242 = vmatpush2.msra.mxu0 %v2816
      %3243 = vmatprep.subr.mxu0 0.0
      %3244 = vmatpush2.msra.mxu0 %v2815
      %3245 = vmatprep.subr.mxu0 0.0
      %3246 = vmatpush2.msra.mxu0 %v2814
      %3247 = vmatprep.subr.mxu0 0.0
      %3248 = vmatpush2.msra.mxu0 %v2813
      %3249 = vmatprep.subr.mxu0 0.0
      %3250 = vmatpush2.msra.mxu0 %v2812
      %3251 = vmatprep.subr.mxu0 0.0
      %3252 = vmatpush2.msra.mxu0 %v2811
      %3253 = vmatprep.subr.mxu0 0.0
      %3254 = vmatpush2.msra.mxu0 %v2810
      %3255 = vmatprep.subr.mxu0 0.0
      %3256 = vmatpush2.msra.mxu0 %v2809
      %3257 = vmatprep.subr.mxu0 0.0
      %3258 = vmatpush2.msra.mxu0 %v2808
      %3259 = vmatprep.subr.mxu0 0.0
      %3260 = vmatpush2.msra.mxu0 %v2807
      %3261 = vmatprep.subr.mxu0 0.0
      %3262 = vmatpush2.msra.mxu0 %v2806
      %3263 = vmatprep.subr.mxu0 0.0
      %3264 = vmatpush2.msra.mxu0 %v2805
      %3265 = vmatprep.subr.mxu0 0.0
      %3266 = vmatpush2.msra.mxu0 %v2804
      %3267 = vmatprep.subr.mxu0 0.0
      %3268 = vmatpush2.msra.mxu0 %v2803
      %3269 = vmatprep.mubr.f32.mxu0 %v3199
      %3270 = vmatmul.mubr.f32.gmra.mxu0 %v3193
      %v3271 = vpop.f32.mrf.mxu0
      %v3272 = vadd.f32 0.0, %v3271
      %v3273 = vpop.f32.mrf.mxu0
      %3274 = vdwg.mxu0
      %3275 = vmatprep.subr.mxu0 0.0
      %3276 = vmatpush1.msra.mxu0 %v2834
      %3277 = vmatprep.subr.mxu0 0.0
      %3278 = vmatpush1.msra.mxu0 %v2833
      %3279 = vmatprep.subr.mxu0 0.0
      %3280 = vmatpush1.msra.mxu0 %v2832
      %3281 = vmatprep.subr.mxu0 0.0
      %3282 = vmatpush1.msra.mxu0 %v2831
      %3283 = vmatprep.subr.mxu0 0.0
      %3284 = vmatpush1.msra.mxu0 %v2830
      %3285 = vmatprep.subr.mxu0 0.0
      %3286 = vmatpush1.msra.mxu0 %v2829
      %3287 = vmatprep.subr.mxu0 0.0
      %3288 = vmatpush1.msra.mxu0 %v2828
      %3289 = vmatprep.subr.mxu0 0.0
      %3290 = vmatpush1.msra.mxu0 %v2827
      %3291 = vmatprep.subr.mxu0 0.0
      %3292 = vmatpush1.msra.mxu0 %v2826
      %3293 = vmatprep.subr.mxu0 0.0
      %3294 = vmatpush1.msra.mxu0 %v2825
      %3295 = vmatprep.subr.mxu0 0.0
      %3296 = vmatpush1.msra.mxu0 %v2824
      %3297 = vmatprep.subr.mxu0 0.0
      %3298 = vmatpush1.msra.mxu0 %v2823
      %3299 = vmatprep.subr.mxu0 0.0
      %3300 = vmatpush1.msra.mxu0 %v2822
      %3301 = vmatprep.subr.mxu0 0.0
      %3302 = vmatpush1.msra.mxu0 %v2821
      %3303 = vmatprep.subr.mxu0 0.0
      %3304 = vmatpush1.msra.mxu0 %v2820
      %3305 = vmatprep.subr.mxu0 0.0
      %3306 = vmatpush1.msra.mxu0 %v2819
      %3307 = vmatprep.subr.mxu0 0.0
      %3308 = vmatpush2.msra.mxu0 0.0
      %3309 = vmatprep.subr.mxu0 0.0
      %3310 = vmatpush2.msra.mxu0 0.0
      %3311 = vmatprep.subr.mxu0 0.0
      %3312 = vmatpush2.msra.mxu0 0.0
      %3313 = vmatprep.subr.mxu0 0.0
      %3314 = vmatpush2.msra.mxu0 0.0
      %3315 = vmatprep.subr.mxu0 0.0
      %3316 = vmatpush2.msra.mxu0 0.0
      %3317 = vmatprep.subr.mxu0 0.0
      %3318 = vmatpush2.msra.mxu0 0.0
      %3319 = vmatprep.subr.mxu0 0.0
      %3320 = vmatpush2.msra.mxu0 0.0
      %3321 = vmatprep.subr.mxu0 0.0
      %3322 = vmatpush2.msra.mxu0 0.0
      %3323 = vmatprep.subr.mxu0 0.0
      %3324 = vmatpush2.msra.mxu0 0.0
      %3325 = vmatprep.subr.mxu0 0.0
      %3326 = vmatpush2.msra.mxu0 0.0
      %3327 = vmatprep.subr.mxu0 0.0
      %3328 = vmatpush2.msra.mxu0 0.0
      %3329 = vmatprep.subr.mxu0 0.0
      %3330 = vmatpush2.msra.mxu0 0.0
      %3331 = vmatprep.subr.mxu0 0.0
      %3332 = vmatpush2.msra.mxu0 0.0
      %3333 = vmatprep.subr.mxu0 0.0
      %3334 = vmatpush2.msra.mxu0 0.0
      %3335 = vmatprep.subr.mxu0 0.0
      %3336 = vmatpush2.msra.mxu0 0.0
      %3337 = vmatprep.subr.mxu0 0.0
      %3338 = vmatpush2.msra.mxu0 0.0
      %3339 = vmatprep.mubr.f32.mxu0 0.0
      %3340 = vmatmul.mubr.f32.gmra.mxu0 %v3203
      %v3341 = vpop.f32.mrf.mxu0
      %v3342 = vadd.f32 %v3272, %v3341
      %v3343 = vpop.f32.mrf.mxu0
      %3344 = vdwg.mxu0
      %v3345 = vrot.slane %v3342, 4
      %v3346 = vadd.f32 %v3342, %v3345
      %v3347 = vrot.slane %v3346, 2
      %v3348 = vadd.f32 %v3346, %v3347
      %v3349 = vrot.slane %v3348, 1
      %v3350 = vadd.f32 %v3348, %v3349
      %v3351 = vmul.f32 %v3350, %v2303
      %v3352 = vmul.f32 %v3342, %v3342
      %v3353 = vrot.slane %v3352, 4
      %v3354 = vadd.f32 %v3352, %v3353
      %v3355 = vrot.slane %v3354, 2
      %v3356 = vadd.f32 %v3354, %v3355
      %v3357 = vrot.slane %v3356, 1
      %v3358 = vadd.f32 %v3356, %v3357
      %v3359 = vmul.f32 %v3358, %v2303
      %v3360 = vmul.f32 %v3351, %v3351
      %v3361 = vsub.f32 %v3359, %v3360
      %v3362 = vmax.f32 %v3361, 0.0
      %v3363 = vsub.f32 %v3342, %v3351
      %v3364 = vadd.f32 %v3362, 1e-05
      %v3365 = vrsqrt.pop %v3364
      %v3366 = vmul.f32 %v3363, %v3365
      %v3367 = vmul.f32 %v3366, %v3000
      %v3368 = vadd.f32 %v3367, %v3005
      %v3369 = vadd.f32 %v3007, %v3368
      %v3371 = vrot.slane %v3369, 7
      %v3373 = vsel %vm1034, 0.0, %v3371
      %v3374 = vsel %vm1034, %v3371, 0.0
      %v3377 = vrot.slane %v3373, 1
      %v3378 = vrot.slane %v3374, 1
      %v3379 = vsel %vm257, %v3377, %v3378
      %v3381 = vrot.slane %v3373, 2
      %v3382 = vrot.slane %v3374, 2
      %v3383 = vsel %vm283, %v3381, %v3382
      %3385 = vmatprep.subr.mxu0 0.0
      %3386 = vmatpush1.msra.mxu0 %v2564
      %3387 = vmatprep.subr.mxu0 0.0
      %3388 = vmatpush1.msra.mxu0 %v2563
      %3389 = vmatprep.subr.mxu0 0.0
      %3390 = vmatpush1.msra.mxu0 %v2562
      %3391 = vmatprep.subr.mxu0 0.0
      %3392 = vmatpush1.msra.mxu0 %v2561
      %3393 = vmatprep.subr.mxu0 0.0
      %3394 = vmatpush1.msra.mxu0 %v2560
      %3395 = vmatprep.subr.mxu0 0.0
      %3396 = vmatpush1.msra.mxu0 %v2559
      %3397 = vmatprep.subr.mxu0 0.0
      %3398 = vmatpush1.msra.mxu0 %v2558
      %3399 = vmatprep.subr.mxu0 0.0
      %3400 = vmatpush1.msra.mxu0 %v2557
      %3401 = vmatprep.subr.mxu0 0.0
      %3402 = vmatpush1.msra.mxu0 %v2556
      %3403 = vmatprep.subr.mxu0 0.0
      %3404 = vmatpush1.msra.mxu0 %v2555
      %3405 = vmatprep.subr.mxu0 0.0
      %3406 = vmatpush1.msra.mxu0 %v2554
      %3407 = vmatprep.subr.mxu0 0.0
      %3408 = vmatpush1.msra.mxu0 %v2553
      %3409 = vmatprep.subr.mxu0 0.0
      %3410 = vmatpush1.msra.mxu0 %v2552
      %3411 = vmatprep.subr.mxu0 0.0
      %3412 = vmatpush1.msra.mxu0 %v2551
      %3413 = vmatprep.subr.mxu0 0.0
      %3414 = vmatpush1.msra.mxu0 %v2550
      %3415 = vmatprep.subr.mxu0 0.0
      %3416 = vmatpush1.msra.mxu0 %v2549
      %3417 = vmatprep.subr.mxu0 0.0
      %3418 = vmatpush2.msra.mxu0 %v2580
      %3419 = vmatprep.subr.mxu0 0.0
      %3420 = vmatpush2.msra.mxu0 %v2579
      %3421 = vmatprep.subr.mxu0 0.0
      %3422 = vmatpush2.msra.mxu0 %v2578
      %3423 = vmatprep.subr.mxu0 0.0
      %3424 = vmatpush2.msra.mxu0 %v2577
      %3425 = vmatprep.subr.mxu0 0.0
      %3426 = vmatpush2.msra.mxu0 %v2576
      %3427 = vmatprep.subr.mxu0 0.0
      %3428 = vmatpush2.msra.mxu0 %v2575
      %3429 = vmatprep.subr.mxu0 0.0
      %3430 = vmatpush2.msra.mxu0 %v2574
      %3431 = vmatprep.subr.mxu0 0.0
      %3432 = vmatpush2.msra.mxu0 %v2573
      %3433 = vmatprep.subr.mxu0 0.0
      %3434 = vmatpush2.msra.mxu0 %v2572
      %3435 = vmatprep.subr.mxu0 0.0
      %3436 = vmatpush2.msra.mxu0 %v2571
      %3437 = vmatprep.subr.mxu0 0.0
      %3438 = vmatpush2.msra.mxu0 %v2570
      %3439 = vmatprep.subr.mxu0 0.0
      %3440 = vmatpush2.msra.mxu0 %v2569
      %3441 = vmatprep.subr.mxu0 0.0
      %3442 = vmatpush2.msra.mxu0 %v2568
      %3443 = vmatprep.subr.mxu0 0.0
      %3444 = vmatpush2.msra.mxu0 %v2567
      %3445 = vmatprep.subr.mxu0 0.0
      %3446 = vmatpush2.msra.mxu0 %v2566
      %3447 = vmatprep.subr.mxu0 0.0
      %3448 = vmatpush2.msra.mxu0 %v2565
      %3449 = vmatprep.mubr.f32.mxu0 %v3379
      %3450 = vmatmul.mubr.f32.gmra.mxu0 %v3373
      %v3451 = vpop.f32.mrf.mxu0
      %v3452 = vadd.f32 %v2527, %v3451
      %v3453 = vpop.f32.mrf.mxu0
      %3454 = vdwg.mxu0
      %3455 = vmatprep.subr.mxu0 0.0
      %3456 = vmatpush1.msra.mxu0 %v2596
      %3457 = vmatprep.subr.mxu0 0.0
      %3458 = vmatpush1.msra.mxu0 %v2595
      %3459 = vmatprep.subr.mxu0 0.0
      %3460 = vmatpush1.msra.mxu0 %v2594
      %3461 = vmatprep.subr.mxu0 0.0
      %3462 = vmatpush1.msra.mxu0 %v2593
      %3463 = vmatprep.subr.mxu0 0.0
      %3464 = vmatpush1.msra.mxu0 %v2592
      %3465 = vmatprep.subr.mxu0 0.0
      %3466 = vmatpush1.msra.mxu0 %v2591
      %3467 = vmatprep.subr.mxu0 0.0
      %3468 = vmatpush1.msra.mxu0 %v2590
      %3469 = vmatprep.subr.mxu0 0.0
      %3470 = vmatpush1.msra.mxu0 %v2589
      %3471 = vmatprep.subr.mxu0 0.0
      %3472 = vmatpush1.msra.mxu0 %v2588
      %3473 = vmatprep.subr.mxu0 0.0
      %3474 = vmatpush1.msra.mxu0 %v2587
      %3475 = vmatprep.subr.mxu0 0.0
      %3476 = vmatpush1.msra.mxu0 %v2586
      %3477 = vmatprep.subr.mxu0 0.0
      %3478 = vmatpush1.msra.mxu0 %v2585
      %3479 = vmatprep.subr.mxu0 0.0
      %3480 = vmatpush1.msra.mxu0 %v2584
      %3481 = vmatprep.subr.mxu0 0.0
      %3482 = vmatpush1.msra.mxu0 %v2583
      %3483 = vmatprep.subr.mxu0 0.0
      %3484 = vmatpush1.msra.mxu0 %v2582
      %3485 = vmatprep.subr.mxu0 0.0
      %3486 = vmatpush1.msra.mxu0 %v2581
      %3487 = vmatprep.subr.mxu0 0.0
      %3488 = vmatpush2.msra.mxu0 0.0
      %3489 = vmatprep.subr.mxu0 0.0
      %3490 = vmatpush2.msra.mxu0 0.0
      %3491 = vmatprep.subr.mxu0 0.0
      %3492 = vmatpush2.msra.mxu0 0.0
      %3493 = vmatprep.subr.mxu0 0.0
      %3494 = vmatpush2.msra.mxu0 0.0
      %3495 = vmatprep.subr.mxu0 0.0
      %3496 = vmatpush2.msra.mxu0 0.0
      %3497 = vmatprep.subr.mxu0 0.0
      %3498 = vmatpush2.msra.mxu0 0.0
      %3499 = vmatprep.subr.mxu0 0.0
      %3500 = vmatpush2.msra.mxu0 0.0
      %3501 = vmatprep.subr.mxu0 0.0
      %3502 = vmatpush2.msra.mxu0 0.0
      %3503 = vmatprep.subr.mxu0 0.0
      %3504 = vmatpush2.msra.mxu0 0.0
      %3505 = vmatprep.subr.mxu0 0.0
      %3506 = vmatpush2.msra.mxu0 0.0
      %3507 = vmatprep.subr.mxu0 0.0
      %3508 = vmatpush2.msra.mxu0 0.0
      %3509 = vmatprep.subr.mxu0 0.0
      %3510 = vmatpush2.msra.mxu0 0.0
      %3511 = vmatprep.subr.mxu0 0.0
      %3512 = vmatpush2.msra.mxu0 0.0
      %3513 = vmatprep.subr.mxu0 0.0
      %3514 = vmatpush2.msra.mxu0 0.0
      %3515 = vmatprep.subr.mxu0 0.0
      %3516 = vmatpush2.msra.mxu0 0.0
      %3517 = vmatprep.subr.mxu0 0.0
      %3518 = vmatpush2.msra.mxu0 0.0
      %3519 = vmatprep.mubr.f32.mxu0 0.0
      %3520 = vmatmul.mubr.f32.gmra.mxu0 %v3383
      %v3521 = vpop.f32.mrf.mxu0
      %v3522 = vadd.f32 %v3452, %v3521
      %v3523 = vpop.f32.mrf.mxu0
      %3524 = vdwg.mxu0
      %v3525 = vrot.slane %v3522, 4
      %v3526 = vadd.f32 %v3522, %v3525
      %v3527 = vrot.slane %v3526, 2
      %v3528 = vadd.f32 %v3526, %v3527
      %v3529 = vrot.slane %v3528, 1
      %v3530 = vadd.f32 %v3528, %v3529
      %v3531 = vmul.f32 %v3530, %v2303
      %v3532 = vmul.f32 %v3522, %v3522
      %v3533 = vrot.slane %v3532, 4
      %v3534 = vadd.f32 %v3532, %v3533
      %v3535 = vrot.slane %v3534, 2
      %v3536 = vadd.f32 %v3534, %v3535
      %v3537 = vrot.slane %v3536, 1
      %v3538 = vadd.f32 %v3536, %v3537
      %v3539 = vmul.f32 %v3538, %v2303
      %v3540 = vmul.f32 %v3531, %v3531
      %v3541 = vsub.f32 %v3539, %v3540
      %v3542 = vmax.f32 %v3541, 0.0
      %v3543 = vsub.f32 %v3522, %v3531
      %v3544 = vadd.f32 %v3542, 1e-05
      %v3545 = vrsqrt.pop %v3544
      %v3546 = vmul.f32 %v3543, %v3545
      %v3547 = vmul.f32 %v3546, %v2762
      %v3548 = vadd.f32 %v3547, %v2767
      %vm3549 = vcmp.gt.f32.partialorder %v3548, 0.0
      %v3550 = vmul.f32 %v3548, 0.01
      %v3551 = vsel %vm3549, %v3548, %v3550
      %v3553 = vrot.slane %v3551, 7
      %v3555 = vsel %vm1034, 0.0, %v3553
      %v3556 = vsel %vm1034, %v3553, 0.0
      %v3559 = vrot.slane %v3555, 1
      %v3560 = vrot.slane %v3556, 1
      %v3561 = vsel %vm257, %v3559, %v3560
      %v3563 = vrot.slane %v3555, 2
      %v3564 = vrot.slane %v3556, 2
      %v3565 = vsel %vm283, %v3563, %v3564
      %3567 = vmatprep.subr.mxu0 0.0
      %3568 = vmatpush1.msra.mxu0 %v2802
      %3569 = vmatprep.subr.mxu0 0.0
      %3570 = vmatpush1.msra.mxu0 %v2801
      %3571 = vmatprep.subr.mxu0 0.0
      %3572 = vmatpush1.msra.mxu0 %v2800
      %3573 = vmatprep.subr.mxu0 0.0
      %3574 = vmatpush1.msra.mxu0 %v2799
      %3575 = vmatprep.subr.mxu0 0.0
      %3576 = vmatpush1.msra.mxu0 %v2798
      %3577 = vmatprep.subr.mxu0 0.0
      %3578 = vmatpush1.msra.mxu0 %v2797
      %3579 = vmatprep.subr.mxu0 0.0
      %3580 = vmatpush1.msra.mxu0 %v2796
      %3581 = vmatprep.subr.mxu0 0.0
      %3582 = vmatpush1.msra.mxu0 %v2795
      %3583 = vmatprep.subr.mxu0 0.0
      %3584 = vmatpush1.msra.mxu0 %v2794
      %3585 = vmatprep.subr.mxu0 0.0
      %3586 = vmatpush1.msra.mxu0 %v2793
      %3587 = vmatprep.subr.mxu0 0.0
      %3588 = vmatpush1.msra.mxu0 %v2792
      %3589 = vmatprep.subr.mxu0 0.0
      %3590 = vmatpush1.msra.mxu0 %v2791
      %3591 = vmatprep.subr.mxu0 0.0
      %3592 = vmatpush1.msra.mxu0 %v2790
      %3593 = vmatprep.subr.mxu0 0.0
      %3594 = vmatpush1.msra.mxu0 %v2789
      %3595 = vmatprep.subr.mxu0 0.0
      %3596 = vmatpush1.msra.mxu0 %v2788
      %3597 = vmatprep.subr.mxu0 0.0
      %3598 = vmatpush1.msra.mxu0 %v2787
      %3599 = vmatprep.subr.mxu0 0.0
      %3600 = vmatpush2.msra.mxu0 %v2818
      %3601 = vmatprep.subr.mxu0 0.0
      %3602 = vmatpush2.msra.mxu0 %v2817
      %3603 = vmatprep.subr.mxu0 0.0
      %3604 = vmatpush2.msra.mxu0 %v2816
      %3605 = vmatprep.subr.mxu0 0.0
      %3606 = vmatpush2.msra.mxu0 %v2815
      %3607 = vmatprep.subr.mxu0 0.0
      %3608 = vmatpush2.msra.mxu0 %v2814
      %3609 = vmatprep.subr.mxu0 0.0
      %3610 = vmatpush2.msra.mxu0 %v2813
      %3611 = vmatprep.subr.mxu0 0.0
      %3612 = vmatpush2.msra.mxu0 %v2812
      %3613 = vmatprep.subr.mxu0 0.0
      %3614 = vmatpush2.msra.mxu0 %v2811
      %3615 = vmatprep.subr.mxu0 0.0
      %3616 = vmatpush2.msra.mxu0 %v2810
      %3617 = vmatprep.subr.mxu0 0.0
      %3618 = vmatpush2.msra.mxu0 %v2809
      %3619 = vmatprep.subr.mxu0 0.0
      %3620 = vmatpush2.msra.mxu0 %v2808
      %3621 = vmatprep.subr.mxu0 0.0
      %3622 = vmatpush2.msra.mxu0 %v2807
      %3623 = vmatprep.subr.mxu0 0.0
      %3624 = vmatpush2.msra.mxu0 %v2806
      %3625 = vmatprep.subr.mxu0 0.0
      %3626 = vmatpush2.msra.mxu0 %v2805
      %3627 = vmatprep.subr.mxu0 0.0
      %3628 = vmatpush2.msra.mxu0 %v2804
      %3629 = vmatprep.subr.mxu0 0.0
      %3630 = vmatpush2.msra.mxu0 %v2803
      %3631 = vmatprep.mubr.f32.mxu0 %v3561
      %3632 = vmatmul.mubr.f32.gmra.mxu0 %v3555
      %v3633 = vpop.f32.mrf.mxu0
      %v3634 = vadd.f32 0.0, %v3633
      %v3635 = vpop.f32.mrf.mxu0
      %3636 = vdwg.mxu0
      %3637 = vmatprep.subr.mxu0 0.0
      %3638 = vmatpush1.msra.mxu0 %v2834
      %3639 = vmatprep.subr.mxu0 0.0
      %3640 = vmatpush1.msra.mxu0 %v2833
      %3641 = vmatprep.subr.mxu0 0.0
      %3642 = vmatpush1.msra.mxu0 %v2832
      %3643 = vmatprep.subr.mxu0 0.0
      %3644 = vmatpush1.msra.mxu0 %v2831
      %3645 = vmatprep.subr.mxu0 0.0
      %3646 = vmatpush1.msra.mxu0 %v2830
      %3647 = vmatprep.subr.mxu0 0.0
      %3648 = vmatpush1.msra.mxu0 %v2829
      %3649 = vmatprep.subr.mxu0 0.0
      %3650 = vmatpush1.msra.mxu0 %v2828
      %3651 = vmatprep.subr.mxu0 0.0
      %3652 = vmatpush1.msra.mxu0 %v2827
      %3653 = vmatprep.subr.mxu0 0.0
      %3654 = vmatpush1.msra.mxu0 %v2826
      %3655 = vmatprep.subr.mxu0 0.0
      %3656 = vmatpush1.msra.mxu0 %v2825
      %3657 = vmatprep.subr.mxu0 0.0
      %3658 = vmatpush1.msra.mxu0 %v2824
      %3659 = vmatprep.subr.mxu0 0.0
      %3660 = vmatpush1.msra.mxu0 %v2823
      %3661 = vmatprep.subr.mxu0 0.0
      %3662 = vmatpush1.msra.mxu0 %v2822
      %3663 = vmatprep.subr.mxu0 0.0
      %3664 = vmatpush1.msra.mxu0 %v2821
      %3665 = vmatprep.subr.mxu0 0.0
      %3666 = vmatpush1.msra.mxu0 %v2820
      %3667 = vmatprep.subr.mxu0 0.0
      %3668 = vmatpush1.msra.mxu0 %v2819
      %3669 = vmatprep.subr.mxu0 0.0
      %3670 = vmatpush2.msra.mxu0 0.0
      %3671 = vmatprep.subr.mxu0 0.0
      %3672 = vmatpush2.msra.mxu0 0.0
      %3673 = vmatprep.subr.mxu0 0.0
      %3674 = vmatpush2.msra.mxu0 0.0
      %3675 = vmatprep.subr.mxu0 0.0
      %3676 = vmatpush2.msra.mxu0 0.0
      %3677 = vmatprep.subr.mxu0 0.0
      %3678 = vmatpush2.msra.mxu0 0.0
      %3679 = vmatprep.subr.mxu0 0.0
      %3680 = vmatpush2.msra.mxu0 0.0
      %3681 = vmatprep.subr.mxu0 0.0
      %3682 = vmatpush2.msra.mxu0 0.0
      %3683 = vmatprep.subr.mxu0 0.0
      %3684 = vmatpush2.msra.mxu0 0.0
      %3685 = vmatprep.subr.mxu0 0.0
      %3686 = vmatpush2.msra.mxu0 0.0
      %3687 = vmatprep.subr.mxu0 0.0
      %3688 = vmatpush2.msra.mxu0 0.0
      %3689 = vmatprep.subr.mxu0 0.0
      %3690 = vmatpush2.msra.mxu0 0.0
      %3691 = vmatprep.subr.mxu0 0.0
      %3692 = vmatpush2.msra.mxu0 0.0
      %3693 = vmatprep.subr.mxu0 0.0
      %3694 = vmatpush2.msra.mxu0 0.0
      %3695 = vmatprep.subr.mxu0 0.0
      %3696 = vmatpush2.msra.mxu0 0.0
      %3697 = vmatprep.subr.mxu0 0.0
      %3698 = vmatpush2.msra.mxu0 0.0
      %3699 = vmatprep.subr.mxu0 0.0
      %3700 = vmatpush2.msra.mxu0 0.0
      %3701 = vmatprep.mubr.f32.mxu0 0.0
      %3702 = vmatmul.mubr.f32.gmra.mxu0 %v3565
      %v3703 = vpop.f32.mrf.mxu0
      %v3704 = vadd.f32 %v3634, %v3703
      %v3705 = vpop.f32.mrf.mxu0
      %3706 = vdwg.mxu0
      %v3707 = vrot.slane %v3704, 4
      %v3708 = vadd.f32 %v3704, %v3707
      %v3709 = vrot.slane %v3708, 2
      %v3710 = vadd.f32 %v3708, %v3709
      %v3711 = vrot.slane %v3710, 1
      %v3712 = vadd.f32 %v3710, %v3711
      %v3713 = vmul.f32 %v3712, %v2303
      %v3714 = vmul.f32 %v3704, %v3704
      %v3715 = vrot.slane %v3714, 4
      %v3716 = vadd.f32 %v3714, %v3715
      %v3717 = vrot.slane %v3716, 2
      %v3718 = vadd.f32 %v3716, %v3717
      %v3719 = vrot.slane %v3718, 1
      %v3720 = vadd.f32 %v3718, %v3719
      %v3721 = vmul.f32 %v3720, %v2303
      %v3722 = vmul.f32 %v3713, %v3713
      %v3723 = vsub.f32 %v3721, %v3722
      %v3724 = vmax.f32 %v3723, 0.0
      %v3725 = vsub.f32 %v3704, %v3713
      %v3726 = vadd.f32 %v3724, 1e-05
      %v3727 = vrsqrt.pop %v3726
      %v3728 = vmul.f32 %v3725, %v3727
      %v3729 = vmul.f32 %v3728, %v3000
      %v3730 = vadd.f32 %v3729, %v3005
      %v3731 = vadd.f32 %v3369, %v3730
      %v3732 = vld [vmem:[%s3] sm:$0xff]
      %v3733 = vld [vmem:[%s3 + $0x8] sm:$0xff]
      %v3734 = vld [vmem:[%s3 + $0x10] sm:$0xff]
      %v3735 = vld [vmem:[%s3 + $0x18] sm:$0xff]
      %v3736 = vld [vmem:[%s3 + $0x20] sm:$0xff]
      %v3737 = vld [vmem:[%s3 + $0x28] sm:$0xff]
      %v3738 = vld [vmem:[%s3 + $0x30] sm:$0xff]
      %v3739 = vld [vmem:[%s3 + $0x38] sm:$0xff]
      %v3740 = vld [vmem:[%s3 + $0x40] sm:$0xff]
      %v3741 = vld [vmem:[%s3 + $0x48] sm:$0xff]
      %v3742 = vld [vmem:[%s3 + $0x50] sm:$0xff]
      %v3743 = vld [vmem:[%s3 + $0x58] sm:$0xff]
      %v3744 = vld [vmem:[%s3 + $0x60] sm:$0xff]
      %v3745 = vld [vmem:[%s3 + $0x68] sm:$0xff]
      %v3746 = vld [vmem:[%s3 + $0x70] sm:$0xff]
      %v3747 = vld [vmem:[%s3 + $0x78] sm:$0xff]
      %v3748 = vld [vmem:[%s3 + $0x80] sm:$0xff]
      %v3749 = vld [vmem:[%s3 + $0x88] sm:$0xff]
      %v3750 = vld [vmem:[%s3 + $0x90] sm:$0xff]
      %v3751 = vld [vmem:[%s3 + $0x98] sm:$0xff]
      %v3752 = vld [vmem:[%s3 + $0xa0] sm:$0xff]
      %v3753 = vld [vmem:[%s3 + $0xa8] sm:$0xff]
      %v3754 = vld [vmem:[%s3 + $0xb0] sm:$0xff]
      %v3755 = vld [vmem:[%s3 + $0xb8] sm:$0xff]
      %v3756 = vld [vmem:[%s3 + $0xc0] sm:$0xff]
      %v3757 = vld [vmem:[%s3 + $0xc8] sm:$0xff]
      %v3758 = vld [vmem:[%s3 + $0xd0] sm:$0xff]
      %v3759 = vld [vmem:[%s3 + $0xd8] sm:$0xff]
      %v3760 = vld [vmem:[%s3 + $0xe0] sm:$0xff]
      %v3761 = vld [vmem:[%s3 + $0xe8] sm:$0xff]
      %v3762 = vld [vmem:[%s3 + $0xf0] sm:$0xff]
      %v3763 = vld [vmem:[%s3 + $0xf8] sm:$0xff]
      %s3764 = scalar_lea.vmem %s3, 256
      %v3765 = vld [vmem:[%s3764] ss:$8 sm:$0x3]
      %v3767 = vlaneseq
      %v3768 = vshrl.u32 %v3767, 7
      %v3769 = vsub.s32 0, %v3768
      %v3770 = vrot.slane %v3765, %v3769
      %v3771 = vlaneseq
      %v3772 = vshrl.u32 %v3771, 7
      %v3773 = vsub.s32 1, %v3772
      %v3774 = vrot.slane %v3765, %v3773
      %3777 = vmatprep.subr.mxu0 %v3763
      %3778 = vmatpush1.msra.mxu0 %v3762
      %3779 = vmatprep.subr.mxu0 %v3761
      %3780 = vmatpush1.msra.mxu0 %v3760
      %3781 = vmatprep.subr.mxu0 %v3759
      %3782 = vmatpush1.msra.mxu0 %v3758
      %3783 = vmatprep.subr.mxu0 %v3757
      %3784 = vmatpush1.msra.mxu0 %v3756
      %3785 = vmatprep.subr.mxu0 %v3755
      %3786 = vmatpush1.msra.mxu0 %v3754
      %3787 = vmatprep.subr.mxu0 %v3753
      %3788 = vmatpush1.msra.mxu0 %v3752
      %3789 = vmatprep.subr.mxu0 %v3751
      %3790 = vmatpush1.msra.mxu0 %v3750
      %3791 = vmatprep.subr.mxu0 %v3749
      %3792 = vmatpush1.msra.mxu0 %v3748
      %3793 = vmatprep.subr.mxu0 %v3747
      %3794 = vmatpush1.msra.mxu0 %v3746
      %3795 = vmatprep.subr.mxu0 %v3745
      %3796 = vmatpush1.msra.mxu0 %v3744
      %3797 = vmatprep.subr.mxu0 %v3743
      %3798 = vmatpush1.msra.mxu0 %v3742
      %3799 = vmatprep.subr.mxu0 %v3741
      %3800 = vmatpush1.msra.mxu0 %v3740
      %3801 = vmatprep.subr.mxu0 %v3739
      %3802 = vmatpush1.msra.mxu0 %v3738
      %3803 = vmatprep.subr.mxu0 %v3737
      %3804 = vmatpush1.msra.mxu0 %v3736
      %3805 = vmatprep.subr.mxu0 %v3735
      %3806 = vmatpush1.msra.mxu0 %v3734
      %3807 = vmatprep.subr.mxu0 %v3733
      %3808 = vmatpush1.msra.mxu0 %v3732
      %3809 = vmatprep.subr.mxu0 0.0
      %3810 = vmatpush2.msra.mxu0 0.0
      %3811 = vmatprep.subr.mxu0 0.0
      %3812 = vmatpush2.msra.mxu0 0.0
      %3813 = vmatprep.subr.mxu0 0.0
      %3814 = vmatpush2.msra.mxu0 0.0
      %3815 = vmatprep.subr.mxu0 0.0
      %3816 = vmatpush2.msra.mxu0 0.0
      %3817 = vmatprep.subr.mxu0 0.0
      %3818 = vmatpush2.msra.mxu0 0.0
      %3819 = vmatprep.subr.mxu0 0.0
      %3820 = vmatpush2.msra.mxu0 0.0
      %3821 = vmatprep.subr.mxu0 0.0
      %3822 = vmatpush2.msra.mxu0 0.0
      %3823 = vmatprep.subr.mxu0 0.0
      %3824 = vmatpush2.msra.mxu0 0.0
      %3825 = vmatprep.subr.mxu0 0.0
      %3826 = vmatpush2.msra.mxu0 0.0
      %3827 = vmatprep.subr.mxu0 0.0
      %3828 = vmatpush2.msra.mxu0 0.0
      %3829 = vmatprep.subr.mxu0 0.0
      %3830 = vmatpush2.msra.mxu0 0.0
      %3831 = vmatprep.subr.mxu0 0.0
      %3832 = vmatpush2.msra.mxu0 0.0
      %3833 = vmatprep.subr.mxu0 0.0
      %3834 = vmatpush2.msra.mxu0 0.0
      %3835 = vmatprep.subr.mxu0 0.0
      %3836 = vmatpush2.msra.mxu0 0.0
      %3837 = vmatprep.subr.mxu0 0.0
      %3838 = vmatpush2.msra.mxu0 0.0
      %3839 = vmatprep.subr.mxu0 0.0
      %3840 = vmatpush2.msra.mxu0 0.0
      %3841 = vmatprep.mubr.f32.mxu0 0.0
      %3842 = vmatmul.mubr.f32.gmra.mxu0 %v3731
      %v3843 = vpop.f32.mrf.mxu0
      %v3844 = vadd.f32 %v3770, %v3843
      %v3845 = vpop.f32.mrf.mxu0
      %v3846 = vadd.f32 %v3774, %v3845
      %3847 = vdwg.mxu0
      %3849 = vrot.lane.b32.xlu0 %v3846, 112
      %v3850 = vpop.permute.xlu0 %3849
      %v3851 = vsel %vm2223, %v3846, 0
      %v3853 = vsel %vm2223, %v3850, 0
      %3855 = vmatprep.subr.mxu0 0.0
      %3856 = vmatpush1.xpose.msra.mxu0 0.0
      %3857 = vmatprep.subr.mxu0 0.0
      %3858 = vmatpush1.xpose.msra.mxu0 0.0
      %3859 = vmatprep.subr.mxu0 0.0
      %3860 = vmatpush1.xpose.msra.mxu0 0.0
      %3861 = vmatprep.subr.mxu0 0.0
      %3862 = vmatpush1.xpose.msra.mxu0 0.0
      %3863 = vmatprep.subr.mxu0 0.0
      %3864 = vmatpush1.xpose.msra.mxu0 0.0
      %3865 = vmatprep.subr.mxu0 0.0
      %3866 = vmatpush1.xpose.msra.mxu0 0.0
      %3867 = vmatprep.subr.mxu0 0.0
      %3868 = vmatpush1.xpose.msra.mxu0 0.0
      %3869 = vmatprep.subr.mxu0 0.0
      %3870 = vmatpush1.xpose.msra.mxu0 0.0
      %3871 = vmatprep.subr.mxu0 0.0
      %3872 = vmatpush1.xpose.msra.mxu0 0.0
      %3873 = vmatprep.subr.mxu0 0.0
      %3874 = vmatpush1.xpose.msra.mxu0 0.0
      %3875 = vmatprep.subr.mxu0 0.0
      %3876 = vmatpush1.xpose.msra.mxu0 0.0
      %3877 = vmatprep.subr.mxu0 0.0
      %3878 = vmatpush1.xpose.msra.mxu0 0.0
      %3879 = vmatprep.subr.mxu0 0.0
      %3880 = vmatpush1.xpose.msra.mxu0 0.0
      %3881 = vmatprep.subr.mxu0 0.0
      %3882 = vmatpush1.xpose.msra.mxu0 0.0
      %3883 = vmatprep.subr.mxu0 0.0
      %3884 = vmatpush1.xpose.msra.mxu0 0.0
      %3885 = vmatprep.subr.mxu0 0.0
      %3886 = vmatpush1.xpose.msra.mxu0 %v3853
      %3887 = vmatprep.subr.mxu0 0.0
      %3888 = vmatpush2.xpose.msra.mxu0 0.0
      %3889 = vmatprep.subr.mxu0 0.0
      %3890 = vmatpush2.xpose.msra.mxu0 0.0
      %3891 = vmatprep.subr.mxu0 0.0
      %3892 = vmatpush2.xpose.msra.mxu0 0.0
      %3893 = vmatprep.subr.mxu0 0.0
      %3894 = vmatpush2.xpose.msra.mxu0 0.0
      %3895 = vmatprep.subr.mxu0 0.0
      %3896 = vmatpush2.xpose.msra.mxu0 0.0
      %3897 = vmatprep.subr.mxu0 0.0
      %3898 = vmatpush2.xpose.msra.mxu0 0.0
      %3899 = vmatprep.subr.mxu0 0.0
      %3900 = vmatpush2.xpose.msra.mxu0 0.0
      %3901 = vmatprep.subr.mxu0 0.0
      %3902 = vmatpush2.xpose.msra.mxu0 0.0
      %3903 = vmatprep.subr.mxu0 0.0
      %3904 = vmatpush2.xpose.msra.mxu0 0.0
      %3905 = vmatprep.subr.mxu0 0.0
      %3906 = vmatpush2.xpose.msra.mxu0 0.0
      %3907 = vmatprep.subr.mxu0 0.0
      %3908 = vmatpush2.xpose.msra.mxu0 0.0
      %3909 = vmatprep.subr.mxu0 0.0
      %3910 = vmatpush2.xpose.msra.mxu0 0.0
      %3911 = vmatprep.subr.mxu0 0.0
      %3912 = vmatpush2.xpose.msra.mxu0 0.0
      %3913 = vmatprep.subr.mxu0 0.0
      %3914 = vmatpush2.xpose.msra.mxu0 0.0
      %3915 = vmatprep.subr.mxu0 0.0
      %3916 = vmatpush2.xpose.msra.mxu0 0.0
      %3917 = vmatprep.subr.mxu0 0.0
      %3918 = vmatpush2.xpose.msra.mxu0 0.0
      %3919 = vmatprep.mubr.f32.mxu0 0.0
      %3920 = vmatmul.mubr.f32.gmra.mxu0 %v3851
      %v3921 = vpop.f32.mrf.mxu0
      %v3922 = vadd.f32 0.0, %v3921
      %v3923 = vpop.f32.mrf.mxu0
      %3924 = vdwg.mxu0
      %vm3925 = vcmask 64512
      %v3926 = vsel %vm3925, %v3922, -inf
      %3927 = vmax.xlane.f32.xlu0 %v3926
      %v3928 = vpop.xlane.xlu0 %3927
      %v3929 = vsub.f32 %v3922, %v3928
      %v3930 = vmul.f32 %v3929, 1.442695
      %v3931 = vpow.pop %v3930
      %v3932 = vsel %vm3925, %v3931, 0.0
      %3933 = vadd.xlane.f32.xlu0 %v3932
      %v3934 = vpop.xlane.xlu0 %3933
      %v3935 = vrcp.pop %v3934
      %v3936 = vmul.f32 %v3931, %v3935
      %v3937 = vld [vmem:[%s2 + $0xe58] sm:$0x1]
      %v3939 = vsel %vm3925, %v3936, 0
      %3941 = vmatprep.subr.mxu0 0.0
      %3942 = vmatpush1.msra.mxu0 0.0
      %3943 = vmatprep.subr.mxu0 0.0
      %3944 = vmatpush1.msra.mxu0 0.0
      %3945 = vmatprep.subr.mxu0 0.0
      %3946 = vmatpush1.msra.mxu0 0.0
      %3947 = vmatprep.subr.mxu0 0.0
      %3948 = vmatpush1.msra.mxu0 0.0
      %3949 = vmatprep.subr.mxu0 0.0
      %3950 = vmatpush1.msra.mxu0 0.0
      %3951 = vmatprep.subr.mxu0 0.0
      %3952 = vmatpush1.msra.mxu0 0.0
      %3953 = vmatprep.subr.mxu0 0.0
      %3954 = vmatpush1.msra.mxu0 0.0
      %3955 = vmatprep.subr.mxu0 0.0
      %3956 = vmatpush1.msra.mxu0 0.0
      %3957 = vmatprep.subr.mxu0 0.0
      %3958 = vmatpush1.msra.mxu0 0.0
      %3959 = vmatprep.subr.mxu0 0.0
      %3960 = vmatpush1.msra.mxu0 0.0
      %3961 = vmatprep.subr.mxu0 0.0
      %3962 = vmatpush1.msra.mxu0 0.0
      %3963 = vmatprep.subr.mxu0 0.0
      %3964 = vmatpush1.msra.mxu0 0.0
      %3965 = vmatprep.subr.mxu0 0.0
      %3966 = vmatpush1.msra.mxu0 0.0
      %3967 = vmatprep.subr.mxu0 0.0
      %3968 = vmatpush1.msra.mxu0 0.0
      %3969 = vmatprep.subr.mxu0 0.0
      %3970 = vmatpush1.msra.mxu0 0.0
      %3971 = vmatprep.subr.mxu0 0.0
      %3972 = vmatpush1.msra.mxu0 %v3844
      %3973 = vmatprep.subr.mxu0 0.0
      %3974 = vmatpush2.msra.mxu0 0.0
      %3975 = vmatprep.subr.mxu0 0.0
      %3976 = vmatpush2.msra.mxu0 0.0
      %3977 = vmatprep.subr.mxu0 0.0
      %3978 = vmatpush2.msra.mxu0 0.0
      %3979 = vmatprep.subr.mxu0 0.0
      %3980 = vmatpush2.msra.mxu0 0.0
      %3981 = vmatprep.subr.mxu0 0.0
      %3982 = vmatpush2.msra.mxu0 0.0
      %3983 = vmatprep.subr.mxu0 0.0
      %3984 = vmatpush2.msra.mxu0 0.0
      %3985 = vmatprep.subr.mxu0 0.0
      %3986 = vmatpush2.msra.mxu0 0.0
      %3987 = vmatprep.subr.mxu0 0.0
      %3988 = vmatpush2.msra.mxu0 0.0
      %3989 = vmatprep.subr.mxu0 0.0
      %3990 = vmatpush2.msra.mxu0 0.0
      %3991 = vmatprep.subr.mxu0 0.0
      %3992 = vmatpush2.msra.mxu0 0.0
      %3993 = vmatprep.subr.mxu0 0.0
      %3994 = vmatpush2.msra.mxu0 0.0
      %3995 = vmatprep.subr.mxu0 0.0
      %3996 = vmatpush2.msra.mxu0 0.0
      %3997 = vmatprep.subr.mxu0 0.0
      %3998 = vmatpush2.msra.mxu0 0.0
      %3999 = vmatprep.subr.mxu0 0.0
      %4000 = vmatpush2.msra.mxu0 0.0
      %4001 = vmatprep.subr.mxu0 0.0
      %4002 = vmatpush2.msra.mxu0 0.0
      %4003 = vmatprep.subr.mxu0 0.0
      %4004 = vmatpush2.msra.mxu0 0.0
      %4005 = vmatprep.mubr.f32.mxu0 0.0
      %4006 = vmatmul.mubr.f32.gmra.mxu0 %v3939
      %v4007 = vpop.f32.mrf.mxu0
      %v4008 = vadd.f32 0.0, %v4007
      %v4009 = vpop.f32.mrf.mxu0
      %4010 = vdwg.mxu0
      %s4012 = vtos %v3937
      %v4013 = vstv %s4012
      %v4015 = vmul.f32 %v4013, %v4008
      %v4016 = vadd.f32 %v4015, %v3731
      %v4018 = vrot.slane %v4016, 7
      %v4020 = vsel %vm1034, 0.0, %v4018
      %v4021 = vsel %vm1034, %v4018, 0.0
      %v4024 = vrot.slane %v4020, 1
      %v4025 = vrot.slane %v4021, 1
      %v4026 = vsel %vm257, %v4024, %v4025
      %v4028 = vrot.slane %v4020, 2
      %v4029 = vrot.slane %v4021, 2
      %v4030 = vsel %vm283, %v4028, %v4029
      %v4032 = vld [vmem:[%s3 + $0x110] sm:$0xff]
      %v4033 = vld [vmem:[%s3 + $0x118] sm:$0xff]
      %v4034 = vld [vmem:[%s3 + $0x120] sm:$0xff]
      %v4035 = vld [vmem:[%s3 + $0x128] sm:$0xff]
      %v4036 = vld [vmem:[%s3 + $0x130] sm:$0xff]
      %v4037 = vld [vmem:[%s3 + $0x138] sm:$0xff]
      %v4038 = vld [vmem:[%s3 + $0x140] sm:$0xff]
      %v4039 = vld [vmem:[%s3 + $0x148] sm:$0xff]
      %v4040 = vld [vmem:[%s3 + $0x150] sm:$0xff]
      %v4041 = vld [vmem:[%s3 + $0x158] sm:$0xff]
      %v4042 = vld [vmem:[%s3 + $0x160] sm:$0xff]
      %v4043 = vld [vmem:[%s3 + $0x168] sm:$0xff]
      %v4044 = vld [vmem:[%s3 + $0x170] sm:$0xff]
      %v4045 = vld [vmem:[%s3 + $0x178] sm:$0xff]
      %v4046 = vld [vmem:[%s3 + $0x180] sm:$0xff]
      %v4047 = vld [vmem:[%s3 + $0x188] sm:$0xff]
      %v4048 = vld [vmem:[%s3 + $0x190] sm:$0xff]
      %v4049 = vld [vmem:[%s3 + $0x198] sm:$0xff]
      %v4050 = vld [vmem:[%s3 + $0x1a0] sm:$0xff]
      %v4051 = vld [vmem:[%s3 + $0x1a8] sm:$0xff]
      %v4052 = vld [vmem:[%s3 + $0x1b0] sm:$0xff]
      %v4053 = vld [vmem:[%s3 + $0x1b8] sm:$0xff]
      %v4054 = vld [vmem:[%s3 + $0x1c0] sm:$0xff]
      %v4055 = vld [vmem:[%s3 + $0x1c8] sm:$0xff]
      %v4056 = vld [vmem:[%s3 + $0x1d0] sm:$0xff]
      %v4057 = vld [vmem:[%s3 + $0x1d8] sm:$0xff]
      %v4058 = vld [vmem:[%s3 + $0x1e0] sm:$0xff]
      %v4059 = vld [vmem:[%s3 + $0x1e8] sm:$0xff]
      %v4060 = vld [vmem:[%s3 + $0x1f0] sm:$0xff]
      %v4061 = vld [vmem:[%s3 + $0x1f8] sm:$0xff]
      %v4062 = vld [vmem:[%s3 + $0x200] sm:$0xff]
      %v4063 = vld [vmem:[%s3 + $0x208] sm:$0xff]
      %v4064 = vld [vmem:[%s3 + $0x210] sm:$0xff]
      %v4065 = vld [vmem:[%s3 + $0x218] sm:$0xff]
      %v4066 = vld [vmem:[%s3 + $0x220] sm:$0xff]
      %v4067 = vld [vmem:[%s3 + $0x228] sm:$0xff]
      %v4068 = vld [vmem:[%s3 + $0x230] sm:$0xff]
      %v4069 = vld [vmem:[%s3 + $0x238] sm:$0xff]
      %v4070 = vld [vmem:[%s3 + $0x240] sm:$0xff]
      %v4071 = vld [vmem:[%s3 + $0x248] sm:$0xff]
      %v4072 = vld [vmem:[%s3 + $0x250] sm:$0xff]
      %v4073 = vld [vmem:[%s3 + $0x258] sm:$0xff]
      %v4074 = vld [vmem:[%s3 + $0x260] sm:$0xff]
      %v4075 = vld [vmem:[%s3 + $0x268] sm:$0xff]
      %v4076 = vld [vmem:[%s3 + $0x270] sm:$0xff]
      %v4077 = vld [vmem:[%s3 + $0x278] sm:$0xff]
      %v4078 = vld [vmem:[%s3 + $0x280] sm:$0xff]
      %v4079 = vld [vmem:[%s3 + $0x288] sm:$0xff]
      %v4080 = vld [vmem:[%s3 + $0x290] sm:$0xff]
      %v4081 = vld [vmem:[%s3 + $0x298] sm:$0xff]
      %v4082 = vld [vmem:[%s3 + $0x2a0] sm:$0xff]
      %v4083 = vld [vmem:[%s3 + $0x2a8] sm:$0xff]
      %v4084 = vld [vmem:[%s3 + $0x2b0] sm:$0xff]
      %v4085 = vld [vmem:[%s3 + $0x2b8] sm:$0xff]
      %v4086 = vld [vmem:[%s3 + $0x2c0] sm:$0xff]
      %v4087 = vld [vmem:[%s3 + $0x2c8] sm:$0xff]
      %v4088 = vld [vmem:[%s3 + $0x2d0] sm:$0xff]
      %v4089 = vld [vmem:[%s3 + $0x2d8] sm:$0xff]
      %v4090 = vld [vmem:[%s3 + $0x2e0] sm:$0xff]
      %v4091 = vld [vmem:[%s3 + $0x2e8] sm:$0xff]
      %v4092 = vld [vmem:[%s3 + $0x2f0] sm:$0xff]
      %v4093 = vld [vmem:[%s3 + $0x2f8] sm:$0xff]
      %v4094 = vld [vmem:[%s3 + $0x300] sm:$0xff]
      %v4095 = vld [vmem:[%s3 + $0x308] sm:$0xff]
      %v4096 = vld [vmem:[%s3 + $0x310] sm:$0xff]
      %v4097 = vld [vmem:[%s3 + $0x318] sm:$0xff]
      %v4098 = vld [vmem:[%s3 + $0x320] sm:$0xff]
      %v4099 = vld [vmem:[%s3 + $0x328] sm:$0xff]
      %v4100 = vld [vmem:[%s3 + $0x330] sm:$0xff]
      %v4101 = vld [vmem:[%s3 + $0x338] sm:$0xff]
      %v4102 = vld [vmem:[%s3 + $0x340] sm:$0xff]
      %v4103 = vld [vmem:[%s3 + $0x348] sm:$0xff]
      %v4104 = vld [vmem:[%s3 + $0x350] sm:$0xff]
      %v4105 = vld [vmem:[%s3 + $0x358] sm:$0xff]
      %v4106 = vld [vmem:[%s3 + $0x360] sm:$0xff]
      %v4107 = vld [vmem:[%s3 + $0x368] sm:$0xff]
      %v4108 = vld [vmem:[%s3 + $0x370] sm:$0xff]
      %v4109 = vld [vmem:[%s3 + $0x378] sm:$0xff]
      %v4110 = vld [vmem:[%s3 + $0x380] sm:$0xff]
      %v4111 = vld [vmem:[%s3 + $0x388] sm:$0xff]
      %v4112 = vld [vmem:[%s3 + $0x390] sm:$0xff]
      %v4113 = vld [vmem:[%s3 + $0x398] sm:$0xff]
      %v4114 = vld [vmem:[%s3 + $0x3a0] sm:$0xff]
      %v4115 = vld [vmem:[%s3 + $0x3a8] sm:$0xff]
      %v4116 = vld [vmem:[%s3 + $0x3b0] sm:$0xff]
      %v4117 = vld [vmem:[%s3 + $0x3b8] sm:$0xff]
      %v4118 = vld [vmem:[%s3 + $0x3c0] sm:$0xff]
      %v4119 = vld [vmem:[%s3 + $0x3c8] sm:$0xff]
      %v4120 = vld [vmem:[%s3 + $0x3d0] sm:$0xff]
      %v4121 = vld [vmem:[%s3 + $0x3d8] sm:$0xff]
      %v4122 = vld [vmem:[%s3 + $0x3e0] sm:$0xff]
      %v4123 = vld [vmem:[%s3 + $0x3e8] sm:$0xff]
      %v4124 = vld [vmem:[%s3 + $0x3f0] sm:$0xff]
      %v4125 = vld [vmem:[%s3 + $0x3f8] sm:$0xff]
      %v4126 = vld [vmem:[%s3 + $0x400] sm:$0xff]
      %v4127 = vld [vmem:[%s3 + $0x408] sm:$0xff]
      %4128 = vmatprep.subr.mxu0 %v4063
      %4129 = vmatpush1.msra.mxu0 %v4062
      %4130 = vmatprep.subr.mxu0 %v4061
      %4131 = vmatpush1.msra.mxu0 %v4060
      %4132 = vmatprep.subr.mxu0 %v4059
      %4133 = vmatpush1.msra.mxu0 %v4058
      %4134 = vmatprep.subr.mxu0 %v4057
      %4135 = vmatpush1.msra.mxu0 %v4056
      %4136 = vmatprep.subr.mxu0 %v4055
      %4137 = vmatpush1.msra.mxu0 %v4054
      %4138 = vmatprep.subr.mxu0 %v4053
      %4139 = vmatpush1.msra.mxu0 %v4052
      %4140 = vmatprep.subr.mxu0 %v4051
      %4141 = vmatpush1.msra.mxu0 %v4050
      %4142 = vmatprep.subr.mxu0 %v4049
      %4143 = vmatpush1.msra.mxu0 %v4048
      %4144 = vmatprep.subr.mxu0 %v4047
      %4145 = vmatpush1.msra.mxu0 %v4046
      %4146 = vmatprep.subr.mxu0 %v4045
      %4147 = vmatpush1.msra.mxu0 %v4044
      %4148 = vmatprep.subr.mxu0 %v4043
      %4149 = vmatpush1.msra.mxu0 %v4042
      %4150 = vmatprep.subr.mxu0 %v4041
      %4151 = vmatpush1.msra.mxu0 %v4040
      %4152 = vmatprep.subr.mxu0 %v4039
      %4153 = vmatpush1.msra.mxu0 %v4038
      %4154 = vmatprep.subr.mxu0 %v4037
      %4155 = vmatpush1.msra.mxu0 %v4036
      %4156 = vmatprep.subr.mxu0 %v4035
      %4157 = vmatpush1.msra.mxu0 %v4034
      %4158 = vmatprep.subr.mxu0 %v4033
      %4159 = vmatpush1.msra.mxu0 %v4032
      %4160 = vmatprep.subr.mxu0 %v4095
      %4161 = vmatpush2.msra.mxu0 %v4094
      %4162 = vmatprep.subr.mxu0 %v4093
      %4163 = vmatpush2.msra.mxu0 %v4092
      %4164 = vmatprep.subr.mxu0 %v4091
      %4165 = vmatpush2.msra.mxu0 %v4090
      %4166 = vmatprep.subr.mxu0 %v4089
      %4167 = vmatpush2.msra.mxu0 %v4088
      %4168 = vmatprep.subr.mxu0 %v4087
      %4169 = vmatpush2.msra.mxu0 %v4086
      %4170 = vmatprep.subr.mxu0 %v4085
      %4171 = vmatpush2.msra.mxu0 %v4084
      %4172 = vmatprep.subr.mxu0 %v4083
      %4173 = vmatpush2.msra.mxu0 %v4082
      %4174 = vmatprep.subr.mxu0 %v4081
      %4175 = vmatpush2.msra.mxu0 %v4080
      %4176 = vmatprep.subr.mxu0 %v4079
      %4177 = vmatpush2.msra.mxu0 %v4078
      %4178 = vmatprep.subr.mxu0 %v4077
      %4179 = vmatpush2.msra.mxu0 %v4076
      %4180 = vmatprep.subr.mxu0 %v4075
      %4181 = vmatpush2.msra.mxu0 %v4074
      %4182 = vmatprep.subr.mxu0 %v4073
      %4183 = vmatpush2.msra.mxu0 %v4072
      %4184 = vmatprep.subr.mxu0 %v4071
      %4185 = vmatpush2.msra.mxu0 %v4070
      %4186 = vmatprep.subr.mxu0 %v4069
      %4187 = vmatpush2.msra.mxu0 %v4068
      %4188 = vmatprep.subr.mxu0 %v4067
      %4189 = vmatpush2.msra.mxu0 %v4066
      %4190 = vmatprep.subr.mxu0 %v4065
      %4191 = vmatpush2.msra.mxu0 %v4064
      %4192 = vmatprep.mubr.f32.mxu0 %v4026
      %4193 = vmatmul.mubr.f32.gmra.mxu0 %v4020
      %v4194 = vpop.f32.mrf.mxu0
      %v4195 = vadd.f32 0.0, %v4194
      %v4196 = vpop.f32.mrf.mxu0
      %v4197 = vadd.f32 0.0, %v4196
      %4198 = vdwg.mxu0
      %4199 = vmatprep.subr.mxu0 %v4127
      %4200 = vmatpush1.msra.mxu0 %v4126
      %4201 = vmatprep.subr.mxu0 %v4125
      %4202 = vmatpush1.msra.mxu0 %v4124
      %4203 = vmatprep.subr.mxu0 %v4123
      %4204 = vmatpush1.msra.mxu0 %v4122
      %4205 = vmatprep.subr.mxu0 %v4121
      %4206 = vmatpush1.msra.mxu0 %v4120
      %4207 = vmatprep.subr.mxu0 %v4119
      %4208 = vmatpush1.msra.mxu0 %v4118
      %4209 = vmatprep.subr.mxu0 %v4117
      %4210 = vmatpush1.msra.mxu0 %v4116
      %4211 = vmatprep.subr.mxu0 %v4115
      %4212 = vmatpush1.msra.mxu0 %v4114
      %4213 = vmatprep.subr.mxu0 %v4113
      %4214 = vmatpush1.msra.mxu0 %v4112
      %4215 = vmatprep.subr.mxu0 %v4111
      %4216 = vmatpush1.msra.mxu0 %v4110
      %4217 = vmatprep.subr.mxu0 %v4109
      %4218 = vmatpush1.msra.mxu0 %v4108
      %4219 = vmatprep.subr.mxu0 %v4107
      %4220 = vmatpush1.msra.mxu0 %v4106
      %4221 = vmatprep.subr.mxu0 %v4105
      %4222 = vmatpush1.msra.mxu0 %v4104
      %4223 = vmatprep.subr.mxu0 %v4103
      %4224 = vmatpush1.msra.mxu0 %v4102
      %4225 = vmatprep.subr.mxu0 %v4101
      %4226 = vmatpush1.msra.mxu0 %v4100
      %4227 = vmatprep.subr.mxu0 %v4099
      %4228 = vmatpush1.msra.mxu0 %v4098
      %4229 = vmatprep.subr.mxu0 %v4097
      %4230 = vmatpush1.msra.mxu0 %v4096
      %4231 = vmatprep.subr.mxu0 0.0
      %4232 = vmatpush2.msra.mxu0 0.0
      %4233 = vmatprep.subr.mxu0 0.0
      %4234 = vmatpush2.msra.mxu0 0.0
      %4235 = vmatprep.subr.mxu0 0.0
      %4236 = vmatpush2.msra.mxu0 0.0
      %4237 = vmatprep.subr.mxu0 0.0
      %4238 = vmatpush2.msra.mxu0 0.0
      %4239 = vmatprep.subr.mxu0 0.0
      %4240 = vmatpush2.msra.mxu0 0.0
      %4241 = vmatprep.subr.mxu0 0.0
      %4242 = vmatpush2.msra.mxu0 0.0
      %4243 = vmatprep.subr.mxu0 0.0
      %4244 = vmatpush2.msra.mxu0 0.0
      %4245 = vmatprep.subr.mxu0 0.0
      %4246 = vmatpush2.msra.mxu0 0.0
      %4247 = vmatprep.subr.mxu0 0.0
      %4248 = vmatpush2.msra.mxu0 0.0
      %4249 = vmatprep.subr.mxu0 0.0
      %4250 = vmatpush2.msra.mxu0 0.0
      %4251 = vmatprep.subr.mxu0 0.0
      %4252 = vmatpush2.msra.mxu0 0.0
      %4253 = vmatprep.subr.mxu0 0.0
      %4254 = vmatpush2.msra.mxu0 0.0
      %4255 = vmatprep.subr.mxu0 0.0
      %4256 = vmatpush2.msra.mxu0 0.0
      %4257 = vmatprep.subr.mxu0 0.0
      %4258 = vmatpush2.msra.mxu0 0.0
      %4259 = vmatprep.subr.mxu0 0.0
      %4260 = vmatpush2.msra.mxu0 0.0
      %4261 = vmatprep.subr.mxu0 0.0
      %4262 = vmatpush2.msra.mxu0 0.0
      %4263 = vmatprep.mubr.f32.mxu0 0.0
      %4264 = vmatmul.mubr.f32.gmra.mxu0 %v4030
      %v4265 = vpop.f32.mrf.mxu0
      %v4266 = vadd.f32 %v4195, %v4265
      %v4267 = vpop.f32.mrf.mxu0
      %v4268 = vadd.f32 %v4197, %v4267
      %4269 = vdwg.mxu0
      %v4270 = vld [vmem:[%s2 + $0xe60] sm:$0xff]
      %v4271 = vld [vmem:[%s2 + $0xe68] sm:$0xff]
      %v4273 = vsel %vm2223, %v4270, 0
      %v4276 = vsel %vm2223, %v4271, 0
      %4278 = vmatprep.subr.mxu0 0.0
      %4279 = vmatpush1.msra.mxu0 0.0
      %4280 = vmatprep.subr.mxu0 0.0
      %4281 = vmatpush1.msra.mxu0 0.0
      %4282 = vmatprep.subr.mxu0 0.0
      %4283 = vmatpush1.msra.mxu0 0.0
      %4284 = vmatprep.subr.mxu0 0.0
      %4285 = vmatpush1.msra.mxu0 0.0
      %4286 = vmatprep.subr.mxu0 0.0
      %4287 = vmatpush1.msra.mxu0 0.0
      %4288 = vmatprep.subr.mxu0 0.0
      %4289 = vmatpush1.msra.mxu0 0.0
      %4290 = vmatprep.subr.mxu0 0.0
      %4291 = vmatpush1.msra.mxu0 0.0
      %4292 = vmatprep.subr.mxu0 0.0
      %4293 = vmatpush1.msra.mxu0 0.0
      %4294 = vmatprep.subr.mxu0 0.0
      %4295 = vmatpush1.msra.mxu0 0.0
      %4296 = vmatprep.subr.mxu0 0.0
      %4297 = vmatpush1.msra.mxu0 0.0
      %4298 = vmatprep.subr.mxu0 0.0
      %4299 = vmatpush1.msra.mxu0 0.0
      %4300 = vmatprep.subr.mxu0 0.0
      %4301 = vmatpush1.msra.mxu0 0.0
      %4302 = vmatprep.subr.mxu0 0.0
      %4303 = vmatpush1.msra.mxu0 0.0
      %4304 = vmatprep.subr.mxu0 0.0
      %4305 = vmatpush1.msra.mxu0 0.0
      %4306 = vmatprep.subr.mxu0 0.0
      %4307 = vmatpush1.msra.mxu0 %v4268
      %4308 = vmatprep.subr.mxu0 0.0
      %4309 = vmatpush1.msra.mxu0 %v4266
      %4310 = vmatprep.subr.mxu0 0.0
      %4311 = vmatpush2.msra.mxu0 0.0
      %4312 = vmatprep.subr.mxu0 0.0
      %4313 = vmatpush2.msra.mxu0 0.0
      %4314 = vmatprep.subr.mxu0 0.0
      %4315 = vmatpush2.msra.mxu0 0.0
      %4316 = vmatprep.subr.mxu0 0.0
      %4317 = vmatpush2.msra.mxu0 0.0
      %4318 = vmatprep.subr.mxu0 0.0
      %4319 = vmatpush2.msra.mxu0 0.0
      %4320 = vmatprep.subr.mxu0 0.0
      %4321 = vmatpush2.msra.mxu0 0.0
      %4322 = vmatprep.subr.mxu0 0.0
      %4323 = vmatpush2.msra.mxu0 0.0
      %4324 = vmatprep.subr.mxu0 0.0
      %4325 = vmatpush2.msra.mxu0 0.0
      %4326 = vmatprep.subr.mxu0 0.0
      %4327 = vmatpush2.msra.mxu0 0.0
      %4328 = vmatprep.subr.mxu0 0.0
      %4329 = vmatpush2.msra.mxu0 0.0
      %4330 = vmatprep.subr.mxu0 0.0
      %4331 = vmatpush2.msra.mxu0 0.0
      %4332 = vmatprep.subr.mxu0 0.0
      %4333 = vmatpush2.msra.mxu0 0.0
      %4334 = vmatprep.subr.mxu0 0.0
      %4335 = vmatpush2.msra.mxu0 0.0
      %4336 = vmatprep.subr.mxu0 0.0
      %4337 = vmatpush2.msra.mxu0 0.0
      %4338 = vmatprep.subr.mxu0 0.0
      %4339 = vmatpush2.msra.mxu0 0.0
      %4340 = vmatprep.subr.mxu0 0.0
      %4341 = vmatpush2.msra.mxu0 0.0
      %4342 = vmatprep.mubr.f32.mxu0 0.0
      %4343 = vmatmul.mubr.f32.gmra.mxu0 %v4273
      %v4344 = vpop.f32.mrf.mxu0
      %v4345 = vadd.f32 0.0, %v4344
      %v4346 = vpop.f32.mrf.mxu0
      %4347 = vmatprep.mubr.f32.mxu0 0.0
      %4348 = vmatmul.mubr.f32.gmra.mxu0 %v4276
      %v4349 = vpop.f32.mrf.mxu0
      %v4350 = vadd.f32 0.0, %v4349
      %v4351 = vpop.f32.mrf.mxu0
      %4352 = vdwg.mxu0
      %v4353 = vadd.f32 %v4345, %v4350
      %v4354 = vrot.slane %v4353, 4
      %v4355 = vadd.f32 %v4353, %v4354
      %v4356 = vrot.slane %v4355, 2
      %v4357 = vadd.f32 %v4355, %v4356
      %v4358 = vrot.slane %v4357, 1
      %v4359 = vadd.f32 %v4357, %v4358
      %v4360 = vmul.f32 %v4359, %v1948
      %v4361 = vmul.f32 %v4345, %v4345
      %v4362 = vmul.f32 %v4350, %v4350
      %v4363 = vadd.f32 %v4361, %v4362
      %v4364 = vrot.slane %v4363, 4
      %v4365 = vadd.f32 %v4363, %v4364
      %v4366 = vrot.slane %v4365, 2
      %v4367 = vadd.f32 %v4365, %v4366
      %v4368 = vrot.slane %v4367, 1
      %v4369 = vadd.f32 %v4367, %v4368
      %v4370 = vmul.f32 %v4369, %v1948
      %v4371 = vmul.f32 %v4360, %v4360
      %v4372 = vsub.f32 %v4370, %v4371
      %v4373 = vmax.f32 %v4372, 0.0
      %v4374 = vsub.f32 %v4345, %v4360
      %v4375 = vsub.f32 %v4350, %v4360
      %v4376 = vadd.f32 %v4373, 1e-05
      %v4377 = vrsqrt.pop %v4376
      %v4378 = vmul.f32 %v4374, %v4377
      %v4379 = vmul.f32 %v4375, %v4377
      %vm4380 = vcmp.gt.f32.partialorder %v4378, 0.0
      %vm4381 = vcmp.gt.f32.partialorder %v4379, 0.0
      %v4382 = vmul.f32 %v4378, 0.01
      %v4383 = vmul.f32 %v4379, 0.01
      %v4384 = vsel %vm4380, %v4378, %v4382
      %v4385 = vsel %vm4381, %v4379, %v4383
      %v4388 = vrot.slane %v4384, 7
      %v4389 = vrot.slane %v4385, 7
      %v4390 = vsel %vm1034, %v4388, %v4389
      %v4394 = vsel %vm1034, 0.0, %v4388
      %v4395 = vsel %vm1034, %v4389, 0.0
      %v4398 = vrot.slane %v4394, 1
      %v4399 = vrot.slane %v4390, 1
      %v4400 = vsel %vm257, %v4398, %v4399
      %v4401 = vrot.slane %v4395, 1
      %v4402 = vsel %vm257, %v4399, %v4401
      %v4405 = vrot.slane %v4394, 2
      %v4406 = vrot.slane %v4390, 2
      %v4407 = vsel %vm283, %v4405, %v4406
      %v4408 = vrot.slane %v4395, 2
      %v4409 = vsel %vm283, %v4406, %v4408
      %v4412 = vld [vmem:[%s3 + $0x410] sm:$0xff]
      %v4413 = vld [vmem:[%s3 + $0x418] sm:$0xff]
      %v4414 = vld [vmem:[%s3 + $0x420] sm:$0xff]
      %v4415 = vld [vmem:[%s3 + $0x428] sm:$0xff]
      %v4416 = vld [vmem:[%s3 + $0x430] sm:$0xff]
      %v4417 = vld [vmem:[%s3 + $0x438] sm:$0xff]
      %v4418 = vld [vmem:[%s3 + $0x440] sm:$0xff]
      %v4419 = vld [vmem:[%s3 + $0x448] sm:$0xff]
      %v4420 = vld [vmem:[%s3 + $0x450] sm:$0xff]
      %v4421 = vld [vmem:[%s3 + $0x458] sm:$0xff]
      %v4422 = vld [vmem:[%s3 + $0x460] sm:$0xff]
      %v4423 = vld [vmem:[%s3 + $0x468] sm:$0xff]
      %v4424 = vld [vmem:[%s3 + $0x470] sm:$0xff]
      %v4425 = vld [vmem:[%s3 + $0x478] sm:$0xff]
      %v4426 = vld [vmem:[%s3 + $0x480] sm:$0xff]
      %v4427 = vld [vmem:[%s3 + $0x488] sm:$0xff]
      %v4428 = vld [vmem:[%s3 + $0x490] sm:$0xff]
      %v4429 = vld [vmem:[%s3 + $0x498] sm:$0xff]
      %v4430 = vld [vmem:[%s3 + $0x4a0] sm:$0xff]
      %v4431 = vld [vmem:[%s3 + $0x4a8] sm:$0xff]
      %v4432 = vld [vmem:[%s3 + $0x4b0] sm:$0xff]
      %v4433 = vld [vmem:[%s3 + $0x4b8] sm:$0xff]
      %v4434 = vld [vmem:[%s3 + $0x4c0] sm:$0xff]
      %v4435 = vld [vmem:[%s3 + $0x4c8] sm:$0xff]
      %v4436 = vld [vmem:[%s3 + $0x4d0] sm:$0xff]
      %v4437 = vld [vmem:[%s3 + $0x4d8] sm:$0xff]
      %v4438 = vld [vmem:[%s3 + $0x4e0] sm:$0xff]
      %v4439 = vld [vmem:[%s3 + $0x4e8] sm:$0xff]
      %v4440 = vld [vmem:[%s3 + $0x4f0] sm:$0xff]
      %v4441 = vld [vmem:[%s3 + $0x4f8] sm:$0xff]
      %v4442 = vld [vmem:[%s3 + $0x500] sm:$0xff]
      %v4443 = vld [vmem:[%s3 + $0x508] sm:$0xff]
      %v4444 = vld [vmem:[%s3 + $0x510] sm:$0xff]
      %v4445 = vld [vmem:[%s3 + $0x518] sm:$0xff]
      %v4446 = vld [vmem:[%s3 + $0x520] sm:$0xff]
      %v4447 = vld [vmem:[%s3 + $0x528] sm:$0xff]
      %v4448 = vld [vmem:[%s3 + $0x530] sm:$0xff]
      %v4449 = vld [vmem:[%s3 + $0x538] sm:$0xff]
      %v4450 = vld [vmem:[%s3 + $0x540] sm:$0xff]
      %v4451 = vld [vmem:[%s3 + $0x548] sm:$0xff]
      %v4452 = vld [vmem:[%s3 + $0x550] sm:$0xff]
      %v4453 = vld [vmem:[%s3 + $0x558] sm:$0xff]
      %v4454 = vld [vmem:[%s3 + $0x560] sm:$0xff]
      %v4455 = vld [vmem:[%s3 + $0x568] sm:$0xff]
      %v4456 = vld [vmem:[%s3 + $0x570] sm:$0xff]
      %v4457 = vld [vmem:[%s3 + $0x578] sm:$0xff]
      %v4458 = vld [vmem:[%s3 + $0x580] sm:$0xff]
      %v4459 = vld [vmem:[%s3 + $0x588] sm:$0xff]
      %v4460 = vld [vmem:[%s3 + $0x590] sm:$0xff]
      %v4461 = vld [vmem:[%s3 + $0x598] sm:$0xff]
      %v4462 = vld [vmem:[%s3 + $0x5a0] sm:$0xff]
      %v4463 = vld [vmem:[%s3 + $0x5a8] sm:$0xff]
      %v4464 = vld [vmem:[%s3 + $0x5b0] sm:$0xff]
      %v4465 = vld [vmem:[%s3 + $0x5b8] sm:$0xff]
      %v4466 = vld [vmem:[%s3 + $0x5c0] sm:$0xff]
      %v4467 = vld [vmem:[%s3 + $0x5c8] sm:$0xff]
      %v4468 = vld [vmem:[%s3 + $0x5d0] sm:$0xff]
      %v4469 = vld [vmem:[%s3 + $0x5d8] sm:$0xff]
      %v4470 = vld [vmem:[%s3 + $0x5e0] sm:$0xff]
      %v4471 = vld [vmem:[%s3 + $0x5e8] sm:$0xff]
      %v4472 = vld [vmem:[%s3 + $0x5f0] sm:$0xff]
      %v4473 = vld [vmem:[%s3 + $0x5f8] sm:$0xff]
      %v4474 = vld [vmem:[%s3 + $0x600] sm:$0xff]
      %v4475 = vld [vmem:[%s3 + $0x608] sm:$0xff]
      %v4476 = vld [vmem:[%s3 + $0x610] sm:$0xff]
      %v4477 = vld [vmem:[%s3 + $0x618] sm:$0xff]
      %v4478 = vld [vmem:[%s3 + $0x620] sm:$0xff]
      %v4479 = vld [vmem:[%s3 + $0x628] sm:$0xff]
      %v4480 = vld [vmem:[%s3 + $0x630] sm:$0xff]
      %v4481 = vld [vmem:[%s3 + $0x638] sm:$0xff]
      %v4482 = vld [vmem:[%s3 + $0x640] sm:$0xff]
      %v4483 = vld [vmem:[%s3 + $0x648] sm:$0xff]
      %v4484 = vld [vmem:[%s3 + $0x650] sm:$0xff]
      %v4485 = vld [vmem:[%s3 + $0x658] sm:$0xff]
      %v4486 = vld [vmem:[%s3 + $0x660] sm:$0xff]
      %v4487 = vld [vmem:[%s3 + $0x668] sm:$0xff]
      %v4488 = vld [vmem:[%s3 + $0x670] sm:$0xff]
      %v4489 = vld [vmem:[%s3 + $0x678] sm:$0xff]
      %v4490 = vld [vmem:[%s3 + $0x680] sm:$0xff]
      %v4491 = vld [vmem:[%s3 + $0x688] sm:$0xff]
      %v4492 = vld [vmem:[%s3 + $0x690] sm:$0xff]
      %v4493 = vld [vmem:[%s3 + $0x698] sm:$0xff]
      %v4494 = vld [vmem:[%s3 + $0x6a0] sm:$0xff]
      %v4495 = vld [vmem:[%s3 + $0x6a8] sm:$0xff]
      %v4496 = vld [vmem:[%s3 + $0x6b0] sm:$0xff]
      %v4497 = vld [vmem:[%s3 + $0x6b8] sm:$0xff]
      %v4498 = vld [vmem:[%s3 + $0x6c0] sm:$0xff]
      %v4499 = vld [vmem:[%s3 + $0x6c8] sm:$0xff]
      %v4500 = vld [vmem:[%s3 + $0x6d0] sm:$0xff]
      %v4501 = vld [vmem:[%s3 + $0x6d8] sm:$0xff]
      %v4502 = vld [vmem:[%s3 + $0x6e0] sm:$0xff]
      %v4503 = vld [vmem:[%s3 + $0x6e8] sm:$0xff]
      %v4504 = vld [vmem:[%s3 + $0x6f0] sm:$0xff]
      %v4505 = vld [vmem:[%s3 + $0x6f8] sm:$0xff]
      %v4506 = vld [vmem:[%s3 + $0x700] sm:$0xff]
      %v4507 = vld [vmem:[%s3 + $0x708] sm:$0xff]
      %4508 = vmatprep.subr.mxu0 %v4443
      %4509 = vmatpush1.msra.mxu0 %v4442
      %4510 = vmatprep.subr.mxu0 %v4441
      %4511 = vmatpush1.msra.mxu0 %v4440
      %4512 = vmatprep.subr.mxu0 %v4439
      %4513 = vmatpush1.msra.mxu0 %v4438
      %4514 = vmatprep.subr.mxu0 %v4437
      %4515 = vmatpush1.msra.mxu0 %v4436
      %4516 = vmatprep.subr.mxu0 %v4435
      %4517 = vmatpush1.msra.mxu0 %v4434
      %4518 = vmatprep.subr.mxu0 %v4433
      %4519 = vmatpush1.msra.mxu0 %v4432
      %4520 = vmatprep.subr.mxu0 %v4431
      %4521 = vmatpush1.msra.mxu0 %v4430
      %4522 = vmatprep.subr.mxu0 %v4429
      %4523 = vmatpush1.msra.mxu0 %v4428
      %4524 = vmatprep.subr.mxu0 %v4427
      %4525 = vmatpush1.msra.mxu0 %v4426
      %4526 = vmatprep.subr.mxu0 %v4425
      %4527 = vmatpush1.msra.mxu0 %v4424
      %4528 = vmatprep.subr.mxu0 %v4423
      %4529 = vmatpush1.msra.mxu0 %v4422
      %4530 = vmatprep.subr.mxu0 %v4421
      %4531 = vmatpush1.msra.mxu0 %v4420
      %4532 = vmatprep.subr.mxu0 %v4419
      %4533 = vmatpush1.msra.mxu0 %v4418
      %4534 = vmatprep.subr.mxu0 %v4417
      %4535 = vmatpush1.msra.mxu0 %v4416
      %4536 = vmatprep.subr.mxu0 %v4415
      %4537 = vmatpush1.msra.mxu0 %v4414
      %4538 = vmatprep.subr.mxu0 %v4413
      %4539 = vmatpush1.msra.mxu0 %v4412
      %4540 = vmatprep.subr.mxu0 %v4475
      %4541 = vmatpush2.msra.mxu0 %v4474
      %4542 = vmatprep.subr.mxu0 %v4473
      %4543 = vmatpush2.msra.mxu0 %v4472
      %4544 = vmatprep.subr.mxu0 %v4471
      %4545 = vmatpush2.msra.mxu0 %v4470
      %4546 = vmatprep.subr.mxu0 %v4469
      %4547 = vmatpush2.msra.mxu0 %v4468
      %4548 = vmatprep.subr.mxu0 %v4467
      %4549 = vmatpush2.msra.mxu0 %v4466
      %4550 = vmatprep.subr.mxu0 %v4465
      %4551 = vmatpush2.msra.mxu0 %v4464
      %4552 = vmatprep.subr.mxu0 %v4463
      %4553 = vmatpush2.msra.mxu0 %v4462
      %4554 = vmatprep.subr.mxu0 %v4461
      %4555 = vmatpush2.msra.mxu0 %v4460
      %4556 = vmatprep.subr.mxu0 %v4459
      %4557 = vmatpush2.msra.mxu0 %v4458
      %4558 = vmatprep.subr.mxu0 %v4457
      %4559 = vmatpush2.msra.mxu0 %v4456
      %4560 = vmatprep.subr.mxu0 %v4455
      %4561 = vmatpush2.msra.mxu0 %v4454
      %4562 = vmatprep.subr.mxu0 %v4453
      %4563 = vmatpush2.msra.mxu0 %v4452
      %4564 = vmatprep.subr.mxu0 %v4451
      %4565 = vmatpush2.msra.mxu0 %v4450
      %4566 = vmatprep.subr.mxu0 %v4449
      %4567 = vmatpush2.msra.mxu0 %v4448
      %4568 = vmatprep.subr.mxu0 %v4447
      %4569 = vmatpush2.msra.mxu0 %v4446
      %4570 = vmatprep.subr.mxu0 %v4445
      %4571 = vmatpush2.msra.mxu0 %v4444
      %4572 = vmatprep.mubr.f32.mxu0 %v4400
      %4573 = vmatmul.mubr.f32.gmra.mxu0 %v4394
      %v4574 = vpop.f32.mrf.mxu0
      %v4575 = vadd.f32 0.0, %v4574
      %v4576 = vpop.f32.mrf.mxu0
      %v4577 = vadd.f32 0.0, %v4576
      %4578 = vmatprep.mubr.f32.mxu0 %v4402
      %4579 = vmatmul.mubr.f32.gmra.mxu0 %v4390
      %v4580 = vpop.f32.mrf.mxu0
      %v4581 = vadd.f32 0.0, %v4580
      %v4582 = vpop.f32.mrf.mxu0
      %v4583 = vadd.f32 0.0, %v4582
      %4584 = vdwg.mxu0
      %4585 = vmatprep.subr.mxu0 %v4507
      %4586 = vmatpush1.msra.mxu0 %v4506
      %4587 = vmatprep.subr.mxu0 %v4505
      %4588 = vmatpush1.msra.mxu0 %v4504
      %4589 = vmatprep.subr.mxu0 %v4503
      %4590 = vmatpush1.msra.mxu0 %v4502
      %4591 = vmatprep.subr.mxu0 %v4501
      %4592 = vmatpush1.msra.mxu0 %v4500
      %4593 = vmatprep.subr.mxu0 %v4499
      %4594 = vmatpush1.msra.mxu0 %v4498
      %4595 = vmatprep.subr.mxu0 %v4497
      %4596 = vmatpush1.msra.mxu0 %v4496
      %4597 = vmatprep.subr.mxu0 %v4495
      %4598 = vmatpush1.msra.mxu0 %v4494
      %4599 = vmatprep.subr.mxu0 %v4493
      %4600 = vmatpush1.msra.mxu0 %v4492
      %4601 = vmatprep.subr.mxu0 %v4491
      %4602 = vmatpush1.msra.mxu0 %v4490
      %4603 = vmatprep.subr.mxu0 %v4489
      %4604 = vmatpush1.msra.mxu0 %v4488
      %4605 = vmatprep.subr.mxu0 %v4487
      %4606 = vmatpush1.msra.mxu0 %v4486
      %4607 = vmatprep.subr.mxu0 %v4485
      %4608 = vmatpush1.msra.mxu0 %v4484
      %4609 = vmatprep.subr.mxu0 %v4483
      %4610 = vmatpush1.msra.mxu0 %v4482
      %4611 = vmatprep.subr.mxu0 %v4481
      %4612 = vmatpush1.msra.mxu0 %v4480
      %4613 = vmatprep.subr.mxu0 %v4479
      %4614 = vmatpush1.msra.mxu0 %v4478
      %4615 = vmatprep.subr.mxu0 %v4477
      %4616 = vmatpush1.msra.mxu0 %v4476
      %4617 = vmatprep.subr.mxu0 0.0
      %4618 = vmatpush2.msra.mxu0 0.0
      %4619 = vmatprep.subr.mxu0 0.0
      %4620 = vmatpush2.msra.mxu0 0.0
      %4621 = vmatprep.subr.mxu0 0.0
      %4622 = vmatpush2.msra.mxu0 0.0
      %4623 = vmatprep.subr.mxu0 0.0
      %4624 = vmatpush2.msra.mxu0 0.0
      %4625 = vmatprep.subr.mxu0 0.0
      %4626 = vmatpush2.msra.mxu0 0.0
      %4627 = vmatprep.subr.mxu0 0.0
      %4628 = vmatpush2.msra.mxu0 0.0
      %4629 = vmatprep.subr.mxu0 0.0
      %4630 = vmatpush2.msra.mxu0 0.0
      %4631 = vmatprep.subr.mxu0 0.0
      %4632 = vmatpush2.msra.mxu0 0.0
      %4633 = vmatprep.subr.mxu0 0.0
      %4634 = vmatpush2.msra.mxu0 0.0
      %4635 = vmatprep.subr.mxu0 0.0
      %4636 = vmatpush2.msra.mxu0 0.0
      %4637 = vmatprep.subr.mxu0 0.0
      %4638 = vmatpush2.msra.mxu0 0.0
      %4639 = vmatprep.subr.mxu0 0.0
      %4640 = vmatpush2.msra.mxu0 0.0
      %4641 = vmatprep.subr.mxu0 0.0
      %4642 = vmatpush2.msra.mxu0 0.0
      %4643 = vmatprep.subr.mxu0 0.0
      %4644 = vmatpush2.msra.mxu0 0.0
      %4645 = vmatprep.subr.mxu0 0.0
      %4646 = vmatpush2.msra.mxu0 0.0
      %4647 = vmatprep.subr.mxu0 0.0
      %4648 = vmatpush2.msra.mxu0 0.0
      %4649 = vmatprep.mubr.f32.mxu0 0.0
      %4650 = vmatmul.mubr.f32.gmra.mxu0 %v4407
      %v4651 = vpop.f32.mrf.mxu0
      %v4652 = vadd.f32 %v4575, %v4651
      %v4653 = vpop.f32.mrf.mxu0
      %v4654 = vadd.f32 %v4577, %v4653
      %4655 = vmatprep.mubr.f32.mxu0 0.0
      %4656 = vmatmul.mubr.f32.gmra.mxu0 %v4409
      %v4657 = vpop.f32.mrf.mxu0
      %v4658 = vadd.f32 %v4581, %v4657
      %v4659 = vpop.f32.mrf.mxu0
      %v4660 = vadd.f32 %v4583, %v4659
      %4661 = vdwg.mxu0
      %v4662 = vld [vmem:[%s2 + $0xe70] sm:$0xff]
      %v4663 = vld [vmem:[%s2 + $0xe78] sm:$0xff]
      %v4664 = vld [vmem:[%s2 + $0xe80] sm:$0xff]
      %v4665 = vld [vmem:[%s2 + $0xe88] sm:$0xff]
      %v4667 = vsel %vm1859, %v4662, 0
      %v4670 = vsel %vm1859, %v4663, 0
      %v4673 = vsel %vm1859, %v4664, 0
      %v4676 = vsel %vm1859, %v4665, 0
      %4678 = vmatprep.subr.mxu0 0.0
      %4679 = vmatpush1.msra.mxu0 0.0
      %4680 = vmatprep.subr.mxu0 0.0
      %4681 = vmatpush1.msra.mxu0 0.0
      %4682 = vmatprep.subr.mxu0 0.0
      %4683 = vmatpush1.msra.mxu0 0.0
      %4684 = vmatprep.subr.mxu0 0.0
      %4685 = vmatpush1.msra.mxu0 0.0
      %4686 = vmatprep.subr.mxu0 0.0
      %4687 = vmatpush1.msra.mxu0 0.0
      %4688 = vmatprep.subr.mxu0 0.0
      %4689 = vmatpush1.msra.mxu0 0.0
      %4690 = vmatprep.subr.mxu0 0.0
      %4691 = vmatpush1.msra.mxu0 0.0
      %4692 = vmatprep.subr.mxu0 0.0
      %4693 = vmatpush1.msra.mxu0 0.0
      %4694 = vmatprep.subr.mxu0 0.0
      %4695 = vmatpush1.msra.mxu0 0.0
      %4696 = vmatprep.subr.mxu0 0.0
      %4697 = vmatpush1.msra.mxu0 0.0
      %4698 = vmatprep.subr.mxu0 0.0
      %4699 = vmatpush1.msra.mxu0 0.0
      %4700 = vmatprep.subr.mxu0 0.0
      %4701 = vmatpush1.msra.mxu0 0.0
      %4702 = vmatprep.subr.mxu0 0.0
      %4703 = vmatpush1.msra.mxu0 %v4660
      %4704 = vmatprep.subr.mxu0 0.0
      %4705 = vmatpush1.msra.mxu0 %v4654
      %4706 = vmatprep.subr.mxu0 0.0
      %4707 = vmatpush1.msra.mxu0 %v4658
      %4708 = vmatprep.subr.mxu0 0.0
      %4709 = vmatpush1.msra.mxu0 %v4652
      %4710 = vmatprep.subr.mxu0 0.0
      %4711 = vmatpush2.msra.mxu0 0.0
      %4712 = vmatprep.subr.mxu0 0.0
      %4713 = vmatpush2.msra.mxu0 0.0
      %4714 = vmatprep.subr.mxu0 0.0
      %4715 = vmatpush2.msra.mxu0 0.0
      %4716 = vmatprep.subr.mxu0 0.0
      %4717 = vmatpush2.msra.mxu0 0.0
      %4718 = vmatprep.subr.mxu0 0.0
      %4719 = vmatpush2.msra.mxu0 0.0
      %4720 = vmatprep.subr.mxu0 0.0
      %4721 = vmatpush2.msra.mxu0 0.0
      %4722 = vmatprep.subr.mxu0 0.0
      %4723 = vmatpush2.msra.mxu0 0.0
      %4724 = vmatprep.subr.mxu0 0.0
      %4725 = vmatpush2.msra.mxu0 0.0
      %4726 = vmatprep.subr.mxu0 0.0
      %4727 = vmatpush2.msra.mxu0 0.0
      %4728 = vmatprep.subr.mxu0 0.0
      %4729 = vmatpush2.msra.mxu0 0.0
      %4730 = vmatprep.subr.mxu0 0.0
      %4731 = vmatpush2.msra.mxu0 0.0
      %4732 = vmatprep.subr.mxu0 0.0
      %4733 = vmatpush2.msra.mxu0 0.0
      %4734 = vmatprep.subr.mxu0 0.0
      %4735 = vmatpush2.msra.mxu0 0.0
      %4736 = vmatprep.subr.mxu0 0.0
      %4737 = vmatpush2.msra.mxu0 0.0
      %4738 = vmatprep.subr.mxu0 0.0
      %4739 = vmatpush2.msra.mxu0 0.0
      %4740 = vmatprep.subr.mxu0 0.0
      %4741 = vmatpush2.msra.mxu0 0.0
      %4742 = vmatprep.mubr.f32.mxu0 0.0
      %4743 = vmatmul.mubr.f32.gmra.mxu0 %v4667
      %v4744 = vpop.f32.mrf.mxu0
      %v4745 = vadd.f32 0.0, %v4744
      %v4746 = vpop.f32.mrf.mxu0
      %4747 = vmatprep.mubr.f32.mxu0 0.0
      %4748 = vmatmul.mubr.f32.gmra.mxu0 %v4670
      %v4749 = vpop.f32.mrf.mxu0
      %v4750 = vadd.f32 0.0, %v4749
      %v4751 = vpop.f32.mrf.mxu0
      %4752 = vmatprep.mubr.f32.mxu0 0.0
      %4753 = vmatmul.mubr.f32.gmra.mxu0 %v4673
      %v4754 = vpop.f32.mrf.mxu0
      %v4755 = vadd.f32 0.0, %v4754
      %v4756 = vpop.f32.mrf.mxu0
      %4757 = vmatprep.mubr.f32.mxu0 0.0
      %4758 = vmatmul.mubr.f32.gmra.mxu0 %v4676
      %v4759 = vpop.f32.mrf.mxu0
      %v4760 = vadd.f32 0.0, %v4759
      %v4761 = vpop.f32.mrf.mxu0
      %4762 = vdwg.mxu0
      %v4763 = vadd.f32 %v4745, %v4750
      %v4764 = vadd.f32 %v4763, %v4755
      %v4765 = vadd.f32 %v4764, %v4760
      %v4766 = vrot.slane %v4765, 4
      %v4767 = vadd.f32 %v4765, %v4766
      %v4768 = vrot.slane %v4767, 2
      %v4769 = vadd.f32 %v4767, %v4768
      %v4770 = vrot.slane %v4769, 1
      %v4771 = vadd.f32 %v4769, %v4770
      %v4772 = vmul.f32 %v4771, %v1523
      %v4773 = vmul.f32 %v4745, %v4745
      %v4774 = vmul.f32 %v4750, %v4750
      %v4775 = vmul.f32 %v4755, %v4755
      %v4776 = vmul.f32 %v4760, %v4760
      %v4777 = vadd.f32 %v4773, %v4774
      %v4778 = vadd.f32 %v4777, %v4775
      %v4779 = vadd.f32 %v4778, %v4776
      %v4780 = vrot.slane %v4779, 4
      %v4781 = vadd.f32 %v4779, %v4780
      %v4782 = vrot.slane %v4781, 2
      %v4783 = vadd.f32 %v4781, %v4782
      %v4784 = vrot.slane %v4783, 1
      %v4785 = vadd.f32 %v4783, %v4784
      %v4786 = vmul.f32 %v4785, %v1523
      %v4787 = vmul.f32 %v4772, %v4772
      %v4788 = vsub.f32 %v4786, %v4787
      %v4789 = vmax.f32 %v4788, 0.0
      %v4790 = vsub.f32 %v4745, %v4772
      %v4791 = vsub.f32 %v4750, %v4772
      %v4792 = vsub.f32 %v4755, %v4772
      %v4793 = vsub.f32 %v4760, %v4772
      %v4794 = vadd.f32 %v4789, 1e-05
      %v4795 = vrsqrt.pop %v4794
      %v4796 = vmul.f32 %v4790, %v4795
      %v4797 = vmul.f32 %v4791, %v4795
      %v4798 = vmul.f32 %v4792, %v4795
      %v4799 = vmul.f32 %v4793, %v4795
      %vm4800 = vcmp.gt.f32.partialorder %v4796, 0.0
      %vm4801 = vcmp.gt.f32.partialorder %v4797, 0.0
      %vm4802 = vcmp.gt.f32.partialorder %v4798, 0.0
      %vm4803 = vcmp.gt.f32.partialorder %v4799, 0.0
      %v4804 = vmul.f32 %v4796, 0.01
      %v4805 = vmul.f32 %v4797, 0.01
      %v4806 = vmul.f32 %v4798, 0.01
      %v4807 = vmul.f32 %v4799, 0.01
      %v4808 = vsel %vm4800, %v4796, %v4804
      %v4809 = vsel %vm4801, %v4797, %v4805
      %v4810 = vsel %vm4802, %v4798, %v4806
      %v4811 = vsel %vm4803, %v4799, %v4807
      %v4816 = vrot.slane %v4808, 7
      %v4817 = vrot.slane %v4809, 7
      %v4818 = vsel %vm1034, %v4816, %v4817
      %v4819 = vrot.slane %v4810, 7
      %v4820 = vsel %vm1034, %v4817, %v4819
      %v4821 = vrot.slane %v4811, 7
      %v4822 = vsel %vm1034, %v4819, %v4821
      %v4828 = vsel %vm1034, 0.0, %v4816
      %v4829 = vsel %vm1034, %v4821, 0.0
      %v4832 = vrot.slane %v4828, 1
      %v4833 = vrot.slane %v4818, 1
      %v4834 = vsel %vm257, %v4832, %v4833
      %v4835 = vrot.slane %v4820, 1
      %v4836 = vsel %vm257, %v4833, %v4835
      %v4837 = vrot.slane %v4822, 1
      %v4838 = vsel %vm257, %v4835, %v4837
      %v4839 = vrot.slane %v4829, 1
      %v4840 = vsel %vm257, %v4837, %v4839
      %v4845 = vrot.slane %v4828, 2
      %v4846 = vrot.slane %v4818, 2
      %v4847 = vsel %vm283, %v4845, %v4846
      %v4848 = vrot.slane %v4820, 2
      %v4849 = vsel %vm283, %v4846, %v4848
      %v4850 = vrot.slane %v4822, 2
      %v4851 = vsel %vm283, %v4848, %v4850
      %v4852 = vrot.slane %v4829, 2
      %v4853 = vsel %vm283, %v4850, %v4852
      %v4858 = vld [vmem:[%s3 + $0x710] sm:$0xff]
      %v4859 = vld [vmem:[%s3 + $0x718] sm:$0xff]
      %v4860 = vld [vmem:[%s3 + $0x720] sm:$0xff]
      %v4861 = vld [vmem:[%s3 + $0x728] sm:$0xff]
      %v4862 = vld [vmem:[%s3 + $0x730] sm:$0xff]
      %v4863 = vld [vmem:[%s3 + $0x738] sm:$0xff]
      %v4864 = vld [vmem:[%s3 + $0x740] sm:$0xff]
      %v4865 = vld [vmem:[%s3 + $0x748] sm:$0xff]
      %v4866 = vld [vmem:[%s3 + $0x750] sm:$0xff]
      %v4867 = vld [vmem:[%s3 + $0x758] sm:$0xff]
      %v4868 = vld [vmem:[%s3 + $0x760] sm:$0xff]
      %v4869 = vld [vmem:[%s3 + $0x768] sm:$0xff]
      %v4870 = vld [vmem:[%s3 + $0x770] sm:$0xff]
      %v4871 = vld [vmem:[%s3 + $0x778] sm:$0xff]
      %v4872 = vld [vmem:[%s3 + $0x780] sm:$0xff]
      %v4873 = vld [vmem:[%s3 + $0x788] sm:$0xff]
      %v4874 = vld [vmem:[%s3 + $0x790] sm:$0xff]
      %v4875 = vld [vmem:[%s3 + $0x798] sm:$0xff]
      %v4876 = vld [vmem:[%s3 + $0x7a0] sm:$0xff]
      %v4877 = vld [vmem:[%s3 + $0x7a8] sm:$0xff]
      %v4878 = vld [vmem:[%s3 + $0x7b0] sm:$0xff]
      %v4879 = vld [vmem:[%s3 + $0x7b8] sm:$0xff]
      %v4880 = vld [vmem:[%s3 + $0x7c0] sm:$0xff]
      %v4881 = vld [vmem:[%s3 + $0x7c8] sm:$0xff]
      %v4882 = vld [vmem:[%s3 + $0x7d0] sm:$0xff]
      %v4883 = vld [vmem:[%s3 + $0x7d8] sm:$0xff]
      %v4884 = vld [vmem:[%s3 + $0x7e0] sm:$0xff]
      %v4885 = vld [vmem:[%s3 + $0x7e8] sm:$0xff]
      %v4886 = vld [vmem:[%s3 + $0x7f0] sm:$0xff]
      %v4887 = vld [vmem:[%s3 + $0x7f8] sm:$0xff]
      %v4888 = vld [vmem:[%s3 + $0x800] sm:$0xff]
      %v4889 = vld [vmem:[%s3 + $0x808] sm:$0xff]
      %v4890 = vld [vmem:[%s3 + $0x810] sm:$0xff]
      %v4891 = vld [vmem:[%s3 + $0x818] sm:$0xff]
      %v4892 = vld [vmem:[%s3 + $0x820] sm:$0xff]
      %v4893 = vld [vmem:[%s3 + $0x828] sm:$0xff]
      %v4894 = vld [vmem:[%s3 + $0x830] sm:$0xff]
      %v4895 = vld [vmem:[%s3 + $0x838] sm:$0xff]
      %v4896 = vld [vmem:[%s3 + $0x840] sm:$0xff]
      %v4897 = vld [vmem:[%s3 + $0x848] sm:$0xff]
      %v4898 = vld [vmem:[%s3 + $0x850] sm:$0xff]
      %v4899 = vld [vmem:[%s3 + $0x858] sm:$0xff]
      %v4900 = vld [vmem:[%s3 + $0x860] sm:$0xff]
      %v4901 = vld [vmem:[%s3 + $0x868] sm:$0xff]
      %v4902 = vld [vmem:[%s3 + $0x870] sm:$0xff]
      %v4903 = vld [vmem:[%s3 + $0x878] sm:$0xff]
      %v4904 = vld [vmem:[%s3 + $0x880] sm:$0xff]
      %v4905 = vld [vmem:[%s3 + $0x888] sm:$0xff]
      %v4906 = vld [vmem:[%s3 + $0x890] sm:$0xff]
      %v4907 = vld [vmem:[%s3 + $0x898] sm:$0xff]
      %v4908 = vld [vmem:[%s3 + $0x8a0] sm:$0xff]
      %v4909 = vld [vmem:[%s3 + $0x8a8] sm:$0xff]
      %v4910 = vld [vmem:[%s3 + $0x8b0] sm:$0xff]
      %v4911 = vld [vmem:[%s3 + $0x8b8] sm:$0xff]
      %v4912 = vld [vmem:[%s3 + $0x8c0] sm:$0xff]
      %v4913 = vld [vmem:[%s3 + $0x8c8] sm:$0xff]
      %v4914 = vld [vmem:[%s3 + $0x8d0] sm:$0xff]
      %v4915 = vld [vmem:[%s3 + $0x8d8] sm:$0xff]
      %v4916 = vld [vmem:[%s3 + $0x8e0] sm:$0xff]
      %v4917 = vld [vmem:[%s3 + $0x8e8] sm:$0xff]
      %v4918 = vld [vmem:[%s3 + $0x8f0] sm:$0xff]
      %v4919 = vld [vmem:[%s3 + $0x8f8] sm:$0xff]
      %v4920 = vld [vmem:[%s3 + $0x900] sm:$0xff]
      %v4921 = vld [vmem:[%s3 + $0x908] sm:$0xff]
      %v4922 = vld [vmem:[%s3 + $0x910] sm:$0xff]
      %v4923 = vld [vmem:[%s3 + $0x918] sm:$0xff]
      %v4924 = vld [vmem:[%s3 + $0x920] sm:$0xff]
      %v4925 = vld [vmem:[%s3 + $0x928] sm:$0xff]
      %v4926 = vld [vmem:[%s3 + $0x930] sm:$0xff]
      %v4927 = vld [vmem:[%s3 + $0x938] sm:$0xff]
      %v4928 = vld [vmem:[%s3 + $0x940] sm:$0xff]
      %v4929 = vld [vmem:[%s3 + $0x948] sm:$0xff]
      %v4930 = vld [vmem:[%s3 + $0x950] sm:$0xff]
      %v4931 = vld [vmem:[%s3 + $0x958] sm:$0xff]
      %v4932 = vld [vmem:[%s3 + $0x960] sm:$0xff]
      %v4933 = vld [vmem:[%s3 + $0x968] sm:$0xff]
      %v4934 = vld [vmem:[%s3 + $0x970] sm:$0xff]
      %v4935 = vld [vmem:[%s3 + $0x978] sm:$0xff]
      %v4936 = vld [vmem:[%s3 + $0x980] sm:$0xff]
      %v4937 = vld [vmem:[%s3 + $0x988] sm:$0xff]
      %v4938 = vld [vmem:[%s3 + $0x990] sm:$0xff]
      %v4939 = vld [vmem:[%s3 + $0x998] sm:$0xff]
      %v4940 = vld [vmem:[%s3 + $0x9a0] sm:$0xff]
      %v4941 = vld [vmem:[%s3 + $0x9a8] sm:$0xff]
      %v4942 = vld [vmem:[%s3 + $0x9b0] sm:$0xff]
      %v4943 = vld [vmem:[%s3 + $0x9b8] sm:$0xff]
      %v4944 = vld [vmem:[%s3 + $0x9c0] sm:$0xff]
      %v4945 = vld [vmem:[%s3 + $0x9c8] sm:$0xff]
      %v4946 = vld [vmem:[%s3 + $0x9d0] sm:$0xff]
      %v4947 = vld [vmem:[%s3 + $0x9d8] sm:$0xff]
      %v4948 = vld [vmem:[%s3 + $0x9e0] sm:$0xff]
      %v4949 = vld [vmem:[%s3 + $0x9e8] sm:$0xff]
      %v4950 = vld [vmem:[%s3 + $0x9f0] sm:$0xff]
      %v4951 = vld [vmem:[%s3 + $0x9f8] sm:$0xff]
      %v4952 = vld [vmem:[%s3 + $0xa00] sm:$0xff]
      %v4953 = vld [vmem:[%s3 + $0xa08] sm:$0xff]
      %4954 = vmatprep.subr.mxu0 %v4889
      %4955 = vmatpush1.msra.mxu0 %v4888
      %4956 = vmatprep.subr.mxu0 %v4887
      %4957 = vmatpush1.msra.mxu0 %v4886
      %4958 = vmatprep.subr.mxu0 %v4885
      %4959 = vmatpush1.msra.mxu0 %v4884
      %4960 = vmatprep.subr.mxu0 %v4883
      %4961 = vmatpush1.msra.mxu0 %v4882
      %4962 = vmatprep.subr.mxu0 %v4881
      %4963 = vmatpush1.msra.mxu0 %v4880
      %4964 = vmatprep.subr.mxu0 %v4879
      %4965 = vmatpush1.msra.mxu0 %v4878
      %4966 = vmatprep.subr.mxu0 %v4877
      %4967 = vmatpush1.msra.mxu0 %v4876
      %4968 = vmatprep.subr.mxu0 %v4875
      %4969 = vmatpush1.msra.mxu0 %v4874
      %4970 = vmatprep.subr.mxu0 %v4873
      %4971 = vmatpush1.msra.mxu0 %v4872
      %4972 = vmatprep.subr.mxu0 %v4871
      %4973 = vmatpush1.msra.mxu0 %v4870
      %4974 = vmatprep.subr.mxu0 %v4869
      %4975 = vmatpush1.msra.mxu0 %v4868
      %4976 = vmatprep.subr.mxu0 %v4867
      %4977 = vmatpush1.msra.mxu0 %v4866
      %4978 = vmatprep.subr.mxu0 %v4865
      %4979 = vmatpush1.msra.mxu0 %v4864
      %4980 = vmatprep.subr.mxu0 %v4863
      %4981 = vmatpush1.msra.mxu0 %v4862
      %4982 = vmatprep.subr.mxu0 %v4861
      %4983 = vmatpush1.msra.mxu0 %v4860
      %4984 = vmatprep.subr.mxu0 %v4859
      %4985 = vmatpush1.msra.mxu0 %v4858
      %4986 = vmatprep.subr.mxu0 %v4921
      %4987 = vmatpush2.msra.mxu0 %v4920
      %4988 = vmatprep.subr.mxu0 %v4919
      %4989 = vmatpush2.msra.mxu0 %v4918
      %4990 = vmatprep.subr.mxu0 %v4917
      %4991 = vmatpush2.msra.mxu0 %v4916
      %4992 = vmatprep.subr.mxu0 %v4915
      %4993 = vmatpush2.msra.mxu0 %v4914
      %4994 = vmatprep.subr.mxu0 %v4913
      %4995 = vmatpush2.msra.mxu0 %v4912
      %4996 = vmatprep.subr.mxu0 %v4911
      %4997 = vmatpush2.msra.mxu0 %v4910
      %4998 = vmatprep.subr.mxu0 %v4909
      %4999 = vmatpush2.msra.mxu0 %v4908
      %5000 = vmatprep.subr.mxu0 %v4907
      %5001 = vmatpush2.msra.mxu0 %v4906
      %5002 = vmatprep.subr.mxu0 %v4905
      %5003 = vmatpush2.msra.mxu0 %v4904
      %5004 = vmatprep.subr.mxu0 %v4903
      %5005 = vmatpush2.msra.mxu0 %v4902
      %5006 = vmatprep.subr.mxu0 %v4901
      %5007 = vmatpush2.msra.mxu0 %v4900
      %5008 = vmatprep.subr.mxu0 %v4899
      %5009 = vmatpush2.msra.mxu0 %v4898
      %5010 = vmatprep.subr.mxu0 %v4897
      %5011 = vmatpush2.msra.mxu0 %v4896
      %5012 = vmatprep.subr.mxu0 %v4895
      %5013 = vmatpush2.msra.mxu0 %v4894
      %5014 = vmatprep.subr.mxu0 %v4893
      %5015 = vmatpush2.msra.mxu0 %v4892
      %5016 = vmatprep.subr.mxu0 %v4891
      %5017 = vmatpush2.msra.mxu0 %v4890
      %5018 = vmatprep.mubr.f32.mxu0 %v4834
      %5019 = vmatmul.mubr.f32.gmra.mxu0 %v4828
      %v5020 = vpop.f32.mrf.mxu0
      %v5021 = vadd.f32 0.0, %v5020
      %v5022 = vpop.f32.mrf.mxu0
      %v5023 = vadd.f32 0.0, %v5022
      %5024 = vmatprep.mubr.f32.mxu0 %v4836
      %5025 = vmatmul.mubr.f32.gmra.mxu0 %v4818
      %v5026 = vpop.f32.mrf.mxu0
      %v5027 = vadd.f32 0.0, %v5026
      %v5028 = vpop.f32.mrf.mxu0
      %v5029 = vadd.f32 0.0, %v5028
      %5030 = vmatprep.mubr.f32.mxu0 %v4838
      %5031 = vmatmul.mubr.f32.gmra.mxu0 %v4820
      %v5032 = vpop.f32.mrf.mxu0
      %v5033 = vadd.f32 0.0, %v5032
      %v5034 = vpop.f32.mrf.mxu0
      %v5035 = vadd.f32 0.0, %v5034
      %5036 = vmatprep.mubr.f32.mxu0 %v4840
      %5037 = vmatmul.mubr.f32.gmra.mxu0 %v4822
      %v5038 = vpop.f32.mrf.mxu0
      %v5039 = vadd.f32 0.0, %v5038
      %v5040 = vpop.f32.mrf.mxu0
      %v5041 = vadd.f32 0.0, %v5040
      %5042 = vdwg.mxu0
      %5043 = vmatprep.subr.mxu0 %v4953
      %5044 = vmatpush1.msra.mxu0 %v4952
      %5045 = vmatprep.subr.mxu0 %v4951
      %5046 = vmatpush1.msra.mxu0 %v4950
      %5047 = vmatprep.subr.mxu0 %v4949
      %5048 = vmatpush1.msra.mxu0 %v4948
      %5049 = vmatprep.subr.mxu0 %v4947
      %5050 = vmatpush1.msra.mxu0 %v4946
      %5051 = vmatprep.subr.mxu0 %v4945
      %5052 = vmatpush1.msra.mxu0 %v4944
      %5053 = vmatprep.subr.mxu0 %v4943
      %5054 = vmatpush1.msra.mxu0 %v4942
      %5055 = vmatprep.subr.mxu0 %v4941
      %5056 = vmatpush1.msra.mxu0 %v4940
      %5057 = vmatprep.subr.mxu0 %v4939
      %5058 = vmatpush1.msra.mxu0 %v4938
      %5059 = vmatprep.subr.mxu0 %v4937
      %5060 = vmatpush1.msra.mxu0 %v4936
      %5061 = vmatprep.subr.mxu0 %v4935
      %5062 = vmatpush1.msra.mxu0 %v4934
      %5063 = vmatprep.subr.mxu0 %v4933
      %5064 = vmatpush1.msra.mxu0 %v4932
      %5065 = vmatprep.subr.mxu0 %v4931
      %5066 = vmatpush1.msra.mxu0 %v4930
      %5067 = vmatprep.subr.mxu0 %v4929
      %5068 = vmatpush1.msra.mxu0 %v4928
      %5069 = vmatprep.subr.mxu0 %v4927
      %5070 = vmatpush1.msra.mxu0 %v4926
      %5071 = vmatprep.subr.mxu0 %v4925
      %5072 = vmatpush1.msra.mxu0 %v4924
      %5073 = vmatprep.subr.mxu0 %v4923
      %5074 = vmatpush1.msra.mxu0 %v4922
      %5075 = vmatprep.subr.mxu0 0.0
      %5076 = vmatpush2.msra.mxu0 0.0
      %5077 = vmatprep.subr.mxu0 0.0
      %5078 = vmatpush2.msra.mxu0 0.0
      %5079 = vmatprep.subr.mxu0 0.0
      %5080 = vmatpush2.msra.mxu0 0.0
      %5081 = vmatprep.subr.mxu0 0.0
      %5082 = vmatpush2.msra.mxu0 0.0
      %5083 = vmatprep.subr.mxu0 0.0
      %5084 = vmatpush2.msra.mxu0 0.0
      %5085 = vmatprep.subr.mxu0 0.0
      %5086 = vmatpush2.msra.mxu0 0.0
      %5087 = vmatprep.subr.mxu0 0.0
      %5088 = vmatpush2.msra.mxu0 0.0
      %5089 = vmatprep.subr.mxu0 0.0
      %5090 = vmatpush2.msra.mxu0 0.0
      %5091 = vmatprep.subr.mxu0 0.0
      %5092 = vmatpush2.msra.mxu0 0.0
      %5093 = vmatprep.subr.mxu0 0.0
      %5094 = vmatpush2.msra.mxu0 0.0
      %5095 = vmatprep.subr.mxu0 0.0
      %5096 = vmatpush2.msra.mxu0 0.0
      %5097 = vmatprep.subr.mxu0 0.0
      %5098 = vmatpush2.msra.mxu0 0.0
      %5099 = vmatprep.subr.mxu0 0.0
      %5100 = vmatpush2.msra.mxu0 0.0
      %5101 = vmatprep.subr.mxu0 0.0
      %5102 = vmatpush2.msra.mxu0 0.0
      %5103 = vmatprep.subr.mxu0 0.0
      %5104 = vmatpush2.msra.mxu0 0.0
      %5105 = vmatprep.subr.mxu0 0.0
      %5106 = vmatpush2.msra.mxu0 0.0
      %5107 = vmatprep.mubr.f32.mxu0 0.0
      %5108 = vmatmul.mubr.f32.gmra.mxu0 %v4847
      %v5109 = vpop.f32.mrf.mxu0
      %v5110 = vadd.f32 %v5021, %v5109
      %v5111 = vpop.f32.mrf.mxu0
      %v5112 = vadd.f32 %v5023, %v5111
      %5113 = vmatprep.mubr.f32.mxu0 0.0
      %5114 = vmatmul.mubr.f32.gmra.mxu0 %v4849
      %v5115 = vpop.f32.mrf.mxu0
      %v5116 = vadd.f32 %v5027, %v5115
      %v5117 = vpop.f32.mrf.mxu0
      %v5118 = vadd.f32 %v5029, %v5117
      %5119 = vmatprep.mubr.f32.mxu0 0.0
      %5120 = vmatmul.mubr.f32.gmra.mxu0 %v4851
      %v5121 = vpop.f32.mrf.mxu0
      %v5122 = vadd.f32 %v5033, %v5121
      %v5123 = vpop.f32.mrf.mxu0
      %v5124 = vadd.f32 %v5035, %v5123
      %5125 = vmatprep.mubr.f32.mxu0 0.0
      %5126 = vmatmul.mubr.f32.gmra.mxu0 %v4853
      %v5127 = vpop.f32.mrf.mxu0
      %v5128 = vadd.f32 %v5039, %v5127
      %v5129 = vpop.f32.mrf.mxu0
      %v5130 = vadd.f32 %v5041, %v5129
      %5131 = vdwg.mxu0
      %v5132 = vld [vmem:[%s2 + $0xe90] sm:$0xff]
      %v5133 = vld [vmem:[%s2 + $0xe98] sm:$0xff]
      %v5134 = vld [vmem:[%s2 + $0xea0] sm:$0xff]
      %v5135 = vld [vmem:[%s2 + $0xea8] sm:$0xff]
      %v5136 = vld [vmem:[%s2 + $0xeb0] sm:$0xff]
      %v5137 = vld [vmem:[%s2 + $0xeb8] sm:$0xff]
      %v5138 = vld [vmem:[%s2 + $0xec0] sm:$0xff]
      %v5139 = vld [vmem:[%s2 + $0xec8] sm:$0xff]
      %v5141 = vsel %vm1416, %v5132, 0
      %v5144 = vsel %vm1416, %v5133, 0
      %v5147 = vsel %vm1416, %v5134, 0
      %v5150 = vsel %vm1416, %v5135, 0
      %v5153 = vsel %vm1416, %v5136, 0
      %v5156 = vsel %vm1416, %v5137, 0
      %v5159 = vsel %vm1416, %v5138, 0
      %v5162 = vsel %vm1416, %v5139, 0
      %5164 = vmatprep.subr.mxu0 0.0
      %5165 = vmatpush1.msra.mxu0 0.0
      %5166 = vmatprep.subr.mxu0 0.0
      %5167 = vmatpush1.msra.mxu0 0.0
      %5168 = vmatprep.subr.mxu0 0.0
      %5169 = vmatpush1.msra.mxu0 0.0
      %5170 = vmatprep.subr.mxu0 0.0
      %5171 = vmatpush1.msra.mxu0 0.0
      %5172 = vmatprep.subr.mxu0 0.0
      %5173 = vmatpush1.msra.mxu0 0.0
      %5174 = vmatprep.subr.mxu0 0.0
      %5175 = vmatpush1.msra.mxu0 0.0
      %5176 = vmatprep.subr.mxu0 0.0
      %5177 = vmatpush1.msra.mxu0 0.0
      %5178 = vmatprep.subr.mxu0 0.0
      %5179 = vmatpush1.msra.mxu0 0.0
      %5180 = vmatprep.subr.mxu0 0.0
      %5181 = vmatpush1.msra.mxu0 %v5130
      %5182 = vmatprep.subr.mxu0 0.0
      %5183 = vmatpush1.msra.mxu0 %v5124
      %5184 = vmatprep.subr.mxu0 0.0
      %5185 = vmatpush1.msra.mxu0 %v5118
      %5186 = vmatprep.subr.mxu0 0.0
      %5187 = vmatpush1.msra.mxu0 %v5112
      %5188 = vmatprep.subr.mxu0 0.0
      %5189 = vmatpush1.msra.mxu0 %v5128
      %5190 = vmatprep.subr.mxu0 0.0
      %5191 = vmatpush1.msra.mxu0 %v5122
      %5192 = vmatprep.subr.mxu0 0.0
      %5193 = vmatpush1.msra.mxu0 %v5116
      %5194 = vmatprep.subr.mxu0 0.0
      %5195 = vmatpush1.msra.mxu0 %v5110
      %5196 = vmatprep.subr.mxu0 0.0
      %5197 = vmatpush2.msra.mxu0 0.0
      %5198 = vmatprep.subr.mxu0 0.0
      %5199 = vmatpush2.msra.mxu0 0.0
      %5200 = vmatprep.subr.mxu0 0.0
      %5201 = vmatpush2.msra.mxu0 0.0
      %5202 = vmatprep.subr.mxu0 0.0
      %5203 = vmatpush2.msra.mxu0 0.0
      %5204 = vmatprep.subr.mxu0 0.0
      %5205 = vmatpush2.msra.mxu0 0.0
      %5206 = vmatprep.subr.mxu0 0.0
      %5207 = vmatpush2.msra.mxu0 0.0
      %5208 = vmatprep.subr.mxu0 0.0
      %5209 = vmatpush2.msra.mxu0 0.0
      %5210 = vmatprep.subr.mxu0 0.0
      %5211 = vmatpush2.msra.mxu0 0.0
      %5212 = vmatprep.subr.mxu0 0.0
      %5213 = vmatpush2.msra.mxu0 0.0
      %5214 = vmatprep.subr.mxu0 0.0
      %5215 = vmatpush2.msra.mxu0 0.0
      %5216 = vmatprep.subr.mxu0 0.0
      %5217 = vmatpush2.msra.mxu0 0.0
      %5218 = vmatprep.subr.mxu0 0.0
      %5219 = vmatpush2.msra.mxu0 0.0
      %5220 = vmatprep.subr.mxu0 0.0
      %5221 = vmatpush2.msra.mxu0 0.0
      %5222 = vmatprep.subr.mxu0 0.0
      %5223 = vmatpush2.msra.mxu0 0.0
      %5224 = vmatprep.subr.mxu0 0.0
      %5225 = vmatpush2.msra.mxu0 0.0
      %5226 = vmatprep.subr.mxu0 0.0
      %5227 = vmatpush2.msra.mxu0 0.0
      %5228 = vmatprep.mubr.f32.mxu0 0.0
      %5229 = vmatmul.mubr.f32.gmra.mxu0 %v5141
      %v5230 = vpop.f32.mrf.mxu0
      %v5231 = vadd.f32 0.0, %v5230
      %v5232 = vpop.f32.mrf.mxu0
      %5233 = vmatprep.mubr.f32.mxu0 0.0
      %5234 = vmatmul.mubr.f32.gmra.mxu0 %v5144
      %v5235 = vpop.f32.mrf.mxu0
      %v5236 = vadd.f32 0.0, %v5235
      %v5237 = vpop.f32.mrf.mxu0
      %5238 = vmatprep.mubr.f32.mxu0 0.0
      %5239 = vmatmul.mubr.f32.gmra.mxu0 %v5147
      %v5240 = vpop.f32.mrf.mxu0
      %v5241 = vadd.f32 0.0, %v5240
      %v5242 = vpop.f32.mrf.mxu0
      %5243 = vmatprep.mubr.f32.mxu0 0.0
      %5244 = vmatmul.mubr.f32.gmra.mxu0 %v5150
      %v5245 = vpop.f32.mrf.mxu0
      %v5246 = vadd.f32 0.0, %v5245
      %v5247 = vpop.f32.mrf.mxu0
      %5248 = vmatprep.mubr.f32.mxu0 0.0
      %5249 = vmatmul.mubr.f32.gmra.mxu0 %v5153
      %v5250 = vpop.f32.mrf.mxu0
      %v5251 = vadd.f32 0.0, %v5250
      %v5252 = vpop.f32.mrf.mxu0
      %5253 = vmatprep.mubr.f32.mxu0 0.0
      %5254 = vmatmul.mubr.f32.gmra.mxu0 %v5156
      %v5255 = vpop.f32.mrf.mxu0
      %v5256 = vadd.f32 0.0, %v5255
      %v5257 = vpop.f32.mrf.mxu0
      %5258 = vmatprep.mubr.f32.mxu0 0.0
      %5259 = vmatmul.mubr.f32.gmra.mxu0 %v5159
      %v5260 = vpop.f32.mrf.mxu0
      %v5261 = vadd.f32 0.0, %v5260
      %v5262 = vpop.f32.mrf.mxu0
      %5263 = vmatprep.mubr.f32.mxu0 0.0
      %5264 = vmatmul.mubr.f32.gmra.mxu0 %v5162
      %v5265 = vpop.f32.mrf.mxu0
      %v5266 = vadd.f32 0.0, %v5265
      %v5267 = vpop.f32.mrf.mxu0
      %5268 = vdwg.mxu0
      %v5269 = vadd.f32 %v5231, %v5236
      %v5270 = vadd.f32 %v5269, %v5241
      %v5271 = vadd.f32 %v5270, %v5246
      %v5272 = vadd.f32 %v5271, %v5251
      %v5273 = vadd.f32 %v5272, %v5256
      %v5274 = vadd.f32 %v5273, %v5261
      %v5275 = vadd.f32 %v5274, %v5266
      %v5276 = vrot.slane %v5275, 4
      %v5277 = vadd.f32 %v5275, %v5276
      %v5278 = vrot.slane %v5277, 2
      %v5279 = vadd.f32 %v5277, %v5278
      %v5280 = vrot.slane %v5279, 1
      %v5281 = vadd.f32 %v5279, %v5280
      %v5282 = vmul.f32 %v5281, %v957
      %v5283 = vmul.f32 %v5231, %v5231
      %v5284 = vmul.f32 %v5236, %v5236
      %v5285 = vmul.f32 %v5241, %v5241
      %v5286 = vmul.f32 %v5246, %v5246
      %v5287 = vmul.f32 %v5251, %v5251
      %v5288 = vmul.f32 %v5256, %v5256
      %v5289 = vmul.f32 %v5261, %v5261
      %v5290 = vmul.f32 %v5266, %v5266
      %v5291 = vadd.f32 %v5283, %v5284
      %v5292 = vadd.f32 %v5291, %v5285
      %v5293 = vadd.f32 %v5292, %v5286
      %v5294 = vadd.f32 %v5293, %v5287
      %v5295 = vadd.f32 %v5294, %v5288
      %v5296 = vadd.f32 %v5295, %v5289
      %v5297 = vadd.f32 %v5296, %v5290
      %v5298 = vrot.slane %v5297, 4
      %v5299 = vadd.f32 %v5297, %v5298
      %v5300 = vrot.slane %v5299, 2
      %v5301 = vadd.f32 %v5299, %v5300
      %v5302 = vrot.slane %v5301, 1
      %v5303 = vadd.f32 %v5301, %v5302
      %v5304 = vmul.f32 %v5303, %v957
      %v5305 = vmul.f32 %v5282, %v5282
      %v5306 = vsub.f32 %v5304, %v5305
      %v5307 = vmax.f32 %v5306, 0.0
      %v5308 = vsub.f32 %v5231, %v5282
      %v5309 = vsub.f32 %v5236, %v5282
      %v5310 = vsub.f32 %v5241, %v5282
      %v5311 = vsub.f32 %v5246, %v5282
      %v5312 = vsub.f32 %v5251, %v5282
      %v5313 = vsub.f32 %v5256, %v5282
      %v5314 = vsub.f32 %v5261, %v5282
      %v5315 = vsub.f32 %v5266, %v5282
      %v5316 = vadd.f32 %v5307, 1e-05
      %v5317 = vrsqrt.pop %v5316
      %v5318 = vmul.f32 %v5308, %v5317
      %v5319 = vmul.f32 %v5309, %v5317
      %v5320 = vmul.f32 %v5310, %v5317
      %v5321 = vmul.f32 %v5311, %v5317
      %v5322 = vmul.f32 %v5312, %v5317
      %v5323 = vmul.f32 %v5313, %v5317
      %v5324 = vmul.f32 %v5314, %v5317
      %v5325 = vmul.f32 %v5315, %v5317
      %vm5326 = vcmp.gt.f32.partialorder %v5318, 0.0
      %vm5327 = vcmp.gt.f32.partialorder %v5319, 0.0
      %vm5328 = vcmp.gt.f32.partialorder %v5320, 0.0
      %vm5329 = vcmp.gt.f32.partialorder %v5321, 0.0
      %vm5330 = vcmp.gt.f32.partialorder %v5322, 0.0
      %vm5331 = vcmp.gt.f32.partialorder %v5323, 0.0
      %vm5332 = vcmp.gt.f32.partialorder %v5324, 0.0
      %vm5333 = vcmp.gt.f32.partialorder %v5325, 0.0
      %v5334 = vmul.f32 %v5318, 0.01
      %v5335 = vmul.f32 %v5319, 0.01
      %v5336 = vmul.f32 %v5320, 0.01
      %v5337 = vmul.f32 %v5321, 0.01
      %v5338 = vmul.f32 %v5322, 0.01
      %v5339 = vmul.f32 %v5323, 0.01
      %v5340 = vmul.f32 %v5324, 0.01
      %v5341 = vmul.f32 %v5325, 0.01
      %v5342 = vsel %vm5326, %v5318, %v5334
      %v5343 = vsel %vm5327, %v5319, %v5335
      %v5344 = vsel %vm5328, %v5320, %v5336
      %v5345 = vsel %vm5329, %v5321, %v5337
      %v5346 = vsel %vm5330, %v5322, %v5338
      %v5347 = vsel %vm5331, %v5323, %v5339
      %v5348 = vsel %vm5332, %v5324, %v5340
      %v5349 = vsel %vm5333, %v5325, %v5341
      %v5358 = vrot.slane %v5342, 2
      %v5359 = vrot.slane %v5343, 2
      %v5360 = vsel %vm283, %v5358, %v5359
      %v5361 = vrot.slane %v5344, 2
      %v5362 = vsel %vm283, %v5359, %v5361
      %v5363 = vrot.slane %v5345, 2
      %v5364 = vsel %vm283, %v5361, %v5363
      %v5365 = vrot.slane %v5346, 2
      %v5366 = vsel %vm283, %v5363, %v5365
      %v5367 = vrot.slane %v5347, 2
      %v5368 = vsel %vm283, %v5365, %v5367
      %v5369 = vrot.slane %v5348, 2
      %v5370 = vsel %vm283, %v5367, %v5369
      %v5371 = vrot.slane %v5349, 2
      %v5372 = vsel %vm283, %v5369, %v5371
      %v5382 = vsel %vm283, 0.0, %v5358
      %v5383 = vsel %vm283, %v5371, 0.0
      %v5386 = vrot.slane %v5382, 1
      %v5387 = vrot.slane %v5360, 1
      %v5388 = vsel %vm257, %v5386, %v5387
      %v5389 = vrot.slane %v5362, 1
      %v5390 = vsel %vm257, %v5387, %v5389
      %v5391 = vrot.slane %v5364, 1
      %v5392 = vsel %vm257, %v5389, %v5391
      %v5393 = vrot.slane %v5366, 1
      %v5394 = vsel %vm257, %v5391, %v5393
      %v5395 = vrot.slane %v5368, 1
      %v5396 = vsel %vm257, %v5393, %v5395
      %v5397 = vrot.slane %v5370, 1
      %v5398 = vsel %vm257, %v5395, %v5397
      %v5399 = vrot.slane %v5372, 1
      %v5400 = vsel %vm257, %v5397, %v5399
      %v5401 = vrot.slane %v5383, 1
      %v5402 = vsel %vm257, %v5399, %v5401
      %v5412 = vrot.slane %v5382, 2
      %v5413 = vrot.slane %v5360, 2
      %v5414 = vsel %vm283, %v5412, %v5413
      %v5415 = vrot.slane %v5362, 2
      %v5416 = vsel %vm283, %v5413, %v5415
      %v5417 = vrot.slane %v5364, 2
      %v5418 = vsel %vm283, %v5415, %v5417
      %v5419 = vrot.slane %v5366, 2
      %v5420 = vsel %vm283, %v5417, %v5419
      %v5421 = vrot.slane %v5368, 2
      %v5422 = vsel %vm283, %v5419, %v5421
      %v5423 = vrot.slane %v5370, 2
      %v5424 = vsel %vm283, %v5421, %v5423
      %v5425 = vrot.slane %v5372, 2
      %v5426 = vsel %vm283, %v5423, %v5425
      %v5427 = vrot.slane %v5383, 2
      %v5428 = vsel %vm283, %v5425, %v5427
      %v5438 = vrot.slane %v5382, 3
      %v5439 = vrot.slane %v5360, 3
      %v5440 = vsel %vm309, %v5438, %v5439
      %v5441 = vrot.slane %v5362, 3
      %v5442 = vsel %vm309, %v5439, %v5441
      %v5443 = vrot.slane %v5364, 3
      %v5444 = vsel %vm309, %v5441, %v5443
      %v5445 = vrot.slane %v5366, 3
      %v5446 = vsel %vm309, %v5443, %v5445
      %v5447 = vrot.slane %v5368, 3
      %v5448 = vsel %vm309, %v5445, %v5447
      %v5449 = vrot.slane %v5370, 3
      %v5450 = vsel %vm309, %v5447, %v5449
      %v5451 = vrot.slane %v5372, 3
      %v5452 = vsel %vm309, %v5449, %v5451
      %v5453 = vrot.slane %v5383, 3
      %v5454 = vsel %vm309, %v5451, %v5453
      %v5464 = vrot.slane %v5382, 4
      %v5465 = vrot.slane %v5360, 4
      %v5466 = vsel %vm335, %v5464, %v5465
      %v5467 = vrot.slane %v5362, 4
      %v5468 = vsel %vm335, %v5465, %v5467
      %v5469 = vrot.slane %v5364, 4
      %v5470 = vsel %vm335, %v5467, %v5469
      %v5471 = vrot.slane %v5366, 4
      %v5472 = vsel %vm335, %v5469, %v5471
      %v5473 = vrot.slane %v5368, 4
      %v5474 = vsel %vm335, %v5471, %v5473
      %v5475 = vrot.slane %v5370, 4
      %v5476 = vsel %vm335, %v5473, %v5475
      %v5477 = vrot.slane %v5372, 4
      %v5478 = vsel %vm335, %v5475, %v5477
      %v5479 = vrot.slane %v5383, 4
      %v5480 = vsel %vm335, %v5477, %v5479
      %v5491 = vrot.slane %v5382, 5
      %v5492 = vrot.slane %v5360, 5
      %v5493 = vsel %vm228, %v5491, %v5492
      %v5494 = vrot.slane %v5362, 5
      %v5495 = vsel %vm228, %v5492, %v5494
      %v5496 = vrot.slane %v5364, 5
      %v5497 = vsel %vm228, %v5494, %v5496
      %v5498 = vrot.slane %v5366, 5
      %v5499 = vsel %vm228, %v5496, %v5498
      %v5500 = vrot.slane %v5368, 5
      %v5501 = vsel %vm228, %v5498, %v5500
      %v5502 = vrot.slane %v5370, 5
      %v5503 = vsel %vm228, %v5500, %v5502
      %v5504 = vrot.slane %v5372, 5
      %v5505 = vsel %vm228, %v5502, %v5504
      %v5506 = vrot.slane %v5383, 5
      %v5507 = vsel %vm228, %v5504, %v5506
      %v5508 = vrot.slane 0.0, 5
      %v5509 = vsel %vm228, %v5506, %v5508
      %v5519 = vrot.slane %v5382, 6
      %v5520 = vrot.slane %v5360, 6
      %v5521 = vsel %vm386, %v5519, %v5520
      %v5522 = vrot.slane %v5362, 6
      %v5523 = vsel %vm386, %v5520, %v5522
      %v5524 = vrot.slane %v5364, 6
      %v5525 = vsel %vm386, %v5522, %v5524
      %v5526 = vrot.slane %v5366, 6
      %v5527 = vsel %vm386, %v5524, %v5526
      %v5528 = vrot.slane %v5368, 6
      %v5529 = vsel %vm386, %v5526, %v5528
      %v5530 = vrot.slane %v5370, 6
      %v5531 = vsel %vm386, %v5528, %v5530
      %v5532 = vrot.slane %v5372, 6
      %v5533 = vsel %vm386, %v5530, %v5532
      %v5534 = vrot.slane %v5383, 6
      %v5535 = vsel %vm386, %v5532, %v5534
      %v5536 = vrot.slane 0.0, 6
      %v5537 = vsel %vm386, %v5534, %v5536
      %v5547 = vrot.slane %v5382, 7
      %v5548 = vrot.slane %v5360, 7
      %v5549 = vsel %vm1034, %v5547, %v5548
      %v5550 = vrot.slane %v5362, 7
      %v5551 = vsel %vm1034, %v5548, %v5550
      %v5552 = vrot.slane %v5364, 7
      %v5553 = vsel %vm1034, %v5550, %v5552
      %v5554 = vrot.slane %v5366, 7
      %v5555 = vsel %vm1034, %v5552, %v5554
      %v5556 = vrot.slane %v5368, 7
      %v5557 = vsel %vm1034, %v5554, %v5556
      %v5558 = vrot.slane %v5370, 7
      %v5559 = vsel %vm1034, %v5556, %v5558
      %v5560 = vrot.slane %v5372, 7
      %v5561 = vsel %vm1034, %v5558, %v5560
      %v5562 = vrot.slane %v5383, 7
      %v5563 = vsel %vm1034, %v5560, %v5562
      %v5564 = vrot.slane 0.0, 7
      %v5565 = vsel %vm1034, %v5562, %v5564
      %v5575 = vld [vmem:[%s2 + $0xed0] sm:$0xff]
      %v5576 = vld [vmem:[%s2 + $0xed8] sm:$0xff]
      %v5577 = vld [vmem:[%s2 + $0xee0] sm:$0xff]
      %v5578 = vld [vmem:[%s2 + $0xee8] sm:$0xff]
      %v5579 = vld [vmem:[%s2 + $0xef0] sm:$0xff]
      %v5580 = vld [vmem:[%s2 + $0xef8] sm:$0xff]
      %v5581 = vld [vmem:[%s2 + $0xf00] sm:$0xff]
      %v5582 = vld [vmem:[%s2 + $0xf08] sm:$0xff]
      %v5583 = vld [vmem:[%s2 + $0xf10] sm:$0xff]
      %v5584 = vld [vmem:[%s2 + $0xf18] sm:$0xff]
      %v5585 = vld [vmem:[%s2 + $0xf20] sm:$0xff]
      %v5586 = vld [vmem:[%s2 + $0xf28] sm:$0xff]
      %v5587 = vld [vmem:[%s2 + $0xf30] sm:$0xff]
      %v5588 = vld [vmem:[%s2 + $0xf38] sm:$0xff]
      %v5589 = vld [vmem:[%s2 + $0xf40] sm:$0xff]
      %v5590 = vld [vmem:[%s2 + $0xf48] sm:$0xff]
      %v5591 = vld [vmem:[%s2 + $0xf50] sm:$0xff]
      %v5592 = vld [vmem:[%s2 + $0xf58] sm:$0xff]
      %v5593 = vld [vmem:[%s2 + $0xf60] sm:$0xff]
      %v5594 = vld [vmem:[%s2 + $0xf68] sm:$0xff]
      %v5595 = vld [vmem:[%s2 + $0xf70] sm:$0xff]
      %v5596 = vld [vmem:[%s2 + $0xf78] sm:$0xff]
      %v5597 = vld [vmem:[%s2 + $0xf80] sm:$0xff]
      %v5598 = vld [vmem:[%s2 + $0xf88] sm:$0xff]
      %v5599 = vld [vmem:[%s2 + $0xf90] sm:$0xff]
      %v5600 = vld [vmem:[%s2 + $0xf98] sm:$0xff]
      %v5601 = vld [vmem:[%s2 + $0xfa0] sm:$0xff]
      %v5602 = vld [vmem:[%s2 + $0xfa8] sm:$0xff]
      %v5603 = vld [vmem:[%s2 + $0xfb0] sm:$0xff]
      %v5604 = vld [vmem:[%s2 + $0xfb8] sm:$0xff]
      %v5605 = vld [vmem:[%s2 + $0xfc0] sm:$0xff]
      %v5606 = vld [vmem:[%s2 + $0xfc8] sm:$0xff]
      %v5607 = vld [vmem:[%s2 + $0xfd0] sm:$0xff]
      %v5608 = vld [vmem:[%s2 + $0xfd8] sm:$0xff]
      %v5609 = vld [vmem:[%s2 + $0xfe0] sm:$0xff]
      %v5610 = vld [vmem:[%s2 + $0xfe8] sm:$0xff]
      %v5611 = vld [vmem:[%s2 + $0xff0] sm:$0xff]
      %v5612 = vld [vmem:[%s2 + $0xff8] sm:$0xff]
      %v5613 = vld [vmem:[%s2 + $0x1000] sm:$0xff]
      %v5614 = vld [vmem:[%s2 + $0x1008] sm:$0xff]
      %v5615 = vld [vmem:[%s2 + $0x1010] sm:$0xff]
      %v5616 = vld [vmem:[%s2 + $0x1018] sm:$0xff]
      %v5617 = vld [vmem:[%s2 + $0x1020] sm:$0xff]
      %v5618 = vld [vmem:[%s2 + $0x1028] sm:$0xff]
      %v5619 = vld [vmem:[%s2 + $0x1030] sm:$0xff]
      %v5620 = vld [vmem:[%s2 + $0x1038] sm:$0xff]
      %v5621 = vld [vmem:[%s2 + $0x1040] sm:$0xff]
      %v5622 = vld [vmem:[%s2 + $0x1048] sm:$0xff]
      %v5623 = vld [vmem:[%s2 + $0x1050] sm:$0xff]
      %v5624 = vld [vmem:[%s2 + $0x1058] sm:$0xff]
      %v5625 = vld [vmem:[%s2 + $0x1060] sm:$0xff]
      %v5626 = vld [vmem:[%s2 + $0x1068] sm:$0xff]
      %v5627 = vld [vmem:[%s2 + $0x1070] sm:$0xff]
      %v5628 = vld [vmem:[%s2 + $0x1078] sm:$0xff]
      %v5629 = vld [vmem:[%s2 + $0x1080] sm:$0xff]
      %v5630 = vld [vmem:[%s2 + $0x1088] sm:$0xff]
      %v5631 = vld [vmem:[%s2 + $0x1090] sm:$0xff]
      %v5632 = vld [vmem:[%s2 + $0x1098] sm:$0xff]
      %v5633 = vld [vmem:[%s2 + $0x10a0] sm:$0xff]
      %v5634 = vld [vmem:[%s2 + $0x10a8] sm:$0xff]
      %v5635 = vld [vmem:[%s2 + $0x10b0] sm:$0xff]
      %v5636 = vld [vmem:[%s2 + $0x10b8] sm:$0xff]
      %v5637 = vld [vmem:[%s2 + $0x10c0] sm:$0xff]
      %v5638 = vld [vmem:[%s2 + $0x10c8] sm:$0xff]
      %v5639 = vld [vmem:[%s2 + $0x10d0] sm:$0xff]
      %v5640 = vld [vmem:[%s2 + $0x10d8] sm:$0xff]
      %v5641 = vld [vmem:[%s2 + $0x10e0] sm:$0xff]
      %v5642 = vld [vmem:[%s2 + $0x10e8] sm:$0xff]
      %v5643 = vld [vmem:[%s2 + $0x10f0] sm:$0xff]
      %v5644 = vld [vmem:[%s2 + $0x10f8] sm:$0xff]
      %v5645 = vld [vmem:[%s2 + $0x1100] sm:$0xff]
      %v5646 = vld [vmem:[%s2 + $0x1108] sm:$0xff]
      %v5647 = vld [vmem:[%s2 + $0x1110] sm:$0xff]
      %v5648 = vld [vmem:[%s2 + $0x1118] sm:$0xff]
      %v5649 = vld [vmem:[%s2 + $0x1120] sm:$0xff]
      %v5650 = vld [vmem:[%s2 + $0x1128] sm:$0xff]
      %v5651 = vld [vmem:[%s2 + $0x1130] sm:$0xff]
      %v5652 = vld [vmem:[%s2 + $0x1138] sm:$0xff]
      %v5653 = vld [vmem:[%s2 + $0x1140] sm:$0xff]
      %v5654 = vld [vmem:[%s2 + $0x1148] sm:$0xff]
      %v5655 = vld [vmem:[%s2 + $0x1150] sm:$0xff]
      %v5656 = vld [vmem:[%s2 + $0x1158] sm:$0xff]
      %v5657 = vld [vmem:[%s2 + $0x1160] sm:$0xff]
      %v5658 = vld [vmem:[%s2 + $0x1168] sm:$0xff]
      %v5659 = vld [vmem:[%s2 + $0x1170] sm:$0xff]
      %v5660 = vld [vmem:[%s2 + $0x1178] sm:$0xff]
      %v5661 = vld [vmem:[%s2 + $0x1180] sm:$0xff]
      %v5662 = vld [vmem:[%s2 + $0x1188] sm:$0xff]
      %v5663 = vld [vmem:[%s2 + $0x1190] sm:$0xff]
      %v5664 = vld [vmem:[%s2 + $0x1198] sm:$0xff]
      %v5665 = vld [vmem:[%s2 + $0x11a0] sm:$0xff]
      %v5666 = vld [vmem:[%s2 + $0x11a8] sm:$0xff]
      %v5667 = vld [vmem:[%s2 + $0x11b0] sm:$0xff]
      %v5668 = vld [vmem:[%s2 + $0x11b8] sm:$0xff]
      %v5669 = vld [vmem:[%s2 + $0x11c0] sm:$0xff]
      %v5670 = vld [vmem:[%s2 + $0x11c8] sm:$0xff]
      %v5671 = vld [vmem:[%s2 + $0x11d0] sm:$0xff]
      %v5672 = vld [vmem:[%s2 + $0x11d8] sm:$0xff]
      %v5673 = vld [vmem:[%s2 + $0x11e0] sm:$0xff]
      %v5674 = vld [vmem:[%s2 + $0x11e8] sm:$0xff]
      %v5675 = vld [vmem:[%s2 + $0x11f0] sm:$0xff]
      %v5676 = vld [vmem:[%s2 + $0x11f8] sm:$0xff]
      %v5677 = vld [vmem:[%s2 + $0x1200] sm:$0xff]
      %v5678 = vld [vmem:[%s2 + $0x1208] sm:$0xff]
      %v5679 = vld [vmem:[%s2 + $0x1210] sm:$0xff]
      %v5680 = vld [vmem:[%s2 + $0x1218] sm:$0xff]
      %v5681 = vld [vmem:[%s2 + $0x1220] sm:$0xff]
      %v5682 = vld [vmem:[%s2 + $0x1228] sm:$0xff]
      %v5683 = vld [vmem:[%s2 + $0x1230] sm:$0xff]
      %v5684 = vld [vmem:[%s2 + $0x1238] sm:$0xff]
      %v5685 = vld [vmem:[%s2 + $0x1240] sm:$0xff]
      %v5686 = vld [vmem:[%s2 + $0x1248] sm:$0xff]
      %v5687 = vld [vmem:[%s2 + $0x1250] sm:$0xff]
      %v5688 = vld [vmem:[%s2 + $0x1258] sm:$0xff]
      %v5689 = vld [vmem:[%s2 + $0x1260] sm:$0xff]
      %v5690 = vld [vmem:[%s2 + $0x1268] sm:$0xff]
      %v5691 = vld [vmem:[%s2 + $0x1270] sm:$0xff]
      %v5692 = vld [vmem:[%s2 + $0x1278] sm:$0xff]
      %v5693 = vld [vmem:[%s2 + $0x1280] sm:$0xff]
      %v5694 = vld [vmem:[%s2 + $0x1288] sm:$0xff]
      %v5695 = vld [vmem:[%s2 + $0x1290] sm:$0xff]
      %v5696 = vld [vmem:[%s2 + $0x1298] sm:$0xff]
      %v5697 = vld [vmem:[%s2 + $0x12a0] sm:$0xff]
      %v5698 = vld [vmem:[%s2 + $0x12a8] sm:$0xff]
      %v5699 = vld [vmem:[%s2 + $0x12b0] sm:$0xff]
      %v5700 = vld [vmem:[%s2 + $0x12b8] sm:$0xff]
      %v5701 = vld [vmem:[%s2 + $0x12c0] sm:$0xff]
      %v5702 = vld [vmem:[%s2 + $0x12c8] sm:$0xff]
      %v5703 = vld [vmem:[%s2 + $0x12d0] sm:$0xff]
      %v5704 = vld [vmem:[%s2 + $0x12d8] sm:$0xff]
      %v5705 = vld [vmem:[%s2 + $0x12e0] sm:$0xff]
      %v5706 = vld [vmem:[%s2 + $0x12e8] sm:$0xff]
      %v5707 = vld [vmem:[%s2 + $0x12f0] sm:$0xff]
      %v5708 = vld [vmem:[%s2 + $0x12f8] sm:$0xff]
      %v5709 = vld [vmem:[%s2 + $0x1300] sm:$0xff]
      %v5710 = vld [vmem:[%s2 + $0x1308] sm:$0xff]
      %v5711 = vld [vmem:[%s2 + $0x1310] sm:$0xff]
      %v5712 = vld [vmem:[%s2 + $0x1318] sm:$0xff]
      %v5713 = vld [vmem:[%s2 + $0x1320] sm:$0xff]
      %v5714 = vld [vmem:[%s2 + $0x1328] sm:$0xff]
      %v5715 = vld [vmem:[%s2 + $0x1330] sm:$0xff]
      %v5716 = vld [vmem:[%s2 + $0x1338] sm:$0xff]
      %v5717 = vld [vmem:[%s2 + $0x1340] sm:$0xff]
      %v5718 = vld [vmem:[%s2 + $0x1348] sm:$0xff]
      %5719 = vmatprep.subr.mxu0 0.0
      %5720 = vmatpush1.msra.mxu0 %v5590
      %5721 = vmatprep.subr.mxu0 0.0
      %5722 = vmatpush1.msra.mxu0 %v5589
      %5723 = vmatprep.subr.mxu0 0.0
      %5724 = vmatpush1.msra.mxu0 %v5588
      %5725 = vmatprep.subr.mxu0 0.0
      %5726 = vmatpush1.msra.mxu0 %v5587
      %5727 = vmatprep.subr.mxu0 0.0
      %5728 = vmatpush1.msra.mxu0 %v5586
      %5729 = vmatprep.subr.mxu0 0.0
      %5730 = vmatpush1.msra.mxu0 %v5585
      %5731 = vmatprep.subr.mxu0 0.0
      %5732 = vmatpush1.msra.mxu0 %v5584
      %5733 = vmatprep.subr.mxu0 0.0
      %5734 = vmatpush1.msra.mxu0 %v5583
      %5735 = vmatprep.subr.mxu0 0.0
      %5736 = vmatpush1.msra.mxu0 %v5582
      %5737 = vmatprep.subr.mxu0 0.0
      %5738 = vmatpush1.msra.mxu0 %v5581
      %5739 = vmatprep.subr.mxu0 0.0
      %5740 = vmatpush1.msra.mxu0 %v5580
      %5741 = vmatprep.subr.mxu0 0.0
      %5742 = vmatpush1.msra.mxu0 %v5579
      %5743 = vmatprep.subr.mxu0 0.0
      %5744 = vmatpush1.msra.mxu0 %v5578
      %5745 = vmatprep.subr.mxu0 0.0
      %5746 = vmatpush1.msra.mxu0 %v5577
      %5747 = vmatprep.subr.mxu0 0.0
      %5748 = vmatpush1.msra.mxu0 %v5576
      %5749 = vmatprep.subr.mxu0 0.0
      %5750 = vmatpush1.msra.mxu0 %v5575
      %5751 = vmatprep.subr.mxu0 0.0
      %5752 = vmatpush2.msra.mxu0 %v5606
      %5753 = vmatprep.subr.mxu0 0.0
      %5754 = vmatpush2.msra.mxu0 %v5605
      %5755 = vmatprep.subr.mxu0 0.0
      %5756 = vmatpush2.msra.mxu0 %v5604
      %5757 = vmatprep.subr.mxu0 0.0
      %5758 = vmatpush2.msra.mxu0 %v5603
      %5759 = vmatprep.subr.mxu0 0.0
      %5760 = vmatpush2.msra.mxu0 %v5602
      %5761 = vmatprep.subr.mxu0 0.0
      %5762 = vmatpush2.msra.mxu0 %v5601
      %5763 = vmatprep.subr.mxu0 0.0
      %5764 = vmatpush2.msra.mxu0 %v5600
      %5765 = vmatprep.subr.mxu0 0.0
      %5766 = vmatpush2.msra.mxu0 %v5599
      %5767 = vmatprep.subr.mxu0 0.0
      %5768 = vmatpush2.msra.mxu0 %v5598
      %5769 = vmatprep.subr.mxu0 0.0
      %5770 = vmatpush2.msra.mxu0 %v5597
      %5771 = vmatprep.subr.mxu0 0.0
      %5772 = vmatpush2.msra.mxu0 %v5596
      %5773 = vmatprep.subr.mxu0 0.0
      %5774 = vmatpush2.msra.mxu0 %v5595
      %5775 = vmatprep.subr.mxu0 0.0
      %5776 = vmatpush2.msra.mxu0 %v5594
      %5777 = vmatprep.subr.mxu0 0.0
      %5778 = vmatpush2.msra.mxu0 %v5593
      %5779 = vmatprep.subr.mxu0 0.0
      %5780 = vmatpush2.msra.mxu0 %v5592
      %5781 = vmatprep.subr.mxu0 0.0
      %5782 = vmatpush2.msra.mxu0 %v5591
      %5783 = vmatprep.mubr.f32.mxu0 %v5388
      %5784 = vmatmul.mubr.f32.gmra.mxu0 %v5382
      %v5785 = vpop.f32.mrf.mxu0
      %v5786 = vadd.f32 0.0, %v5785
      %v5787 = vpop.f32.mrf.mxu0
      %5788 = vmatprep.mubr.f32.mxu0 %v5390
      %5789 = vmatmul.mubr.f32.gmra.mxu0 %v5360
      %v5790 = vpop.f32.mrf.mxu0
      %v5791 = vadd.f32 0.0, %v5790
      %v5792 = vpop.f32.mrf.mxu0
      %5793 = vmatprep.mubr.f32.mxu0 %v5392
      %5794 = vmatmul.mubr.f32.gmra.mxu0 %v5362
      %v5795 = vpop.f32.mrf.mxu0
      %v5796 = vadd.f32 0.0, %v5795
      %v5797 = vpop.f32.mrf.mxu0
      %5798 = vmatprep.mubr.f32.mxu0 %v5394
      %5799 = vmatmul.mubr.f32.gmra.mxu0 %v5364
      %v5800 = vpop.f32.mrf.mxu0
      %v5801 = vadd.f32 0.0, %v5800
      %v5802 = vpop.f32.mrf.mxu0
      %5803 = vmatprep.mubr.f32.mxu0 %v5396
      %5804 = vmatmul.mubr.f32.gmra.mxu0 %v5366
      %v5805 = vpop.f32.mrf.mxu0
      %v5806 = vadd.f32 0.0, %v5805
      %v5807 = vpop.f32.mrf.mxu0
      %5808 = vmatprep.mubr.f32.mxu0 %v5398
      %5809 = vmatmul.mubr.f32.gmra.mxu0 %v5368
      %v5810 = vpop.f32.mrf.mxu0
      %v5811 = vadd.f32 0.0, %v5810
      %v5812 = vpop.f32.mrf.mxu0
      %5813 = vmatprep.mubr.f32.mxu0 %v5400
      %5814 = vmatmul.mubr.f32.gmra.mxu0 %v5370
      %v5815 = vpop.f32.mrf.mxu0
      %v5816 = vadd.f32 0.0, %v5815
      %v5817 = vpop.f32.mrf.mxu0
      %5818 = vmatprep.mubr.f32.mxu0 %v5402
      %5819 = vmatmul.mubr.f32.gmra.mxu0 %v5372
      %v5820 = vpop.f32.mrf.mxu0
      %v5821 = vadd.f32 0.0, %v5820
      %v5822 = vpop.f32.mrf.mxu0
      %5823 = vmatprep.mubr.f32.mxu0 %v5401
      %5824 = vmatmul.mubr.f32.gmra.mxu0 %v5383
      %v5825 = vpop.f32.mrf.mxu0
      %v5826 = vadd.f32 0.0, %v5825
      %v5827 = vpop.f32.mrf.mxu0
      %5828 = vdwg.mxu0
      %5829 = vmatprep.subr.mxu0 0.0
      %5830 = vmatpush1.msra.mxu0 %v5622
      %5831 = vmatprep.subr.mxu0 0.0
      %5832 = vmatpush1.msra.mxu0 %v5621
      %5833 = vmatprep.subr.mxu0 0.0
      %5834 = vmatpush1.msra.mxu0 %v5620
      %5835 = vmatprep.subr.mxu0 0.0
      %5836 = vmatpush1.msra.mxu0 %v5619
      %5837 = vmatprep.subr.mxu0 0.0
      %5838 = vmatpush1.msra.mxu0 %v5618
      %5839 = vmatprep.subr.mxu0 0.0
      %5840 = vmatpush1.msra.mxu0 %v5617
      %5841 = vmatprep.subr.mxu0 0.0
      %5842 = vmatpush1.msra.mxu0 %v5616
      %5843 = vmatprep.subr.mxu0 0.0
      %5844 = vmatpush1.msra.mxu0 %v5615
      %5845 = vmatprep.subr.mxu0 0.0
      %5846 = vmatpush1.msra.mxu0 %v5614
      %5847 = vmatprep.subr.mxu0 0.0
      %5848 = vmatpush1.msra.mxu0 %v5613
      %5849 = vmatprep.subr.mxu0 0.0
      %5850 = vmatpush1.msra.mxu0 %v5612
      %5851 = vmatprep.subr.mxu0 0.0
      %5852 = vmatpush1.msra.mxu0 %v5611
      %5853 = vmatprep.subr.mxu0 0.0
      %5854 = vmatpush1.msra.mxu0 %v5610
      %5855 = vmatprep.subr.mxu0 0.0
      %5856 = vmatpush1.msra.mxu0 %v5609
      %5857 = vmatprep.subr.mxu0 0.0
      %5858 = vmatpush1.msra.mxu0 %v5608
      %5859 = vmatprep.subr.mxu0 0.0
      %5860 = vmatpush1.msra.mxu0 %v5607
      %5861 = vmatprep.subr.mxu0 0.0
      %5862 = vmatpush2.msra.mxu0 %v5638
      %5863 = vmatprep.subr.mxu0 0.0
      %5864 = vmatpush2.msra.mxu0 %v5637
      %5865 = vmatprep.subr.mxu0 0.0
      %5866 = vmatpush2.msra.mxu0 %v5636
      %5867 = vmatprep.subr.mxu0 0.0
      %5868 = vmatpush2.msra.mxu0 %v5635
      %5869 = vmatprep.subr.mxu0 0.0
      %5870 = vmatpush2.msra.mxu0 %v5634
      %5871 = vmatprep.subr.mxu0 0.0
      %5872 = vmatpush2.msra.mxu0 %v5633
      %5873 = vmatprep.subr.mxu0 0.0
      %5874 = vmatpush2.msra.mxu0 %v5632
      %5875 = vmatprep.subr.mxu0 0.0
      %5876 = vmatpush2.msra.mxu0 %v5631
      %5877 = vmatprep.subr.mxu0 0.0
      %5878 = vmatpush2.msra.mxu0 %v5630
      %5879 = vmatprep.subr.mxu0 0.0
      %5880 = vmatpush2.msra.mxu0 %v5629
      %5881 = vmatprep.subr.mxu0 0.0
      %5882 = vmatpush2.msra.mxu0 %v5628
      %5883 = vmatprep.subr.mxu0 0.0
      %5884 = vmatpush2.msra.mxu0 %v5627
      %5885 = vmatprep.subr.mxu0 0.0
      %5886 = vmatpush2.msra.mxu0 %v5626
      %5887 = vmatprep.subr.mxu0 0.0
      %5888 = vmatpush2.msra.mxu0 %v5625
      %5889 = vmatprep.subr.mxu0 0.0
      %5890 = vmatpush2.msra.mxu0 %v5624
      %5891 = vmatprep.subr.mxu0 0.0
      %5892 = vmatpush2.msra.mxu0 %v5623
      %5893 = vmatprep.mubr.f32.mxu0 %v5440
      %5894 = vmatmul.mubr.f32.gmra.mxu0 %v5414
      %v5895 = vpop.f32.mrf.mxu0
      %v5896 = vadd.f32 %v5786, %v5895
      %v5897 = vpop.f32.mrf.mxu0
      %5898 = vmatprep.mubr.f32.mxu0 %v5442
      %5899 = vmatmul.mubr.f32.gmra.mxu0 %v5416
      %v5900 = vpop.f32.mrf.mxu0
      %v5901 = vadd.f32 %v5791, %v5900
      %v5902 = vpop.f32.mrf.mxu0
      %5903 = vmatprep.mubr.f32.mxu0 %v5444
      %5904 = vmatmul.mubr.f32.gmra.mxu0 %v5418
      %v5905 = vpop.f32.mrf.mxu0
      %v5906 = vadd.f32 %v5796, %v5905
      %v5907 = vpop.f32.mrf.mxu0
      %5908 = vmatprep.mubr.f32.mxu0 %v5446
      %5909 = vmatmul.mubr.f32.gmra.mxu0 %v5420
      %v5910 = vpop.f32.mrf.mxu0
      %v5911 = vadd.f32 %v5801, %v5910
      %v5912 = vpop.f32.mrf.mxu0
      %5913 = vmatprep.mubr.f32.mxu0 %v5448
      %5914 = vmatmul.mubr.f32.gmra.mxu0 %v5422
      %v5915 = vpop.f32.mrf.mxu0
      %v5916 = vadd.f32 %v5806, %v5915
      %v5917 = vpop.f32.mrf.mxu0
      %5918 = vmatprep.mubr.f32.mxu0 %v5450
      %5919 = vmatmul.mubr.f32.gmra.mxu0 %v5424
      %v5920 = vpop.f32.mrf.mxu0
      %v5921 = vadd.f32 %v5811, %v5920
      %v5922 = vpop.f32.mrf.mxu0
      %5923 = vmatprep.mubr.f32.mxu0 %v5452
      %5924 = vmatmul.mubr.f32.gmra.mxu0 %v5426
      %v5925 = vpop.f32.mrf.mxu0
      %v5926 = vadd.f32 %v5816, %v5925
      %v5927 = vpop.f32.mrf.mxu0
      %5928 = vmatprep.mubr.f32.mxu0 %v5454
      %5929 = vmatmul.mubr.f32.gmra.mxu0 %v5428
      %v5930 = vpop.f32.mrf.mxu0
      %v5931 = vadd.f32 %v5821, %v5930
      %v5932 = vpop.f32.mrf.mxu0
      %5933 = vmatprep.mubr.f32.mxu0 %v5453
      %5934 = vmatmul.mubr.f32.gmra.mxu0 %v5427
      %v5935 = vpop.f32.mrf.mxu0
      %v5936 = vadd.f32 %v5826, %v5935
      %v5937 = vpop.f32.mrf.mxu0
      %5938 = vdwg.mxu0
      %5939 = vmatprep.subr.mxu0 0.0
      %5940 = vmatpush1.msra.mxu0 %v5654
      %5941 = vmatprep.subr.mxu0 0.0
      %5942 = vmatpush1.msra.mxu0 %v5653
      %5943 = vmatprep.subr.mxu0 0.0
      %5944 = vmatpush1.msra.mxu0 %v5652
      %5945 = vmatprep.subr.mxu0 0.0
      %5946 = vmatpush1.msra.mxu0 %v5651
      %5947 = vmatprep.subr.mxu0 0.0
      %5948 = vmatpush1.msra.mxu0 %v5650
      %5949 = vmatprep.subr.mxu0 0.0
      %5950 = vmatpush1.msra.mxu0 %v5649
      %5951 = vmatprep.subr.mxu0 0.0
      %5952 = vmatpush1.msra.mxu0 %v5648
      %5953 = vmatprep.subr.mxu0 0.0
      %5954 = vmatpush1.msra.mxu0 %v5647
      %5955 = vmatprep.subr.mxu0 0.0
      %5956 = vmatpush1.msra.mxu0 %v5646
      %5957 = vmatprep.subr.mxu0 0.0
      %5958 = vmatpush1.msra.mxu0 %v5645
      %5959 = vmatprep.subr.mxu0 0.0
      %5960 = vmatpush1.msra.mxu0 %v5644
      %5961 = vmatprep.subr.mxu0 0.0
      %5962 = vmatpush1.msra.mxu0 %v5643
      %5963 = vmatprep.subr.mxu0 0.0
      %5964 = vmatpush1.msra.mxu0 %v5642
      %5965 = vmatprep.subr.mxu0 0.0
      %5966 = vmatpush1.msra.mxu0 %v5641
      %5967 = vmatprep.subr.mxu0 0.0
      %5968 = vmatpush1.msra.mxu0 %v5640
      %5969 = vmatprep.subr.mxu0 0.0
      %5970 = vmatpush1.msra.mxu0 %v5639
      %5971 = vmatprep.subr.mxu0 0.0
      %5972 = vmatpush2.msra.mxu0 %v5670
      %5973 = vmatprep.subr.mxu0 0.0
      %5974 = vmatpush2.msra.mxu0 %v5669
      %5975 = vmatprep.subr.mxu0 0.0
      %5976 = vmatpush2.msra.mxu0 %v5668
      %5977 = vmatprep.subr.mxu0 0.0
      %5978 = vmatpush2.msra.mxu0 %v5667
      %5979 = vmatprep.subr.mxu0 0.0
      %5980 = vmatpush2.msra.mxu0 %v5666
      %5981 = vmatprep.subr.mxu0 0.0
      %5982 = vmatpush2.msra.mxu0 %v5665
      %5983 = vmatprep.subr.mxu0 0.0
      %5984 = vmatpush2.msra.mxu0 %v5664
      %5985 = vmatprep.subr.mxu0 0.0
      %5986 = vmatpush2.msra.mxu0 %v5663
      %5987 = vmatprep.subr.mxu0 0.0
      %5988 = vmatpush2.msra.mxu0 %v5662
      %5989 = vmatprep.subr.mxu0 0.0
      %5990 = vmatpush2.msra.mxu0 %v5661
      %5991 = vmatprep.subr.mxu0 0.0
      %5992 = vmatpush2.msra.mxu0 %v5660
      %5993 = vmatprep.subr.mxu0 0.0
      %5994 = vmatpush2.msra.mxu0 %v5659
      %5995 = vmatprep.subr.mxu0 0.0
      %5996 = vmatpush2.msra.mxu0 %v5658
      %5997 = vmatprep.subr.mxu0 0.0
      %5998 = vmatpush2.msra.mxu0 %v5657
      %5999 = vmatprep.subr.mxu0 0.0
      %6000 = vmatpush2.msra.mxu0 %v5656
      %6001 = vmatprep.subr.mxu0 0.0
      %6002 = vmatpush2.msra.mxu0 %v5655
      %6003 = vmatprep.mubr.f32.mxu0 %v5493
      %6004 = vmatmul.mubr.f32.gmra.mxu0 %v5466
      %v6005 = vpop.f32.mrf.mxu0
      %v6006 = vadd.f32 %v5896, %v6005
      %v6007 = vpop.f32.mrf.mxu0
      %6008 = vmatprep.mubr.f32.mxu0 %v5495
      %6009 = vmatmul.mubr.f32.gmra.mxu0 %v5468
      %v6010 = vpop.f32.mrf.mxu0
      %v6011 = vadd.f32 %v5901, %v6010
      %v6012 = vpop.f32.mrf.mxu0
      %6013 = vmatprep.mubr.f32.mxu0 %v5497
      %6014 = vmatmul.mubr.f32.gmra.mxu0 %v5470
      %v6015 = vpop.f32.mrf.mxu0
      %v6016 = vadd.f32 %v5906, %v6015
      %v6017 = vpop.f32.mrf.mxu0
      %6018 = vmatprep.mubr.f32.mxu0 %v5499
      %6019 = vmatmul.mubr.f32.gmra.mxu0 %v5472
      %v6020 = vpop.f32.mrf.mxu0
      %v6021 = vadd.f32 %v5911, %v6020
      %v6022 = vpop.f32.mrf.mxu0
      %6023 = vmatprep.mubr.f32.mxu0 %v5501
      %6024 = vmatmul.mubr.f32.gmra.mxu0 %v5474
      %v6025 = vpop.f32.mrf.mxu0
      %v6026 = vadd.f32 %v5916, %v6025
      %v6027 = vpop.f32.mrf.mxu0
      %6028 = vmatprep.mubr.f32.mxu0 %v5503
      %6029 = vmatmul.mubr.f32.gmra.mxu0 %v5476
      %v6030 = vpop.f32.mrf.mxu0
      %v6031 = vadd.f32 %v5921, %v6030
      %v6032 = vpop.f32.mrf.mxu0
      %6033 = vmatprep.mubr.f32.mxu0 %v5505
      %6034 = vmatmul.mubr.f32.gmra.mxu0 %v5478
      %v6035 = vpop.f32.mrf.mxu0
      %v6036 = vadd.f32 %v5926, %v6035
      %v6037 = vpop.f32.mrf.mxu0
      %6038 = vmatprep.mubr.f32.mxu0 %v5507
      %6039 = vmatmul.mubr.f32.gmra.mxu0 %v5480
      %v6040 = vpop.f32.mrf.mxu0
      %v6041 = vadd.f32 %v5931, %v6040
      %v6042 = vpop.f32.mrf.mxu0
      %6043 = vmatprep.mubr.f32.mxu0 %v5509
      %6044 = vmatmul.mubr.f32.gmra.mxu0 %v5479
      %v6045 = vpop.f32.mrf.mxu0
      %v6046 = vadd.f32 %v5936, %v6045
      %v6047 = vpop.f32.mrf.mxu0
      %6048 = vdwg.mxu0
      %6049 = vmatprep.subr.mxu0 0.0
      %6050 = vmatpush1.msra.mxu0 %v5686
      %6051 = vmatprep.subr.mxu0 0.0
      %6052 = vmatpush1.msra.mxu0 %v5685
      %6053 = vmatprep.subr.mxu0 0.0
      %6054 = vmatpush1.msra.mxu0 %v5684
      %6055 = vmatprep.subr.mxu0 0.0
      %6056 = vmatpush1.msra.mxu0 %v5683
      %6057 = vmatprep.subr.mxu0 0.0
      %6058 = vmatpush1.msra.mxu0 %v5682
      %6059 = vmatprep.subr.mxu0 0.0
      %6060 = vmatpush1.msra.mxu0 %v5681
      %6061 = vmatprep.subr.mxu0 0.0
      %6062 = vmatpush1.msra.mxu0 %v5680
      %6063 = vmatprep.subr.mxu0 0.0
      %6064 = vmatpush1.msra.mxu0 %v5679
      %6065 = vmatprep.subr.mxu0 0.0
      %6066 = vmatpush1.msra.mxu0 %v5678
      %6067 = vmatprep.subr.mxu0 0.0
      %6068 = vmatpush1.msra.mxu0 %v5677
      %6069 = vmatprep.subr.mxu0 0.0
      %6070 = vmatpush1.msra.mxu0 %v5676
      %6071 = vmatprep.subr.mxu0 0.0
      %6072 = vmatpush1.msra.mxu0 %v5675
      %6073 = vmatprep.subr.mxu0 0.0
      %6074 = vmatpush1.msra.mxu0 %v5674
      %6075 = vmatprep.subr.mxu0 0.0
      %6076 = vmatpush1.msra.mxu0 %v5673
      %6077 = vmatprep.subr.mxu0 0.0
      %6078 = vmatpush1.msra.mxu0 %v5672
      %6079 = vmatprep.subr.mxu0 0.0
      %6080 = vmatpush1.msra.mxu0 %v5671
      %6081 = vmatprep.subr.mxu0 0.0
      %6082 = vmatpush2.msra.mxu0 %v5702
      %6083 = vmatprep.subr.mxu0 0.0
      %6084 = vmatpush2.msra.mxu0 %v5701
      %6085 = vmatprep.subr.mxu0 0.0
      %6086 = vmatpush2.msra.mxu0 %v5700
      %6087 = vmatprep.subr.mxu0 0.0
      %6088 = vmatpush2.msra.mxu0 %v5699
      %6089 = vmatprep.subr.mxu0 0.0
      %6090 = vmatpush2.msra.mxu0 %v5698
      %6091 = vmatprep.subr.mxu0 0.0
      %6092 = vmatpush2.msra.mxu0 %v5697
      %6093 = vmatprep.subr.mxu0 0.0
      %6094 = vmatpush2.msra.mxu0 %v5696
      %6095 = vmatprep.subr.mxu0 0.0
      %6096 = vmatpush2.msra.mxu0 %v5695
      %6097 = vmatprep.subr.mxu0 0.0
      %6098 = vmatpush2.msra.mxu0 %v5694
      %6099 = vmatprep.subr.mxu0 0.0
      %6100 = vmatpush2.msra.mxu0 %v5693
      %6101 = vmatprep.subr.mxu0 0.0
      %6102 = vmatpush2.msra.mxu0 %v5692
      %6103 = vmatprep.subr.mxu0 0.0
      %6104 = vmatpush2.msra.mxu0 %v5691
      %6105 = vmatprep.subr.mxu0 0.0
      %6106 = vmatpush2.msra.mxu0 %v5690
      %6107 = vmatprep.subr.mxu0 0.0
      %6108 = vmatpush2.msra.mxu0 %v5689
      %6109 = vmatprep.subr.mxu0 0.0
      %6110 = vmatpush2.msra.mxu0 %v5688
      %6111 = vmatprep.subr.mxu0 0.0
      %6112 = vmatpush2.msra.mxu0 %v5687
      %6113 = vmatprep.mubr.f32.mxu0 %v5549
      %6114 = vmatmul.mubr.f32.gmra.mxu0 %v5521
      %v6115 = vpop.f32.mrf.mxu0
      %v6116 = vadd.f32 %v6006, %v6115
      %v6117 = vpop.f32.mrf.mxu0
      %6118 = vmatprep.mubr.f32.mxu0 %v5551
      %6119 = vmatmul.mubr.f32.gmra.mxu0 %v5523
      %v6120 = vpop.f32.mrf.mxu0
      %v6121 = vadd.f32 %v6011, %v6120
      %v6122 = vpop.f32.mrf.mxu0
      %6123 = vmatprep.mubr.f32.mxu0 %v5553
      %6124 = vmatmul.mubr.f32.gmra.mxu0 %v5525
      %v6125 = vpop.f32.mrf.mxu0
      %v6126 = vadd.f32 %v6016, %v6125
      %v6127 = vpop.f32.mrf.mxu0
      %6128 = vmatprep.mubr.f32.mxu0 %v5555
      %6129 = vmatmul.mubr.f32.gmra.mxu0 %v5527
      %v6130 = vpop.f32.mrf.mxu0
      %v6131 = vadd.f32 %v6021, %v6130
      %v6132 = vpop.f32.mrf.mxu0
      %6133 = vmatprep.mubr.f32.mxu0 %v5557
      %6134 = vmatmul.mubr.f32.gmra.mxu0 %v5529
      %v6135 = vpop.f32.mrf.mxu0
      %v6136 = vadd.f32 %v6026, %v6135
      %v6137 = vpop.f32.mrf.mxu0
      %6138 = vmatprep.mubr.f32.mxu0 %v5559
      %6139 = vmatmul.mubr.f32.gmra.mxu0 %v5531
      %v6140 = vpop.f32.mrf.mxu0
      %v6141 = vadd.f32 %v6031, %v6140
      %v6142 = vpop.f32.mrf.mxu0
      %6143 = vmatprep.mubr.f32.mxu0 %v5561
      %6144 = vmatmul.mubr.f32.gmra.mxu0 %v5533
      %v6145 = vpop.f32.mrf.mxu0
      %v6146 = vadd.f32 %v6036, %v6145
      %v6147 = vpop.f32.mrf.mxu0
      %6148 = vmatprep.mubr.f32.mxu0 %v5563
      %6149 = vmatmul.mubr.f32.gmra.mxu0 %v5535
      %v6150 = vpop.f32.mrf.mxu0
      %v6151 = vadd.f32 %v6041, %v6150
      %v6152 = vpop.f32.mrf.mxu0
      %6153 = vmatprep.mubr.f32.mxu0 %v5565
      %6154 = vmatmul.mubr.f32.gmra.mxu0 %v5537
      %v6155 = vpop.f32.mrf.mxu0
      %v6156 = vadd.f32 %v6046, %v6155
      %v6157 = vpop.f32.mrf.mxu0
      %6158 = vdwg.mxu0
      %6159 = vmatprep.subr.mxu0 0.0
      %6160 = vmatpush1.msra.mxu0 %v5718
      %6161 = vmatprep.subr.mxu0 0.0
      %6162 = vmatpush1.msra.mxu0 %v5717
      %6163 = vmatprep.subr.mxu0 0.0
      %6164 = vmatpush1.msra.mxu0 %v5716
      %6165 = vmatprep.subr.mxu0 0.0
      %6166 = vmatpush1.msra.mxu0 %v5715
      %6167 = vmatprep.subr.mxu0 0.0
      %6168 = vmatpush1.msra.mxu0 %v5714
      %6169 = vmatprep.subr.mxu0 0.0
      %6170 = vmatpush1.msra.mxu0 %v5713
      %6171 = vmatprep.subr.mxu0 0.0
      %6172 = vmatpush1.msra.mxu0 %v5712
      %6173 = vmatprep.subr.mxu0 0.0
      %6174 = vmatpush1.msra.mxu0 %v5711
      %6175 = vmatprep.subr.mxu0 0.0
      %6176 = vmatpush1.msra.mxu0 %v5710
      %6177 = vmatprep.subr.mxu0 0.0
      %6178 = vmatpush1.msra.mxu0 %v5709
      %6179 = vmatprep.subr.mxu0 0.0
      %6180 = vmatpush1.msra.mxu0 %v5708
      %6181 = vmatprep.subr.mxu0 0.0
      %6182 = vmatpush1.msra.mxu0 %v5707
      %6183 = vmatprep.subr.mxu0 0.0
      %6184 = vmatpush1.msra.mxu0 %v5706
      %6185 = vmatprep.subr.mxu0 0.0
      %6186 = vmatpush1.msra.mxu0 %v5705
      %6187 = vmatprep.subr.mxu0 0.0
      %6188 = vmatpush1.msra.mxu0 %v5704
      %6189 = vmatprep.subr.mxu0 0.0
      %6190 = vmatpush1.msra.mxu0 %v5703
      %6191 = vmatprep.subr.mxu0 0.0
      %6192 = vmatpush2.msra.mxu0 0.0
      %6193 = vmatprep.subr.mxu0 0.0
      %6194 = vmatpush2.msra.mxu0 0.0
      %6195 = vmatprep.subr.mxu0 0.0
      %6196 = vmatpush2.msra.mxu0 0.0
      %6197 = vmatprep.subr.mxu0 0.0
      %6198 = vmatpush2.msra.mxu0 0.0
      %6199 = vmatprep.subr.mxu0 0.0
      %6200 = vmatpush2.msra.mxu0 0.0
      %6201 = vmatprep.subr.mxu0 0.0
      %6202 = vmatpush2.msra.mxu0 0.0
      %6203 = vmatprep.subr.mxu0 0.0
      %6204 = vmatpush2.msra.mxu0 0.0
      %6205 = vmatprep.subr.mxu0 0.0
      %6206 = vmatpush2.msra.mxu0 0.0
      %6207 = vmatprep.subr.mxu0 0.0
      %6208 = vmatpush2.msra.mxu0 0.0
      %6209 = vmatprep.subr.mxu0 0.0
      %6210 = vmatpush2.msra.mxu0 0.0
      %6211 = vmatprep.subr.mxu0 0.0
      %6212 = vmatpush2.msra.mxu0 0.0
      %6213 = vmatprep.subr.mxu0 0.0
      %6214 = vmatpush2.msra.mxu0 0.0
      %6215 = vmatprep.subr.mxu0 0.0
      %6216 = vmatpush2.msra.mxu0 0.0
      %6217 = vmatprep.subr.mxu0 0.0
      %6218 = vmatpush2.msra.mxu0 0.0
      %6219 = vmatprep.subr.mxu0 0.0
      %6220 = vmatpush2.msra.mxu0 0.0
      %6221 = vmatprep.subr.mxu0 0.0
      %6222 = vmatpush2.msra.mxu0 0.0
      %6223 = vmatprep.mubr.f32.mxu0 0.0
      %6224 = vmatmul.mubr.f32.gmra.mxu0 %v5360
      %v6225 = vpop.f32.mrf.mxu0
      %v6226 = vadd.f32 %v6116, %v6225
      %v6227 = vpop.f32.mrf.mxu0
      %6228 = vmatprep.mubr.f32.mxu0 0.0
      %6229 = vmatmul.mubr.f32.gmra.mxu0 %v5362
      %v6230 = vpop.f32.mrf.mxu0
      %v6231 = vadd.f32 %v6121, %v6230
      %v6232 = vpop.f32.mrf.mxu0
      %6233 = vmatprep.mubr.f32.mxu0 0.0
      %6234 = vmatmul.mubr.f32.gmra.mxu0 %v5364
      %v6235 = vpop.f32.mrf.mxu0
      %v6236 = vadd.f32 %v6126, %v6235
      %v6237 = vpop.f32.mrf.mxu0
      %6238 = vmatprep.mubr.f32.mxu0 0.0
      %6239 = vmatmul.mubr.f32.gmra.mxu0 %v5366
      %v6240 = vpop.f32.mrf.mxu0
      %v6241 = vadd.f32 %v6131, %v6240
      %v6242 = vpop.f32.mrf.mxu0
      %6243 = vmatprep.mubr.f32.mxu0 0.0
      %6244 = vmatmul.mubr.f32.gmra.mxu0 %v5368
      %v6245 = vpop.f32.mrf.mxu0
      %v6246 = vadd.f32 %v6136, %v6245
      %v6247 = vpop.f32.mrf.mxu0
      %6248 = vmatprep.mubr.f32.mxu0 0.0
      %6249 = vmatmul.mubr.f32.gmra.mxu0 %v5370
      %v6250 = vpop.f32.mrf.mxu0
      %v6251 = vadd.f32 %v6141, %v6250
      %v6252 = vpop.f32.mrf.mxu0
      %6253 = vmatprep.mubr.f32.mxu0 0.0
      %6254 = vmatmul.mubr.f32.gmra.mxu0 %v5372
      %v6255 = vpop.f32.mrf.mxu0
      %v6256 = vadd.f32 %v6146, %v6255
      %v6257 = vpop.f32.mrf.mxu0
      %6258 = vmatprep.mubr.f32.mxu0 0.0
      %6259 = vmatmul.mubr.f32.gmra.mxu0 %v5383
      %v6260 = vpop.f32.mrf.mxu0
      %v6261 = vadd.f32 %v6151, %v6260
      %v6262 = vpop.f32.mrf.mxu0
      %6263 = vmatprep.mubr.f32.mxu0 0.0
      %6264 = vmatmul.mubr.f32.gmra.mxu0 0.0
      %v6265 = vpop.f32.mrf.mxu0
      %v6266 = vadd.f32 %v6156, %v6265
      %v6267 = vpop.f32.mrf.mxu0
      %6268 = vdwg.mxu0
      %v6269 = vadd.f32 %v6226, %v6231
      %v6270 = vadd.f32 %v6269, %v6236
      %v6271 = vadd.f32 %v6270, %v6241
      %v6272 = vadd.f32 %v6271, %v6246
      %v6273 = vadd.f32 %v6272, %v6251
      %v6274 = vadd.f32 %v6273, %v6256
      %v6275 = vadd.f32 %v6274, %v6261
      %v6276 = vsel %vm335, %v6266, 0.0
      %v6277 = vadd.f32 %v6275, %v6276
      %v6278 = vrot.slane %v6277, 4
      %v6279 = vadd.f32 %v6277, %v6278
      %v6280 = vrot.slane %v6279, 2
      %v6281 = vadd.f32 %v6279, %v6280
      %v6282 = vrot.slane %v6281, 1
      %v6283 = vadd.f32 %v6281, %v6282
      %v6284 = vrcp.pop 68.0
      %v6285 = vmul.f32 %v6283, %v6284
      %v6286 = vmul.f32 %v6226, %v6226
      %v6287 = vmul.f32 %v6231, %v6231
      %v6288 = vmul.f32 %v6236, %v6236
      %v6289 = vmul.f32 %v6241, %v6241
      %v6290 = vmul.f32 %v6246, %v6246
      %v6291 = vmul.f32 %v6251, %v6251
      %v6292 = vmul.f32 %v6256, %v6256
      %v6293 = vmul.f32 %v6261, %v6261
      %v6294 = vmul.f32 %v6266, %v6266
      %v6295 = vadd.f32 %v6286, %v6287
      %v6296 = vadd.f32 %v6295, %v6288
      %v6297 = vadd.f32 %v6296, %v6289
      %v6298 = vadd.f32 %v6297, %v6290
      %v6299 = vadd.f32 %v6298, %v6291
      %v6300 = vadd.f32 %v6299, %v6292
      %v6301 = vadd.f32 %v6300, %v6293
      %v6302 = vsel %vm335, %v6294, 0.0
      %v6303 = vadd.f32 %v6301, %v6302
      %v6304 = vrot.slane %v6303, 4
      %v6305 = vadd.f32 %v6303, %v6304
      %v6306 = vrot.slane %v6305, 2
      %v6307 = vadd.f32 %v6305, %v6306
      %v6308 = vrot.slane %v6307, 1
      %v6309 = vadd.f32 %v6307, %v6308
      %v6310 = vmul.f32 %v6309, %v6284
      %v6311 = vmul.f32 %v6285, %v6285
      %v6312 = vsub.f32 %v6310, %v6311
      %v6313 = vmax.f32 %v6312, 0.0
      %v6314 = vsub.f32 %v6226, %v6285
      %v6315 = vsub.f32 %v6231, %v6285
      %v6316 = vsub.f32 %v6236, %v6285
      %v6317 = vsub.f32 %v6241, %v6285
      %v6318 = vsub.f32 %v6246, %v6285
      %v6319 = vsub.f32 %v6251, %v6285
      %v6320 = vsub.f32 %v6256, %v6285
      %v6321 = vsub.f32 %v6261, %v6285
      %v6322 = vsub.f32 %v6266, %v6285
      %v6323 = vadd.f32 %v6313, 1e-05
      %v6324 = vrsqrt.pop %v6323
      %v6325 = vmul.f32 %v6314, %v6324
      %v6326 = vmul.f32 %v6315, %v6324
      %v6327 = vmul.f32 %v6316, %v6324
      %v6328 = vmul.f32 %v6317, %v6324
      %v6329 = vmul.f32 %v6318, %v6324
      %v6330 = vmul.f32 %v6319, %v6324
      %v6331 = vmul.f32 %v6320, %v6324
      %v6332 = vmul.f32 %v6321, %v6324
      %v6333 = vmul.f32 %v6322, %v6324
      %vm6334 = vcmp.gt.f32.partialorder %v6325, 0.0
      %vm6335 = vcmp.gt.f32.partialorder %v6326, 0.0
      %vm6336 = vcmp.gt.f32.partialorder %v6327, 0.0
      %vm6337 = vcmp.gt.f32.partialorder %v6328, 0.0
      %vm6338 = vcmp.gt.f32.partialorder %v6329, 0.0
      %vm6339 = vcmp.gt.f32.partialorder %v6330, 0.0
      %vm6340 = vcmp.gt.f32.partialorder %v6331, 0.0
      %vm6341 = vcmp.gt.f32.partialorder %v6332, 0.0
      %vm6342 = vcmp.gt.f32.partialorder %v6333, 0.0
      %v6343 = vmul.f32 %v6325, 0.01
      %v6344 = vmul.f32 %v6326, 0.01
      %v6345 = vmul.f32 %v6327, 0.01
      %v6346 = vmul.f32 %v6328, 0.01
      %v6347 = vmul.f32 %v6329, 0.01
      %v6348 = vmul.f32 %v6330, 0.01
      %v6349 = vmul.f32 %v6331, 0.01
      %v6350 = vmul.f32 %v6332, 0.01
      %v6351 = vmul.f32 %v6333, 0.01
      %v6352 = vsel %vm6334, %v6325, %v6343
      %v6353 = vsel %vm6335, %v6326, %v6344
      %v6354 = vsel %vm6336, %v6327, %v6345
      %v6355 = vsel %vm6337, %v6328, %v6346
      %v6356 = vsel %vm6338, %v6329, %v6347
      %v6357 = vsel %vm6339, %v6330, %v6348
      %v6358 = vsel %vm6340, %v6331, %v6349
      %v6359 = vsel %vm6341, %v6332, %v6350
      %v6360 = vsel %vm6342, %v6333, %v6351
      %6361 = vst [vmem:[%s211] sm:$0xff] %v6352
      %6362 = vst [vmem:[%s211 + $0x8] sm:$0xff] %v6353
      %6363 = vst [vmem:[%s211 + $0x10] sm:$0xff] %v6354
      %6364 = vst [vmem:[%s211 + $0x18] sm:$0xff] %v6355
      %6365 = vst [vmem:[%s211 + $0x20] sm:$0xff] %v6356
      %6366 = vst [vmem:[%s211 + $0x28] sm:$0xff] %v6357
      %6367 = vst [vmem:[%s211 + $0x30] sm:$0xff] %v6358
      %6368 = vst [vmem:[%s211 + $0x38] sm:$0xff] %v6359
      %6369 = vst [vmem:[%s211 + $0x40] sm:$0xf] %v6360
      %p6370 = scmp.lt.s32.totalorder %s15, 1
      %s6371 = scalar_select %p6370, %s15, 1
      %s6372 = smul.addr %s6371, 9
      %s6373 = smul.addr %s6372, 8
      %s6374 = scalar_lea.vmem %s4, %s6373
      // Predicated region
      $region37: #{_lambda_.1} parent=35 // pred_check
        %p6375 = pneg %p127
      $region38: #{_lambda_.1} parent=35 // pred_check_branch
        %6377 = sbr.rel (%p6375) target = $region40
      $region39: #{_lambda_.1} parent=35 // pred_region
        _
      $region40: #{_lambda_.1} parent=35 // pred_fallthru
        _
    $region36: #{_lambda_.1} parent=5 // pred_fallthru
      _
    %p6378 = scmp.le.s32.totalorder 2, %s10
    // Predicated region
    $region41: #{_lambda_.1} parent=5 // pred_check
      %p6379 = pneg %p6378
    $region42: #{_lambda_.1} parent=5 // pred_check_branch
      %6381 = sbr.rel (%p6379) target = $region44
    $region43: #{_lambda_.1} parent=5 // pred_region
      %s6382 = ssub.s32 %s10, 2
      // Predicated region
      $region45: #{_lambda_.1} parent=43 // pred_check
        %p6383 = pneg %p133
      $region46: #{_lambda_.1} parent=43 // pred_check_branch
        %6385 = sbr.rel (%p6383) target = $region48
      $region47: #{_lambda_.1} parent=43 // pred_region
        %p6386 = scmp.lt.s32.totalorder %s16, 1
        %s6387 = scalar_select %p6386, %s16, 1
        %s6388 = smul.addr %s6387, 9
        %s6389 = smul.addr %s6388, 8
        %s6390 = scalar_lea.vmem %s4, %s6389
      $region48: #{_lambda_.1} parent=43 // pred_fallthru
        _
    $region44: #{_lambda_.1} parent=5 // pred_fallthru
      _
  $region6: #{_lambda_.1} parent=0 // loop_footer
    %s14 = sadd.s32 1, %s10
  $region7: #{_lambda_.1} parent=0 // loop_footer_branch
    %9 = sbr.rel target = $region3
  $region8: #{_lambda_.1} parent=0 // loop_exit
    _

</llo_original>
